<compile_context>
chip_gen: v7x
topology: tpu7x:2x2x1
jax: 0.10.0
libtpu: 0.0.40
codegen_flags: <defaults>
</compile_context>

<pallas_src>
import math
import functools

import jax
import jax.numpy as jnp
from jax.experimental import pallas as pl
from jax.experimental.pallas import tpu as pltpu


_WEIGHT_ORDER = (
    "wq", "bq", "wk", "bk", "wv", "bv", "wo", "bo",
    "ln1g", "ln1b", "w1", "b1", "w2", "b2", "ln2g", "ln2b",
)


def _layernorm(x, gamma, beta, eps=1e-5):
    # PyTorch LayerNorm: biased variance over last dim, eps inside rsqrt.
    mu = jnp.mean(x, axis=-1, keepdims=True)
    var = jnp.mean(jnp.square(x - mu), axis=-1, keepdims=True)
    return (x - mu) * jax.lax.rsqrt(var + eps) * gamma + beta


# --------------------------- fused layer kernel ----------------------------
def encoder_layer_kernel(
    xq_ref, xkv_ref,
    wq_ref, bq_ref, wk_ref, bk_ref, wv_ref, bv_ref, wo_ref, bo_ref,
    ln1g_ref, ln1b_ref, w1_ref, b1_ref, w2_ref, b2_ref, ln2g_ref, ln2b_ref,
    out_ref,
    *, heads, d_k, scale, batched_heads,
):
    # xq_ref : (1, TQ, D) row tile this grid step computes (queries, residual,
    #          FFN).  xkv_ref : (1, S, D) full sequence of the same batch
    #          element (keys / values).
    cdt = wq_ref.dtype                      # MXU input dtype (bf16); acc = f32

    xq = xq_ref[0]                          # (TQ, D)
    xkv = xkv_ref[0]                        # (S, D)
    tq, d_model = xq.shape
    s_kv = xkv.shape[0]

    def mm(a, b):
        # bf16 x bf16 -> f32 accumulation on the MXU.
        return jnp.dot(a.astype(cdt), b.astype(cdt),
                       preferred_element_type=jnp.float32)

    # ---- multi-head self-attention ----------------------------------------
    q = mm(xq, wq_ref[...]) + bq_ref[...]        # (TQ, D) f32
    k = mm(xkv, wk_ref[...]) + bk_ref[...]       # (S,  D) f32
    v = mm(xkv, wv_ref[...]) + bv_ref[...]       # (S,  D) f32

    if batched_heads:
        # One batched contraction over heads (no lane slices / concatenate).
        qh = q.reshape(tq, heads, d_k).transpose(1, 0, 2)      # (H, TQ, dk)
        kh = k.reshape(s_kv, heads, d_k).transpose(1, 0, 2)    # (H, S,  dk)
        vh = v.reshape(s_kv, heads, d_k).transpose(1, 0, 2)    # (H, S,  dk)

        s = jnp.einsum("hqd,hkd->hqk", qh.astype(cdt), kh.astype(cdt),
                       preferred_element_type=jnp.float32) * scale  # (H,TQ,S)
        s_max = jnp.max(s, axis=-1, keepdims=True)
        p = jnp.exp(s - s_max)
        denom = jnp.sum(p, axis=-1, keepdims=True)
        p = p * pl.reciprocal(denom, approx=True)   # EUP reciprocal (free slot)
        oh = jnp.einsum("hqk,hkd->hqd", p.astype(cdt), vh.astype(cdt),
                        preferred_element_type=jnp.float32)         # (H,TQ,dk)
        attn = oh.transpose(1, 0, 2).reshape(tq, d_model)           # (TQ, D)
    else:
        # Conservative fallback: static unroll over heads.
        head_outs = []
        for h in range(heads):
            sl = slice(h * d_k, (h + 1) * d_k)
            qh, kh, vh = q[:, sl], k[:, sl], v[:, sl]
            s = jnp.dot(qh.astype(cdt), kh.astype(cdt).T,
                        preferred_element_type=jnp.float32) * scale
            s_max = jnp.max(s, axis=-1, keepdims=True)
            p = jnp.exp(s - s_max)
            p = p * pl.reciprocal(jnp.sum(p, axis=-1, keepdims=True),
                                  approx=True)
            head_outs.append(jnp.dot(p.astype(cdt), vh.astype(cdt),
                                     preferred_element_type=jnp.float32))
        attn = jnp.concatenate(head_outs, axis=-1)

    attn = mm(attn, wo_ref[...]) + bo_ref[...]

    # dropout_1: identity (eval mode)
    h1 = _layernorm(attn + xq.astype(jnp.float32), ln1g_ref[...], ln1b_ref[...])

    # ---- position-wise feed-forward ----------------------------------------
    ff = mm(h1, w1_ref[...]) + b1_ref[...]
    ff = jnp.maximum(ff, 0.0)                     # ReLU
    ff = mm(ff, w2_ref[...]) + b2_ref[...]

    # dropout_2: identity (eval mode)
    out = _layernorm(ff + h1, ln2g_ref[...], ln2b_ref[...])
    out_ref[0] = out.astype(out_ref.dtype)


# ------------------------------ wrapper -------------------------------------
def _choose_tile_s(seq_len):
    # Largest multiple-of-8 divisor of S up to 256; else full S.
    for t in (256, 128, 64, 32, 16, 8):
        if t <= seq_len and seq_len % t == 0:
            return t
    return seq_len


def _const_index_map(ndim):
    return lambda b, s: (0,) * ndim


def _build_layer_call(B, S, D, tile_s, heads, d_k, weights, out_dtype,
                      resident_weights, batched_heads):
    kernel = functools.partial(
        encoder_layer_kernel, heads=heads, d_k=d_k,
        scale=1.0 / math.sqrt(d_k), batched_heads=batched_heads)

    if resident_weights:
        # Weights never change across the grid -> single resident VMEM copy
        # (no double-buffered pipelining, halves weight VMEM).
        w_specs = [pl.BlockSpec(memory_space=pltpu.MemorySpace.VMEM)
                   for _ in weights]
    else:
        # Fallback: whole-array blocks with constant index maps.
        w_specs = [pl.BlockSpec(w.shape, _const_index_map(w.ndim))
                   for w in weights]

    in_specs = [
        pl.BlockSpec((1, tile_s, D), lambda b, s: (b, s, 0)),   # query row tile
        pl.BlockSpec((1, S, D), lambda b, s: (b, 0, 0)),        # full seq (K/V)
    ] + w_specs

    return pl.pallas_call(
        kernel,
        out_shape=jax.ShapeDtypeStruct((B, S, D), out_dtype),
        grid_spec=pltpu.PrefetchScalarGridSpec(
            num_scalar_prefetch=0,
            grid=(B, S // tile_s),
            in_specs=in_specs,
            out_specs=pl.BlockSpec((1, tile_s, D), lambda b, s: (b, s, 0)),
        ),
        compiler_params=pltpu.CompilerParams(
            dimension_semantics=("parallel", "parallel"),
            vmem_limit_bytes=48 * 1024 * 1024,   # above default scoped limit,
                                                 # below v7x physical (64 MiB)
        ),
    )


_CHOSEN_CONFIG = None  # (resident_weights, batched_heads) that compiled OK


def encoder_layer_forward(x, params, *, heads):
    global _CHOSEN_CONFIG
    B, S, D = x.shape
    assert D % heads == 0
    d_k = D // heads
    tile_s = _choose_tile_s(S)
    weights = [params[name] for name in _WEIGHT_ORDER]

    configs = [(True, True), (True, False), (False, True), (False, False)]
    if _CHOSEN_CONFIG in configs:
        configs.remove(_CHOSEN_CONFIG)
        configs.insert(0, _CHOSEN_CONFIG)

    last_err = None
    for cfg in configs:
        try:
            call = _build_layer_call(B, S, D, tile_s, heads, d_k, weights,
                                     x.dtype, *cfg)
            out = call(x, x, *weights)
            _CHOSEN_CONFIG = cfg
            return out
        except Exception as e:  # fall back to a more conservative config
            last_err = e
    raise last_err


def encoder_forward(x, layer_params, *, heads):
    # Stack of encoder layers (sequential pallas_calls).
    # TODO(synk): cross-layer weight prefetch (cross-pallas_call DMA future)
    # would hide the per-layer weight fetch; omitted for clarity here.
    for params in layer_params:
        x = encoder_layer_forward(x, params, heads=heads)
    return x


# ---------------------- pure-JAX reference (mirrors kernel dtypes) ----------
def _ref_layer(x, p, heads):
    B, S, D = x.shape
    d_k = D // heads
    scale = 1.0 / math.sqrt(d_k)
    cdt = p["wq"].dtype

    def mm(a, b):
        return jnp.dot(a.astype(cdt), b.astype(cdt),
                       preferred_element_type=jnp.float32)

    def one(xb):  # (S, D)
        q = mm(xb, p["wq"]) + p["bq"]
        k = mm(xb, p["wk"]) + p["bk"]
        v = mm(xb, p["wv"]) + p["bv"]
        qh = q.reshape(S, heads, d_k).transpose(1, 0, 2)
        kh = k.reshape(S, heads, d_k).transpose(1, 0, 2)
        vh = v.reshape(S, heads, d_k).transpose(1, 0, 2)
        s = jnp.einsum("hqd,hkd->hqk", qh.astype(cdt), kh.astype(cdt),
                       preferred_element_type=jnp.float32) * scale
        s = s - jnp.max(s, axis=-1, keepdims=True)
        e = jnp.exp(s)
        pr = e / jnp.sum(e, axis=-1, keepdims=True)
        oh = jnp.einsum("hqk,hkd->hqd", pr.astype(cdt), vh.astype(cdt),
                        preferred_element_type=jnp.float32)
        attn = oh.transpose(1, 0, 2).reshape(S, D)
        attn = mm(attn, p["wo"]) + p["bo"]
        h1 = _layernorm(attn + xb.astype(jnp.float32), p["ln1g"], p["ln1b"])
        ff = jnp.maximum(mm(h1, p["w1"]) + p["b1"], 0.0)
        ff = mm(ff, p["w2"]) + p["b2"]
        return _layernorm(ff + h1, p["ln2g"], p["ln2b"]).astype(x.dtype)

    return jax.vmap(one)(x)


def _ref_encoder(x, layer_params, heads):
    for p in layer_params:
        x = _ref_layer(x, p, heads)
    return x


# --------------------------------- main -------------------------------------
def _init_layer_params(key, d_model, d_ff, w_dtype=jnp.bfloat16):
    ks = jax.random.split(key, 14)
    s = 0.05
    f32 = jnp.float32

    def mat(k, shape):
        return (s * jax.random.normal(k, shape, dtype=f32)).astype(w_dtype)

    def vec(k, n):
        return (0.02 * jax.random.normal(k, (1, n), dtype=f32)).astype(f32)

    return {
        "wq": mat(ks[0], (d_model, d_model)), "bq": vec(ks[1], d_model),
        "wk": mat(ks[2], (d_model, d_model)), "bk": vec(ks[3], d_model),
        "wv": mat(ks[4], (d_model, d_model)), "bv": vec(ks[5], d_model),
        "wo": mat(ks[6], (d_model, d_model)), "bo": vec(ks[7], d_model),
        "ln1g": (1.0 + vec(ks[8], d_model)), "ln1b": vec(ks[9], d_model),
        "w1": mat(ks[10], (d_model, d_ff)), "b1": vec(ks[11], d_ff),
        "w2": mat(ks[12], (d_ff, d_model)), "b2": vec(ks[13], d_model),
        "ln2g": jnp.ones((1, d_model), f32), "ln2b": jnp.zeros((1, d_model), f32),
    }


if __name__ == "__main__":
    d_model, heads, d_ff, num_layers = 32, 4, 64, 2
    B, S = 2, 8

    root = jax.random.PRNGKey(0)
    kx, *layer_keys = jax.random.split(root, 1 + num_layers)

    x = jax.random.normal(kx, (B, S, d_model), dtype=jnp.float32).astype(jnp.bfloat16)
    layer_params = [_init_layer_params(k, d_model, d_ff) for k in layer_keys]

    out = encoder_forward(x, layer_params, heads=heads)
    out = jax.block_until_ready(out)

    ref = _ref_encoder(x, layer_params, heads)
    assert out.shape == (B, S, d_model)
    err = float(jnp.max(jnp.abs(out.astype(jnp.float32) - ref.astype(jnp.float32))))
    assert err < 3e-2, f"mismatch vs reference: max abs err = {err}"

    print("KERNEL_OK")
</pallas_src>

<mosaic_0001>
module attributes {stable_mosaic.version = 11 : i64} {
  func.func @encoder_layer_kernel(%arg0: i32, %arg1: i32, %arg2: memref<1x8x32xbf16, #tpu.memory_space<vmem>>, %arg3: memref<1x8x32xbf16, #tpu.memory_space<vmem>>, %arg4: memref<32x32xbf16, #tpu.memory_space<vmem>>, %arg5: memref<1x32xf32, #tpu.memory_space<vmem>>, %arg6: memref<32x32xbf16, #tpu.memory_space<vmem>>, %arg7: memref<1x32xf32, #tpu.memory_space<vmem>>, %arg8: memref<32x32xbf16, #tpu.memory_space<vmem>>, %arg9: memref<1x32xf32, #tpu.memory_space<vmem>>, %arg10: memref<32x32xbf16, #tpu.memory_space<vmem>>, %arg11: memref<1x32xf32, #tpu.memory_space<vmem>>, %arg12: memref<1x32xf32, #tpu.memory_space<vmem>>, %arg13: memref<1x32xf32, #tpu.memory_space<vmem>>, %arg14: memref<32x64xbf16, #tpu.memory_space<vmem>>, %arg15: memref<1x64xf32, #tpu.memory_space<vmem>>, %arg16: memref<64x32xbf16, #tpu.memory_space<vmem>>, %arg17: memref<1x32xf32, #tpu.memory_space<vmem>>, %arg18: memref<1x32xf32, #tpu.memory_space<vmem>>, %arg19: memref<1x32xf32, #tpu.memory_space<vmem>>, %arg20: memref<1x8x32xbf16, #tpu.memory_space<vmem>>) attributes {dimension_semantics = [#tpu.dimension_semantics<parallel>, #tpu.dimension_semantics<parallel>], iteration_bounds = array<i64: 2, 1>, scalar_prefetch = 0 : i64, scratch_operands = 0 : i64, tpu.core_type = #tpu.core_type<tc>, window_params = [{transform_indices = @transform_0, window_bounds = array<i64: 1, 8, 32>}, {transform_indices = @transform_1, window_bounds = array<i64: 1, 8, 32>}, {pipeline_mode = #tpu.pipeline_mode<synchronous>, transform_indices = @transform_2, window_bounds = array<i64: 32, 32>}, {pipeline_mode = #tpu.pipeline_mode<synchronous>, transform_indices = @transform_3, window_bounds = array<i64: 1, 32>}, {pipeline_mode = #tpu.pipeline_mode<synchronous>, transform_indices = @transform_4, window_bounds = array<i64: 32, 32>}, {pipeline_mode = #tpu.pipeline_mode<synchronous>, transform_indices = @transform_5, window_bounds = array<i64: 1, 32>}, {pipeline_mode = #tpu.pipeline_mode<synchronous>, transform_indices = @transform_6, window_bounds = array<i64: 32, 32>}, {pipeline_mode = #tpu.pipeline_mode<synchronous>, transform_indices = @transform_7, window_bounds = array<i64: 1, 32>}, {pipeline_mode = #tpu.pipeline_mode<synchronous>, transform_indices = @transform_8, window_bounds = array<i64: 32, 32>}, {pipeline_mode = #tpu.pipeline_mode<synchronous>, transform_indices = @transform_9, window_bounds = array<i64: 1, 32>}, {pipeline_mode = #tpu.pipeline_mode<synchronous>, transform_indices = @transform_10, window_bounds = array<i64: 1, 32>}, {pipeline_mode = #tpu.pipeline_mode<synchronous>, transform_indices = @transform_11, window_bounds = array<i64: 1, 32>}, {pipeline_mode = #tpu.pipeline_mode<synchronous>, transform_indices = @transform_12, window_bounds = array<i64: 32, 64>}, {pipeline_mode = #tpu.pipeline_mode<synchronous>, transform_indices = @transform_13, window_bounds = array<i64: 1, 64>}, {pipeline_mode = #tpu.pipeline_mode<synchronous>, transform_indices = @transform_14, window_bounds = array<i64: 64, 32>}, {pipeline_mode = #tpu.pipeline_mode<synchronous>, transform_indices = @transform_15, window_bounds = array<i64: 1, 32>}, {pipeline_mode = #tpu.pipeline_mode<synchronous>, transform_indices = @transform_16, window_bounds = array<i64: 1, 32>}, {pipeline_mode = #tpu.pipeline_mode<synchronous>, transform_indices = @transform_17, window_bounds = array<i64: 1, 32>}, {transform_indices = @transform_18, window_bounds = array<i64: 1, 8, 32>}]} {
    %c0 = arith.constant 0 : index
    %c0_0 = arith.constant 0 : index
    %c0_1 = arith.constant 0 : index
    %0 = vector.load %arg2[%c0, %c0_0, %c0_1] : memref<1x8x32xbf16, #tpu.memory_space<vmem>>, vector<1x8x32xbf16>
    %1 = vector.shape_cast %0 : vector<1x8x32xbf16> to vector<8x32xbf16>
    %c0_2 = arith.constant 0 : index
    %c0_3 = arith.constant 0 : index
    %c0_4 = arith.constant 0 : index
    %2 = vector.load %arg3[%c0_2, %c0_3, %c0_4] : memref<1x8x32xbf16, #tpu.memory_space<vmem>>, vector<1x8x32xbf16>
    %3 = vector.shape_cast %2 : vector<1x8x32xbf16> to vector<8x32xbf16>
    %c0_5 = arith.constant 0 : index
    %c0_6 = arith.constant 0 : index
    %4 = vector.load %arg4[%c0_5, %c0_6] : memref<32x32xbf16, #tpu.memory_space<vmem>>, vector<32x32xbf16>
    %cst = arith.constant dense<0.000000e+00> : vector<8x32xf32>
    %5 = tpu.matmul %1, %4, %cst {dimension_numbers = #tpu.dot_dimension_numbers<[1], [0], [0], [1], [0, 0, 1, 1], [], []>} : vector<8x32xbf16>, vector<32x32xbf16>, vector<8x32xf32> -> vector<8x32xf32>
    %c0_7 = arith.constant 0 : index
    %c0_8 = arith.constant 0 : index
    %6 = vector.load %arg5[%c0_7, %c0_8] : memref<1x32xf32, #tpu.memory_space<vmem>>, vector<1x32xf32>
    %7 = vector.broadcast %6 : vector<1x32xf32> to vector<8x32xf32>
    %8 = arith.addf %5, %7 : vector<8x32xf32>
    %c0_9 = arith.constant 0 : index
    %c0_10 = arith.constant 0 : index
    %9 = vector.load %arg6[%c0_9, %c0_10] : memref<32x32xbf16, #tpu.memory_space<vmem>>, vector<32x32xbf16>
    %cst_11 = arith.constant dense<0.000000e+00> : vector<8x32xf32>
    %10 = tpu.matmul %3, %9, %cst_11 {dimension_numbers = #tpu.dot_dimension_numbers<[1], [0], [0], [1], [0, 0, 1, 1], [], []>} : vector<8x32xbf16>, vector<32x32xbf16>, vector<8x32xf32> -> vector<8x32xf32>
    %c0_12 = arith.constant 0 : index
    %c0_13 = arith.constant 0 : index
    %11 = vector.load %arg7[%c0_12, %c0_13] : memref<1x32xf32, #tpu.memory_space<vmem>>, vector<1x32xf32>
    %12 = vector.broadcast %11 : vector<1x32xf32> to vector<8x32xf32>
    %13 = arith.addf %10, %12 : vector<8x32xf32>
    %c0_14 = arith.constant 0 : index
    %c0_15 = arith.constant 0 : index
    %14 = vector.load %arg8[%c0_14, %c0_15] : memref<32x32xbf16, #tpu.memory_space<vmem>>, vector<32x32xbf16>
    %cst_16 = arith.constant dense<0.000000e+00> : vector<8x32xf32>
    %15 = tpu.matmul %3, %14, %cst_16 {dimension_numbers = #tpu.dot_dimension_numbers<[1], [0], [0], [1], [0, 0, 1, 1], [], []>} : vector<8x32xbf16>, vector<32x32xbf16>, vector<8x32xf32> -> vector<8x32xf32>
    %c0_17 = arith.constant 0 : index
    %c0_18 = arith.constant 0 : index
    %16 = vector.load %arg9[%c0_17, %c0_18] : memref<1x32xf32, #tpu.memory_space<vmem>>, vector<1x32xf32>
    %17 = vector.broadcast %16 : vector<1x32xf32> to vector<8x32xf32>
    %18 = arith.addf %15, %17 : vector<8x32xf32>
    %19 = vector.shape_cast %8 : vector<8x32xf32> to vector<8x4x8xf32>
    %20 = tpu.transpose %19, [1, 0, 2] : vector<8x4x8xf32> -> vector<4x8x8xf32>
    %21 = vector.shape_cast %13 : vector<8x32xf32> to vector<8x4x8xf32>
    %22 = tpu.transpose %21, [1, 0, 2] : vector<8x4x8xf32> -> vector<4x8x8xf32>
    %23 = vector.shape_cast %18 : vector<8x32xf32> to vector<8x4x8xf32>
    %24 = tpu.transpose %23, [1, 0, 2] : vector<8x4x8xf32> -> vector<4x8x8xf32>
    %25 = arith.truncf %20 : vector<4x8x8xf32> to vector<4x8x8xbf16>
    %26 = arith.truncf %22 : vector<4x8x8xf32> to vector<4x8x8xbf16>
    "tpu.trace_start"() <{level = 10 : i32, message = "hqd,hkd->hqk"}> : () -> ()
    %cst_19 = arith.constant dense<0.000000e+00> : vector<4x8x8xf32>
    %27 = tpu.matmul %25, %26, %cst_19 {dimension_numbers = #tpu.dot_dimension_numbers<[2], [2], [1], [1], [0, 0, 0, 1, 1, 1], [0], [0]>} : vector<4x8x8xbf16>, vector<4x8x8xbf16>, vector<4x8x8xf32> -> vector<4x8x8xf32>
    "tpu.trace_stop"() : () -> ()
    %cst_20 = arith.constant 0.353553385 : f32
    %28 = vector.broadcast %cst_20 : f32 to vector<4x8x8xf32>
    %29 = arith.mulf %27, %28 : vector<4x8x8xf32>
    %cst_21 = arith.constant dense<0xFF800000> : vector<4x8xf32>
    %30 = vector.multi_reduction <maximumf>, %29, %cst_21 [2] : vector<4x8x8xf32> to vector<4x8xf32>
    %31 = vector.shape_cast %30 : vector<4x8xf32> to vector<4x8x1xf32>
    %32 = vector.broadcast %31 : vector<4x8x1xf32> to vector<4x8x8xf32>
    %33 = arith.subf %29, %32 : vector<4x8x8xf32>
    %34 = math.exp %33 : vector<4x8x8xf32>
    %cst_22 = arith.constant dense<0.000000e+00> : vector<4x8xf32>
    %35 = vector.multi_reduction <add>, %34, %cst_22 [2] : vector<4x8x8xf32> to vector<4x8xf32>
    %36 = vector.shape_cast %35 : vector<4x8xf32> to vector<4x8x1xf32>
    %37 = tpu.reciprocal %36 {approx = true} : vector<4x8x1xf32> -> vector<4x8x1xf32>
    %38 = vector.broadcast %37 : vector<4x8x1xf32> to vector<4x8x8xf32>
    %39 = arith.mulf %34, %38 : vector<4x8x8xf32>
    %40 = arith.truncf %39 : vector<4x8x8xf32> to vector<4x8x8xbf16>
    %41 = arith.truncf %24 : vector<4x8x8xf32> to vector<4x8x8xbf16>
    "tpu.trace_start"() <{level = 10 : i32, message = "hqk,hkd->hqd"}> : () -> ()
    %cst_23 = arith.constant dense<0.000000e+00> : vector<4x8x8xf32>
    %42 = tpu.matmul %40, %41, %cst_23 {dimension_numbers = #tpu.dot_dimension_numbers<[2], [1], [1], [2], [0, 0, 0, 1, 1, 2], [0], [0]>} : vector<4x8x8xbf16>, vector<4x8x8xbf16>, vector<4x8x8xf32> -> vector<4x8x8xf32>
    "tpu.trace_stop"() : () -> ()
    %43 = tpu.transpose %42, [1, 0, 2] : vector<4x8x8xf32> -> vector<8x4x8xf32>
    %44 = vector.shape_cast %43 : vector<8x4x8xf32> to vector<8x32xf32>
    %c0_24 = arith.constant 0 : index
    %c0_25 = arith.constant 0 : index
    %45 = vector.load %arg10[%c0_24, %c0_25] : memref<32x32xbf16, #tpu.memory_space<vmem>>, vector<32x32xbf16>
    %46 = arith.truncf %44 : vector<8x32xf32> to vector<8x32xbf16>
    %cst_26 = arith.constant dense<0.000000e+00> : vector<8x32xf32>
    %47 = tpu.matmul %46, %45, %cst_26 {dimension_numbers = #tpu.dot_dimension_numbers<[1], [0], [0], [1], [0, 0, 1, 1], [], []>} : vector<8x32xbf16>, vector<32x32xbf16>, vector<8x32xf32> -> vector<8x32xf32>
    %c0_27 = arith.constant 0 : index
    %c0_28 = arith.constant 0 : index
    %48 = vector.load %arg11[%c0_27, %c0_28] : memref<1x32xf32, #tpu.memory_space<vmem>>, vector<1x32xf32>
    %49 = vector.broadcast %48 : vector<1x32xf32> to vector<8x32xf32>
    %50 = arith.addf %47, %49 : vector<8x32xf32>
    %51 = arith.extf %1 : vector<8x32xbf16> to vector<8x32xf32>
    %52 = arith.addf %50, %51 : vector<8x32xf32>
    %c0_29 = arith.constant 0 : index
    %c0_30 = arith.constant 0 : index
    %53 = vector.load %arg12[%c0_29, %c0_30] : memref<1x32xf32, #tpu.memory_space<vmem>>, vector<1x32xf32>
    %c0_31 = arith.constant 0 : index
    %c0_32 = arith.constant 0 : index
    %54 = vector.load %arg13[%c0_31, %c0_32] : memref<1x32xf32, #tpu.memory_space<vmem>>, vector<1x32xf32>
    %cst_33 = arith.constant dense<0.000000e+00> : vector<8xf32>
    %55 = vector.multi_reduction <add>, %52, %cst_33 [1] : vector<8x32xf32> to vector<8xf32>
    %56 = vector.shape_cast %55 : vector<8xf32> to vector<8x1xf32>
    %cst_34 = arith.constant 3.200000e+01 : f32
    %57 = vector.broadcast %cst_34 : f32 to vector<8x1xf32>
    %58 = arith.divf %56, %57 : vector<8x1xf32>
    %59 = vector.broadcast %58 : vector<8x1xf32> to vector<8x32xf32>
    %60 = arith.subf %52, %59 : vector<8x32xf32>
    %61 = arith.mulf %60, %60 : vector<8x32xf32>
    %cst_35 = arith.constant dense<0.000000e+00> : vector<8xf32>
    %62 = vector.multi_reduction <add>, %61, %cst_35 [1] : vector<8x32xf32> to vector<8xf32>
    %63 = vector.shape_cast %62 : vector<8xf32> to vector<8x1xf32>
    %cst_36 = arith.constant 3.200000e+01 : f32
    %64 = vector.broadcast %cst_36 : f32 to vector<8x1xf32>
    %65 = arith.divf %63, %64 : vector<8x1xf32>
    %66 = vector.broadcast %58 : vector<8x1xf32> to vector<8x32xf32>
    %67 = arith.subf %52, %66 : vector<8x32xf32>
    %cst_37 = arith.constant 9.99999974E-6 : f32
    %68 = vector.broadcast %cst_37 : f32 to vector<8x1xf32>
    %69 = arith.addf %65, %68 : vector<8x1xf32>
    %70 = math.rsqrt %69 : vector<8x1xf32>
    %71 = vector.broadcast %70 : vector<8x1xf32> to vector<8x32xf32>
    %72 = arith.mulf %67, %71 : vector<8x32xf32>
    %73 = vector.broadcast %53 : vector<1x32xf32> to vector<8x32xf32>
    %74 = arith.mulf %72, %73 : vector<8x32xf32>
    %75 = vector.broadcast %54 : vector<1x32xf32> to vector<8x32xf32>
    %76 = arith.addf %74, %75 : vector<8x32xf32>
    %c0_38 = arith.constant 0 : index
    %c0_39 = arith.constant 0 : index
    %77 = vector.load %arg14[%c0_38, %c0_39] : memref<32x64xbf16, #tpu.memory_space<vmem>>, vector<32x64xbf16>
    %78 = arith.truncf %76 : vector<8x32xf32> to vector<8x32xbf16>
    %cst_40 = arith.constant dense<0.000000e+00> : vector<8x64xf32>
    %79 = tpu.matmul %78, %77, %cst_40 {dimension_numbers = #tpu.dot_dimension_numbers<[1], [0], [0], [1], [0, 0, 1, 1], [], []>} : vector<8x32xbf16>, vector<32x64xbf16>, vector<8x64xf32> -> vector<8x64xf32>
    %c0_41 = arith.constant 0 : index
    %c0_42 = arith.constant 0 : index
    %80 = vector.load %arg15[%c0_41, %c0_42] : memref<1x64xf32, #tpu.memory_space<vmem>>, vector<1x64xf32>
    %81 = vector.broadcast %80 : vector<1x64xf32> to vector<8x64xf32>
    %82 = arith.addf %79, %81 : vector<8x64xf32>
    %cst_43 = arith.constant 0.000000e+00 : f32
    %83 = vector.broadcast %cst_43 : f32 to vector<8x64xf32>
    %84 = arith.maximumf %82, %83 : vector<8x64xf32>
    %c0_44 = arith.constant 0 : index
    %c0_45 = arith.constant 0 : index
    %85 = vector.load %arg16[%c0_44, %c0_45] : memref<64x32xbf16, #tpu.memory_space<vmem>>, vector<64x32xbf16>
    %86 = arith.truncf %84 : vector<8x64xf32> to vector<8x64xbf16>
    %cst_46 = arith.constant dense<0.000000e+00> : vector<8x32xf32>
    %87 = tpu.matmul %86, %85, %cst_46 {dimension_numbers = #tpu.dot_dimension_numbers<[1], [0], [0], [1], [0, 0, 1, 1], [], []>} : vector<8x64xbf16>, vector<64x32xbf16>, vector<8x32xf32> -> vector<8x32xf32>
    %c0_47 = arith.constant 0 : index
    %c0_48 = arith.constant 0 : index
    %88 = vector.load %arg17[%c0_47, %c0_48] : memref<1x32xf32, #tpu.memory_space<vmem>>, vector<1x32xf32>
    %89 = vector.broadcast %88 : vector<1x32xf32> to vector<8x32xf32>
    %90 = arith.addf %87, %89 : vector<8x32xf32>
    %91 = arith.addf %90, %76 : vector<8x32xf32>
    %c0_49 = arith.constant 0 : index
    %c0_50 = arith.constant 0 : index
    %92 = vector.load %arg18[%c0_49, %c0_50] : memref<1x32xf32, #tpu.memory_space<vmem>>, vector<1x32xf32>
    %c0_51 = arith.constant 0 : index
    %c0_52 = arith.constant 0 : index
    %93 = vector.load %arg19[%c0_51, %c0_52] : memref<1x32xf32, #tpu.memory_space<vmem>>, vector<1x32xf32>
    %cst_53 = arith.constant dense<0.000000e+00> : vector<8xf32>
    %94 = vector.multi_reduction <add>, %91, %cst_53 [1] : vector<8x32xf32> to vector<8xf32>
    %95 = vector.shape_cast %94 : vector<8xf32> to vector<8x1xf32>
    %cst_54 = arith.constant 3.200000e+01 : f32
    %96 = vector.broadcast %cst_54 : f32 to vector<8x1xf32>
    %97 = arith.divf %95, %96 : vector<8x1xf32>
    %98 = vector.broadcast %97 : vector<8x1xf32> to vector<8x32xf32>
    %99 = arith.subf %91, %98 : vector<8x32xf32>
    %100 = arith.mulf %99, %99 : vector<8x32xf32>
    %cst_55 = arith.constant dense<0.000000e+00> : vector<8xf32>
    %101 = vector.multi_reduction <add>, %100, %cst_55 [1] : vector<8x32xf32> to vector<8xf32>
    %102 = vector.shape_cast %101 : vector<8xf32> to vector<8x1xf32>
    %cst_56 = arith.constant 3.200000e+01 : f32
    %103 = vector.broadcast %cst_56 : f32 to vector<8x1xf32>
    %104 = arith.divf %102, %103 : vector<8x1xf32>
    %105 = vector.broadcast %97 : vector<8x1xf32> to vector<8x32xf32>
    %106 = arith.subf %91, %105 : vector<8x32xf32>
    %cst_57 = arith.constant 9.99999974E-6 : f32
    %107 = vector.broadcast %cst_57 : f32 to vector<8x1xf32>
    %108 = arith.addf %104, %107 : vector<8x1xf32>
    %109 = math.rsqrt %108 : vector<8x1xf32>
    %110 = vector.broadcast %109 : vector<8x1xf32> to vector<8x32xf32>
    %111 = arith.mulf %106, %110 : vector<8x32xf32>
    %112 = vector.broadcast %92 : vector<1x32xf32> to vector<8x32xf32>
    %113 = arith.mulf %111, %112 : vector<8x32xf32>
    %114 = vector.broadcast %93 : vector<1x32xf32> to vector<8x32xf32>
    %115 = arith.addf %113, %114 : vector<8x32xf32>
    %116 = arith.truncf %115 : vector<8x32xf32> to vector<8x32xbf16>
    %c0_58 = arith.constant 0 : index
    %c0_59 = arith.constant 0 : index
    %c0_60 = arith.constant 0 : index
    %117 = vector.load %arg20[%c0_58, %c0_59, %c0_60] : memref<1x8x32xbf16, #tpu.memory_space<vmem>>, vector<1x8x32xbf16>
    %118 = vector.shape_cast %117 : vector<1x8x32xbf16> to vector<8x32xbf16>
    %119 = vector.shape_cast %116 : vector<8x32xbf16> to vector<1x8x32xbf16>
    tpu.vector_store %arg20[%c0_58, %c0_59, %c0_60], %119 {strides = array<i32>} : memref<1x8x32xbf16, #tpu.memory_space<vmem>>, vector<1x8x32xbf16>,
    return
  }
  func.func @transform_0(%arg0: i32, %arg1: i32) -> (i32, i32, i32) {
    %c0_i32 = arith.constant 0 : i32
    %c0_i32_0 = arith.constant 0 : i32
    return %arg0, %arg1, %c0_i32 : i32, i32, i32
  }
  func.func @transform_1(%arg0: i32, %arg1: i32) -> (i32, i32, i32) {
    %c0_i32 = arith.constant 0 : i32
    %c0_i32_0 = arith.constant 0 : i32
    %c0_i32_1 = arith.constant 0 : i32
    return %arg0, %c0_i32, %c0_i32_0 : i32, i32, i32
  }
  func.func @transform_2(%arg0: i32, %arg1: i32) -> (i32, i32) {
    %c0_i32 = arith.constant 0 : i32
    %c0_i32_0 = arith.constant 0 : i32
    %c0_i32_1 = arith.constant 0 : i32
    return %c0_i32, %c0_i32_0 : i32, i32
  }
  func.func @transform_3(%arg0: i32, %arg1: i32) -> (i32, i32) {
    %c0_i32 = arith.constant 0 : i32
    %c0_i32_0 = arith.constant 0 : i32
    %c0_i32_1 = arith.constant 0 : i32
    return %c0_i32, %c0_i32_0 : i32, i32
  }
  func.func @transform_4(%arg0: i32, %arg1: i32) -> (i32, i32) {
    %c0_i32 = arith.constant 0 : i32
    %c0_i32_0 = arith.constant 0 : i32
    %c0_i32_1 = arith.constant 0 : i32
    return %c0_i32, %c0_i32_0 : i32, i32
  }
  func.func @transform_5(%arg0: i32, %arg1: i32) -> (i32, i32) {
    %c0_i32 = arith.constant 0 : i32
    %c0_i32_0 = arith.constant 0 : i32
    %c0_i32_1 = arith.constant 0 : i32
    return %c0_i32, %c0_i32_0 : i32, i32
  }
  func.func @transform_6(%arg0: i32, %arg1: i32) -> (i32, i32) {
    %c0_i32 = arith.constant 0 : i32
    %c0_i32_0 = arith.constant 0 : i32
    %c0_i32_1 = arith.constant 0 : i32
    return %c0_i32, %c0_i32_0 : i32, i32
  }
  func.func @transform_7(%arg0: i32, %arg1: i32) -> (i32, i32) {
    %c0_i32 = arith.constant 0 : i32
    %c0_i32_0 = arith.constant 0 : i32
    %c0_i32_1 = arith.constant 0 : i32
    return %c0_i32, %c0_i32_0 : i32, i32
  }
  func.func @transform_8(%arg0: i32, %arg1: i32) -> (i32, i32) {
    %c0_i32 = arith.constant 0 : i32
    %c0_i32_0 = arith.constant 0 : i32
    %c0_i32_1 = arith.constant 0 : i32
    return %c0_i32, %c0_i32_0 : i32, i32
  }
  func.func @transform_9(%arg0: i32, %arg1: i32) -> (i32, i32) {
    %c0_i32 = arith.constant 0 : i32
    %c0_i32_0 = arith.constant 0 : i32
    %c0_i32_1 = arith.constant 0 : i32
    return %c0_i32, %c0_i32_0 : i32, i32
  }
  func.func @transform_10(%arg0: i32, %arg1: i32) -> (i32, i32) {
    %c0_i32 = arith.constant 0 : i32
    %c0_i32_0 = arith.constant 0 : i32
    %c0_i32_1 = arith.constant 0 : i32
    return %c0_i32, %c0_i32_0 : i32, i32
  }
  func.func @transform_11(%arg0: i32, %arg1: i32) -> (i32, i32) {
    %c0_i32 = arith.constant 0 : i32
    %c0_i32_0 = arith.constant 0 : i32
    %c0_i32_1 = arith.constant 0 : i32
    return %c0_i32, %c0_i32_0 : i32, i32
  }
  func.func @transform_12(%arg0: i32, %arg1: i32) -> (i32, i32) {
    %c0_i32 = arith.constant 0 : i32
    %c0_i32_0 = arith.constant 0 : i32
    %c0_i32_1 = arith.constant 0 : i32
    return %c0_i32, %c0_i32_0 : i32, i32
  }
  func.func @transform_13(%arg0: i32, %arg1: i32) -> (i32, i32) {
    %c0_i32 = arith.constant 0 : i32
    %c0_i32_0 = arith.constant 0 : i32
    %c0_i32_1 = arith.constant 0 : i32
    return %c0_i32, %c0_i32_0 : i32, i32
  }
  func.func @transform_14(%arg0: i32, %arg1: i32) -> (i32, i32) {
    %c0_i32 = arith.constant 0 : i32
    %c0_i32_0 = arith.constant 0 : i32
    %c0_i32_1 = arith.constant 0 : i32
    return %c0_i32, %c0_i32_0 : i32, i32
  }
  func.func @transform_15(%arg0: i32, %arg1: i32) -> (i32, i32) {
    %c0_i32 = arith.constant 0 : i32
    %c0_i32_0 = arith.constant 0 : i32
    %c0_i32_1 = arith.constant 0 : i32
    return %c0_i32, %c0_i32_0 : i32, i32
  }
  func.func @transform_16(%arg0: i32, %arg1: i32) -> (i32, i32) {
    %c0_i32 = arith.constant 0 : i32
    %c0_i32_0 = arith.constant 0 : i32
    %c0_i32_1 = arith.constant 0 : i32
    return %c0_i32, %c0_i32_0 : i32, i32
  }
  func.func @transform_17(%arg0: i32, %arg1: i32) -> (i32, i32) {
    %c0_i32 = arith.constant 0 : i32
    %c0_i32_0 = arith.constant 0 : i32
    %c0_i32_1 = arith.constant 0 : i32
    return %c0_i32, %c0_i32_0 : i32, i32
  }
  func.func @transform_18(%arg0: i32, %arg1: i32) -> (i32, i32, i32) {
    %c0_i32 = arith.constant 0 : i32
    %c0_i32_0 = arith.constant 0 : i32
    return %arg0, %arg1, %c0_i32 : i32, i32, i32
  }
}

module attributes {stable_mosaic.version = 11 : i64} {
  func.func @encoder_layer_kernel(%arg0: i32, %arg1: i32, %arg2: memref<1x8x32xbf16, #tpu.memory_space<vmem>>, %arg3: memref<1x8x32xbf16, #tpu.memory_space<vmem>>, %arg4: memref<32x32xbf16, #tpu.memory_space<vmem>>, %arg5: memref<1x32xf32, #tpu.memory_space<vmem>>, %arg6: memref<32x32xbf16, #tpu.memory_space<vmem>>, %arg7: memref<1x32xf32, #tpu.memory_space<vmem>>, %arg8: memref<32x32xbf16, #tpu.memory_space<vmem>>, %arg9: memref<1x32xf32, #tpu.memory_space<vmem>>, %arg10: memref<32x32xbf16, #tpu.memory_space<vmem>>, %arg11: memref<1x32xf32, #tpu.memory_space<vmem>>, %arg12: memref<1x32xf32, #tpu.memory_space<vmem>>, %arg13: memref<1x32xf32, #tpu.memory_space<vmem>>, %arg14: memref<32x64xbf16, #tpu.memory_space<vmem>>, %arg15: memref<1x64xf32, #tpu.memory_space<vmem>>, %arg16: memref<64x32xbf16, #tpu.memory_space<vmem>>, %arg17: memref<1x32xf32, #tpu.memory_space<vmem>>, %arg18: memref<1x32xf32, #tpu.memory_space<vmem>>, %arg19: memref<1x32xf32, #tpu.memory_space<vmem>>, %arg20: memref<1x8x32xbf16, #tpu.memory_space<vmem>>) attributes {dimension_semantics = [#tpu.dimension_semantics<parallel>, #tpu.dimension_semantics<parallel>], iteration_bounds = array<i64: 2, 1>, scalar_prefetch = 0 : i64, scratch_operands = 0 : i64, tpu.core_type = #tpu.core_type<tc>, window_params = [{transform_indices = @transform_0, window_bounds = array<i64: 1, 8, 32>}, {transform_indices = @transform_1, window_bounds = array<i64: 1, 8, 32>}, {pipeline_mode = #tpu.pipeline_mode<synchronous>, transform_indices = @transform_2, window_bounds = array<i64: 32, 32>}, {pipeline_mode = #tpu.pipeline_mode<synchronous>, transform_indices = @transform_3, window_bounds = array<i64: 1, 32>}, {pipeline_mode = #tpu.pipeline_mode<synchronous>, transform_indices = @transform_4, window_bounds = array<i64: 32, 32>}, {pipeline_mode = #tpu.pipeline_mode<synchronous>, transform_indices = @transform_5, window_bounds = array<i64: 1, 32>}, {pipeline_mode = #tpu.pipeline_mode<synchronous>, transform_indices = @transform_6, window_bounds = array<i64: 32, 32>}, {pipeline_mode = #tpu.pipeline_mode<synchronous>, transform_indices = @transform_7, window_bounds = array<i64: 1, 32>}, {pipeline_mode = #tpu.pipeline_mode<synchronous>, transform_indices = @transform_8, window_bounds = array<i64: 32, 32>}, {pipeline_mode = #tpu.pipeline_mode<synchronous>, transform_indices = @transform_9, window_bounds = array<i64: 1, 32>}, {pipeline_mode = #tpu.pipeline_mode<synchronous>, transform_indices = @transform_10, window_bounds = array<i64: 1, 32>}, {pipeline_mode = #tpu.pipeline_mode<synchronous>, transform_indices = @transform_11, window_bounds = array<i64: 1, 32>}, {pipeline_mode = #tpu.pipeline_mode<synchronous>, transform_indices = @transform_12, window_bounds = array<i64: 32, 64>}, {pipeline_mode = #tpu.pipeline_mode<synchronous>, transform_indices = @transform_13, window_bounds = array<i64: 1, 64>}, {pipeline_mode = #tpu.pipeline_mode<synchronous>, transform_indices = @transform_14, window_bounds = array<i64: 64, 32>}, {pipeline_mode = #tpu.pipeline_mode<synchronous>, transform_indices = @transform_15, window_bounds = array<i64: 1, 32>}, {pipeline_mode = #tpu.pipeline_mode<synchronous>, transform_indices = @transform_16, window_bounds = array<i64: 1, 32>}, {pipeline_mode = #tpu.pipeline_mode<synchronous>, transform_indices = @transform_17, window_bounds = array<i64: 1, 32>}, {transform_indices = @transform_18, window_bounds = array<i64: 1, 8, 32>}]} {
    %c0 = arith.constant 0 : index
    %c0_0 = arith.constant 0 : index
    %c0_1 = arith.constant 0 : index
    %0 = vector.load %arg2[%c0, %c0_0, %c0_1] : memref<1x8x32xbf16, #tpu.memory_space<vmem>>, vector<1x8x32xbf16>
    %1 = vector.shape_cast %0 : vector<1x8x32xbf16> to vector<8x32xbf16>
    %c0_2 = arith.constant 0 : index
    %c0_3 = arith.constant 0 : index
    %c0_4 = arith.constant 0 : index
    %2 = vector.load %arg3[%c0_2, %c0_3, %c0_4] : memref<1x8x32xbf16, #tpu.memory_space<vmem>>, vector<1x8x32xbf16>
    %3 = vector.shape_cast %2 : vector<1x8x32xbf16> to vector<8x32xbf16>
    %c0_5 = arith.constant 0 : index
    %c0_6 = arith.constant 0 : index
    %4 = vector.load %arg4[%c0_5, %c0_6] : memref<32x32xbf16, #tpu.memory_space<vmem>>, vector<32x32xbf16>
    %cst = arith.constant dense<0.000000e+00> : vector<8x32xf32>
    %5 = tpu.matmul %1, %4, %cst {dimension_numbers = #tpu.dot_dimension_numbers<[1], [0], [0], [1], [0, 0, 1, 1], [], []>} : vector<8x32xbf16>, vector<32x32xbf16>, vector<8x32xf32> -> vector<8x32xf32>
    %c0_7 = arith.constant 0 : index
    %c0_8 = arith.constant 0 : index
    %6 = vector.load %arg5[%c0_7, %c0_8] : memref<1x32xf32, #tpu.memory_space<vmem>>, vector<1x32xf32>
    %7 = vector.broadcast %6 : vector<1x32xf32> to vector<8x32xf32>
    %8 = arith.addf %5, %7 : vector<8x32xf32>
    %c0_9 = arith.constant 0 : index
    %c0_10 = arith.constant 0 : index
    %9 = vector.load %arg6[%c0_9, %c0_10] : memref<32x32xbf16, #tpu.memory_space<vmem>>, vector<32x32xbf16>
    %cst_11 = arith.constant dense<0.000000e+00> : vector<8x32xf32>
    %10 = tpu.matmul %3, %9, %cst_11 {dimension_numbers = #tpu.dot_dimension_numbers<[1], [0], [0], [1], [0, 0, 1, 1], [], []>} : vector<8x32xbf16>, vector<32x32xbf16>, vector<8x32xf32> -> vector<8x32xf32>
    %c0_12 = arith.constant 0 : index
    %c0_13 = arith.constant 0 : index
    %11 = vector.load %arg7[%c0_12, %c0_13] : memref<1x32xf32, #tpu.memory_space<vmem>>, vector<1x32xf32>
    %12 = vector.broadcast %11 : vector<1x32xf32> to vector<8x32xf32>
    %13 = arith.addf %10, %12 : vector<8x32xf32>
    %c0_14 = arith.constant 0 : index
    %c0_15 = arith.constant 0 : index
    %14 = vector.load %arg8[%c0_14, %c0_15] : memref<32x32xbf16, #tpu.memory_space<vmem>>, vector<32x32xbf16>
    %cst_16 = arith.constant dense<0.000000e+00> : vector<8x32xf32>
    %15 = tpu.matmul %3, %14, %cst_16 {dimension_numbers = #tpu.dot_dimension_numbers<[1], [0], [0], [1], [0, 0, 1, 1], [], []>} : vector<8x32xbf16>, vector<32x32xbf16>, vector<8x32xf32> -> vector<8x32xf32>
    %c0_17 = arith.constant 0 : index
    %c0_18 = arith.constant 0 : index
    %16 = vector.load %arg9[%c0_17, %c0_18] : memref<1x32xf32, #tpu.memory_space<vmem>>, vector<1x32xf32>
    %17 = vector.broadcast %16 : vector<1x32xf32> to vector<8x32xf32>
    %18 = arith.addf %15, %17 : vector<8x32xf32>
    %19 = vector.extract_strided_slice %8 {offsets = [0, 0], sizes = [8, 8], strides = [1, 1]} : vector<8x32xf32> to vector<8x8xf32>
    %20 = vector.extract_strided_slice %13 {offsets = [0, 0], sizes = [8, 8], strides = [1, 1]} : vector<8x32xf32> to vector<8x8xf32>
    %21 = vector.extract_strided_slice %18 {offsets = [0, 0], sizes = [8, 8], strides = [1, 1]} : vector<8x32xf32> to vector<8x8xf32>
    %22 = arith.truncf %19 : vector<8x8xf32> to vector<8x8xbf16>
    %23 = arith.truncf %20 : vector<8x8xf32> to vector<8x8xbf16>
    %24 = tpu.transpose %23, [1, 0] : vector<8x8xbf16> -> vector<8x8xbf16>
    %cst_19 = arith.constant dense<0.000000e+00> : vector<8x8xf32>
    %25 = tpu.matmul %22, %24, %cst_19 {dimension_numbers = #tpu.dot_dimension_numbers<[1], [0], [0], [1], [0, 0, 1, 1], [], []>} : vector<8x8xbf16>, vector<8x8xbf16>, vector<8x8xf32> -> vector<8x8xf32>
    %cst_20 = arith.constant 0.353553385 : f32
    %26 = vector.broadcast %cst_20 : f32 to vector<8x8xf32>
    %27 = arith.mulf %25, %26 : vector<8x8xf32>
    %cst_21 = arith.constant dense<0xFF800000> : vector<8xf32>
    %28 = vector.multi_reduction <maximumf>, %27, %cst_21 [1] : vector<8x8xf32> to vector<8xf32>
    %29 = vector.shape_cast %28 : vector<8xf32> to vector<8x1xf32>
    %30 = vector.broadcast %29 : vector<8x1xf32> to vector<8x8xf32>
    %31 = arith.subf %27, %30 : vector<8x8xf32>
    %32 = math.exp %31 : vector<8x8xf32>
    %cst_22 = arith.constant dense<0.000000e+00> : vector<8xf32>
    %33 = vector.multi_reduction <add>, %32, %cst_22 [1] : vector<8x8xf32> to vector<8xf32>
    %34 = vector.shape_cast %33 : vector<8xf32> to vector<8x1xf32>
    %35 = tpu.reciprocal %34 {approx = true} : vector<8x1xf32> -> vector<8x1xf32>
    %36 = vector.broadcast %35 : vector<8x1xf32> to vector<8x8xf32>
    %37 = arith.mulf %32, %36 : vector<8x8xf32>
    %38 = arith.truncf %37 : vector<8x8xf32> to vector<8x8xbf16>
    %39 = arith.truncf %21 : vector<8x8xf32> to vector<8x8xbf16>
    %cst_23 = arith.constant dense<0.000000e+00> : vector<8x8xf32>
    %40 = tpu.matmul %38, %39, %cst_23 {dimension_numbers = #tpu.dot_dimension_numbers<[1], [0], [0], [1], [0, 0, 1, 1], [], []>} : vector<8x8xbf16>, vector<8x8xbf16>, vector<8x8xf32> -> vector<8x8xf32>
    %41 = vector.extract_strided_slice %8 {offsets = [0, 8], sizes = [8, 8], strides = [1, 1]} : vector<8x32xf32> to vector<8x8xf32>
    %42 = vector.extract_strided_slice %13 {offsets = [0, 8], sizes = [8, 8], strides = [1, 1]} : vector<8x32xf32> to vector<8x8xf32>
    %43 = vector.extract_strided_slice %18 {offsets = [0, 8], sizes = [8, 8], strides = [1, 1]} : vector<8x32xf32> to vector<8x8xf32>
    %44 = arith.truncf %41 : vector<8x8xf32> to vector<8x8xbf16>
    %45 = arith.truncf %42 : vector<8x8xf32> to vector<8x8xbf16>
    %46 = tpu.transpose %45, [1, 0] : vector<8x8xbf16> -> vector<8x8xbf16>
    %cst_24 = arith.constant dense<0.000000e+00> : vector<8x8xf32>
    %47 = tpu.matmul %44, %46, %cst_24 {dimension_numbers = #tpu.dot_dimension_numbers<[1], [0], [0], [1], [0, 0, 1, 1], [], []>} : vector<8x8xbf16>, vector<8x8xbf16>, vector<8x8xf32> -> vector<8x8xf32>
    %cst_25 = arith.constant 0.353553385 : f32
    %48 = vector.broadcast %cst_25 : f32 to vector<8x8xf32>
    %49 = arith.mulf %47, %48 : vector<8x8xf32>
    %cst_26 = arith.constant dense<0xFF800000> : vector<8xf32>
    %50 = vector.multi_reduction <maximumf>, %49, %cst_26 [1] : vector<8x8xf32> to vector<8xf32>
    %51 = vector.shape_cast %50 : vector<8xf32> to vector<8x1xf32>
    %52 = vector.broadcast %51 : vector<8x1xf32> to vector<8x8xf32>
    %53 = arith.subf %49, %52 : vector<8x8xf32>
    %54 = math.exp %53 : vector<8x8xf32>
    %cst_27 = arith.constant dense<0.000000e+00> : vector<8xf32>
    %55 = vector.multi_reduction <add>, %54, %cst_27 [1] : vector<8x8xf32> to vector<8xf32>
    %56 = vector.shape_cast %55 : vector<8xf32> to vector<8x1xf32>
    %57 = tpu.reciprocal %56 {approx = true} : vector<8x1xf32> -> vector<8x1xf32>
    %58 = vector.broadcast %57 : vector<8x1xf32> to vector<8x8xf32>
    %59 = arith.mulf %54, %58 : vector<8x8xf32>
    %60 = arith.truncf %59 : vector<8x8xf32> to vector<8x8xbf16>
    %61 = arith.truncf %43 : vector<8x8xf32> to vector<8x8xbf16>
    %cst_28 = arith.constant dense<0.000000e+00> : vector<8x8xf32>
    %62 = tpu.matmul %60, %61, %cst_28 {dimension_numbers = #tpu.dot_dimension_numbers<[1], [0], [0], [1], [0, 0, 1, 1], [], []>} : vector<8x8xbf16>, vector<8x8xbf16>, vector<8x8xf32> -> vector<8x8xf32>
    %63 = vector.extract_strided_slice %8 {offsets = [0, 16], sizes = [8, 8], strides = [1, 1]} : vector<8x32xf32> to vector<8x8xf32>
    %64 = vector.extract_strided_slice %13 {offsets = [0, 16], sizes = [8, 8], strides = [1, 1]} : vector<8x32xf32> to vector<8x8xf32>
    %65 = vector.extract_strided_slice %18 {offsets = [0, 16], sizes = [8, 8], strides = [1, 1]} : vector<8x32xf32> to vector<8x8xf32>
    %66 = arith.truncf %63 : vector<8x8xf32> to vector<8x8xbf16>
    %67 = arith.truncf %64 : vector<8x8xf32> to vector<8x8xbf16>
    %68 = tpu.transpose %67, [1, 0] : vector<8x8xbf16> -> vector<8x8xbf16>
    %cst_29 = arith.constant dense<0.000000e+00> : vector<8x8xf32>
    %69 = tpu.matmul %66, %68, %cst_29 {dimension_numbers = #tpu.dot_dimension_numbers<[1], [0], [0], [1], [0, 0, 1, 1], [], []>} : vector<8x8xbf16>, vector<8x8xbf16>, vector<8x8xf32> -> vector<8x8xf32>
    %cst_30 = arith.constant 0.353553385 : f32
    %70 = vector.broadcast %cst_30 : f32 to vector<8x8xf32>
    %71 = arith.mulf %69, %70 : vector<8x8xf32>
    %cst_31 = arith.constant dense<0xFF800000> : vector<8xf32>
    %72 = vector.multi_reduction <maximumf>, %71, %cst_31 [1] : vector<8x8xf32> to vector<8xf32>
    %73 = vector.shape_cast %72 : vector<8xf32> to vector<8x1xf32>
    %74 = vector.broadcast %73 : vector<8x1xf32> to vector<8x8xf32>
    %75 = arith.subf %71, %74 : vector<8x8xf32>
    %76 = math.exp %75 : vector<8x8xf32>
    %cst_32 = arith.constant dense<0.000000e+00> : vector<8xf32>
    %77 = vector.multi_reduction <add>, %76, %cst_32 [1] : vector<8x8xf32> to vector<8xf32>
    %78 = vector.shape_cast %77 : vector<8xf32> to vector<8x1xf32>
    %79 = tpu.reciprocal %78 {approx = true} : vector<8x1xf32> -> vector<8x1xf32>
    %80 = vector.broadcast %79 : vector<8x1xf32> to vector<8x8xf32>
    %81 = arith.mulf %76, %80 : vector<8x8xf32>
    %82 = arith.truncf %81 : vector<8x8xf32> to vector<8x8xbf16>
    %83 = arith.truncf %65 : vector<8x8xf32> to vector<8x8xbf16>
    %cst_33 = arith.constant dense<0.000000e+00> : vector<8x8xf32>
    %84 = tpu.matmul %82, %83, %cst_33 {dimension_numbers = #tpu.dot_dimension_numbers<[1], [0], [0], [1], [0, 0, 1, 1], [], []>} : vector<8x8xbf16>, vector<8x8xbf16>, vector<8x8xf32> -> vector<8x8xf32>
    %85 = vector.extract_strided_slice %8 {offsets = [0, 24], sizes = [8, 8], strides = [1, 1]} : vector<8x32xf32> to vector<8x8xf32>
    %86 = vector.extract_strided_slice %13 {offsets = [0, 24], sizes = [8, 8], strides = [1, 1]} : vector<8x32xf32> to vector<8x8xf32>
    %87 = vector.extract_strided_slice %18 {offsets = [0, 24], sizes = [8, 8], strides = [1, 1]} : vector<8x32xf32> to vector<8x8xf32>
    %88 = arith.truncf %85 : vector<8x8xf32> to vector<8x8xbf16>
    %89 = arith.truncf %86 : vector<8x8xf32> to vector<8x8xbf16>
    %90 = tpu.transpose %89, [1, 0] : vector<8x8xbf16> -> vector<8x8xbf16>
    %cst_34 = arith.constant dense<0.000000e+00> : vector<8x8xf32>
    %91 = tpu.matmul %88, %90, %cst_34 {dimension_numbers = #tpu.dot_dimension_numbers<[1], [0], [0], [1], [0, 0, 1, 1], [], []>} : vector<8x8xbf16>, vector<8x8xbf16>, vector<8x8xf32> -> vector<8x8xf32>
    %cst_35 = arith.constant 0.353553385 : f32
    %92 = vector.broadcast %cst_35 : f32 to vector<8x8xf32>
    %93 = arith.mulf %91, %92 : vector<8x8xf32>
    %cst_36 = arith.constant dense<0xFF800000> : vector<8xf32>
    %94 = vector.multi_reduction <maximumf>, %93, %cst_36 [1] : vector<8x8xf32> to vector<8xf32>
    %95 = vector.shape_cast %94 : vector<8xf32> to vector<8x1xf32>
    %96 = vector.broadcast %95 : vector<8x1xf32> to vector<8x8xf32>
    %97 = arith.subf %93, %96 : vector<8x8xf32>
    %98 = math.exp %97 : vector<8x8xf32>
    %cst_37 = arith.constant dense<0.000000e+00> : vector<8xf32>
    %99 = vector.multi_reduction <add>, %98, %cst_37 [1] : vector<8x8xf32> to vector<8xf32>
    %100 = vector.shape_cast %99 : vector<8xf32> to vector<8x1xf32>
    %101 = tpu.reciprocal %100 {approx = true} : vector<8x1xf32> -> vector<8x1xf32>
    %102 = vector.broadcast %101 : vector<8x1xf32> to vector<8x8xf32>
    %103 = arith.mulf %98, %102 : vector<8x8xf32>
    %104 = arith.truncf %103 : vector<8x8xf32> to vector<8x8xbf16>
    %105 = arith.truncf %87 : vector<8x8xf32> to vector<8x8xbf16>
    %cst_38 = arith.constant dense<0.000000e+00> : vector<8x8xf32>
    %106 = tpu.matmul %104, %105, %cst_38 {dimension_numbers = #tpu.dot_dimension_numbers<[1], [0], [0], [1], [0, 0, 1, 1], [], []>} : vector<8x8xbf16>, vector<8x8xbf16>, vector<8x8xf32> -> vector<8x8xf32>
    %107 = tpu.concatenate %40, %62, %84, %106 in 1 : vector<8x8xf32>, vector<8x8xf32>, vector<8x8xf32>, vector<8x8xf32> -> vector<8x32xf32>
    %c0_39 = arith.constant 0 : index
    %c0_40 = arith.constant 0 : index
    %108 = vector.load %arg10[%c0_39, %c0_40] : memref<32x32xbf16, #tpu.memory_space<vmem>>, vector<32x32xbf16>
    %109 = arith.truncf %107 : vector<8x32xf32> to vector<8x32xbf16>
    %cst_41 = arith.constant dense<0.000000e+00> : vector<8x32xf32>
    %110 = tpu.matmul %109, %108, %cst_41 {dimension_numbers = #tpu.dot_dimension_numbers<[1], [0], [0], [1], [0, 0, 1, 1], [], []>} : vector<8x32xbf16>, vector<32x32xbf16>, vector<8x32xf32> -> vector<8x32xf32>
    %c0_42 = arith.constant 0 : index
    %c0_43 = arith.constant 0 : index
    %111 = vector.load %arg11[%c0_42, %c0_43] : memref<1x32xf32, #tpu.memory_space<vmem>>, vector<1x32xf32>
    %112 = vector.broadcast %111 : vector<1x32xf32> to vector<8x32xf32>
    %113 = arith.addf %110, %112 : vector<8x32xf32>
    %114 = arith.extf %1 : vector<8x32xbf16> to vector<8x32xf32>
    %115 = arith.addf %113, %114 : vector<8x32xf32>
    %c0_44 = arith.constant 0 : index
    %c0_45 = arith.constant 0 : index
    %116 = vector.load %arg12[%c0_44, %c0_45] : memref<1x32xf32, #tpu.memory_space<vmem>>, vector<1x32xf32>
    %c0_46 = arith.constant 0 : index
    %c0_47 = arith.constant 0 : index
    %117 = vector.load %arg13[%c0_46, %c0_47] : memref<1x32xf32, #tpu.memory_space<vmem>>, vector<1x32xf32>
    %cst_48 = arith.constant dense<0.000000e+00> : vector<8xf32>
    %118 = vector.multi_reduction <add>, %115, %cst_48 [1] : vector<8x32xf32> to vector<8xf32>
    %119 = vector.shape_cast %118 : vector<8xf32> to vector<8x1xf32>
    %cst_49 = arith.constant 3.200000e+01 : f32
    %120 = vector.broadcast %cst_49 : f32 to vector<8x1xf32>
    %121 = arith.divf %119, %120 : vector<8x1xf32>
    %122 = vector.broadcast %121 : vector<8x1xf32> to vector<8x32xf32>
    %123 = arith.subf %115, %122 : vector<8x32xf32>
    %124 = arith.mulf %123, %123 : vector<8x32xf32>
    %cst_50 = arith.constant dense<0.000000e+00> : vector<8xf32>
    %125 = vector.multi_reduction <add>, %124, %cst_50 [1] : vector<8x32xf32> to vector<8xf32>
    %126 = vector.shape_cast %125 : vector<8xf32> to vector<8x1xf32>
    %cst_51 = arith.constant 3.200000e+01 : f32
    %127 = vector.broadcast %cst_51 : f32 to vector<8x1xf32>
    %128 = arith.divf %126, %127 : vector<8x1xf32>
    %129 = vector.broadcast %121 : vector<8x1xf32> to vector<8x32xf32>
    %130 = arith.subf %115, %129 : vector<8x32xf32>
    %cst_52 = arith.constant 9.99999974E-6 : f32
    %131 = vector.broadcast %cst_52 : f32 to vector<8x1xf32>
    %132 = arith.addf %128, %131 : vector<8x1xf32>
    %133 = math.rsqrt %132 : vector<8x1xf32>
    %134 = vector.broadcast %133 : vector<8x1xf32> to vector<8x32xf32>
    %135 = arith.mulf %130, %134 : vector<8x32xf32>
    %136 = vector.broadcast %116 : vector<1x32xf32> to vector<8x32xf32>
    %137 = arith.mulf %135, %136 : vector<8x32xf32>
    %138 = vector.broadcast %117 : vector<1x32xf32> to vector<8x32xf32>
    %139 = arith.addf %137, %138 : vector<8x32xf32>
    %c0_53 = arith.constant 0 : index
    %c0_54 = arith.constant 0 : index
    %140 = vector.load %arg14[%c0_53, %c0_54] : memref<32x64xbf16, #tpu.memory_space<vmem>>, vector<32x64xbf16>
    %141 = arith.truncf %139 : vector<8x32xf32> to vector<8x32xbf16>
    %cst_55 = arith.constant dense<0.000000e+00> : vector<8x64xf32>
    %142 = tpu.matmul %141, %140, %cst_55 {dimension_numbers = #tpu.dot_dimension_numbers<[1], [0], [0], [1], [0, 0, 1, 1], [], []>} : vector<8x32xbf16>, vector<32x64xbf16>, vector<8x64xf32> -> vector<8x64xf32>
    %c0_56 = arith.constant 0 : index
    %c0_57 = arith.constant 0 : index
    %143 = vector.load %arg15[%c0_56, %c0_57] : memref<1x64xf32, #tpu.memory_space<vmem>>, vector<1x64xf32>
    %144 = vector.broadcast %143 : vector<1x64xf32> to vector<8x64xf32>
    %145 = arith.addf %142, %144 : vector<8x64xf32>
    %cst_58 = arith.constant 0.000000e+00 : f32
    %146 = vector.broadcast %cst_58 : f32 to vector<8x64xf32>
    %147 = arith.maximumf %145, %146 : vector<8x64xf32>
    %c0_59 = arith.constant 0 : index
    %c0_60 = arith.constant 0 : index
    %148 = vector.load %arg16[%c0_59, %c0_60] : memref<64x32xbf16, #tpu.memory_space<vmem>>, vector<64x32xbf16>
    %149 = arith.truncf %147 : vector<8x64xf32> to vector<8x64xbf16>
    %cst_61 = arith.constant dense<0.000000e+00> : vector<8x32xf32>
    %150 = tpu.matmul %149, %148, %cst_61 {dimension_numbers = #tpu.dot_dimension_numbers<[1], [0], [0], [1], [0, 0, 1, 1], [], []>} : vector<8x64xbf16>, vector<64x32xbf16>, vector<8x32xf32> -> vector<8x32xf32>
    %c0_62 = arith.constant 0 : index
    %c0_63 = arith.constant 0 : index
    %151 = vector.load %arg17[%c0_62, %c0_63] : memref<1x32xf32, #tpu.memory_space<vmem>>, vector<1x32xf32>
    %152 = vector.broadcast %151 : vector<1x32xf32> to vector<8x32xf32>
    %153 = arith.addf %150, %152 : vector<8x32xf32>
    %154 = arith.addf %153, %139 : vector<8x32xf32>
    %c0_64 = arith.constant 0 : index
    %c0_65 = arith.constant 0 : index
    %155 = vector.load %arg18[%c0_64, %c0_65] : memref<1x32xf32, #tpu.memory_space<vmem>>, vector<1x32xf32>
    %c0_66 = arith.constant 0 : index
    %c0_67 = arith.constant 0 : index
    %156 = vector.load %arg19[%c0_66, %c0_67] : memref<1x32xf32, #tpu.memory_space<vmem>>, vector<1x32xf32>
    %cst_68 = arith.constant dense<0.000000e+00> : vector<8xf32>
    %157 = vector.multi_reduction <add>, %154, %cst_68 [1] : vector<8x32xf32> to vector<8xf32>
    %158 = vector.shape_cast %157 : vector<8xf32> to vector<8x1xf32>
    %cst_69 = arith.constant 3.200000e+01 : f32
    %159 = vector.broadcast %cst_69 : f32 to vector<8x1xf32>
    %160 = arith.divf %158, %159 : vector<8x1xf32>
    %161 = vector.broadcast %160 : vector<8x1xf32> to vector<8x32xf32>
    %162 = arith.subf %154, %161 : vector<8x32xf32>
    %163 = arith.mulf %162, %162 : vector<8x32xf32>
    %cst_70 = arith.constant dense<0.000000e+00> : vector<8xf32>
    %164 = vector.multi_reduction <add>, %163, %cst_70 [1] : vector<8x32xf32> to vector<8xf32>
    %165 = vector.shape_cast %164 : vector<8xf32> to vector<8x1xf32>
    %cst_71 = arith.constant 3.200000e+01 : f32
    %166 = vector.broadcast %cst_71 : f32 to vector<8x1xf32>
    %167 = arith.divf %165, %166 : vector<8x1xf32>
    %168 = vector.broadcast %160 : vector<8x1xf32> to vector<8x32xf32>
    %169 = arith.subf %154, %168 : vector<8x32xf32>
    %cst_72 = arith.constant 9.99999974E-6 : f32
    %170 = vector.broadcast %cst_72 : f32 to vector<8x1xf32>
    %171 = arith.addf %167, %170 : vector<8x1xf32>
    %172 = math.rsqrt %171 : vector<8x1xf32>
    %173 = vector.broadcast %172 : vector<8x1xf32> to vector<8x32xf32>
    %174 = arith.mulf %169, %173 : vector<8x32xf32>
    %175 = vector.broadcast %155 : vector<1x32xf32> to vector<8x32xf32>
    %176 = arith.mulf %174, %175 : vector<8x32xf32>
    %177 = vector.broadcast %156 : vector<1x32xf32> to vector<8x32xf32>
    %178 = arith.addf %176, %177 : vector<8x32xf32>
    %179 = arith.truncf %178 : vector<8x32xf32> to vector<8x32xbf16>
    %c0_73 = arith.constant 0 : index
    %c0_74 = arith.constant 0 : index
    %c0_75 = arith.constant 0 : index
    %180 = vector.load %arg20[%c0_73, %c0_74, %c0_75] : memref<1x8x32xbf16, #tpu.memory_space<vmem>>, vector<1x8x32xbf16>
    %181 = vector.shape_cast %180 : vector<1x8x32xbf16> to vector<8x32xbf16>
    %182 = vector.shape_cast %179 : vector<8x32xbf16> to vector<1x8x32xbf16>
    tpu.vector_store %arg20[%c0_73, %c0_74, %c0_75], %182 {strides = array<i32>} : memref<1x8x32xbf16, #tpu.memory_space<vmem>>, vector<1x8x32xbf16>,
    return
  }
  func.func @transform_0(%arg0: i32, %arg1: i32) -> (i32, i32, i32) {
    %c0_i32 = arith.constant 0 : i32
    %c0_i32_0 = arith.constant 0 : i32
    return %arg0, %arg1, %c0_i32 : i32, i32, i32
  }
  func.func @transform_1(%arg0: i32, %arg1: i32) -> (i32, i32, i32) {
    %c0_i32 = arith.constant 0 : i32
    %c0_i32_0 = arith.constant 0 : i32
    %c0_i32_1 = arith.constant 0 : i32
    return %arg0, %c0_i32, %c0_i32_0 : i32, i32, i32
  }
  func.func @transform_2(%arg0: i32, %arg1: i32) -> (i32, i32) {
    %c0_i32 = arith.constant 0 : i32
    %c0_i32_0 = arith.constant 0 : i32
    %c0_i32_1 = arith.constant 0 : i32
    return %c0_i32, %c0_i32_0 : i32, i32
  }
  func.func @transform_3(%arg0: i32, %arg1: i32) -> (i32, i32) {
    %c0_i32 = arith.constant 0 : i32
    %c0_i32_0 = arith.constant 0 : i32
    %c0_i32_1 = arith.constant 0 : i32
    return %c0_i32, %c0_i32_0 : i32, i32
  }
  func.func @transform_4(%arg0: i32, %arg1: i32) -> (i32, i32) {
    %c0_i32 = arith.constant 0 : i32
    %c0_i32_0 = arith.constant 0 : i32
    %c0_i32_1 = arith.constant 0 : i32
    return %c0_i32, %c0_i32_0 : i32, i32
  }
  func.func @transform_5(%arg0: i32, %arg1: i32) -> (i32, i32) {
    %c0_i32 = arith.constant 0 : i32
    %c0_i32_0 = arith.constant 0 : i32
    %c0_i32_1 = arith.constant 0 : i32
    return %c0_i32, %c0_i32_0 : i32, i32
  }
  func.func @transform_6(%arg0: i32, %arg1: i32) -> (i32, i32) {
    %c0_i32 = arith.constant 0 : i32
    %c0_i32_0 = arith.constant 0 : i32
    %c0_i32_1 = arith.constant 0 : i32
    return %c0_i32, %c0_i32_0 : i32, i32
  }
  func.func @transform_7(%arg0: i32, %arg1: i32) -> (i32, i32) {
    %c0_i32 = arith.constant 0 : i32
    %c0_i32_0 = arith.constant 0 : i32
    %c0_i32_1 = arith.constant 0 : i32
    return %c0_i32, %c0_i32_0 : i32, i32
  }
  func.func @transform_8(%arg0: i32, %arg1: i32) -> (i32, i32) {
    %c0_i32 = arith.constant 0 : i32
    %c0_i32_0 = arith.constant 0 : i32
    %c0_i32_1 = arith.constant 0 : i32
    return %c0_i32, %c0_i32_0 : i32, i32
  }
  func.func @transform_9(%arg0: i32, %arg1: i32) -> (i32, i32) {
    %c0_i32 = arith.constant 0 : i32
    %c0_i32_0 = arith.constant 0 : i32
    %c0_i32_1 = arith.constant 0 : i32
    return %c0_i32, %c0_i32_0 : i32, i32
  }
  func.func @transform_10(%arg0: i32, %arg1: i32) -> (i32, i32) {
    %c0_i32 = arith.constant 0 : i32
    %c0_i32_0 = arith.constant 0 : i32
    %c0_i32_1 = arith.constant 0 : i32
    return %c0_i32, %c0_i32_0 : i32, i32
  }
  func.func @transform_11(%arg0: i32, %arg1: i32) -> (i32, i32) {
    %c0_i32 = arith.constant 0 : i32
    %c0_i32_0 = arith.constant 0 : i32
    %c0_i32_1 = arith.constant 0 : i32
    return %c0_i32, %c0_i32_0 : i32, i32
  }
  func.func @transform_12(%arg0: i32, %arg1: i32) -> (i32, i32) {
    %c0_i32 = arith.constant 0 : i32
    %c0_i32_0 = arith.constant 0 : i32
    %c0_i32_1 = arith.constant 0 : i32
    return %c0_i32, %c0_i32_0 : i32, i32
  }
  func.func @transform_13(%arg0: i32, %arg1: i32) -> (i32, i32) {
    %c0_i32 = arith.constant 0 : i32
    %c0_i32_0 = arith.constant 0 : i32
    %c0_i32_1 = arith.constant 0 : i32
    return %c0_i32, %c0_i32_0 : i32, i32
  }
  func.func @transform_14(%arg0: i32, %arg1: i32) -> (i32, i32) {
    %c0_i32 = arith.constant 0 : i32
    %c0_i32_0 = arith.constant 0 : i32
    %c0_i32_1 = arith.constant 0 : i32
    return %c0_i32, %c0_i32_0 : i32, i32
  }
  func.func @transform_15(%arg0: i32, %arg1: i32) -> (i32, i32) {
    %c0_i32 = arith.constant 0 : i32
    %c0_i32_0 = arith.constant 0 : i32
    %c0_i32_1 = arith.constant 0 : i32
    return %c0_i32, %c0_i32_0 : i32, i32
  }
  func.func @transform_16(%arg0: i32, %arg1: i32) -> (i32, i32) {
    %c0_i32 = arith.constant 0 : i32
    %c0_i32_0 = arith.constant 0 : i32
    %c0_i32_1 = arith.constant 0 : i32
    return %c0_i32, %c0_i32_0 : i32, i32
  }
  func.func @transform_17(%arg0: i32, %arg1: i32) -> (i32, i32) {
    %c0_i32 = arith.constant 0 : i32
    %c0_i32_0 = arith.constant 0 : i32
    %c0_i32_1 = arith.constant 0 : i32
    return %c0_i32, %c0_i32_0 : i32, i32
  }
  func.func @transform_18(%arg0: i32, %arg1: i32) -> (i32, i32, i32) {
    %c0_i32 = arith.constant 0 : i32
    %c0_i32_0 = arith.constant 0 : i32
    return %arg0, %arg1, %c0_i32 : i32, i32, i32
  }
}

module attributes {stable_mosaic.version = 11 : i64} {
  func.func @encoder_layer_kernel(%arg0: i32, %arg1: i32, %arg2: memref<1x8x32xbf16, #tpu.memory_space<vmem>>, %arg3: memref<1x8x32xbf16, #tpu.memory_space<vmem>>, %arg4: memref<32x32xbf16, #tpu.memory_space<vmem>>, %arg5: memref<1x32xf32, #tpu.memory_space<vmem>>, %arg6: memref<32x32xbf16, #tpu.memory_space<vmem>>, %arg7: memref<1x32xf32, #tpu.memory_space<vmem>>, %arg8: memref<32x32xbf16, #tpu.memory_space<vmem>>, %arg9: memref<1x32xf32, #tpu.memory_space<vmem>>, %arg10: memref<32x32xbf16, #tpu.memory_space<vmem>>, %arg11: memref<1x32xf32, #tpu.memory_space<vmem>>, %arg12: memref<1x32xf32, #tpu.memory_space<vmem>>, %arg13: memref<1x32xf32, #tpu.memory_space<vmem>>, %arg14: memref<32x64xbf16, #tpu.memory_space<vmem>>, %arg15: memref<1x64xf32, #tpu.memory_space<vmem>>, %arg16: memref<64x32xbf16, #tpu.memory_space<vmem>>, %arg17: memref<1x32xf32, #tpu.memory_space<vmem>>, %arg18: memref<1x32xf32, #tpu.memory_space<vmem>>, %arg19: memref<1x32xf32, #tpu.memory_space<vmem>>, %arg20: memref<1x8x32xbf16, #tpu.memory_space<vmem>>) attributes {dimension_semantics = [#tpu.dimension_semantics<parallel>, #tpu.dimension_semantics<parallel>], iteration_bounds = array<i64: 2, 1>, scalar_prefetch = 0 : i64, scratch_operands = 0 : i64, tpu.core_type = #tpu.core_type<tc>, window_params = [{transform_indices = @transform_0, window_bounds = array<i64: 1, 8, 32>}, {transform_indices = @transform_1, window_bounds = array<i64: 1, 8, 32>}, {pipeline_mode = #tpu.pipeline_mode<synchronous>, transform_indices = @transform_2, window_bounds = array<i64: 32, 32>}, {pipeline_mode = #tpu.pipeline_mode<synchronous>, transform_indices = @transform_3, window_bounds = array<i64: 1, 32>}, {pipeline_mode = #tpu.pipeline_mode<synchronous>, transform_indices = @transform_4, window_bounds = array<i64: 32, 32>}, {pipeline_mode = #tpu.pipeline_mode<synchronous>, transform_indices = @transform_5, window_bounds = array<i64: 1, 32>}, {pipeline_mode = #tpu.pipeline_mode<synchronous>, transform_indices = @transform_6, window_bounds = array<i64: 32, 32>}, {pipeline_mode = #tpu.pipeline_mode<synchronous>, transform_indices = @transform_7, window_bounds = array<i64: 1, 32>}, {pipeline_mode = #tpu.pipeline_mode<synchronous>, transform_indices = @transform_8, window_bounds = array<i64: 32, 32>}, {pipeline_mode = #tpu.pipeline_mode<synchronous>, transform_indices = @transform_9, window_bounds = array<i64: 1, 32>}, {pipeline_mode = #tpu.pipeline_mode<synchronous>, transform_indices = @transform_10, window_bounds = array<i64: 1, 32>}, {pipeline_mode = #tpu.pipeline_mode<synchronous>, transform_indices = @transform_11, window_bounds = array<i64: 1, 32>}, {pipeline_mode = #tpu.pipeline_mode<synchronous>, transform_indices = @transform_12, window_bounds = array<i64: 32, 64>}, {pipeline_mode = #tpu.pipeline_mode<synchronous>, transform_indices = @transform_13, window_bounds = array<i64: 1, 64>}, {pipeline_mode = #tpu.pipeline_mode<synchronous>, transform_indices = @transform_14, window_bounds = array<i64: 64, 32>}, {pipeline_mode = #tpu.pipeline_mode<synchronous>, transform_indices = @transform_15, window_bounds = array<i64: 1, 32>}, {pipeline_mode = #tpu.pipeline_mode<synchronous>, transform_indices = @transform_16, window_bounds = array<i64: 1, 32>}, {pipeline_mode = #tpu.pipeline_mode<synchronous>, transform_indices = @transform_17, window_bounds = array<i64: 1, 32>}, {transform_indices = @transform_18, window_bounds = array<i64: 1, 8, 32>}]} {
    %c0 = arith.constant 0 : index
    %c0_0 = arith.constant 0 : index
    %c0_1 = arith.constant 0 : index
    %0 = vector.load %arg2[%c0, %c0_0, %c0_1] : memref<1x8x32xbf16, #tpu.memory_space<vmem>>, vector<1x8x32xbf16>
    %1 = vector.shape_cast %0 : vector<1x8x32xbf16> to vector<8x32xbf16>
    %c0_2 = arith.constant 0 : index
    %c0_3 = arith.constant 0 : index
    %c0_4 = arith.constant 0 : index
    %2 = vector.load %arg3[%c0_2, %c0_3, %c0_4] : memref<1x8x32xbf16, #tpu.memory_space<vmem>>, vector<1x8x32xbf16>
    %3 = vector.shape_cast %2 : vector<1x8x32xbf16> to vector<8x32xbf16>
    %c0_5 = arith.constant 0 : index
    %c0_6 = arith.constant 0 : index
    %4 = vector.load %arg4[%c0_5, %c0_6] : memref<32x32xbf16, #tpu.memory_space<vmem>>, vector<32x32xbf16>
    %cst = arith.constant dense<0.000000e+00> : vector<8x32xf32>
    %5 = tpu.matmul %1, %4, %cst {dimension_numbers = #tpu.dot_dimension_numbers<[1], [0], [0], [1], [0, 0, 1, 1], [], []>} : vector<8x32xbf16>, vector<32x32xbf16>, vector<8x32xf32> -> vector<8x32xf32>
    %c0_7 = arith.constant 0 : index
    %c0_8 = arith.constant 0 : index
    %6 = vector.load %arg5[%c0_7, %c0_8] : memref<1x32xf32, #tpu.memory_space<vmem>>, vector<1x32xf32>
    %7 = vector.broadcast %6 : vector<1x32xf32> to vector<8x32xf32>
    %8 = arith.addf %5, %7 : vector<8x32xf32>
    %c0_9 = arith.constant 0 : index
    %c0_10 = arith.constant 0 : index
    %9 = vector.load %arg6[%c0_9, %c0_10] : memref<32x32xbf16, #tpu.memory_space<vmem>>, vector<32x32xbf16>
    %cst_11 = arith.constant dense<0.000000e+00> : vector<8x32xf32>
    %10 = tpu.matmul %3, %9, %cst_11 {dimension_numbers = #tpu.dot_dimension_numbers<[1], [0], [0], [1], [0, 0, 1, 1], [], []>} : vector<8x32xbf16>, vector<32x32xbf16>, vector<8x32xf32> -> vector<8x32xf32>
    %c0_12 = arith.constant 0 : index
    %c0_13 = arith.constant 0 : index
    %11 = vector.load %arg7[%c0_12, %c0_13] : memref<1x32xf32, #tpu.memory_space<vmem>>, vector<1x32xf32>
    %12 = vector.broadcast %11 : vector<1x32xf32> to vector<8x32xf32>
    %13 = arith.addf %10, %12 : vector<8x32xf32>
    %c0_14 = arith.constant 0 : index
    %c0_15 = arith.constant 0 : index
    %14 = vector.load %arg8[%c0_14, %c0_15] : memref<32x32xbf16, #tpu.memory_space<vmem>>, vector<32x32xbf16>
    %cst_16 = arith.constant dense<0.000000e+00> : vector<8x32xf32>
    %15 = tpu.matmul %3, %14, %cst_16 {dimension_numbers = #tpu.dot_dimension_numbers<[1], [0], [0], [1], [0, 0, 1, 1], [], []>} : vector<8x32xbf16>, vector<32x32xbf16>, vector<8x32xf32> -> vector<8x32xf32>
    %c0_17 = arith.constant 0 : index
    %c0_18 = arith.constant 0 : index
    %16 = vector.load %arg9[%c0_17, %c0_18] : memref<1x32xf32, #tpu.memory_space<vmem>>, vector<1x32xf32>
    %17 = vector.broadcast %16 : vector<1x32xf32> to vector<8x32xf32>
    %18 = arith.addf %15, %17 : vector<8x32xf32>
    %19 = vector.shape_cast %8 : vector<8x32xf32> to vector<8x4x8xf32>
    %20 = tpu.transpose %19, [1, 0, 2] : vector<8x4x8xf32> -> vector<4x8x8xf32>
    %21 = vector.shape_cast %13 : vector<8x32xf32> to vector<8x4x8xf32>
    %22 = tpu.transpose %21, [1, 0, 2] : vector<8x4x8xf32> -> vector<4x8x8xf32>
    %23 = vector.shape_cast %18 : vector<8x32xf32> to vector<8x4x8xf32>
    %24 = tpu.transpose %23, [1, 0, 2] : vector<8x4x8xf32> -> vector<4x8x8xf32>
    %25 = arith.truncf %20 : vector<4x8x8xf32> to vector<4x8x8xbf16>
    %26 = arith.truncf %22 : vector<4x8x8xf32> to vector<4x8x8xbf16>
    "tpu.trace_start"() <{level = 10 : i32, message = "hqd,hkd->hqk"}> : () -> ()
    %cst_19 = arith.constant dense<0.000000e+00> : vector<4x8x8xf32>
    %27 = tpu.matmul %25, %26, %cst_19 {dimension_numbers = #tpu.dot_dimension_numbers<[2], [2], [1], [1], [0, 0, 0, 1, 1, 1], [0], [0]>} : vector<4x8x8xbf16>, vector<4x8x8xbf16>, vector<4x8x8xf32> -> vector<4x8x8xf32>
    "tpu.trace_stop"() : () -> ()
    %cst_20 = arith.constant 0.353553385 : f32
    %28 = vector.broadcast %cst_20 : f32 to vector<4x8x8xf32>
    %29 = arith.mulf %27, %28 : vector<4x8x8xf32>
    %cst_21 = arith.constant dense<0xFF800000> : vector<4x8xf32>
    %30 = vector.multi_reduction <maximumf>, %29, %cst_21 [2] : vector<4x8x8xf32> to vector<4x8xf32>
    %31 = vector.shape_cast %30 : vector<4x8xf32> to vector<4x8x1xf32>
    %32 = vector.broadcast %31 : vector<4x8x1xf32> to vector<4x8x8xf32>
    %33 = arith.subf %29, %32 : vector<4x8x8xf32>
    %34 = math.exp %33 : vector<4x8x8xf32>
    %cst_22 = arith.constant dense<0.000000e+00> : vector<4x8xf32>
    %35 = vector.multi_reduction <add>, %34, %cst_22 [2] : vector<4x8x8xf32> to vector<4x8xf32>
    %36 = vector.shape_cast %35 : vector<4x8xf32> to vector<4x8x1xf32>
    %37 = tpu.reciprocal %36 {approx = true} : vector<4x8x1xf32> -> vector<4x8x1xf32>
    %38 = vector.broadcast %37 : vector<4x8x1xf32> to vector<4x8x8xf32>
    %39 = arith.mulf %34, %38 : vector<4x8x8xf32>
    %40 = arith.truncf %39 : vector<4x8x8xf32> to vector<4x8x8xbf16>
    %41 = arith.truncf %24 : vector<4x8x8xf32> to vector<4x8x8xbf16>
    "tpu.trace_start"() <{level = 10 : i32, message = "hqk,hkd->hqd"}> : () -> ()
    %cst_23 = arith.constant dense<0.000000e+00> : vector<4x8x8xf32>
    %42 = tpu.matmul %40, %41, %cst_23 {dimension_numbers = #tpu.dot_dimension_numbers<[2], [1], [1], [2], [0, 0, 0, 1, 1, 2], [0], [0]>} : vector<4x8x8xbf16>, vector<4x8x8xbf16>, vector<4x8x8xf32> -> vector<4x8x8xf32>
    "tpu.trace_stop"() : () -> ()
    %43 = tpu.transpose %42, [1, 0, 2] : vector<4x8x8xf32> -> vector<8x4x8xf32>
    %44 = vector.shape_cast %43 : vector<8x4x8xf32> to vector<8x32xf32>
    %c0_24 = arith.constant 0 : index
    %c0_25 = arith.constant 0 : index
    %45 = vector.load %arg10[%c0_24, %c0_25] : memref<32x32xbf16, #tpu.memory_space<vmem>>, vector<32x32xbf16>
    %46 = arith.truncf %44 : vector<8x32xf32> to vector<8x32xbf16>
    %cst_26 = arith.constant dense<0.000000e+00> : vector<8x32xf32>
    %47 = tpu.matmul %46, %45, %cst_26 {dimension_numbers = #tpu.dot_dimension_numbers<[1], [0], [0], [1], [0, 0, 1, 1], [], []>} : vector<8x32xbf16>, vector<32x32xbf16>, vector<8x32xf32> -> vector<8x32xf32>
    %c0_27 = arith.constant 0 : index
    %c0_28 = arith.constant 0 : index
    %48 = vector.load %arg11[%c0_27, %c0_28] : memref<1x32xf32, #tpu.memory_space<vmem>>, vector<1x32xf32>
    %49 = vector.broadcast %48 : vector<1x32xf32> to vector<8x32xf32>
    %50 = arith.addf %47, %49 : vector<8x32xf32>
    %51 = arith.extf %1 : vector<8x32xbf16> to vector<8x32xf32>
    %52 = arith.addf %50, %51 : vector<8x32xf32>
    %c0_29 = arith.constant 0 : index
    %c0_30 = arith.constant 0 : index
    %53 = vector.load %arg12[%c0_29, %c0_30] : memref<1x32xf32, #tpu.memory_space<vmem>>, vector<1x32xf32>
    %c0_31 = arith.constant 0 : index
    %c0_32 = arith.constant 0 : index
    %54 = vector.load %arg13[%c0_31, %c0_32] : memref<1x32xf32, #tpu.memory_space<vmem>>, vector<1x32xf32>
    %cst_33 = arith.constant dense<0.000000e+00> : vector<8xf32>
    %55 = vector.multi_reduction <add>, %52, %cst_33 [1] : vector<8x32xf32> to vector<8xf32>
    %56 = vector.shape_cast %55 : vector<8xf32> to vector<8x1xf32>
    %cst_34 = arith.constant 3.200000e+01 : f32
    %57 = vector.broadcast %cst_34 : f32 to vector<8x1xf32>
    %58 = arith.divf %56, %57 : vector<8x1xf32>
    %59 = vector.broadcast %58 : vector<8x1xf32> to vector<8x32xf32>
    %60 = arith.subf %52, %59 : vector<8x32xf32>
    %61 = arith.mulf %60, %60 : vector<8x32xf32>
    %cst_35 = arith.constant dense<0.000000e+00> : vector<8xf32>
    %62 = vector.multi_reduction <add>, %61, %cst_35 [1] : vector<8x32xf32> to vector<8xf32>
    %63 = vector.shape_cast %62 : vector<8xf32> to vector<8x1xf32>
    %cst_36 = arith.constant 3.200000e+01 : f32
    %64 = vector.broadcast %cst_36 : f32 to vector<8x1xf32>
    %65 = arith.divf %63, %64 : vector<8x1xf32>
    %66 = vector.broadcast %58 : vector<8x1xf32> to vector<8x32xf32>
    %67 = arith.subf %52, %66 : vector<8x32xf32>
    %cst_37 = arith.constant 9.99999974E-6 : f32
    %68 = vector.broadcast %cst_37 : f32 to vector<8x1xf32>
    %69 = arith.addf %65, %68 : vector<8x1xf32>
    %70 = math.rsqrt %69 : vector<8x1xf32>
    %71 = vector.broadcast %70 : vector<8x1xf32> to vector<8x32xf32>
    %72 = arith.mulf %67, %71 : vector<8x32xf32>
    %73 = vector.broadcast %53 : vector<1x32xf32> to vector<8x32xf32>
    %74 = arith.mulf %72, %73 : vector<8x32xf32>
    %75 = vector.broadcast %54 : vector<1x32xf32> to vector<8x32xf32>
    %76 = arith.addf %74, %75 : vector<8x32xf32>
    %c0_38 = arith.constant 0 : index
    %c0_39 = arith.constant 0 : index
    %77 = vector.load %arg14[%c0_38, %c0_39] : memref<32x64xbf16, #tpu.memory_space<vmem>>, vector<32x64xbf16>
    %78 = arith.truncf %76 : vector<8x32xf32> to vector<8x32xbf16>
    %cst_40 = arith.constant dense<0.000000e+00> : vector<8x64xf32>
    %79 = tpu.matmul %78, %77, %cst_40 {dimension_numbers = #tpu.dot_dimension_numbers<[1], [0], [0], [1], [0, 0, 1, 1], [], []>} : vector<8x32xbf16>, vector<32x64xbf16>, vector<8x64xf32> -> vector<8x64xf32>
    %c0_41 = arith.constant 0 : index
    %c0_42 = arith.constant 0 : index
    %80 = vector.load %arg15[%c0_41, %c0_42] : memref<1x64xf32, #tpu.memory_space<vmem>>, vector<1x64xf32>
    %81 = vector.broadcast %80 : vector<1x64xf32> to vector<8x64xf32>
    %82 = arith.addf %79, %81 : vector<8x64xf32>
    %cst_43 = arith.constant 0.000000e+00 : f32
    %83 = vector.broadcast %cst_43 : f32 to vector<8x64xf32>
    %84 = arith.maximumf %82, %83 : vector<8x64xf32>
    %c0_44 = arith.constant 0 : index
    %c0_45 = arith.constant 0 : index
    %85 = vector.load %arg16[%c0_44, %c0_45] : memref<64x32xbf16, #tpu.memory_space<vmem>>, vector<64x32xbf16>
    %86 = arith.truncf %84 : vector<8x64xf32> to vector<8x64xbf16>
    %cst_46 = arith.constant dense<0.000000e+00> : vector<8x32xf32>
    %87 = tpu.matmul %86, %85, %cst_46 {dimension_numbers = #tpu.dot_dimension_numbers<[1], [0], [0], [1], [0, 0, 1, 1], [], []>} : vector<8x64xbf16>, vector<64x32xbf16>, vector<8x32xf32> -> vector<8x32xf32>
    %c0_47 = arith.constant 0 : index
    %c0_48 = arith.constant 0 : index
    %88 = vector.load %arg17[%c0_47, %c0_48] : memref<1x32xf32, #tpu.memory_space<vmem>>, vector<1x32xf32>
    %89 = vector.broadcast %88 : vector<1x32xf32> to vector<8x32xf32>
    %90 = arith.addf %87, %89 : vector<8x32xf32>
    %91 = arith.addf %90, %76 : vector<8x32xf32>
    %c0_49 = arith.constant 0 : index
    %c0_50 = arith.constant 0 : index
    %92 = vector.load %arg18[%c0_49, %c0_50] : memref<1x32xf32, #tpu.memory_space<vmem>>, vector<1x32xf32>
    %c0_51 = arith.constant 0 : index
    %c0_52 = arith.constant 0 : index
    %93 = vector.load %arg19[%c0_51, %c0_52] : memref<1x32xf32, #tpu.memory_space<vmem>>, vector<1x32xf32>
    %cst_53 = arith.constant dense<0.000000e+00> : vector<8xf32>
    %94 = vector.multi_reduction <add>, %91, %cst_53 [1] : vector<8x32xf32> to vector<8xf32>
    %95 = vector.shape_cast %94 : vector<8xf32> to vector<8x1xf32>
    %cst_54 = arith.constant 3.200000e+01 : f32
    %96 = vector.broadcast %cst_54 : f32 to vector<8x1xf32>
    %97 = arith.divf %95, %96 : vector<8x1xf32>
    %98 = vector.broadcast %97 : vector<8x1xf32> to vector<8x32xf32>
    %99 = arith.subf %91, %98 : vector<8x32xf32>
    %100 = arith.mulf %99, %99 : vector<8x32xf32>
    %cst_55 = arith.constant dense<0.000000e+00> : vector<8xf32>
    %101 = vector.multi_reduction <add>, %100, %cst_55 [1] : vector<8x32xf32> to vector<8xf32>
    %102 = vector.shape_cast %101 : vector<8xf32> to vector<8x1xf32>
    %cst_56 = arith.constant 3.200000e+01 : f32
    %103 = vector.broadcast %cst_56 : f32 to vector<8x1xf32>
    %104 = arith.divf %102, %103 : vector<8x1xf32>
    %105 = vector.broadcast %97 : vector<8x1xf32> to vector<8x32xf32>
    %106 = arith.subf %91, %105 : vector<8x32xf32>
    %cst_57 = arith.constant 9.99999974E-6 : f32
    %107 = vector.broadcast %cst_57 : f32 to vector<8x1xf32>
    %108 = arith.addf %104, %107 : vector<8x1xf32>
    %109 = math.rsqrt %108 : vector<8x1xf32>
    %110 = vector.broadcast %109 : vector<8x1xf32> to vector<8x32xf32>
    %111 = arith.mulf %106, %110 : vector<8x32xf32>
    %112 = vector.broadcast %92 : vector<1x32xf32> to vector<8x32xf32>
    %113 = arith.mulf %111, %112 : vector<8x32xf32>
    %114 = vector.broadcast %93 : vector<1x32xf32> to vector<8x32xf32>
    %115 = arith.addf %113, %114 : vector<8x32xf32>
    %116 = arith.truncf %115 : vector<8x32xf32> to vector<8x32xbf16>
    %c0_58 = arith.constant 0 : index
    %c0_59 = arith.constant 0 : index
    %c0_60 = arith.constant 0 : index
    %117 = vector.load %arg20[%c0_58, %c0_59, %c0_60] : memref<1x8x32xbf16, #tpu.memory_space<vmem>>, vector<1x8x32xbf16>
    %118 = vector.shape_cast %117 : vector<1x8x32xbf16> to vector<8x32xbf16>
    %119 = vector.shape_cast %116 : vector<8x32xbf16> to vector<1x8x32xbf16>
    tpu.vector_store %arg20[%c0_58, %c0_59, %c0_60], %119 {strides = array<i32>} : memref<1x8x32xbf16, #tpu.memory_space<vmem>>, vector<1x8x32xbf16>,
    return
  }
  func.func @transform_0(%arg0: i32, %arg1: i32) -> (i32, i32, i32) {
    %c0_i32 = arith.constant 0 : i32
    %c0_i32_0 = arith.constant 0 : i32
    return %arg0, %arg1, %c0_i32 : i32, i32, i32
  }
  func.func @transform_1(%arg0: i32, %arg1: i32) -> (i32, i32, i32) {
    %c0_i32 = arith.constant 0 : i32
    %c0_i32_0 = arith.constant 0 : i32
    %c0_i32_1 = arith.constant 0 : i32
    return %arg0, %c0_i32, %c0_i32_0 : i32, i32, i32
  }
  func.func @transform_2(%arg0: i32, %arg1: i32) -> (i32, i32) {
    %c0_i32 = arith.constant 0 : i32
    %c0_i32_0 = arith.constant 0 : i32
    %c0_i32_1 = arith.constant 0 : i32
    return %c0_i32, %c0_i32_0 : i32, i32
  }
  func.func @transform_3(%arg0: i32, %arg1: i32) -> (i32, i32) {
    %c0_i32 = arith.constant 0 : i32
    %c0_i32_0 = arith.constant 0 : i32
    %c0_i32_1 = arith.constant 0 : i32
    return %c0_i32, %c0_i32_0 : i32, i32
  }
  func.func @transform_4(%arg0: i32, %arg1: i32) -> (i32, i32) {
    %c0_i32 = arith.constant 0 : i32
    %c0_i32_0 = arith.constant 0 : i32
    %c0_i32_1 = arith.constant 0 : i32
    return %c0_i32, %c0_i32_0 : i32, i32
  }
  func.func @transform_5(%arg0: i32, %arg1: i32) -> (i32, i32) {
    %c0_i32 = arith.constant 0 : i32
    %c0_i32_0 = arith.constant 0 : i32
    %c0_i32_1 = arith.constant 0 : i32
    return %c0_i32, %c0_i32_0 : i32, i32
  }
  func.func @transform_6(%arg0: i32, %arg1: i32) -> (i32, i32) {
    %c0_i32 = arith.constant 0 : i32
    %c0_i32_0 = arith.constant 0 : i32
    %c0_i32_1 = arith.constant 0 : i32
    return %c0_i32, %c0_i32_0 : i32, i32
  }
  func.func @transform_7(%arg0: i32, %arg1: i32) -> (i32, i32) {
    %c0_i32 = arith.constant 0 : i32
    %c0_i32_0 = arith.constant 0 : i32
    %c0_i32_1 = arith.constant 0 : i32
    return %c0_i32, %c0_i32_0 : i32, i32
  }
  func.func @transform_8(%arg0: i32, %arg1: i32) -> (i32, i32) {
    %c0_i32 = arith.constant 0 : i32
    %c0_i32_0 = arith.constant 0 : i32
    %c0_i32_1 = arith.constant 0 : i32
    return %c0_i32, %c0_i32_0 : i32, i32
  }
  func.func @transform_9(%arg0: i32, %arg1: i32) -> (i32, i32) {
    %c0_i32 = arith.constant 0 : i32
    %c0_i32_0 = arith.constant 0 : i32
    %c0_i32_1 = arith.constant 0 : i32
    return %c0_i32, %c0_i32_0 : i32, i32
  }
  func.func @transform_10(%arg0: i32, %arg1: i32) -> (i32, i32) {
    %c0_i32 = arith.constant 0 : i32
    %c0_i32_0 = arith.constant 0 : i32
    %c0_i32_1 = arith.constant 0 : i32
    return %c0_i32, %c0_i32_0 : i32, i32
  }
  func.func @transform_11(%arg0: i32, %arg1: i32) -> (i32, i32) {
    %c0_i32 = arith.constant 0 : i32
    %c0_i32_0 = arith.constant 0 : i32
    %c0_i32_1 = arith.constant 0 : i32
    return %c0_i32, %c0_i32_0 : i32, i32
  }
  func.func @transform_12(%arg0: i32, %arg1: i32) -> (i32, i32) {
    %c0_i32 = arith.constant 0 : i32
    %c0_i32_0 = arith.constant 0 : i32
    %c0_i32_1 = arith.constant 0 : i32
    return %c0_i32, %c0_i32_0 : i32, i32
  }
  func.func @transform_13(%arg0: i32, %arg1: i32) -> (i32, i32) {
    %c0_i32 = arith.constant 0 : i32
    %c0_i32_0 = arith.constant 0 : i32
    %c0_i32_1 = arith.constant 0 : i32
    return %c0_i32, %c0_i32_0 : i32, i32
  }
  func.func @transform_14(%arg0: i32, %arg1: i32) -> (i32, i32) {
    %c0_i32 = arith.constant 0 : i32
    %c0_i32_0 = arith.constant 0 : i32
    %c0_i32_1 = arith.constant 0 : i32
    return %c0_i32, %c0_i32_0 : i32, i32
  }
  func.func @transform_15(%arg0: i32, %arg1: i32) -> (i32, i32) {
    %c0_i32 = arith.constant 0 : i32
    %c0_i32_0 = arith.constant 0 : i32
    %c0_i32_1 = arith.constant 0 : i32
    return %c0_i32, %c0_i32_0 : i32, i32
  }
  func.func @transform_16(%arg0: i32, %arg1: i32) -> (i32, i32) {
    %c0_i32 = arith.constant 0 : i32
    %c0_i32_0 = arith.constant 0 : i32
    %c0_i32_1 = arith.constant 0 : i32
    return %c0_i32, %c0_i32_0 : i32, i32
  }
  func.func @transform_17(%arg0: i32, %arg1: i32) -> (i32, i32) {
    %c0_i32 = arith.constant 0 : i32
    %c0_i32_0 = arith.constant 0 : i32
    %c0_i32_1 = arith.constant 0 : i32
    return %c0_i32, %c0_i32_0 : i32, i32
  }
  func.func @transform_18(%arg0: i32, %arg1: i32) -> (i32, i32, i32) {
    %c0_i32 = arith.constant 0 : i32
    %c0_i32_0 = arith.constant 0 : i32
    return %arg0, %arg1, %c0_i32 : i32, i32, i32
  }
}

module attributes {stable_mosaic.version = 11 : i64} {
  func.func @encoder_layer_kernel(%arg0: i32, %arg1: i32, %arg2: memref<1x8x32xbf16, #tpu.memory_space<vmem>>, %arg3: memref<1x8x32xbf16, #tpu.memory_space<vmem>>, %arg4: memref<32x32xbf16, #tpu.memory_space<vmem>>, %arg5: memref<1x32xf32, #tpu.memory_space<vmem>>, %arg6: memref<32x32xbf16, #tpu.memory_space<vmem>>, %arg7: memref<1x32xf32, #tpu.memory_space<vmem>>, %arg8: memref<32x32xbf16, #tpu.memory_space<vmem>>, %arg9: memref<1x32xf32, #tpu.memory_space<vmem>>, %arg10: memref<32x32xbf16, #tpu.memory_space<vmem>>, %arg11: memref<1x32xf32, #tpu.memory_space<vmem>>, %arg12: memref<1x32xf32, #tpu.memory_space<vmem>>, %arg13: memref<1x32xf32, #tpu.memory_space<vmem>>, %arg14: memref<32x64xbf16, #tpu.memory_space<vmem>>, %arg15: memref<1x64xf32, #tpu.memory_space<vmem>>, %arg16: memref<64x32xbf16, #tpu.memory_space<vmem>>, %arg17: memref<1x32xf32, #tpu.memory_space<vmem>>, %arg18: memref<1x32xf32, #tpu.memory_space<vmem>>, %arg19: memref<1x32xf32, #tpu.memory_space<vmem>>, %arg20: memref<1x8x32xbf16, #tpu.memory_space<vmem>>) attributes {dimension_semantics = [#tpu.dimension_semantics<parallel>, #tpu.dimension_semantics<parallel>], iteration_bounds = array<i64: 2, 1>, scalar_prefetch = 0 : i64, scratch_operands = 0 : i64, tpu.core_type = #tpu.core_type<tc>, window_params = [{transform_indices = @transform_0, window_bounds = array<i64: 1, 8, 32>}, {transform_indices = @transform_1, window_bounds = array<i64: 1, 8, 32>}, {pipeline_mode = #tpu.pipeline_mode<synchronous>, transform_indices = @transform_2, window_bounds = array<i64: 32, 32>}, {pipeline_mode = #tpu.pipeline_mode<synchronous>, transform_indices = @transform_3, window_bounds = array<i64: 1, 32>}, {pipeline_mode = #tpu.pipeline_mode<synchronous>, transform_indices = @transform_4, window_bounds = array<i64: 32, 32>}, {pipeline_mode = #tpu.pipeline_mode<synchronous>, transform_indices = @transform_5, window_bounds = array<i64: 1, 32>}, {pipeline_mode = #tpu.pipeline_mode<synchronous>, transform_indices = @transform_6, window_bounds = array<i64: 32, 32>}, {pipeline_mode = #tpu.pipeline_mode<synchronous>, transform_indices = @transform_7, window_bounds = array<i64: 1, 32>}, {pipeline_mode = #tpu.pipeline_mode<synchronous>, transform_indices = @transform_8, window_bounds = array<i64: 32, 32>}, {pipeline_mode = #tpu.pipeline_mode<synchronous>, transform_indices = @transform_9, window_bounds = array<i64: 1, 32>}, {pipeline_mode = #tpu.pipeline_mode<synchronous>, transform_indices = @transform_10, window_bounds = array<i64: 1, 32>}, {pipeline_mode = #tpu.pipeline_mode<synchronous>, transform_indices = @transform_11, window_bounds = array<i64: 1, 32>}, {pipeline_mode = #tpu.pipeline_mode<synchronous>, transform_indices = @transform_12, window_bounds = array<i64: 32, 64>}, {pipeline_mode = #tpu.pipeline_mode<synchronous>, transform_indices = @transform_13, window_bounds = array<i64: 1, 64>}, {pipeline_mode = #tpu.pipeline_mode<synchronous>, transform_indices = @transform_14, window_bounds = array<i64: 64, 32>}, {pipeline_mode = #tpu.pipeline_mode<synchronous>, transform_indices = @transform_15, window_bounds = array<i64: 1, 32>}, {pipeline_mode = #tpu.pipeline_mode<synchronous>, transform_indices = @transform_16, window_bounds = array<i64: 1, 32>}, {pipeline_mode = #tpu.pipeline_mode<synchronous>, transform_indices = @transform_17, window_bounds = array<i64: 1, 32>}, {transform_indices = @transform_18, window_bounds = array<i64: 1, 8, 32>}]} {
    %c0 = arith.constant 0 : index
    %c0_0 = arith.constant 0 : index
    %c0_1 = arith.constant 0 : index
    %0 = vector.load %arg2[%c0, %c0_0, %c0_1] : memref<1x8x32xbf16, #tpu.memory_space<vmem>>, vector<1x8x32xbf16>
    %1 = vector.shape_cast %0 : vector<1x8x32xbf16> to vector<8x32xbf16>
    %c0_2 = arith.constant 0 : index
    %c0_3 = arith.constant 0 : index
    %c0_4 = arith.constant 0 : index
    %2 = vector.load %arg3[%c0_2, %c0_3, %c0_4] : memref<1x8x32xbf16, #tpu.memory_space<vmem>>, vector<1x8x32xbf16>
    %3 = vector.shape_cast %2 : vector<1x8x32xbf16> to vector<8x32xbf16>
    %c0_5 = arith.constant 0 : index
    %c0_6 = arith.constant 0 : index
    %4 = vector.load %arg4[%c0_5, %c0_6] : memref<32x32xbf16, #tpu.memory_space<vmem>>, vector<32x32xbf16>
    %cst = arith.constant dense<0.000000e+00> : vector<8x32xf32>
    %5 = tpu.matmul %1, %4, %cst {dimension_numbers = #tpu.dot_dimension_numbers<[1], [0], [0], [1], [0, 0, 1, 1], [], []>} : vector<8x32xbf16>, vector<32x32xbf16>, vector<8x32xf32> -> vector<8x32xf32>
    %c0_7 = arith.constant 0 : index
    %c0_8 = arith.constant 0 : index
    %6 = vector.load %arg5[%c0_7, %c0_8] : memref<1x32xf32, #tpu.memory_space<vmem>>, vector<1x32xf32>
    %7 = vector.broadcast %6 : vector<1x32xf32> to vector<8x32xf32>
    %8 = arith.addf %5, %7 : vector<8x32xf32>
    %c0_9 = arith.constant 0 : index
    %c0_10 = arith.constant 0 : index
    %9 = vector.load %arg6[%c0_9, %c0_10] : memref<32x32xbf16, #tpu.memory_space<vmem>>, vector<32x32xbf16>
    %cst_11 = arith.constant dense<0.000000e+00> : vector<8x32xf32>
    %10 = tpu.matmul %3, %9, %cst_11 {dimension_numbers = #tpu.dot_dimension_numbers<[1], [0], [0], [1], [0, 0, 1, 1], [], []>} : vector<8x32xbf16>, vector<32x32xbf16>, vector<8x32xf32> -> vector<8x32xf32>
    %c0_12 = arith.constant 0 : index
    %c0_13 = arith.constant 0 : index
    %11 = vector.load %arg7[%c0_12, %c0_13] : memref<1x32xf32, #tpu.memory_space<vmem>>, vector<1x32xf32>
    %12 = vector.broadcast %11 : vector<1x32xf32> to vector<8x32xf32>
    %13 = arith.addf %10, %12 : vector<8x32xf32>
    %c0_14 = arith.constant 0 : index
    %c0_15 = arith.constant 0 : index
    %14 = vector.load %arg8[%c0_14, %c0_15] : memref<32x32xbf16, #tpu.memory_space<vmem>>, vector<32x32xbf16>
    %cst_16 = arith.constant dense<0.000000e+00> : vector<8x32xf32>
    %15 = tpu.matmul %3, %14, %cst_16 {dimension_numbers = #tpu.dot_dimension_numbers<[1], [0], [0], [1], [0, 0, 1, 1], [], []>} : vector<8x32xbf16>, vector<32x32xbf16>, vector<8x32xf32> -> vector<8x32xf32>
    %c0_17 = arith.constant 0 : index
    %c0_18 = arith.constant 0 : index
    %16 = vector.load %arg9[%c0_17, %c0_18] : memref<1x32xf32, #tpu.memory_space<vmem>>, vector<1x32xf32>
    %17 = vector.broadcast %16 : vector<1x32xf32> to vector<8x32xf32>
    %18 = arith.addf %15, %17 : vector<8x32xf32>
    %19 = vector.extract_strided_slice %8 {offsets = [0, 0], sizes = [8, 8], strides = [1, 1]} : vector<8x32xf32> to vector<8x8xf32>
    %20 = vector.extract_strided_slice %13 {offsets = [0, 0], sizes = [8, 8], strides = [1, 1]} : vector<8x32xf32> to vector<8x8xf32>
    %21 = vector.extract_strided_slice %18 {offsets = [0, 0], sizes = [8, 8], strides = [1, 1]} : vector<8x32xf32> to vector<8x8xf32>
    %22 = arith.truncf %19 : vector<8x8xf32> to vector<8x8xbf16>
    %23 = arith.truncf %20 : vector<8x8xf32> to vector<8x8xbf16>
    %24 = tpu.transpose %23, [1, 0] : vector<8x8xbf16> -> vector<8x8xbf16>
    %cst_19 = arith.constant dense<0.000000e+00> : vector<8x8xf32>
    %25 = tpu.matmul %22, %24, %cst_19 {dimension_numbers = #tpu.dot_dimension_numbers<[1], [0], [0], [1], [0, 0, 1, 1], [], []>} : vector<8x8xbf16>, vector<8x8xbf16>, vector<8x8xf32> -> vector<8x8xf32>
    %cst_20 = arith.constant 0.353553385 : f32
    %26 = vector.broadcast %cst_20 : f32 to vector<8x8xf32>
    %27 = arith.mulf %25, %26 : vector<8x8xf32>
    %cst_21 = arith.constant dense<0xFF800000> : vector<8xf32>
    %28 = vector.multi_reduction <maximumf>, %27, %cst_21 [1] : vector<8x8xf32> to vector<8xf32>
    %29 = vector.shape_cast %28 : vector<8xf32> to vector<8x1xf32>
    %30 = vector.broadcast %29 : vector<8x1xf32> to vector<8x8xf32>
    %31 = arith.subf %27, %30 : vector<8x8xf32>
    %32 = math.exp %31 : vector<8x8xf32>
    %cst_22 = arith.constant dense<0.000000e+00> : vector<8xf32>
    %33 = vector.multi_reduction <add>, %32, %cst_22 [1] : vector<8x8xf32> to vector<8xf32>
    %34 = vector.shape_cast %33 : vector<8xf32> to vector<8x1xf32>
    %35 = tpu.reciprocal %34 {approx = true} : vector<8x1xf32> -> vector<8x1xf32>
    %36 = vector.broadcast %35 : vector<8x1xf32> to vector<8x8xf32>
    %37 = arith.mulf %32, %36 : vector<8x8xf32>
    %38 = arith.truncf %37 : vector<8x8xf32> to vector<8x8xbf16>
    %39 = arith.truncf %21 : vector<8x8xf32> to vector<8x8xbf16>
    %cst_23 = arith.constant dense<0.000000e+00> : vector<8x8xf32>
    %40 = tpu.matmul %38, %39, %cst_23 {dimension_numbers = #tpu.dot_dimension_numbers<[1], [0], [0], [1], [0, 0, 1, 1], [], []>} : vector<8x8xbf16>, vector<8x8xbf16>, vector<8x8xf32> -> vector<8x8xf32>
    %41 = vector.extract_strided_slice %8 {offsets = [0, 8], sizes = [8, 8], strides = [1, 1]} : vector<8x32xf32> to vector<8x8xf32>
    %42 = vector.extract_strided_slice %13 {offsets = [0, 8], sizes = [8, 8], strides = [1, 1]} : vector<8x32xf32> to vector<8x8xf32>
    %43 = vector.extract_strided_slice %18 {offsets = [0, 8], sizes = [8, 8], strides = [1, 1]} : vector<8x32xf32> to vector<8x8xf32>
    %44 = arith.truncf %41 : vector<8x8xf32> to vector<8x8xbf16>
    %45 = arith.truncf %42 : vector<8x8xf32> to vector<8x8xbf16>
    %46 = tpu.transpose %45, [1, 0] : vector<8x8xbf16> -> vector<8x8xbf16>
    %cst_24 = arith.constant dense<0.000000e+00> : vector<8x8xf32>
    %47 = tpu.matmul %44, %46, %cst_24 {dimension_numbers = #tpu.dot_dimension_numbers<[1], [0], [0], [1], [0, 0, 1, 1], [], []>} : vector<8x8xbf16>, vector<8x8xbf16>, vector<8x8xf32> -> vector<8x8xf32>
    %cst_25 = arith.constant 0.353553385 : f32
    %48 = vector.broadcast %cst_25 : f32 to vector<8x8xf32>
    %49 = arith.mulf %47, %48 : vector<8x8xf32>
    %cst_26 = arith.constant dense<0xFF800000> : vector<8xf32>
    %50 = vector.multi_reduction <maximumf>, %49, %cst_26 [1] : vector<8x8xf32> to vector<8xf32>
    %51 = vector.shape_cast %50 : vector<8xf32> to vector<8x1xf32>
    %52 = vector.broadcast %51 : vector<8x1xf32> to vector<8x8xf32>
    %53 = arith.subf %49, %52 : vector<8x8xf32>
    %54 = math.exp %53 : vector<8x8xf32>
    %cst_27 = arith.constant dense<0.000000e+00> : vector<8xf32>
    %55 = vector.multi_reduction <add>, %54, %cst_27 [1] : vector<8x8xf32> to vector<8xf32>
    %56 = vector.shape_cast %55 : vector<8xf32> to vector<8x1xf32>
    %57 = tpu.reciprocal %56 {approx = true} : vector<8x1xf32> -> vector<8x1xf32>
    %58 = vector.broadcast %57 : vector<8x1xf32> to vector<8x8xf32>
    %59 = arith.mulf %54, %58 : vector<8x8xf32>
    %60 = arith.truncf %59 : vector<8x8xf32> to vector<8x8xbf16>
    %61 = arith.truncf %43 : vector<8x8xf32> to vector<8x8xbf16>
    %cst_28 = arith.constant dense<0.000000e+00> : vector<8x8xf32>
    %62 = tpu.matmul %60, %61, %cst_28 {dimension_numbers = #tpu.dot_dimension_numbers<[1], [0], [0], [1], [0, 0, 1, 1], [], []>} : vector<8x8xbf16>, vector<8x8xbf16>, vector<8x8xf32> -> vector<8x8xf32>
    %63 = vector.extract_strided_slice %8 {offsets = [0, 16], sizes = [8, 8], strides = [1, 1]} : vector<8x32xf32> to vector<8x8xf32>
    %64 = vector.extract_strided_slice %13 {offsets = [0, 16], sizes = [8, 8], strides = [1, 1]} : vector<8x32xf32> to vector<8x8xf32>
    %65 = vector.extract_strided_slice %18 {offsets = [0, 16], sizes = [8, 8], strides = [1, 1]} : vector<8x32xf32> to vector<8x8xf32>
    %66 = arith.truncf %63 : vector<8x8xf32> to vector<8x8xbf16>
    %67 = arith.truncf %64 : vector<8x8xf32> to vector<8x8xbf16>
    %68 = tpu.transpose %67, [1, 0] : vector<8x8xbf16> -> vector<8x8xbf16>
    %cst_29 = arith.constant dense<0.000000e+00> : vector<8x8xf32>
    %69 = tpu.matmul %66, %68, %cst_29 {dimension_numbers = #tpu.dot_dimension_numbers<[1], [0], [0], [1], [0, 0, 1, 1], [], []>} : vector<8x8xbf16>, vector<8x8xbf16>, vector<8x8xf32> -> vector<8x8xf32>
    %cst_30 = arith.constant 0.353553385 : f32
    %70 = vector.broadcast %cst_30 : f32 to vector<8x8xf32>
    %71 = arith.mulf %69, %70 : vector<8x8xf32>
    %cst_31 = arith.constant dense<0xFF800000> : vector<8xf32>
    %72 = vector.multi_reduction <maximumf>, %71, %cst_31 [1] : vector<8x8xf32> to vector<8xf32>
    %73 = vector.shape_cast %72 : vector<8xf32> to vector<8x1xf32>
    %74 = vector.broadcast %73 : vector<8x1xf32> to vector<8x8xf32>
    %75 = arith.subf %71, %74 : vector<8x8xf32>
    %76 = math.exp %75 : vector<8x8xf32>
    %cst_32 = arith.constant dense<0.000000e+00> : vector<8xf32>
    %77 = vector.multi_reduction <add>, %76, %cst_32 [1] : vector<8x8xf32> to vector<8xf32>
    %78 = vector.shape_cast %77 : vector<8xf32> to vector<8x1xf32>
    %79 = tpu.reciprocal %78 {approx = true} : vector<8x1xf32> -> vector<8x1xf32>
    %80 = vector.broadcast %79 : vector<8x1xf32> to vector<8x8xf32>
    %81 = arith.mulf %76, %80 : vector<8x8xf32>
    %82 = arith.truncf %81 : vector<8x8xf32> to vector<8x8xbf16>
    %83 = arith.truncf %65 : vector<8x8xf32> to vector<8x8xbf16>
    %cst_33 = arith.constant dense<0.000000e+00> : vector<8x8xf32>
    %84 = tpu.matmul %82, %83, %cst_33 {dimension_numbers = #tpu.dot_dimension_numbers<[1], [0], [0], [1], [0, 0, 1, 1], [], []>} : vector<8x8xbf16>, vector<8x8xbf16>, vector<8x8xf32> -> vector<8x8xf32>
    %85 = vector.extract_strided_slice %8 {offsets = [0, 24], sizes = [8, 8], strides = [1, 1]} : vector<8x32xf32> to vector<8x8xf32>
    %86 = vector.extract_strided_slice %13 {offsets = [0, 24], sizes = [8, 8], strides = [1, 1]} : vector<8x32xf32> to vector<8x8xf32>
    %87 = vector.extract_strided_slice %18 {offsets = [0, 24], sizes = [8, 8], strides = [1, 1]} : vector<8x32xf32> to vector<8x8xf32>
    %88 = arith.truncf %85 : vector<8x8xf32> to vector<8x8xbf16>
    %89 = arith.truncf %86 : vector<8x8xf32> to vector<8x8xbf16>
    %90 = tpu.transpose %89, [1, 0] : vector<8x8xbf16> -> vector<8x8xbf16>
    %cst_34 = arith.constant dense<0.000000e+00> : vector<8x8xf32>
    %91 = tpu.matmul %88, %90, %cst_34 {dimension_numbers = #tpu.dot_dimension_numbers<[1], [0], [0], [1], [0, 0, 1, 1], [], []>} : vector<8x8xbf16>, vector<8x8xbf16>, vector<8x8xf32> -> vector<8x8xf32>
    %cst_35 = arith.constant 0.353553385 : f32
    %92 = vector.broadcast %cst_35 : f32 to vector<8x8xf32>
    %93 = arith.mulf %91, %92 : vector<8x8xf32>
    %cst_36 = arith.constant dense<0xFF800000> : vector<8xf32>
    %94 = vector.multi_reduction <maximumf>, %93, %cst_36 [1] : vector<8x8xf32> to vector<8xf32>
    %95 = vector.shape_cast %94 : vector<8xf32> to vector<8x1xf32>
    %96 = vector.broadcast %95 : vector<8x1xf32> to vector<8x8xf32>
    %97 = arith.subf %93, %96 : vector<8x8xf32>
    %98 = math.exp %97 : vector<8x8xf32>
    %cst_37 = arith.constant dense<0.000000e+00> : vector<8xf32>
    %99 = vector.multi_reduction <add>, %98, %cst_37 [1] : vector<8x8xf32> to vector<8xf32>
    %100 = vector.shape_cast %99 : vector<8xf32> to vector<8x1xf32>
    %101 = tpu.reciprocal %100 {approx = true} : vector<8x1xf32> -> vector<8x1xf32>
    %102 = vector.broadcast %101 : vector<8x1xf32> to vector<8x8xf32>
    %103 = arith.mulf %98, %102 : vector<8x8xf32>
    %104 = arith.truncf %103 : vector<8x8xf32> to vector<8x8xbf16>
    %105 = arith.truncf %87 : vector<8x8xf32> to vector<8x8xbf16>
    %cst_38 = arith.constant dense<0.000000e+00> : vector<8x8xf32>
    %106 = tpu.matmul %104, %105, %cst_38 {dimension_numbers = #tpu.dot_dimension_numbers<[1], [0], [0], [1], [0, 0, 1, 1], [], []>} : vector<8x8xbf16>, vector<8x8xbf16>, vector<8x8xf32> -> vector<8x8xf32>
    %107 = tpu.concatenate %40, %62, %84, %106 in 1 : vector<8x8xf32>, vector<8x8xf32>, vector<8x8xf32>, vector<8x8xf32> -> vector<8x32xf32>
    %c0_39 = arith.constant 0 : index
    %c0_40 = arith.constant 0 : index
    %108 = vector.load %arg10[%c0_39, %c0_40] : memref<32x32xbf16, #tpu.memory_space<vmem>>, vector<32x32xbf16>
    %109 = arith.truncf %107 : vector<8x32xf32> to vector<8x32xbf16>
    %cst_41 = arith.constant dense<0.000000e+00> : vector<8x32xf32>
    %110 = tpu.matmul %109, %108, %cst_41 {dimension_numbers = #tpu.dot_dimension_numbers<[1], [0], [0], [1], [0, 0, 1, 1], [], []>} : vector<8x32xbf16>, vector<32x32xbf16>, vector<8x32xf32> -> vector<8x32xf32>
    %c0_42 = arith.constant 0 : index
    %c0_43 = arith.constant 0 : index
    %111 = vector.load %arg11[%c0_42, %c0_43] : memref<1x32xf32, #tpu.memory_space<vmem>>, vector<1x32xf32>
    %112 = vector.broadcast %111 : vector<1x32xf32> to vector<8x32xf32>
    %113 = arith.addf %110, %112 : vector<8x32xf32>
    %114 = arith.extf %1 : vector<8x32xbf16> to vector<8x32xf32>
    %115 = arith.addf %113, %114 : vector<8x32xf32>
    %c0_44 = arith.constant 0 : index
    %c0_45 = arith.constant 0 : index
    %116 = vector.load %arg12[%c0_44, %c0_45] : memref<1x32xf32, #tpu.memory_space<vmem>>, vector<1x32xf32>
    %c0_46 = arith.constant 0 : index
    %c0_47 = arith.constant 0 : index
    %117 = vector.load %arg13[%c0_46, %c0_47] : memref<1x32xf32, #tpu.memory_space<vmem>>, vector<1x32xf32>
    %cst_48 = arith.constant dense<0.000000e+00> : vector<8xf32>
    %118 = vector.multi_reduction <add>, %115, %cst_48 [1] : vector<8x32xf32> to vector<8xf32>
    %119 = vector.shape_cast %118 : vector<8xf32> to vector<8x1xf32>
    %cst_49 = arith.constant 3.200000e+01 : f32
    %120 = vector.broadcast %cst_49 : f32 to vector<8x1xf32>
    %121 = arith.divf %119, %120 : vector<8x1xf32>
    %122 = vector.broadcast %121 : vector<8x1xf32> to vector<8x32xf32>
    %123 = arith.subf %115, %122 : vector<8x32xf32>
    %124 = arith.mulf %123, %123 : vector<8x32xf32>
    %cst_50 = arith.constant dense<0.000000e+00> : vector<8xf32>
    %125 = vector.multi_reduction <add>, %124, %cst_50 [1] : vector<8x32xf32> to vector<8xf32>
    %126 = vector.shape_cast %125 : vector<8xf32> to vector<8x1xf32>
    %cst_51 = arith.constant 3.200000e+01 : f32
    %127 = vector.broadcast %cst_51 : f32 to vector<8x1xf32>
    %128 = arith.divf %126, %127 : vector<8x1xf32>
    %129 = vector.broadcast %121 : vector<8x1xf32> to vector<8x32xf32>
    %130 = arith.subf %115, %129 : vector<8x32xf32>
    %cst_52 = arith.constant 9.99999974E-6 : f32
    %131 = vector.broadcast %cst_52 : f32 to vector<8x1xf32>
    %132 = arith.addf %128, %131 : vector<8x1xf32>
    %133 = math.rsqrt %132 : vector<8x1xf32>
    %134 = vector.broadcast %133 : vector<8x1xf32> to vector<8x32xf32>
    %135 = arith.mulf %130, %134 : vector<8x32xf32>
    %136 = vector.broadcast %116 : vector<1x32xf32> to vector<8x32xf32>
    %137 = arith.mulf %135, %136 : vector<8x32xf32>
    %138 = vector.broadcast %117 : vector<1x32xf32> to vector<8x32xf32>
    %139 = arith.addf %137, %138 : vector<8x32xf32>
    %c0_53 = arith.constant 0 : index
    %c0_54 = arith.constant 0 : index
    %140 = vector.load %arg14[%c0_53, %c0_54] : memref<32x64xbf16, #tpu.memory_space<vmem>>, vector<32x64xbf16>
    %141 = arith.truncf %139 : vector<8x32xf32> to vector<8x32xbf16>
    %cst_55 = arith.constant dense<0.000000e+00> : vector<8x64xf32>
    %142 = tpu.matmul %141, %140, %cst_55 {dimension_numbers = #tpu.dot_dimension_numbers<[1], [0], [0], [1], [0, 0, 1, 1], [], []>} : vector<8x32xbf16>, vector<32x64xbf16>, vector<8x64xf32> -> vector<8x64xf32>
    %c0_56 = arith.constant 0 : index
    %c0_57 = arith.constant 0 : index
    %143 = vector.load %arg15[%c0_56, %c0_57] : memref<1x64xf32, #tpu.memory_space<vmem>>, vector<1x64xf32>
    %144 = vector.broadcast %143 : vector<1x64xf32> to vector<8x64xf32>
    %145 = arith.addf %142, %144 : vector<8x64xf32>
    %cst_58 = arith.constant 0.000000e+00 : f32
    %146 = vector.broadcast %cst_58 : f32 to vector<8x64xf32>
    %147 = arith.maximumf %145, %146 : vector<8x64xf32>
    %c0_59 = arith.constant 0 : index
    %c0_60 = arith.constant 0 : index
    %148 = vector.load %arg16[%c0_59, %c0_60] : memref<64x32xbf16, #tpu.memory_space<vmem>>, vector<64x32xbf16>
    %149 = arith.truncf %147 : vector<8x64xf32> to vector<8x64xbf16>
    %cst_61 = arith.constant dense<0.000000e+00> : vector<8x32xf32>
    %150 = tpu.matmul %149, %148, %cst_61 {dimension_numbers = #tpu.dot_dimension_numbers<[1], [0], [0], [1], [0, 0, 1, 1], [], []>} : vector<8x64xbf16>, vector<64x32xbf16>, vector<8x32xf32> -> vector<8x32xf32>
    %c0_62 = arith.constant 0 : index
    %c0_63 = arith.constant 0 : index
    %151 = vector.load %arg17[%c0_62, %c0_63] : memref<1x32xf32, #tpu.memory_space<vmem>>, vector<1x32xf32>
    %152 = vector.broadcast %151 : vector<1x32xf32> to vector<8x32xf32>
    %153 = arith.addf %150, %152 : vector<8x32xf32>
    %154 = arith.addf %153, %139 : vector<8x32xf32>
    %c0_64 = arith.constant 0 : index
    %c0_65 = arith.constant 0 : index
    %155 = vector.load %arg18[%c0_64, %c0_65] : memref<1x32xf32, #tpu.memory_space<vmem>>, vector<1x32xf32>
    %c0_66 = arith.constant 0 : index
    %c0_67 = arith.constant 0 : index
    %156 = vector.load %arg19[%c0_66, %c0_67] : memref<1x32xf32, #tpu.memory_space<vmem>>, vector<1x32xf32>
    %cst_68 = arith.constant dense<0.000000e+00> : vector<8xf32>
    %157 = vector.multi_reduction <add>, %154, %cst_68 [1] : vector<8x32xf32> to vector<8xf32>
    %158 = vector.shape_cast %157 : vector<8xf32> to vector<8x1xf32>
    %cst_69 = arith.constant 3.200000e+01 : f32
    %159 = vector.broadcast %cst_69 : f32 to vector<8x1xf32>
    %160 = arith.divf %158, %159 : vector<8x1xf32>
    %161 = vector.broadcast %160 : vector<8x1xf32> to vector<8x32xf32>
    %162 = arith.subf %154, %161 : vector<8x32xf32>
    %163 = arith.mulf %162, %162 : vector<8x32xf32>
    %cst_70 = arith.constant dense<0.000000e+00> : vector<8xf32>
    %164 = vector.multi_reduction <add>, %163, %cst_70 [1] : vector<8x32xf32> to vector<8xf32>
    %165 = vector.shape_cast %164 : vector<8xf32> to vector<8x1xf32>
    %cst_71 = arith.constant 3.200000e+01 : f32
    %166 = vector.broadcast %cst_71 : f32 to vector<8x1xf32>
    %167 = arith.divf %165, %166 : vector<8x1xf32>
    %168 = vector.broadcast %160 : vector<8x1xf32> to vector<8x32xf32>
    %169 = arith.subf %154, %168 : vector<8x32xf32>
    %cst_72 = arith.constant 9.99999974E-6 : f32
    %170 = vector.broadcast %cst_72 : f32 to vector<8x1xf32>
    %171 = arith.addf %167, %170 : vector<8x1xf32>
    %172 = math.rsqrt %171 : vector<8x1xf32>
    %173 = vector.broadcast %172 : vector<8x1xf32> to vector<8x32xf32>
    %174 = arith.mulf %169, %173 : vector<8x32xf32>
    %175 = vector.broadcast %155 : vector<1x32xf32> to vector<8x32xf32>
    %176 = arith.mulf %174, %175 : vector<8x32xf32>
    %177 = vector.broadcast %156 : vector<1x32xf32> to vector<8x32xf32>
    %178 = arith.addf %176, %177 : vector<8x32xf32>
    %179 = arith.truncf %178 : vector<8x32xf32> to vector<8x32xbf16>
    %c0_73 = arith.constant 0 : index
    %c0_74 = arith.constant 0 : index
    %c0_75 = arith.constant 0 : index
    %180 = vector.load %arg20[%c0_73, %c0_74, %c0_75] : memref<1x8x32xbf16, #tpu.memory_space<vmem>>, vector<1x8x32xbf16>
    %181 = vector.shape_cast %180 : vector<1x8x32xbf16> to vector<8x32xbf16>
    %182 = vector.shape_cast %179 : vector<8x32xbf16> to vector<1x8x32xbf16>
    tpu.vector_store %arg20[%c0_73, %c0_74, %c0_75], %182 {strides = array<i32>} : memref<1x8x32xbf16, #tpu.memory_space<vmem>>, vector<1x8x32xbf16>,
    return
  }
  func.func @transform_0(%arg0: i32, %arg1: i32) -> (i32, i32, i32) {
    %c0_i32 = arith.constant 0 : i32
    %c0_i32_0 = arith.constant 0 : i32
    return %arg0, %arg1, %c0_i32 : i32, i32, i32
  }
  func.func @transform_1(%arg0: i32, %arg1: i32) -> (i32, i32, i32) {
    %c0_i32 = arith.constant 0 : i32
    %c0_i32_0 = arith.constant 0 : i32
    %c0_i32_1 = arith.constant 0 : i32
    return %arg0, %c0_i32, %c0_i32_0 : i32, i32, i32
  }
  func.func @transform_2(%arg0: i32, %arg1: i32) -> (i32, i32) {
    %c0_i32 = arith.constant 0 : i32
    %c0_i32_0 = arith.constant 0 : i32
    %c0_i32_1 = arith.constant 0 : i32
    return %c0_i32, %c0_i32_0 : i32, i32
  }
  func.func @transform_3(%arg0: i32, %arg1: i32) -> (i32, i32) {
    %c0_i32 = arith.constant 0 : i32
    %c0_i32_0 = arith.constant 0 : i32
    %c0_i32_1 = arith.constant 0 : i32
    return %c0_i32, %c0_i32_0 : i32, i32
  }
  func.func @transform_4(%arg0: i32, %arg1: i32) -> (i32, i32) {
    %c0_i32 = arith.constant 0 : i32
    %c0_i32_0 = arith.constant 0 : i32
    %c0_i32_1 = arith.constant 0 : i32
    return %c0_i32, %c0_i32_0 : i32, i32
  }
  func.func @transform_5(%arg0: i32, %arg1: i32) -> (i32, i32) {
    %c0_i32 = arith.constant 0 : i32
    %c0_i32_0 = arith.constant 0 : i32
    %c0_i32_1 = arith.constant 0 : i32
    return %c0_i32, %c0_i32_0 : i32, i32
  }
  func.func @transform_6(%arg0: i32, %arg1: i32) -> (i32, i32) {
    %c0_i32 = arith.constant 0 : i32
    %c0_i32_0 = arith.constant 0 : i32
    %c0_i32_1 = arith.constant 0 : i32
    return %c0_i32, %c0_i32_0 : i32, i32
  }
  func.func @transform_7(%arg0: i32, %arg1: i32) -> (i32, i32) {
    %c0_i32 = arith.constant 0 : i32
    %c0_i32_0 = arith.constant 0 : i32
    %c0_i32_1 = arith.constant 0 : i32
    return %c0_i32, %c0_i32_0 : i32, i32
  }
  func.func @transform_8(%arg0: i32, %arg1: i32) -> (i32, i32) {
    %c0_i32 = arith.constant 0 : i32
    %c0_i32_0 = arith.constant 0 : i32
    %c0_i32_1 = arith.constant 0 : i32
    return %c0_i32, %c0_i32_0 : i32, i32
  }
  func.func @transform_9(%arg0: i32, %arg1: i32) -> (i32, i32) {
    %c0_i32 = arith.constant 0 : i32
    %c0_i32_0 = arith.constant 0 : i32
    %c0_i32_1 = arith.constant 0 : i32
    return %c0_i32, %c0_i32_0 : i32, i32
  }
  func.func @transform_10(%arg0: i32, %arg1: i32) -> (i32, i32) {
    %c0_i32 = arith.constant 0 : i32
    %c0_i32_0 = arith.constant 0 : i32
    %c0_i32_1 = arith.constant 0 : i32
    return %c0_i32, %c0_i32_0 : i32, i32
  }
  func.func @transform_11(%arg0: i32, %arg1: i32) -> (i32, i32) {
    %c0_i32 = arith.constant 0 : i32
    %c0_i32_0 = arith.constant 0 : i32
    %c0_i32_1 = arith.constant 0 : i32
    return %c0_i32, %c0_i32_0 : i32, i32
  }
  func.func @transform_12(%arg0: i32, %arg1: i32) -> (i32, i32) {
    %c0_i32 = arith.constant 0 : i32
    %c0_i32_0 = arith.constant 0 : i32
    %c0_i32_1 = arith.constant 0 : i32
    return %c0_i32, %c0_i32_0 : i32, i32
  }
  func.func @transform_13(%arg0: i32, %arg1: i32) -> (i32, i32) {
    %c0_i32 = arith.constant 0 : i32
    %c0_i32_0 = arith.constant 0 : i32
    %c0_i32_1 = arith.constant 0 : i32
    return %c0_i32, %c0_i32_0 : i32, i32
  }
  func.func @transform_14(%arg0: i32, %arg1: i32) -> (i32, i32) {
    %c0_i32 = arith.constant 0 : i32
    %c0_i32_0 = arith.constant 0 : i32
    %c0_i32_1 = arith.constant 0 : i32
    return %c0_i32, %c0_i32_0 : i32, i32
  }
  func.func @transform_15(%arg0: i32, %arg1: i32) -> (i32, i32) {
    %c0_i32 = arith.constant 0 : i32
    %c0_i32_0 = arith.constant 0 : i32
    %c0_i32_1 = arith.constant 0 : i32
    return %c0_i32, %c0_i32_0 : i32, i32
  }
  func.func @transform_16(%arg0: i32, %arg1: i32) -> (i32, i32) {
    %c0_i32 = arith.constant 0 : i32
    %c0_i32_0 = arith.constant 0 : i32
    %c0_i32_1 = arith.constant 0 : i32
    return %c0_i32, %c0_i32_0 : i32, i32
  }
  func.func @transform_17(%arg0: i32, %arg1: i32) -> (i32, i32) {
    %c0_i32 = arith.constant 0 : i32
    %c0_i32_0 = arith.constant 0 : i32
    %c0_i32_1 = arith.constant 0 : i32
    return %c0_i32, %c0_i32_0 : i32, i32
  }
  func.func @transform_18(%arg0: i32, %arg1: i32) -> (i32, i32, i32) {
    %c0_i32 = arith.constant 0 : i32
    %c0_i32_0 = arith.constant 0 : i32
    return %arg0, %arg1, %c0_i32 : i32, i32, i32
  }
}

</mosaic_0001>

<llo_original>
// kernel: tpu_custom_call.1
$region0: #{tpu_custom_call.1}
  #allocation0 [shape = 'u32[]', space=smem, size = 0x4, offset = 0x4, fixed_abs, tag = 'smem constant byte address 0x4 - core index']
  #allocation1 [shape = 'u32[144,128]{1,0:T(1,128)}', space=vmem, size = 0x12000, scoped, tag = 'internal scratch']
  %s0 = inlined_call_operand.hbm [shape: bf16[2,8,32], index: 0, kind: input, shape index: {}]
  %s1 = inlined_call_operand.hbm [shape: bf16[2,8,32], index: 1, kind: input, shape index: {}]
  %s2 = inlined_call_operand.vmem [shape: bf16[32,32], index: 2, kind: input, shape index: {}]
  %s3 = inlined_call_operand.vmem [shape: f32[1,32], index: 3, kind: input, shape index: {}]
  %s4 = inlined_call_operand.vmem [shape: bf16[32,32], index: 4, kind: input, shape index: {}]
  %s5 = inlined_call_operand.vmem [shape: f32[1,32], index: 5, kind: input, shape index: {}]
  %s6 = inlined_call_operand.vmem [shape: bf16[32,32], index: 6, kind: input, shape index: {}]
  %s7 = inlined_call_operand.hbm [shape: f32[1,32], index: 7, kind: input, shape index: {}]
  %s8 = inlined_call_operand.hbm [shape: bf16[32,32], index: 8, kind: input, shape index: {}]
  %s9 = inlined_call_operand.hbm [shape: f32[1,32], index: 9, kind: input, shape index: {}]
  %s10 = inlined_call_operand.vmem [shape: f32[1,32], index: 10, kind: input, shape index: {}]
  %s11 = inlined_call_operand.vmem [shape: f32[1,32], index: 11, kind: input, shape index: {}]
  %s12 = inlined_call_operand.vmem [shape: bf16[32,64], index: 12, kind: input, shape index: {}]
  %s13 = inlined_call_operand.vmem [shape: f32[1,64], index: 13, kind: input, shape index: {}]
  %s14 = inlined_call_operand.vmem [shape: bf16[64,32], index: 14, kind: input, shape index: {}]
  %s15 = inlined_call_operand.vmem [shape: f32[1,32], index: 15, kind: input, shape index: {}]
  %s16 = inlined_call_operand.vmem [shape: f32[1,32], index: 16, kind: input, shape index: {}]
  %s17 = inlined_call_operand.vmem [shape: f32[1,32], index: 17, kind: input, shape index: {}]
  %s18 = inlined_call_operand.hbm [shape: bf16[2,8,32], index: 18, kind: output, shape index: {}]
  %s19 = sld [smem:[#allocation0]]
  $region125: #{tpu_custom_call.1} parent=0
    _
  %s21 = ssub.s32 1, %s19
  %s22 = scalar_select 0, %s21, %s19
  $region1: #{tpu_custom_call.1} parent=0
    #allocation2 [shape = 'u8[4096]{0}', space=vmem, size = 0x1000, scoped, tag = 'input window, operand 0']
    #allocation3 [shape = 's32[2]{0}', space=sflag, size = 0x8, scoped, tag = 'scoped memory for tpu_custom_call.1']
    #allocation4 [shape = 's32[2]{0}', space=sflag, size = 0x8, scoped, tag = 'scoped memory for tpu_custom_call.1']
    #allocation5 [shape = 'u8[4096]{0}', space=vmem, size = 0x1000, scoped, tag = 'input window, operand 1']
    #allocation6 [shape = 's32[2]{0}', space=sflag, size = 0x8, scoped, tag = 'scoped memory for tpu_custom_call.1']
    #allocation7 [shape = 'u8[512]{0}', space=vmem, size = 0x400, scoped, tag = 'input window, operand 7, single buffered']
    #allocation8 [shape = 'u8[8192]{0}', space=vmem, size = 0x2000, scoped, tag = 'input window, operand 8, single buffered']
    #allocation9 [shape = 's32[1]{0}', space=sflag, size = 0x4, scoped, tag = 'scoped memory for tpu_custom_call.1']
    #allocation10 [shape = 'u8[512]{0}', space=vmem, size = 0x400, scoped, tag = 'input window, operand 9, single buffered']
    #allocation11 [shape = 'u8[4096]{0}', space=vmem, size = 0x1000, scoped, tag = 'output window, operand 0']
    %23 = vsyncpa [#allocation3], 0
    %s24 = scalar_lea.sflag [#allocation3], 1
    %25 = vsyncpa %s24, 0
    %26 = vsyncpa [#allocation6], 0
    %s27 = scalar_lea.sflag [#allocation6], 1
    %28 = vsyncpa %s27, 0
    %29 = vsyncpa [#allocation9], 0
    %30 = vsyncpa [#allocation4], 0
    %s31 = scalar_lea.sflag [#allocation4], 1
    %32 = vsyncpa %s31, 0
    loop: start=0, step=1, limit=4
    $region2: #{tpu_custom_call.1} parent=1 // loop_pre_header
      _
    $region3: #{tpu_custom_call.1} parent=1 // loop_header
      %s34 = sphi 0, %s38
      %p35 = scmp.ge.s32.totalorder %s34, 4
      %s41 = sphi 0, %s53
      %s42 = sphi 0, %s49
      %s43 = sphi 0, %s41
      %s44 = sphi 0, %s42
      %s45 = sphi 0, %s43
      %s46 = sphi 0, %s44
      %s58 = sphi 0, %s60
      %s61 = sphi 0, %s58
      %s62 = sphi 0, %s61
      %s78 = sphi 0, %s62
      %s84 = sphi 0, %s86
      %s87 = sphi 0, %s84
      %s88 = sphi 0, %s87
      %s104 = sphi 0, %s88
      %s108 = sphi 0, %s108
      %s110 = sphi 0, %s108
      %s111 = sphi 0, %s110
      %s125 = sphi 0, %s111
      %s129 = sphi 0, %s129
      %s131 = sphi 0, %s129
      %s132 = sphi 0, %s131
      %s146 = sphi 0, %s132
      %s150 = sphi 0, %s150
      %s152 = sphi 0, %s150
      %s153 = sphi 0, %s152
      %s167 = sphi 0, %s153
      %s171 = sphi 0, %s171
      %s173 = sphi 0, %s171
      %s174 = sphi 0, %s173
      %s188 = sphi 0, %s174
      %s192 = sphi 0, %s192
      %s194 = sphi 0, %s192
      %s195 = sphi 0, %s194
      %s209 = sphi 0, %s195
      %s213 = sphi 0, %s213
      %s215 = sphi 0, %s213
      %s216 = sphi 0, %s215
      %s230 = sphi 0, %s216
      %s234 = sphi 0, %s234
      %s236 = sphi 0, %s234
      %s237 = sphi 0, %s236
      %s251 = sphi 0, %s237
      %s255 = sphi 0, %s255
      %s257 = sphi 0, %s255
      %s258 = sphi 0, %s257
      %s272 = sphi 0, %s258
      %s276 = sphi 0, %s276
      %s278 = sphi 0, %s276
      %s279 = sphi 0, %s278
      %s293 = sphi 0, %s279
      %s297 = sphi 0, %s297
      %s299 = sphi 0, %s297
      %s300 = sphi 0, %s299
      %s314 = sphi 0, %s300
      %s318 = sphi 0, %s318
      %s320 = sphi 0, %s318
      %s321 = sphi 0, %s320
      %s335 = sphi 0, %s321
      %s339 = sphi 0, %s339
      %s341 = sphi 0, %s339
      %s342 = sphi 0, %s341
      %s356 = sphi 0, %s342
      %s360 = sphi 0, %s360
      %s362 = sphi 0, %s360
      %s363 = sphi 0, %s362
      %s377 = sphi 0, %s363
      %s381 = sphi 0, %s381
      %s383 = sphi 0, %s381
      %s384 = sphi 0, %s383
      %s398 = sphi 0, %s384
      %s402 = sphi 0, %s402
      %s404 = sphi 0, %s402
      %s405 = sphi 0, %s404
      %s419 = sphi 0, %s405
      %s423 = sphi 0, %s423
      %s425 = sphi 0, %s423
      %s426 = sphi 0, %s425
      %s440 = sphi 0, %s426
      %s448 = sphi 0, %s450
      %s451 = sphi 0, %s448
      %s452 = sphi 0, %s451
      %s468 = sphi 0, %s452
    $region4: #{tpu_custom_call.1} parent=1 // loop_header_branch
      %37 = sbr.rel (%p35) target = $region8
    $region5: #{tpu_custom_call.1} parent=1 // loop_body
      %s39 = ssub.s32 %s34, 1
      %s40 = ssub.s32 %s34, 2
      %s47 = sadd.s32 1, %s42
      %p48 = scmp.ge.s32.totalorder %s47, 1
      %s49 = scalar_select %p48, 0, %s47
      %s50 = sadd.s32 1, %s41
      %s51 = scalar_select %p48, %s50, %s41
      %p52 = scmp.ge.s32.totalorder %s51, 2
      %s53 = scalar_select %p52, 0, %s51
      %s54 = ssub.s32 %s41, %s53
      %s55 = ssub.s32 %s42, %s49
      %s56 = sor.u32 %s54, %s55
      %p57 = scmp.eq.s32.totalorder %s56, 0
      %s59 = sadd.s32 %s58, 1
      %s60 = scalar_select %p57, %s58, %s59
      %p63 = pneg %p57
      %p64 = scmp.eq.s32.totalorder %s34, 1
      %p65 = por %p63, %p64
      %p66 = scmp.ne.s32.totalorder %s58, %s61
      %p67 = scmp.eq.s32.totalorder %s34, 0
      %p68 = por %p66, %p67
      %p69 = scmp.ne.s32.totalorder %s58, %s61
      %p70 = scmp.eq.s32.totalorder %s39, 1
      %p71 = por %p69, %p70
      %p72 = scmp.ne.s32.totalorder %s61, %s62
      %p73 = scmp.eq.s32.totalorder %s39, 0
      %p74 = por %p72, %p73
      %p75 = scmp.ne.s32.totalorder %s61, %s62
      %p76 = scmp.eq.s32.totalorder %s40, 1
      %p77 = por %p75, %p76
      %p79 = scmp.ne.s32.totalorder %s62, %s78
      %p80 = scmp.eq.s32.totalorder %s40, 0
      %p81 = por %p79, %p80
      %s82 = ssub.s32 %s41, %s53
      %p83 = scmp.eq.s32.totalorder %s82, 0
      %s85 = sadd.s32 %s84, 1
      %s86 = scalar_select %p83, %s84, %s85
      %p89 = pneg %p83
      %p90 = scmp.eq.s32.totalorder %s34, 1
      %p91 = por %p89, %p90
      %p92 = scmp.ne.s32.totalorder %s84, %s87
      %p93 = scmp.eq.s32.totalorder %s34, 0
      %p94 = por %p92, %p93
      %p95 = scmp.ne.s32.totalorder %s84, %s87
      %p96 = scmp.eq.s32.totalorder %s39, 1
      %p97 = por %p95, %p96
      %p98 = scmp.ne.s32.totalorder %s87, %s88
      %p99 = scmp.eq.s32.totalorder %s39, 0
      %p100 = por %p98, %p99
      %p101 = scmp.ne.s32.totalorder %s87, %s88
      %p102 = scmp.eq.s32.totalorder %s40, 1
      %p103 = por %p101, %p102
      %p105 = scmp.ne.s32.totalorder %s88, %s104
      %p106 = scmp.eq.s32.totalorder %s40, 0
      %p107 = por %p105, %p106
      %s109 = sadd.s32 %s108, 1
      %p112 = scmp.eq.s32.totalorder %s34, 1
      %p113 = scmp.ne.s32.totalorder %s108, %s110
      %p114 = scmp.eq.s32.totalorder %s34, 0
      %p115 = por %p113, %p114
      %p116 = scmp.ne.s32.totalorder %s108, %s110
      %p117 = scmp.eq.s32.totalorder %s39, 1
      %p118 = por %p116, %p117
      %p119 = scmp.ne.s32.totalorder %s110, %s111
      %p120 = scmp.eq.s32.totalorder %s39, 0
      %p121 = por %p119, %p120
      %p122 = scmp.ne.s32.totalorder %s110, %s111
      %p123 = scmp.eq.s32.totalorder %s40, 1
      %p124 = por %p122, %p123
      %p126 = scmp.ne.s32.totalorder %s111, %s125
      %p127 = scmp.eq.s32.totalorder %s40, 0
      %p128 = por %p126, %p127
      %s130 = sadd.s32 %s129, 1
      %p133 = scmp.eq.s32.totalorder %s34, 1
      %p134 = scmp.ne.s32.totalorder %s129, %s131
      %p135 = scmp.eq.s32.totalorder %s34, 0
      %p136 = por %p134, %p135
      %p137 = scmp.ne.s32.totalorder %s129, %s131
      %p138 = scmp.eq.s32.totalorder %s39, 1
      %p139 = por %p137, %p138
      %p140 = scmp.ne.s32.totalorder %s131, %s132
      %p141 = scmp.eq.s32.totalorder %s39, 0
      %p142 = por %p140, %p141
      %p143 = scmp.ne.s32.totalorder %s131, %s132
      %p144 = scmp.eq.s32.totalorder %s40, 1
      %p145 = por %p143, %p144
      %p147 = scmp.ne.s32.totalorder %s132, %s146
      %p148 = scmp.eq.s32.totalorder %s40, 0
      %p149 = por %p147, %p148
      %s151 = sadd.s32 %s150, 1
      %p154 = scmp.eq.s32.totalorder %s34, 1
      %p155 = scmp.ne.s32.totalorder %s150, %s152
      %p156 = scmp.eq.s32.totalorder %s34, 0
      %p157 = por %p155, %p156
      %p158 = scmp.ne.s32.totalorder %s150, %s152
      %p159 = scmp.eq.s32.totalorder %s39, 1
      %p160 = por %p158, %p159
      %p161 = scmp.ne.s32.totalorder %s152, %s153
      %p162 = scmp.eq.s32.totalorder %s39, 0
      %p163 = por %p161, %p162
      %p164 = scmp.ne.s32.totalorder %s152, %s153
      %p165 = scmp.eq.s32.totalorder %s40, 1
      %p166 = por %p164, %p165
      %p168 = scmp.ne.s32.totalorder %s153, %s167
      %p169 = scmp.eq.s32.totalorder %s40, 0
      %p170 = por %p168, %p169
      %s172 = sadd.s32 %s171, 1
      %p175 = scmp.eq.s32.totalorder %s34, 1
      %p176 = scmp.ne.s32.totalorder %s171, %s173
      %p177 = scmp.eq.s32.totalorder %s34, 0
      %p178 = por %p176, %p177
      %p179 = scmp.ne.s32.totalorder %s171, %s173
      %p180 = scmp.eq.s32.totalorder %s39, 1
      %p181 = por %p179, %p180
      %p182 = scmp.ne.s32.totalorder %s173, %s174
      %p183 = scmp.eq.s32.totalorder %s39, 0
      %p184 = por %p182, %p183
      %p185 = scmp.ne.s32.totalorder %s173, %s174
      %p186 = scmp.eq.s32.totalorder %s40, 1
      %p187 = por %p185, %p186
      %p189 = scmp.ne.s32.totalorder %s174, %s188
      %p190 = scmp.eq.s32.totalorder %s40, 0
      %p191 = por %p189, %p190
      %s193 = sadd.s32 %s192, 1
      %p196 = scmp.eq.s32.totalorder %s34, 1
      %p197 = scmp.ne.s32.totalorder %s192, %s194
      %p198 = scmp.eq.s32.totalorder %s34, 0
      %p199 = por %p197, %p198
      %p200 = scmp.ne.s32.totalorder %s192, %s194
      %p201 = scmp.eq.s32.totalorder %s39, 1
      %p202 = por %p200, %p201
      %p203 = scmp.ne.s32.totalorder %s194, %s195
      %p204 = scmp.eq.s32.totalorder %s39, 0
      %p205 = por %p203, %p204
      %p206 = scmp.ne.s32.totalorder %s194, %s195
      %p207 = scmp.eq.s32.totalorder %s40, 1
      %p208 = por %p206, %p207
      %p210 = scmp.ne.s32.totalorder %s195, %s209
      %p211 = scmp.eq.s32.totalorder %s40, 0
      %p212 = por %p210, %p211
      %s214 = sadd.s32 %s213, 1
      %p217 = scmp.eq.s32.totalorder %s34, 1
      %p218 = scmp.ne.s32.totalorder %s213, %s215
      %p219 = scmp.eq.s32.totalorder %s34, 0
      %p220 = por %p218, %p219
      %p221 = scmp.ne.s32.totalorder %s213, %s215
      %p222 = scmp.eq.s32.totalorder %s39, 1
      %p223 = por %p221, %p222
      %p224 = scmp.ne.s32.totalorder %s215, %s216
      %p225 = scmp.eq.s32.totalorder %s39, 0
      %p226 = por %p224, %p225
      %p227 = scmp.ne.s32.totalorder %s215, %s216
      %p228 = scmp.eq.s32.totalorder %s40, 1
      %p229 = por %p227, %p228
      %p231 = scmp.ne.s32.totalorder %s216, %s230
      %p232 = scmp.eq.s32.totalorder %s40, 0
      %p233 = por %p231, %p232
      %s235 = sadd.s32 %s234, 1
      %p238 = scmp.eq.s32.totalorder %s34, 1
      %p239 = scmp.ne.s32.totalorder %s234, %s236
      %p240 = scmp.eq.s32.totalorder %s34, 0
      %p241 = por %p239, %p240
      %p242 = scmp.ne.s32.totalorder %s234, %s236
      %p243 = scmp.eq.s32.totalorder %s39, 1
      %p244 = por %p242, %p243
      %p245 = scmp.ne.s32.totalorder %s236, %s237
      %p246 = scmp.eq.s32.totalorder %s39, 0
      %p247 = por %p245, %p246
      %p248 = scmp.ne.s32.totalorder %s236, %s237
      %p249 = scmp.eq.s32.totalorder %s40, 1
      %p250 = por %p248, %p249
      %p252 = scmp.ne.s32.totalorder %s237, %s251
      %p253 = scmp.eq.s32.totalorder %s40, 0
      %p254 = por %p252, %p253
      %s256 = sadd.s32 %s255, 1
      %p259 = scmp.eq.s32.totalorder %s34, 1
      %p260 = scmp.ne.s32.totalorder %s255, %s257
      %p261 = scmp.eq.s32.totalorder %s34, 0
      %p262 = por %p260, %p261
      %p263 = scmp.ne.s32.totalorder %s255, %s257
      %p264 = scmp.eq.s32.totalorder %s39, 1
      %p265 = por %p263, %p264
      %p266 = scmp.ne.s32.totalorder %s257, %s258
      %p267 = scmp.eq.s32.totalorder %s39, 0
      %p268 = por %p266, %p267
      %p269 = scmp.ne.s32.totalorder %s257, %s258
      %p270 = scmp.eq.s32.totalorder %s40, 1
      %p271 = por %p269, %p270
      %p273 = scmp.ne.s32.totalorder %s258, %s272
      %p274 = scmp.eq.s32.totalorder %s40, 0
      %p275 = por %p273, %p274
      %s277 = sadd.s32 %s276, 1
      %p280 = scmp.eq.s32.totalorder %s34, 1
      %p281 = scmp.ne.s32.totalorder %s276, %s278
      %p282 = scmp.eq.s32.totalorder %s34, 0
      %p283 = por %p281, %p282
      %p284 = scmp.ne.s32.totalorder %s276, %s278
      %p285 = scmp.eq.s32.totalorder %s39, 1
      %p286 = por %p284, %p285
      %p287 = scmp.ne.s32.totalorder %s278, %s279
      %p288 = scmp.eq.s32.totalorder %s39, 0
      %p289 = por %p287, %p288
      %p290 = scmp.ne.s32.totalorder %s278, %s279
      %p291 = scmp.eq.s32.totalorder %s40, 1
      %p292 = por %p290, %p291
      %p294 = scmp.ne.s32.totalorder %s279, %s293
      %p295 = scmp.eq.s32.totalorder %s40, 0
      %p296 = por %p294, %p295
      %s298 = sadd.s32 %s297, 1
      %p301 = scmp.eq.s32.totalorder %s34, 1
      %p302 = scmp.ne.s32.totalorder %s297, %s299
      %p303 = scmp.eq.s32.totalorder %s34, 0
      %p304 = por %p302, %p303
      %p305 = scmp.ne.s32.totalorder %s297, %s299
      %p306 = scmp.eq.s32.totalorder %s39, 1
      %p307 = por %p305, %p306
      %p308 = scmp.ne.s32.totalorder %s299, %s300
      %p309 = scmp.eq.s32.totalorder %s39, 0
      %p310 = por %p308, %p309
      %p311 = scmp.ne.s32.totalorder %s299, %s300
      %p312 = scmp.eq.s32.totalorder %s40, 1
      %p313 = por %p311, %p312
      %p315 = scmp.ne.s32.totalorder %s300, %s314
      %p316 = scmp.eq.s32.totalorder %s40, 0
      %p317 = por %p315, %p316
      %s319 = sadd.s32 %s318, 1
      %p322 = scmp.eq.s32.totalorder %s34, 1
      %p323 = scmp.ne.s32.totalorder %s318, %s320
      %p324 = scmp.eq.s32.totalorder %s34, 0
      %p325 = por %p323, %p324
      %p326 = scmp.ne.s32.totalorder %s318, %s320
      %p327 = scmp.eq.s32.totalorder %s39, 1
      %p328 = por %p326, %p327
      %p329 = scmp.ne.s32.totalorder %s320, %s321
      %p330 = scmp.eq.s32.totalorder %s39, 0
      %p331 = por %p329, %p330
      %p332 = scmp.ne.s32.totalorder %s320, %s321
      %p333 = scmp.eq.s32.totalorder %s40, 1
      %p334 = por %p332, %p333
      %p336 = scmp.ne.s32.totalorder %s321, %s335
      %p337 = scmp.eq.s32.totalorder %s40, 0
      %p338 = por %p336, %p337
      %s340 = sadd.s32 %s339, 1
      %p343 = scmp.eq.s32.totalorder %s34, 1
      %p344 = scmp.ne.s32.totalorder %s339, %s341
      %p345 = scmp.eq.s32.totalorder %s34, 0
      %p346 = por %p344, %p345
      %p347 = scmp.ne.s32.totalorder %s339, %s341
      %p348 = scmp.eq.s32.totalorder %s39, 1
      %p349 = por %p347, %p348
      %p350 = scmp.ne.s32.totalorder %s341, %s342
      %p351 = scmp.eq.s32.totalorder %s39, 0
      %p352 = por %p350, %p351
      %p353 = scmp.ne.s32.totalorder %s341, %s342
      %p354 = scmp.eq.s32.totalorder %s40, 1
      %p355 = por %p353, %p354
      %p357 = scmp.ne.s32.totalorder %s342, %s356
      %p358 = scmp.eq.s32.totalorder %s40, 0
      %p359 = por %p357, %p358
      %s361 = sadd.s32 %s360, 1
      %p364 = scmp.eq.s32.totalorder %s34, 1
      %p365 = scmp.ne.s32.totalorder %s360, %s362
      %p366 = scmp.eq.s32.totalorder %s34, 0
      %p367 = por %p365, %p366
      %p368 = scmp.ne.s32.totalorder %s360, %s362
      %p369 = scmp.eq.s32.totalorder %s39, 1
      %p370 = por %p368, %p369
      %p371 = scmp.ne.s32.totalorder %s362, %s363
      %p372 = scmp.eq.s32.totalorder %s39, 0
      %p373 = por %p371, %p372
      %p374 = scmp.ne.s32.totalorder %s362, %s363
      %p375 = scmp.eq.s32.totalorder %s40, 1
      %p376 = por %p374, %p375
      %p378 = scmp.ne.s32.totalorder %s363, %s377
      %p379 = scmp.eq.s32.totalorder %s40, 0
      %p380 = por %p378, %p379
      %s382 = sadd.s32 %s381, 1
      %p385 = scmp.eq.s32.totalorder %s34, 1
      %p386 = scmp.ne.s32.totalorder %s381, %s383
      %p387 = scmp.eq.s32.totalorder %s34, 0
      %p388 = por %p386, %p387
      %p389 = scmp.ne.s32.totalorder %s381, %s383
      %p390 = scmp.eq.s32.totalorder %s39, 1
      %p391 = por %p389, %p390
      %p392 = scmp.ne.s32.totalorder %s383, %s384
      %p393 = scmp.eq.s32.totalorder %s39, 0
      %p394 = por %p392, %p393
      %p395 = scmp.ne.s32.totalorder %s383, %s384
      %p396 = scmp.eq.s32.totalorder %s40, 1
      %p397 = por %p395, %p396
      %p399 = scmp.ne.s32.totalorder %s384, %s398
      %p400 = scmp.eq.s32.totalorder %s40, 0
      %p401 = por %p399, %p400
      %s403 = sadd.s32 %s402, 1
      %p406 = scmp.eq.s32.totalorder %s34, 1
      %p407 = scmp.ne.s32.totalorder %s402, %s404
      %p408 = scmp.eq.s32.totalorder %s34, 0
      %p409 = por %p407, %p408
      %p410 = scmp.ne.s32.totalorder %s402, %s404
      %p411 = scmp.eq.s32.totalorder %s39, 1
      %p412 = por %p410, %p411
      %p413 = scmp.ne.s32.totalorder %s404, %s405
      %p414 = scmp.eq.s32.totalorder %s39, 0
      %p415 = por %p413, %p414
      %p416 = scmp.ne.s32.totalorder %s404, %s405
      %p417 = scmp.eq.s32.totalorder %s40, 1
      %p418 = por %p416, %p417
      %p420 = scmp.ne.s32.totalorder %s405, %s419
      %p421 = scmp.eq.s32.totalorder %s40, 0
      %p422 = por %p420, %p421
      %s424 = sadd.s32 %s423, 1
      %p427 = scmp.eq.s32.totalorder %s34, 1
      %p428 = scmp.ne.s32.totalorder %s423, %s425
      %p429 = scmp.eq.s32.totalorder %s34, 0
      %p430 = por %p428, %p429
      %p431 = scmp.ne.s32.totalorder %s423, %s425
      %p432 = scmp.eq.s32.totalorder %s39, 1
      %p433 = por %p431, %p432
      %p434 = scmp.ne.s32.totalorder %s425, %s426
      %p435 = scmp.eq.s32.totalorder %s39, 0
      %p436 = por %p434, %p435
      %p437 = scmp.ne.s32.totalorder %s425, %s426
      %p438 = scmp.eq.s32.totalorder %s40, 1
      %p439 = por %p437, %p438
      %p441 = scmp.ne.s32.totalorder %s426, %s440
      %p442 = scmp.eq.s32.totalorder %s40, 0
      %p443 = por %p441, %p442
      %s444 = ssub.s32 %s41, %s53
      %s445 = ssub.s32 %s42, %s49
      %s446 = sor.u32 %s444, %s445
      %p447 = scmp.eq.s32.totalorder %s446, 0
      %s449 = sadd.s32 %s448, 1
      %s450 = scalar_select %p447, %s448, %s449
      %p453 = pneg %p447
      %p454 = scmp.eq.s32.totalorder %s34, 1
      %p455 = por %p453, %p454
      %p456 = scmp.ne.s32.totalorder %s448, %s451
      %p457 = scmp.eq.s32.totalorder %s34, 0
      %p458 = por %p456, %p457
      %p459 = scmp.ne.s32.totalorder %s448, %s451
      %p460 = scmp.eq.s32.totalorder %s39, 1
      %p461 = por %p459, %p460
      %p462 = scmp.ne.s32.totalorder %s451, %s452
      %p463 = scmp.eq.s32.totalorder %s39, 0
      %p464 = por %p462, %p463
      %p465 = scmp.ne.s32.totalorder %s451, %s452
      %p466 = scmp.eq.s32.totalorder %s40, 1
      %p467 = por %p465, %p466
      %p469 = scmp.ne.s32.totalorder %s452, %s468
      %p470 = scmp.eq.s32.totalorder %s40, 0
      %p471 = por %p469, %p470
      %p472 = scmp.le.s32.totalorder 1, %s34
      %p473 = scmp.lt.s32.totalorder %s34, 3
      %p474 = pnand %p472, %p473
      %p475 = pneg %p474
      // Predicated region
      $region9: #{tpu_custom_call.1} parent=5 // pred_check
        _
      $region10: #{tpu_custom_call.1} parent=5 // pred_check_branch
        %477 = sbr.rel (%p474) target = $region12
      $region11: #{tpu_custom_call.1} parent=5 // pred_region
        %s478 = ssub.s32 %s34, 1
        // Predicated region
        $region13: #{tpu_custom_call.1} parent=11 // pred_check
          %p479 = pneg %p121
        $region14: #{tpu_custom_call.1} parent=11 // pred_check_branch
          %481 = sbr.rel (%p479) target = $region16
        $region15: #{tpu_custom_call.1} parent=11 // pred_region
          _
        $region16: #{tpu_custom_call.1} parent=11 // pred_fallthru
          _
        // Predicated region
        $region17: #{tpu_custom_call.1} parent=11 // pred_check
          %p482 = pneg %p142
        $region18: #{tpu_custom_call.1} parent=11 // pred_check_branch
          %484 = sbr.rel (%p482) target = $region20
        $region19: #{tpu_custom_call.1} parent=11 // pred_region
          _
        $region20: #{tpu_custom_call.1} parent=11 // pred_fallthru
          _
        // Predicated region
        $region21: #{tpu_custom_call.1} parent=11 // pred_check
          %p485 = pneg %p163
        $region22: #{tpu_custom_call.1} parent=11 // pred_check_branch
          %487 = sbr.rel (%p485) target = $region24
        $region23: #{tpu_custom_call.1} parent=11 // pred_region
          _
        $region24: #{tpu_custom_call.1} parent=11 // pred_fallthru
          _
        // Predicated region
        $region25: #{tpu_custom_call.1} parent=11 // pred_check
          %p488 = pneg %p184
        $region26: #{tpu_custom_call.1} parent=11 // pred_check_branch
          %490 = sbr.rel (%p488) target = $region28
        $region27: #{tpu_custom_call.1} parent=11 // pred_region
          _
        $region28: #{tpu_custom_call.1} parent=11 // pred_fallthru
          _
        // Predicated region
        $region29: #{tpu_custom_call.1} parent=11 // pred_check
          %p491 = pneg %p205
        $region30: #{tpu_custom_call.1} parent=11 // pred_check_branch
          %493 = sbr.rel (%p491) target = $region32
        $region31: #{tpu_custom_call.1} parent=11 // pred_region
          _
        $region32: #{tpu_custom_call.1} parent=11 // pred_fallthru
          _
        // Predicated region
        $region33: #{tpu_custom_call.1} parent=11 // pred_check
          %p494 = pneg %p226
        $region34: #{tpu_custom_call.1} parent=11 // pred_check_branch
          %496 = sbr.rel (%p494) target = $region36
        $region35: #{tpu_custom_call.1} parent=11 // pred_region
          %s498 = ssub.s32 16, 16
          %499 = vsyncadd [#allocation6], %s498
          %s501 = sshll.u32 [#allocation7], 4
          %s502 = int_to_ptr.vmem [resolvable:$true] %s501
          %504 = dma.hbm_to_vmem [thread:$0]  %s7, 16, %s502, [#allocation6]
        $region36: #{tpu_custom_call.1} parent=11 // pred_fallthru
          _
        // Predicated region
        $region37: #{tpu_custom_call.1} parent=11 // pred_check
          %p505 = pneg %p247
        $region38: #{tpu_custom_call.1} parent=11 // pred_check_branch
          %507 = sbr.rel (%p505) target = $region40
        $region39: #{tpu_custom_call.1} parent=11 // pred_region
          %s509 = ssub.s32 256, 256
          %510 = vsyncadd [#allocation9], %s509
          %s511 = sshll.u32 [#allocation8], 4
          %s512 = int_to_ptr.vmem [resolvable:$true] %s511
          %517 = dma.hbm_to_vmem [thread:$0]  %s8, 256, %s512, [#allocation9], 64, 64, 4
        $region40: #{tpu_custom_call.1} parent=11 // pred_fallthru
          _
        // Predicated region
        $region41: #{tpu_custom_call.1} parent=11 // pred_check
          %p518 = pneg %p268
        $region42: #{tpu_custom_call.1} parent=11 // pred_check_branch
          %520 = sbr.rel (%p518) target = $region44
        $region43: #{tpu_custom_call.1} parent=11 // pred_region
          %s522 = ssub.s32 16, 16
          %523 = vsyncadd [#allocation9], %s522
          %s525 = sshll.u32 [#allocation10], 4
          %s526 = int_to_ptr.vmem [resolvable:$true] %s525
          %528 = dma.hbm_to_vmem [thread:$0]  %s9, 16, %s526, [#allocation9]
        $region44: #{tpu_custom_call.1} parent=11 // pred_fallthru
          _
        // Predicated region
        $region45: #{tpu_custom_call.1} parent=11 // pred_check
          %p529 = pneg %p289
        $region46: #{tpu_custom_call.1} parent=11 // pred_check_branch
          %531 = sbr.rel (%p529) target = $region48
        $region47: #{tpu_custom_call.1} parent=11 // pred_region
          _
        $region48: #{tpu_custom_call.1} parent=11 // pred_fallthru
          _
        // Predicated region
        $region49: #{tpu_custom_call.1} parent=11 // pred_check
          %p532 = pneg %p310
        $region50: #{tpu_custom_call.1} parent=11 // pred_check_branch
          %534 = sbr.rel (%p532) target = $region52
        $region51: #{tpu_custom_call.1} parent=11 // pred_region
          _
        $region52: #{tpu_custom_call.1} parent=11 // pred_fallthru
          _
        // Predicated region
        $region53: #{tpu_custom_call.1} parent=11 // pred_check
          %p535 = pneg %p331
        $region54: #{tpu_custom_call.1} parent=11 // pred_check_branch
          %537 = sbr.rel (%p535) target = $region56
        $region55: #{tpu_custom_call.1} parent=11 // pred_region
          _
        $region56: #{tpu_custom_call.1} parent=11 // pred_fallthru
          _
        // Predicated region
        $region57: #{tpu_custom_call.1} parent=11 // pred_check
          %p538 = pneg %p352
        $region58: #{tpu_custom_call.1} parent=11 // pred_check_branch
          %540 = sbr.rel (%p538) target = $region60
        $region59: #{tpu_custom_call.1} parent=11 // pred_region
          _
        $region60: #{tpu_custom_call.1} parent=11 // pred_fallthru
          _
        // Predicated region
        $region61: #{tpu_custom_call.1} parent=11 // pred_check
          %p541 = pneg %p373
        $region62: #{tpu_custom_call.1} parent=11 // pred_check_branch
          %543 = sbr.rel (%p541) target = $region64
        $region63: #{tpu_custom_call.1} parent=11 // pred_region
          _
        $region64: #{tpu_custom_call.1} parent=11 // pred_fallthru
          _
        // Predicated region
        $region65: #{tpu_custom_call.1} parent=11 // pred_check
          %p544 = pneg %p394
        $region66: #{tpu_custom_call.1} parent=11 // pred_check_branch
          %546 = sbr.rel (%p544) target = $region68
        $region67: #{tpu_custom_call.1} parent=11 // pred_region
          _
        $region68: #{tpu_custom_call.1} parent=11 // pred_fallthru
          _
        // Predicated region
        $region69: #{tpu_custom_call.1} parent=11 // pred_check
          %p547 = pneg %p415
        $region70: #{tpu_custom_call.1} parent=11 // pred_check_branch
          %549 = sbr.rel (%p547) target = $region72
        $region71: #{tpu_custom_call.1} parent=11 // pred_region
          _
        $region72: #{tpu_custom_call.1} parent=11 // pred_fallthru
          _
        // Predicated region
        $region73: #{tpu_custom_call.1} parent=11 // pred_check
          %p550 = pneg %p436
        $region74: #{tpu_custom_call.1} parent=11 // pred_check_branch
          %552 = sbr.rel (%p550) target = $region76
        $region75: #{tpu_custom_call.1} parent=11 // pred_region
          _
        $region76: #{tpu_custom_call.1} parent=11 // pred_fallthru
          _
      $region12: #{tpu_custom_call.1} parent=5 // pred_fallthru
        _
      %p553 = scmp.lt.s32.totalorder %s34, 2
      // Predicated region
      $region77: #{tpu_custom_call.1} parent=5 // pred_check
        %p554 = pneg %p553
      $region78: #{tpu_custom_call.1} parent=5 // pred_check_branch
        %556 = sbr.rel (%p554) target = $region80
      $region79: #{tpu_custom_call.1} parent=5 // pred_region
        // Predicated region
        $region81: #{tpu_custom_call.1} parent=79 // pred_check
          %p557 = pneg %p68
        $region82: #{tpu_custom_call.1} parent=79 // pred_check_branch
          %559 = sbr.rel (%p557) target = $region84
        $region83: #{tpu_custom_call.1} parent=79 // pred_region
          %s560 = sand.u32 %s58, 1
          %s561 = scalar_lea.sflag [#allocation3], %s560
          %s562 = sand.u32 %s58, 1
          %s563 = smul.addr %s562, 4
          %s564 = scalar_lea.vmem [#allocation2], %s563
          %s566 = ssub.s32 64, 64
          %567 = vsyncadd %s561, %s566
          %s568 = sadd.s32 %s42, %s41
          %s569 = smul.addr %s568, 64
          %s570 = scalar_lea.hbm %s0, %s569
          %s572 = sshll.u32 %s564, 4
          %s573 = int_to_ptr.vmem [resolvable:$true] %s572
          %575 = dma.hbm_to_vmem [thread:$0]  %s570, 64, %s573, %s561
        $region84: #{tpu_custom_call.1} parent=79 // pred_fallthru
          _
        // Predicated region
        $region85: #{tpu_custom_call.1} parent=79 // pred_check
          %p576 = pneg %p94
        $region86: #{tpu_custom_call.1} parent=79 // pred_check_branch
          %578 = sbr.rel (%p576) target = $region88
        $region87: #{tpu_custom_call.1} parent=79 // pred_region
          %s579 = sand.u32 %s34, 1
          %s580 = scalar_lea.sflag [#allocation6], %s579
          %s581 = sand.u32 %s84, 1
          %s582 = smul.addr %s581, 4
          %s583 = scalar_lea.vmem [#allocation5], %s582
          %s585 = ssub.s32 64, 64
          %586 = vsyncadd %s580, %s585
          %s587 = smul.addr %s41, 64
          %s588 = scalar_lea.hbm %s1, %s587
          %s590 = sshll.u32 %s583, 4
          %s591 = int_to_ptr.vmem [resolvable:$true] %s590
          %593 = dma.hbm_to_vmem [thread:$0]  %s588, 64, %s591, %s580
        $region88: #{tpu_custom_call.1} parent=79 // pred_fallthru
          _
      $region80: #{tpu_custom_call.1} parent=5 // pred_fallthru
        _
      %p594 = scmp.le.s32.totalorder 1, %s34
      %p595 = scmp.lt.s32.totalorder %s34, 3
      %p596 = pnand %p594, %p595
      %p597 = pneg %p596
      // Predicated region
      $region89: #{tpu_custom_call.1} parent=5 // pred_check
        _
      $region90: #{tpu_custom_call.1} parent=5 // pred_check_branch
        %599 = sbr.rel (%p596) target = $region92
      $region91: #{tpu_custom_call.1} parent=5 // pred_region
        %s600 = ssub.s32 %s34, 1
        %s601 = sand.u32 %s61, 1
        %s602 = scalar_lea.sflag [#allocation3], %s601
        %s603 = sand.u32 %s61, 1
        %s604 = smul.addr %s603, 4
        %s605 = scalar_lea.vmem [#allocation2], %s604
        // Predicated region
        $region93: #{tpu_custom_call.1} parent=91 // pred_check
          %p606 = pneg %p74
        $region94: #{tpu_custom_call.1} parent=91 // pred_check_branch
          %608 = sbr.rel (%p606) target = $region96
        $region95: #{tpu_custom_call.1} parent=91 // pred_region
          %609 = dma.done %s602, 64
        $region96: #{tpu_custom_call.1} parent=91 // pred_fallthru
          _
        %s610 = sand.u32 %s39, 1
        %s611 = scalar_lea.sflag [#allocation6], %s610
        %s612 = sand.u32 %s87, 1
        %s613 = smul.addr %s612, 4
        %s614 = scalar_lea.vmem [#allocation5], %s613
        // Predicated region
        $region97: #{tpu_custom_call.1} parent=91 // pred_check
          %p615 = pneg %p100
        $region98: #{tpu_custom_call.1} parent=91 // pred_check_branch
          %617 = sbr.rel (%p615) target = $region100
        $region99: #{tpu_custom_call.1} parent=91 // pred_region
          %618 = dma.done %s611, 64
        $region100: #{tpu_custom_call.1} parent=91 // pred_fallthru
          _
        // Predicated region
        $region101: #{tpu_custom_call.1} parent=91 // pred_check
          %p619 = pneg %p226
        $region102: #{tpu_custom_call.1} parent=91 // pred_check_branch
          %621 = sbr.rel (%p619) target = $region104
        $region103: #{tpu_custom_call.1} parent=91 // pred_region
          %622 = dma.done [#allocation6], 16
        $region104: #{tpu_custom_call.1} parent=91 // pred_fallthru
          _
        // Predicated region
        $region105: #{tpu_custom_call.1} parent=91 // pred_check
          %p623 = pneg %p247
        $region106: #{tpu_custom_call.1} parent=91 // pred_check_branch
          %625 = sbr.rel (%p623) target = $region108
        $region107: #{tpu_custom_call.1} parent=91 // pred_region
          %626 = dma.done [#allocation9], 256
        $region108: #{tpu_custom_call.1} parent=91 // pred_fallthru
          _
        // Predicated region
        $region109: #{tpu_custom_call.1} parent=91 // pred_check
          %p627 = pneg %p268
        $region110: #{tpu_custom_call.1} parent=91 // pred_check_branch
          %629 = sbr.rel (%p627) target = $region112
        $region111: #{tpu_custom_call.1} parent=91 // pred_region
          %630 = dma.done [#allocation9], 16
        $region112: #{tpu_custom_call.1} parent=91 // pred_fallthru
          _
        %s631 = sand.u32 %s61, 1
        %s632 = scalar_lea.sflag [#allocation3], %s631
        %s633 = sand.u32 %s61, 1
        %s634 = smul.addr %s633, 4
        %s635 = scalar_lea.vmem [#allocation2], %s634
        %p636 = pneg %p74
        %p637 = pneg %p71
        %s638 = sand.u32 %s39, 1
        %s639 = scalar_lea.sflag [#allocation6], %s638
        %s640 = sand.u32 %s87, 1
        %s641 = smul.addr %s640, 4
        %s642 = scalar_lea.vmem [#allocation5], %s641
        %p643 = pneg %p100
        %p644 = pneg %p97
        %p645 = pneg %p121
        %p646 = pneg %p118
        %p647 = pneg %p142
        %p648 = pneg %p139
        %p649 = pneg %p163
        %p650 = pneg %p160
        %p651 = pneg %p184
        %p652 = pneg %p181
        %p653 = pneg %p205
        %p654 = pneg %p202
        %p655 = pneg %p226
        %p656 = pneg %p223
        %p657 = pneg %p247
        %p658 = pneg %p244
        %p659 = pneg %p268
        %p660 = pneg %p265
        %p661 = pneg %p289
        %p662 = pneg %p286
        %p663 = pneg %p310
        %p664 = pneg %p307
        %p665 = pneg %p331
        %p666 = pneg %p328
        %p667 = pneg %p352
        %p668 = pneg %p349
        %p669 = pneg %p373
        %p670 = pneg %p370
        %p671 = pneg %p394
        %p672 = pneg %p391
        %p673 = pneg %p415
        %p674 = pneg %p412
        %p675 = pneg %p436
        %p676 = pneg %p433
        %p677 = pneg %p464
        %p678 = pneg %p461
        %s679 = sand.u32 %s451, 1
        %s680 = scalar_lea.sflag [#allocation4], %s679
        %s681 = sand.u32 %s451, 1
        %s682 = smul.addr %s681, 4
        %s683 = scalar_lea.vmem [#allocation11], %s682
        %v685 = vld [vmem:[%s605] sm:$0xf]
        %v686 = vld [vmem:[%s614] sm:$0xf]
        %v687 = vld [vmem:[%s2] sm:$0xf]
        %v688 = vld [vmem:[%s2 + $0x4] sm:$0xf]
        %v689 = vld [vmem:[%s2 + $0x8] sm:$0xf]
        %v690 = vld [vmem:[%s2 + $0xc] sm:$0xf]
        %v691 = vld [vmem:[%s3] sm:$0x1]
        %v693 = vlaneseq
        %v694 = vshrl.u32 %v693, 7
        %v695 = vsub.s32 0, %v694
        %v696 = vrot.slane %v691, %v695
        %v702 = vunpack.c.l.b16 %v687
        %v703 = vunpack.c.l.b16 %v688
        %v704 = vunpack.c.l.b16 %v689
        %v705 = vunpack.c.l.b16 %v690
        %v706 = vpack.c.b16 %v703, %v702
        %v707 = vpack.c.b16 %v705, %v704
        %vm710 = vcmask 261120
        %v712 = vsel %vm710, %v685, 0
        %714 = vmatprep.subr.bf16.mxu0 0
        %715 = vmatpush1.bf16.msra.mxu0 %v706
        %716 = vmatprep.subr.bf16.mxu0 0
        %717 = vmatpush1.bf16.msra.mxu0 %v707
        %718 = vmatprep.subr.bf16.mxu0 0
        %719 = vmatpush1.bf16.msra.mxu0 0
        %720 = vmatprep.subr.bf16.mxu0 0
        %721 = vmatpush1.bf16.msra.mxu0 0
        %722 = vmatprep.subr.bf16.mxu0 0
        %723 = vmatpush1.bf16.msra.mxu0 0
        %724 = vmatprep.subr.bf16.mxu0 0
        %725 = vmatpush1.bf16.msra.mxu0 0
        %726 = vmatprep.subr.bf16.mxu0 0
        %727 = vmatpush1.bf16.msra.mxu0 0
        %728 = vmatprep.subr.bf16.mxu0 0
        %729 = vmatpush1.bf16.msra.mxu0 0
        %730 = vmatprep.subr.bf16.mxu0 0
        %731 = vmatpush1.bf16.msra.mxu0 0
        %732 = vmatprep.subr.bf16.mxu0 0
        %733 = vmatpush1.bf16.msra.mxu0 0
        %734 = vmatprep.subr.bf16.mxu0 0
        %735 = vmatpush1.bf16.msra.mxu0 0
        %736 = vmatprep.subr.bf16.mxu0 0
        %737 = vmatpush1.bf16.msra.mxu0 0
        %738 = vmatprep.subr.bf16.mxu0 0
        %739 = vmatpush1.bf16.msra.mxu0 0
        %740 = vmatprep.subr.bf16.mxu0 0
        %741 = vmatpush1.bf16.msra.mxu0 0
        %742 = vmatprep.subr.bf16.mxu0 0
        %743 = vmatpush1.bf16.msra.mxu0 0
        %744 = vmatprep.subr.bf16.mxu0 0
        %745 = vmatpush1.bf16.msra.mxu0 0
        %746 = vmatprep.mubr.bf16.mxu0 0
        %747 = vmatmul.mubr.bf16.gmra.mrb[0].mxu0 %v712
        %v748 = vpop.f32.mrb[0].mxu0
        %v749 = vadd.f32 %v696, %v748
        %v750 = vpop.f32.mrb[0].mxu0
        %v751 = vpop.f32.mrb[0].mxu0
        %v752 = vpop.f32.mrb[0].mxu0
        %753 = vdwg.mxu0
        %v754 = vld [vmem:[%s4] sm:$0xf]
        %v755 = vld [vmem:[%s4 + $0x4] sm:$0xf]
        %v756 = vld [vmem:[%s4 + $0x8] sm:$0xf]
        %v757 = vld [vmem:[%s4 + $0xc] sm:$0xf]
        %v758 = vld [vmem:[%s5] sm:$0x1]
        %v760 = vlaneseq
        %v761 = vshrl.u32 %v760, 7
        %v762 = vsub.s32 0, %v761
        %v763 = vrot.slane %v758, %v762
        %v769 = vunpack.c.l.b16 %v754
        %v770 = vunpack.c.l.b16 %v755
        %v771 = vunpack.c.l.b16 %v756
        %v772 = vunpack.c.l.b16 %v757
        %v773 = vpack.c.b16 %v770, %v769
        %v774 = vpack.c.b16 %v772, %v771
        %v778 = vsel %vm710, %v686, 0
        %780 = vmatprep.subr.bf16.mxu0 0
        %781 = vmatpush1.bf16.msra.mxu0 %v773
        %782 = vmatprep.subr.bf16.mxu0 0
        %783 = vmatpush1.bf16.msra.mxu0 %v774
        %784 = vmatprep.subr.bf16.mxu0 0
        %785 = vmatpush1.bf16.msra.mxu0 0
        %786 = vmatprep.subr.bf16.mxu0 0
        %787 = vmatpush1.bf16.msra.mxu0 0
        %788 = vmatprep.subr.bf16.mxu0 0
        %789 = vmatpush1.bf16.msra.mxu0 0
        %790 = vmatprep.subr.bf16.mxu0 0
        %791 = vmatpush1.bf16.msra.mxu0 0
        %792 = vmatprep.subr.bf16.mxu0 0
        %793 = vmatpush1.bf16.msra.mxu0 0
        %794 = vmatprep.subr.bf16.mxu0 0
        %795 = vmatpush1.bf16.msra.mxu0 0
        %796 = vmatprep.subr.bf16.mxu0 0
        %797 = vmatpush1.bf16.msra.mxu0 0
        %798 = vmatprep.subr.bf16.mxu0 0
        %799 = vmatpush1.bf16.msra.mxu0 0
        %800 = vmatprep.subr.bf16.mxu0 0
        %801 = vmatpush1.bf16.msra.mxu0 0
        %802 = vmatprep.subr.bf16.mxu0 0
        %803 = vmatpush1.bf16.msra.mxu0 0
        %804 = vmatprep.subr.bf16.mxu0 0
        %805 = vmatpush1.bf16.msra.mxu0 0
        %806 = vmatprep.subr.bf16.mxu0 0
        %807 = vmatpush1.bf16.msra.mxu0 0
        %808 = vmatprep.subr.bf16.mxu0 0
        %809 = vmatpush1.bf16.msra.mxu0 0
        %810 = vmatprep.subr.bf16.mxu0 0
        %811 = vmatpush1.bf16.msra.mxu0 0
        %812 = vmatprep.mubr.bf16.mxu0 0
        %813 = vmatmul.mubr.bf16.gmra.mrb[0].mxu0 %v778
        %v814 = vpop.f32.mrb[0].mxu0
        %v815 = vadd.f32 %v763, %v814
        %v816 = vpop.f32.mrb[0].mxu0
        %v817 = vpop.f32.mrb[0].mxu0
        %v818 = vpop.f32.mrb[0].mxu0
        %819 = vdwg.mxu0
        %v820 = vld [vmem:[%s6] sm:$0xf]
        %v821 = vld [vmem:[%s6 + $0x4] sm:$0xf]
        %v822 = vld [vmem:[%s6 + $0x8] sm:$0xf]
        %v823 = vld [vmem:[%s6 + $0xc] sm:$0xf]
        %v824 = vld [vmem:[#allocation7] sm:$0x1]
        %v826 = vlaneseq
        %v827 = vshrl.u32 %v826, 7
        %v828 = vsub.s32 0, %v827
        %v829 = vrot.slane %v824, %v828
        %v835 = vunpack.c.l.b16 %v820
        %v836 = vunpack.c.l.b16 %v821
        %v837 = vunpack.c.l.b16 %v822
        %v838 = vunpack.c.l.b16 %v823
        %v839 = vpack.c.b16 %v836, %v835
        %v840 = vpack.c.b16 %v838, %v837
        %843 = vmatprep.subr.bf16.mxu0 0
        %844 = vmatpush1.bf16.msra.mxu0 %v839
        %845 = vmatprep.subr.bf16.mxu0 0
        %846 = vmatpush1.bf16.msra.mxu0 %v840
        %847 = vmatprep.subr.bf16.mxu0 0
        %848 = vmatpush1.bf16.msra.mxu0 0
        %849 = vmatprep.subr.bf16.mxu0 0
        %850 = vmatpush1.bf16.msra.mxu0 0
        %851 = vmatprep.subr.bf16.mxu0 0
        %852 = vmatpush1.bf16.msra.mxu0 0
        %853 = vmatprep.subr.bf16.mxu0 0
        %854 = vmatpush1.bf16.msra.mxu0 0
        %855 = vmatprep.subr.bf16.mxu0 0
        %856 = vmatpush1.bf16.msra.mxu0 0
        %857 = vmatprep.subr.bf16.mxu0 0
        %858 = vmatpush1.bf16.msra.mxu0 0
        %859 = vmatprep.subr.bf16.mxu0 0
        %860 = vmatpush1.bf16.msra.mxu0 0
        %861 = vmatprep.subr.bf16.mxu0 0
        %862 = vmatpush1.bf16.msra.mxu0 0
        %863 = vmatprep.subr.bf16.mxu0 0
        %864 = vmatpush1.bf16.msra.mxu0 0
        %865 = vmatprep.subr.bf16.mxu0 0
        %866 = vmatpush1.bf16.msra.mxu0 0
        %867 = vmatprep.subr.bf16.mxu0 0
        %868 = vmatpush1.bf16.msra.mxu0 0
        %869 = vmatprep.subr.bf16.mxu0 0
        %870 = vmatpush1.bf16.msra.mxu0 0
        %871 = vmatprep.subr.bf16.mxu0 0
        %872 = vmatpush1.bf16.msra.mxu0 0
        %873 = vmatprep.subr.bf16.mxu0 0
        %874 = vmatpush1.bf16.msra.mxu0 0
        %875 = vmatprep.mubr.bf16.mxu0 0
        %876 = vmatmul.mubr.bf16.gmra.mrb[0].mxu0 %v778
        %v877 = vpop.f32.mrb[0].mxu0
        %v878 = vadd.f32 %v829, %v877
        %v879 = vpop.f32.mrb[0].mxu0
        %v880 = vpop.f32.mrb[0].mxu0
        %v881 = vpop.f32.mrb[0].mxu0
        %882 = vdwg.mxu0
        %884 = vrot.lane.b32.xlu0 %v749, 120
        %v885 = vpop.permute.xlu0 %884
        %887 = vrot.lane.b32.xlu0 %v749, 112
        %v888 = vpop.permute.xlu0 %887
        %890 = vrot.lane.b32.xlu0 %v749, 104
        %v891 = vpop.permute.xlu0 %890
        %v893 = vcombine.low %v749, %v888
        %v894 = vcombine.high %v749, %v888
        %v896 = vunpack.c.l.s4 1983009808
        %v897 = vunpack.c.0.s8 %v896
        %v898 = vlaneseq
        %v899 = vshrl.u32 %v898, 7
        %v900 = vsub.s32 %v897, %v899
        %v901 = vrot.slane %v893, %v900
        %v903 = vunpack.c.l.s4 1983009808
        %v904 = vunpack.c.0.s8 %v903
        %v905 = vlaneseq
        %v906 = vshrl.u32 %v905, 7
        %v907 = vsub.s32 %v904, %v906
        %v908 = vrot.slane %v894, %v907
        %v909 = vcombine.low %v885, %v891
        %v910 = vcombine.high %v885, %v891
        %v912 = vunpack.c.l.s4 1983009808
        %v913 = vunpack.c.0.s8 %v912
        %v914 = vlaneseq
        %v915 = vshrl.u32 %v914, 7
        %v916 = vsub.s32 %v913, %v915
        %v917 = vrot.slane %v909, %v916
        %v919 = vunpack.c.l.s4 1983009808
        %v920 = vunpack.c.0.s8 %v919
        %v921 = vlaneseq
        %v922 = vshrl.u32 %v921, 7
        %v923 = vsub.s32 %v920, %v922
        %v924 = vrot.slane %v910, %v923
        %v925 = vcombine.low %v901, %v917
        %v926 = vcombine.high %v901, %v917
        %v928 = vunpack.c.l.s4 1934713408
        %v929 = vunpack.c.0.s8 %v928
        %v930 = vlaneseq
        %v931 = vshrl.u32 %v930, 7
        %v932 = vsub.s32 %v929, %v931
        %v933 = vrot.slane %v925, %v932
        %v935 = vunpack.c.l.s4 1934713408
        %v936 = vunpack.c.0.s8 %v935
        %v937 = vlaneseq
        %v938 = vshrl.u32 %v937, 7
        %v939 = vsub.s32 %v936, %v938
        %v940 = vrot.slane %v926, %v939
        %v941 = vcombine.low %v908, %v924
        %v942 = vcombine.high %v908, %v924
        %v944 = vunpack.c.l.s4 1934713408
        %v945 = vunpack.c.0.s8 %v944
        %v946 = vlaneseq
        %v947 = vshrl.u32 %v946, 7
        %v948 = vsub.s32 %v945, %v947
        %v949 = vrot.slane %v941, %v948
        %v951 = vunpack.c.l.s4 1934713408
        %v952 = vunpack.c.0.s8 %v951
        %v953 = vlaneseq
        %v954 = vshrl.u32 %v953, 7
        %v955 = vsub.s32 %v952, %v954
        %v956 = vrot.slane %v942, %v955
        %v957 = vcombine.high %v933, 0.0
        %v958 = vcombine.high %v940, 0.0
        %v959 = vcombine.high %v949, 0.0
        %v960 = vcombine.high %v956, 0.0
        %v961 = vcombine.low %v933, %v940
        %v963 = vunpack.c.l.s4 1983009808
        %v964 = vunpack.c.0.s8 %v963
        %v965 = vlaneseq
        %v966 = vshrl.u32 %v965, 7
        %v967 = vsub.s32 %v964, %v966
        %v968 = vrot.slane %v961, %v967
        %v969 = vcombine.low %v957, %v958
        %v971 = vunpack.c.l.s4 1983009808
        %v972 = vunpack.c.0.s8 %v971
        %v973 = vlaneseq
        %v974 = vshrl.u32 %v973, 7
        %v975 = vsub.s32 %v972, %v974
        %v976 = vrot.slane %v969, %v975
        %v977 = vcombine.low %v949, %v956
        %v979 = vunpack.c.l.s4 1983009808
        %v980 = vunpack.c.0.s8 %v979
        %v981 = vlaneseq
        %v982 = vshrl.u32 %v981, 7
        %v983 = vsub.s32 %v980, %v982
        %v984 = vrot.slane %v977, %v983
        %v985 = vcombine.low %v959, %v960
        %v987 = vunpack.c.l.s4 1983009808
        %v988 = vunpack.c.0.s8 %v987
        %v989 = vlaneseq
        %v990 = vshrl.u32 %v989, 7
        %v991 = vsub.s32 %v988, %v990
        %v992 = vrot.slane %v985, %v991
        %v993 = vcombine.low %v968, %v976
        %v994 = vcombine.high %v968, %v976
        %v996 = vunpack.c.l.s4 1934713408
        %v997 = vunpack.c.0.s8 %v996
        %v998 = vlaneseq
        %v999 = vshrl.u32 %v998, 7
        %v1000 = vsub.s32 %v997, %v999
        %v1001 = vrot.slane %v993, %v1000
        %v1003 = vunpack.c.l.s4 1934713408
        %v1004 = vunpack.c.0.s8 %v1003
        %v1005 = vlaneseq
        %v1006 = vshrl.u32 %v1005, 7
        %v1007 = vsub.s32 %v1004, %v1006
        %v1008 = vrot.slane %v994, %v1007
        %v1009 = vcombine.low %v984, %v992
        %v1010 = vcombine.high %v984, %v992
        %v1012 = vunpack.c.l.s4 1934713408
        %v1013 = vunpack.c.0.s8 %v1012
        %v1014 = vlaneseq
        %v1015 = vshrl.u32 %v1014, 7
        %v1016 = vsub.s32 %v1013, %v1015
        %v1017 = vrot.slane %v1009, %v1016
        %v1019 = vunpack.c.l.s4 1934713408
        %v1020 = vunpack.c.0.s8 %v1019
        %v1021 = vlaneseq
        %v1022 = vshrl.u32 %v1021, 7
        %v1023 = vsub.s32 %v1020, %v1022
        %v1024 = vrot.slane %v1010, %v1023
        %v1025 = vcombine.low %v1001, %v1017
        %v1026 = vcombine.high %v1001, %v1017
        %v1027 = vcombine.low %v1008, %v1024
        %v1028 = vcombine.high %v1008, %v1024
        %1030 = vrot.lane.b32.xlu0 %v815, 120
        %v1031 = vpop.permute.xlu0 %1030
        %1033 = vrot.lane.b32.xlu0 %v815, 112
        %v1034 = vpop.permute.xlu0 %1033
        %1036 = vrot.lane.b32.xlu0 %v815, 104
        %v1037 = vpop.permute.xlu0 %1036
        %v1039 = vcombine.low %v815, %v1034
        %v1040 = vcombine.high %v815, %v1034
        %v1042 = vunpack.c.l.s4 1983009808
        %v1043 = vunpack.c.0.s8 %v1042
        %v1044 = vlaneseq
        %v1045 = vshrl.u32 %v1044, 7
        %v1046 = vsub.s32 %v1043, %v1045
        %v1047 = vrot.slane %v1039, %v1046
        %v1049 = vunpack.c.l.s4 1983009808
        %v1050 = vunpack.c.0.s8 %v1049
        %v1051 = vlaneseq
        %v1052 = vshrl.u32 %v1051, 7
        %v1053 = vsub.s32 %v1050, %v1052
        %v1054 = vrot.slane %v1040, %v1053
        %v1055 = vcombine.low %v1031, %v1037
        %v1056 = vcombine.high %v1031, %v1037
        %v1058 = vunpack.c.l.s4 1983009808
        %v1059 = vunpack.c.0.s8 %v1058
        %v1060 = vlaneseq
        %v1061 = vshrl.u32 %v1060, 7
        %v1062 = vsub.s32 %v1059, %v1061
        %v1063 = vrot.slane %v1055, %v1062
        %v1065 = vunpack.c.l.s4 1983009808
        %v1066 = vunpack.c.0.s8 %v1065
        %v1067 = vlaneseq
        %v1068 = vshrl.u32 %v1067, 7
        %v1069 = vsub.s32 %v1066, %v1068
        %v1070 = vrot.slane %v1056, %v1069
        %v1071 = vcombine.low %v1047, %v1063
        %v1072 = vcombine.high %v1047, %v1063
        %v1074 = vunpack.c.l.s4 1934713408
        %v1075 = vunpack.c.0.s8 %v1074
        %v1076 = vlaneseq
        %v1077 = vshrl.u32 %v1076, 7
        %v1078 = vsub.s32 %v1075, %v1077
        %v1079 = vrot.slane %v1071, %v1078
        %v1081 = vunpack.c.l.s4 1934713408
        %v1082 = vunpack.c.0.s8 %v1081
        %v1083 = vlaneseq
        %v1084 = vshrl.u32 %v1083, 7
        %v1085 = vsub.s32 %v1082, %v1084
        %v1086 = vrot.slane %v1072, %v1085
        %v1087 = vcombine.low %v1054, %v1070
        %v1088 = vcombine.high %v1054, %v1070
        %v1090 = vunpack.c.l.s4 1934713408
        %v1091 = vunpack.c.0.s8 %v1090
        %v1092 = vlaneseq
        %v1093 = vshrl.u32 %v1092, 7
        %v1094 = vsub.s32 %v1091, %v1093
        %v1095 = vrot.slane %v1087, %v1094
        %v1097 = vunpack.c.l.s4 1934713408
        %v1098 = vunpack.c.0.s8 %v1097
        %v1099 = vlaneseq
        %v1100 = vshrl.u32 %v1099, 7
        %v1101 = vsub.s32 %v1098, %v1100
        %v1102 = vrot.slane %v1088, %v1101
        %v1103 = vcombine.high %v1079, 0.0
        %v1104 = vcombine.high %v1086, 0.0
        %v1105 = vcombine.high %v1095, 0.0
        %v1106 = vcombine.high %v1102, 0.0
        %v1107 = vcombine.low %v1079, %v1086
        %v1109 = vunpack.c.l.s4 1983009808
        %v1110 = vunpack.c.0.s8 %v1109
        %v1111 = vlaneseq
        %v1112 = vshrl.u32 %v1111, 7
        %v1113 = vsub.s32 %v1110, %v1112
        %v1114 = vrot.slane %v1107, %v1113
        %v1115 = vcombine.low %v1103, %v1104
        %v1117 = vunpack.c.l.s4 1983009808
        %v1118 = vunpack.c.0.s8 %v1117
        %v1119 = vlaneseq
        %v1120 = vshrl.u32 %v1119, 7
        %v1121 = vsub.s32 %v1118, %v1120
        %v1122 = vrot.slane %v1115, %v1121
        %v1123 = vcombine.low %v1095, %v1102
        %v1125 = vunpack.c.l.s4 1983009808
        %v1126 = vunpack.c.0.s8 %v1125
        %v1127 = vlaneseq
        %v1128 = vshrl.u32 %v1127, 7
        %v1129 = vsub.s32 %v1126, %v1128
        %v1130 = vrot.slane %v1123, %v1129
        %v1131 = vcombine.low %v1105, %v1106
        %v1133 = vunpack.c.l.s4 1983009808
        %v1134 = vunpack.c.0.s8 %v1133
        %v1135 = vlaneseq
        %v1136 = vshrl.u32 %v1135, 7
        %v1137 = vsub.s32 %v1134, %v1136
        %v1138 = vrot.slane %v1131, %v1137
        %v1139 = vcombine.low %v1114, %v1122
        %v1140 = vcombine.high %v1114, %v1122
        %v1142 = vunpack.c.l.s4 1934713408
        %v1143 = vunpack.c.0.s8 %v1142
        %v1144 = vlaneseq
        %v1145 = vshrl.u32 %v1144, 7
        %v1146 = vsub.s32 %v1143, %v1145
        %v1147 = vrot.slane %v1139, %v1146
        %v1149 = vunpack.c.l.s4 1934713408
        %v1150 = vunpack.c.0.s8 %v1149
        %v1151 = vlaneseq
        %v1152 = vshrl.u32 %v1151, 7
        %v1153 = vsub.s32 %v1150, %v1152
        %v1154 = vrot.slane %v1140, %v1153
        %v1155 = vcombine.low %v1130, %v1138
        %v1156 = vcombine.high %v1130, %v1138
        %v1158 = vunpack.c.l.s4 1934713408
        %v1159 = vunpack.c.0.s8 %v1158
        %v1160 = vlaneseq
        %v1161 = vshrl.u32 %v1160, 7
        %v1162 = vsub.s32 %v1159, %v1161
        %v1163 = vrot.slane %v1155, %v1162
        %v1165 = vunpack.c.l.s4 1934713408
        %v1166 = vunpack.c.0.s8 %v1165
        %v1167 = vlaneseq
        %v1168 = vshrl.u32 %v1167, 7
        %v1169 = vsub.s32 %v1166, %v1168
        %v1170 = vrot.slane %v1156, %v1169
        %v1171 = vcombine.low %v1147, %v1163
        %v1172 = vcombine.high %v1147, %v1163
        %v1173 = vcombine.low %v1154, %v1170
        %v1174 = vcombine.high %v1154, %v1170
        %1176 = vrot.lane.b32.xlu0 %v878, 120
        %v1177 = vpop.permute.xlu0 %1176
        %1179 = vrot.lane.b32.xlu0 %v878, 112
        %v1180 = vpop.permute.xlu0 %1179
        %1182 = vrot.lane.b32.xlu0 %v878, 104
        %v1183 = vpop.permute.xlu0 %1182
        %v1185 = vcombine.low %v878, %v1180
        %v1186 = vcombine.high %v878, %v1180
        %v1188 = vunpack.c.l.s4 1983009808
        %v1189 = vunpack.c.0.s8 %v1188
        %v1190 = vlaneseq
        %v1191 = vshrl.u32 %v1190, 7
        %v1192 = vsub.s32 %v1189, %v1191
        %v1193 = vrot.slane %v1185, %v1192
        %v1195 = vunpack.c.l.s4 1983009808
        %v1196 = vunpack.c.0.s8 %v1195
        %v1197 = vlaneseq
        %v1198 = vshrl.u32 %v1197, 7
        %v1199 = vsub.s32 %v1196, %v1198
        %v1200 = vrot.slane %v1186, %v1199
        %v1201 = vcombine.low %v1177, %v1183
        %v1202 = vcombine.high %v1177, %v1183
        %v1204 = vunpack.c.l.s4 1983009808
        %v1205 = vunpack.c.0.s8 %v1204
        %v1206 = vlaneseq
        %v1207 = vshrl.u32 %v1206, 7
        %v1208 = vsub.s32 %v1205, %v1207
        %v1209 = vrot.slane %v1201, %v1208
        %v1211 = vunpack.c.l.s4 1983009808
        %v1212 = vunpack.c.0.s8 %v1211
        %v1213 = vlaneseq
        %v1214 = vshrl.u32 %v1213, 7
        %v1215 = vsub.s32 %v1212, %v1214
        %v1216 = vrot.slane %v1202, %v1215
        %v1217 = vcombine.low %v1193, %v1209
        %v1218 = vcombine.high %v1193, %v1209
        %v1220 = vunpack.c.l.s4 1934713408
        %v1221 = vunpack.c.0.s8 %v1220
        %v1222 = vlaneseq
        %v1223 = vshrl.u32 %v1222, 7
        %v1224 = vsub.s32 %v1221, %v1223
        %v1225 = vrot.slane %v1217, %v1224
        %v1227 = vunpack.c.l.s4 1934713408
        %v1228 = vunpack.c.0.s8 %v1227
        %v1229 = vlaneseq
        %v1230 = vshrl.u32 %v1229, 7
        %v1231 = vsub.s32 %v1228, %v1230
        %v1232 = vrot.slane %v1218, %v1231
        %v1233 = vcombine.low %v1200, %v1216
        %v1234 = vcombine.high %v1200, %v1216
        %v1236 = vunpack.c.l.s4 1934713408
        %v1237 = vunpack.c.0.s8 %v1236
        %v1238 = vlaneseq
        %v1239 = vshrl.u32 %v1238, 7
        %v1240 = vsub.s32 %v1237, %v1239
        %v1241 = vrot.slane %v1233, %v1240
        %v1243 = vunpack.c.l.s4 1934713408
        %v1244 = vunpack.c.0.s8 %v1243
        %v1245 = vlaneseq
        %v1246 = vshrl.u32 %v1245, 7
        %v1247 = vsub.s32 %v1244, %v1246
        %v1248 = vrot.slane %v1234, %v1247
        %v1249 = vcombine.high %v1225, 0.0
        %v1250 = vcombine.high %v1232, 0.0
        %v1251 = vcombine.high %v1241, 0.0
        %v1252 = vcombine.high %v1248, 0.0
        %v1253 = vcombine.low %v1225, %v1232
        %v1255 = vunpack.c.l.s4 1983009808
        %v1256 = vunpack.c.0.s8 %v1255
        %v1257 = vlaneseq
        %v1258 = vshrl.u32 %v1257, 7
        %v1259 = vsub.s32 %v1256, %v1258
        %v1260 = vrot.slane %v1253, %v1259
        %v1261 = vcombine.low %v1249, %v1250
        %v1263 = vunpack.c.l.s4 1983009808
        %v1264 = vunpack.c.0.s8 %v1263
        %v1265 = vlaneseq
        %v1266 = vshrl.u32 %v1265, 7
        %v1267 = vsub.s32 %v1264, %v1266
        %v1268 = vrot.slane %v1261, %v1267
        %v1269 = vcombine.low %v1241, %v1248
        %v1271 = vunpack.c.l.s4 1983009808
        %v1272 = vunpack.c.0.s8 %v1271
        %v1273 = vlaneseq
        %v1274 = vshrl.u32 %v1273, 7
        %v1275 = vsub.s32 %v1272, %v1274
        %v1276 = vrot.slane %v1269, %v1275
        %v1277 = vcombine.low %v1251, %v1252
        %v1279 = vunpack.c.l.s4 1983009808
        %v1280 = vunpack.c.0.s8 %v1279
        %v1281 = vlaneseq
        %v1282 = vshrl.u32 %v1281, 7
        %v1283 = vsub.s32 %v1280, %v1282
        %v1284 = vrot.slane %v1277, %v1283
        %v1285 = vcombine.low %v1260, %v1268
        %v1286 = vcombine.high %v1260, %v1268
        %v1288 = vunpack.c.l.s4 1934713408
        %v1289 = vunpack.c.0.s8 %v1288
        %v1290 = vlaneseq
        %v1291 = vshrl.u32 %v1290, 7
        %v1292 = vsub.s32 %v1289, %v1291
        %v1293 = vrot.slane %v1285, %v1292
        %v1295 = vunpack.c.l.s4 1934713408
        %v1296 = vunpack.c.0.s8 %v1295
        %v1297 = vlaneseq
        %v1298 = vshrl.u32 %v1297, 7
        %v1299 = vsub.s32 %v1296, %v1298
        %v1300 = vrot.slane %v1286, %v1299
        %v1301 = vcombine.low %v1276, %v1284
        %v1302 = vcombine.high %v1276, %v1284
        %v1304 = vunpack.c.l.s4 1934713408
        %v1305 = vunpack.c.0.s8 %v1304
        %v1306 = vlaneseq
        %v1307 = vshrl.u32 %v1306, 7
        %v1308 = vsub.s32 %v1305, %v1307
        %v1309 = vrot.slane %v1301, %v1308
        %v1311 = vunpack.c.l.s4 1934713408
        %v1312 = vunpack.c.0.s8 %v1311
        %v1313 = vlaneseq
        %v1314 = vshrl.u32 %v1313, 7
        %v1315 = vsub.s32 %v1312, %v1314
        %v1316 = vrot.slane %v1302, %v1315
        %v1317 = vcombine.low %v1293, %v1309
        %v1318 = vcombine.high %v1293, %v1309
        %v1319 = vcombine.low %v1300, %v1316
        %v1320 = vcombine.high %v1300, %v1316
        %v1321 = vpack.c.bf16 %v1025, %v1025
        %v1322 = vpack.c.bf16 %v1026, %v1026
        %v1323 = vpack.c.bf16 %v1027, %v1027
        %v1324 = vpack.c.bf16 %v1028, %v1028
        %v1325 = vpack.c.bf16 %v1171, %v1171
        %v1326 = vpack.c.bf16 %v1172, %v1172
        %v1327 = vpack.c.bf16 %v1173, %v1173
        %v1328 = vpack.c.bf16 %v1174, %v1174
        %vm1329 = vcmask 64512
        %v1331 = vsel %vm1329, %v1321, 0
        %v1334 = vsel %vm1329, %v1325, 0
        %1336 = vmatprep.subr.bf16.mxu0 0
        %1337 = vmatpush1.bf16.xpose.msra.mxu0 %v1334
        %1338 = vmatprep.subr.bf16.mxu0 0
        %1339 = vmatpush1.bf16.xpose.msra.mxu0 0
        %1340 = vmatprep.subr.bf16.mxu0 0
        %1341 = vmatpush1.bf16.xpose.msra.mxu0 0
        %1342 = vmatprep.subr.bf16.mxu0 0
        %1343 = vmatpush1.bf16.xpose.msra.mxu0 0
        %1344 = vmatprep.subr.bf16.mxu0 0
        %1345 = vmatpush1.bf16.xpose.msra.mxu0 0
        %1346 = vmatprep.subr.bf16.mxu0 0
        %1347 = vmatpush1.bf16.xpose.msra.mxu0 0
        %1348 = vmatprep.subr.bf16.mxu0 0
        %1349 = vmatpush1.bf16.xpose.msra.mxu0 0
        %1350 = vmatprep.subr.bf16.mxu0 0
        %1351 = vmatpush1.bf16.xpose.msra.mxu0 0
        %1352 = vmatprep.subr.bf16.mxu0 0
        %1353 = vmatpush1.bf16.xpose.msra.mxu0 0
        %1354 = vmatprep.subr.bf16.mxu0 0
        %1355 = vmatpush1.bf16.xpose.msra.mxu0 0
        %1356 = vmatprep.subr.bf16.mxu0 0
        %1357 = vmatpush1.bf16.xpose.msra.mxu0 0
        %1358 = vmatprep.subr.bf16.mxu0 0
        %1359 = vmatpush1.bf16.xpose.msra.mxu0 0
        %1360 = vmatprep.subr.bf16.mxu0 0
        %1361 = vmatpush1.bf16.xpose.msra.mxu0 0
        %1362 = vmatprep.subr.bf16.mxu0 0
        %1363 = vmatpush1.bf16.xpose.msra.mxu0 0
        %1364 = vmatprep.subr.bf16.mxu0 0
        %1365 = vmatpush1.bf16.xpose.msra.mxu0 0
        %1366 = vmatprep.subr.bf16.mxu0 0
        %1367 = vmatpush1.bf16.xpose.msra.mxu0 0
        %1368 = vmatprep.mubr.bf16.mxu0 0
        %1369 = vmatmul.mubr.bf16.gmra.mrb[0].mxu0 %v1331
        %v1370 = vpop.f32.mrb[0].mxu0
        %v1371 = vadd.f32 0.0, %v1370
        %v1372 = vpop.f32.mrb[0].mxu0
        %v1373 = vpop.f32.mrb[0].mxu0
        %v1374 = vpop.f32.mrb[0].mxu0
        %1375 = vdwg.mxu0
        %v1377 = vsel %vm1329, %v1322, 0
        %v1380 = vsel %vm1329, %v1326, 0
        %1382 = vmatprep.subr.bf16.mxu0 0
        %1383 = vmatpush1.bf16.xpose.msra.mxu0 %v1380
        %1384 = vmatprep.subr.bf16.mxu0 0
        %1385 = vmatpush1.bf16.xpose.msra.mxu0 0
        %1386 = vmatprep.subr.bf16.mxu0 0
        %1387 = vmatpush1.bf16.xpose.msra.mxu0 0
        %1388 = vmatprep.subr.bf16.mxu0 0
        %1389 = vmatpush1.bf16.xpose.msra.mxu0 0
        %1390 = vmatprep.subr.bf16.mxu0 0
        %1391 = vmatpush1.bf16.xpose.msra.mxu0 0
        %1392 = vmatprep.subr.bf16.mxu0 0
        %1393 = vmatpush1.bf16.xpose.msra.mxu0 0
        %1394 = vmatprep.subr.bf16.mxu0 0
        %1395 = vmatpush1.bf16.xpose.msra.mxu0 0
        %1396 = vmatprep.subr.bf16.mxu0 0
        %1397 = vmatpush1.bf16.xpose.msra.mxu0 0
        %1398 = vmatprep.subr.bf16.mxu0 0
        %1399 = vmatpush1.bf16.xpose.msra.mxu0 0
        %1400 = vmatprep.subr.bf16.mxu0 0
        %1401 = vmatpush1.bf16.xpose.msra.mxu0 0
        %1402 = vmatprep.subr.bf16.mxu0 0
        %1403 = vmatpush1.bf16.xpose.msra.mxu0 0
        %1404 = vmatprep.subr.bf16.mxu0 0
        %1405 = vmatpush1.bf16.xpose.msra.mxu0 0
        %1406 = vmatprep.subr.bf16.mxu0 0
        %1407 = vmatpush1.bf16.xpose.msra.mxu0 0
        %1408 = vmatprep.subr.bf16.mxu0 0
        %1409 = vmatpush1.bf16.xpose.msra.mxu0 0
        %1410 = vmatprep.subr.bf16.mxu0 0
        %1411 = vmatpush1.bf16.xpose.msra.mxu0 0
        %1412 = vmatprep.subr.bf16.mxu0 0
        %1413 = vmatpush1.bf16.xpose.msra.mxu0 0
        %1414 = vmatprep.mubr.bf16.mxu0 0
        %1415 = vmatmul.mubr.bf16.gmra.mrb[0].mxu0 %v1377
        %v1416 = vpop.f32.mrb[0].mxu0
        %v1417 = vadd.f32 0.0, %v1416
        %v1418 = vpop.f32.mrb[0].mxu0
        %v1419 = vpop.f32.mrb[0].mxu0
        %v1420 = vpop.f32.mrb[0].mxu0
        %1421 = vdwg.mxu0
        %v1423 = vsel %vm1329, %v1323, 0
        %v1426 = vsel %vm1329, %v1327, 0
        %1428 = vmatprep.subr.bf16.mxu0 0
        %1429 = vmatpush1.bf16.xpose.msra.mxu0 %v1426
        %1430 = vmatprep.subr.bf16.mxu0 0
        %1431 = vmatpush1.bf16.xpose.msra.mxu0 0
        %1432 = vmatprep.subr.bf16.mxu0 0
        %1433 = vmatpush1.bf16.xpose.msra.mxu0 0
        %1434 = vmatprep.subr.bf16.mxu0 0
        %1435 = vmatpush1.bf16.xpose.msra.mxu0 0
        %1436 = vmatprep.subr.bf16.mxu0 0
        %1437 = vmatpush1.bf16.xpose.msra.mxu0 0
        %1438 = vmatprep.subr.bf16.mxu0 0
        %1439 = vmatpush1.bf16.xpose.msra.mxu0 0
        %1440 = vmatprep.subr.bf16.mxu0 0
        %1441 = vmatpush1.bf16.xpose.msra.mxu0 0
        %1442 = vmatprep.subr.bf16.mxu0 0
        %1443 = vmatpush1.bf16.xpose.msra.mxu0 0
        %1444 = vmatprep.subr.bf16.mxu0 0
        %1445 = vmatpush1.bf16.xpose.msra.mxu0 0
        %1446 = vmatprep.subr.bf16.mxu0 0
        %1447 = vmatpush1.bf16.xpose.msra.mxu0 0
        %1448 = vmatprep.subr.bf16.mxu0 0
        %1449 = vmatpush1.bf16.xpose.msra.mxu0 0
        %1450 = vmatprep.subr.bf16.mxu0 0
        %1451 = vmatpush1.bf16.xpose.msra.mxu0 0
        %1452 = vmatprep.subr.bf16.mxu0 0
        %1453 = vmatpush1.bf16.xpose.msra.mxu0 0
        %1454 = vmatprep.subr.bf16.mxu0 0
        %1455 = vmatpush1.bf16.xpose.msra.mxu0 0
        %1456 = vmatprep.subr.bf16.mxu0 0
        %1457 = vmatpush1.bf16.xpose.msra.mxu0 0
        %1458 = vmatprep.subr.bf16.mxu0 0
        %1459 = vmatpush1.bf16.xpose.msra.mxu0 0
        %1460 = vmatprep.mubr.bf16.mxu0 0
        %1461 = vmatmul.mubr.bf16.gmra.mrb[0].mxu0 %v1423
        %v1462 = vpop.f32.mrb[0].mxu0
        %v1463 = vadd.f32 0.0, %v1462
        %v1464 = vpop.f32.mrb[0].mxu0
        %v1465 = vpop.f32.mrb[0].mxu0
        %v1466 = vpop.f32.mrb[0].mxu0
        %1467 = vdwg.mxu0
        %v1469 = vsel %vm1329, %v1324, 0
        %v1472 = vsel %vm1329, %v1328, 0
        %1474 = vmatprep.subr.bf16.mxu0 0
        %1475 = vmatpush1.bf16.xpose.msra.mxu0 %v1472
        %1476 = vmatprep.subr.bf16.mxu0 0
        %1477 = vmatpush1.bf16.xpose.msra.mxu0 0
        %1478 = vmatprep.subr.bf16.mxu0 0
        %1479 = vmatpush1.bf16.xpose.msra.mxu0 0
        %1480 = vmatprep.subr.bf16.mxu0 0
        %1481 = vmatpush1.bf16.xpose.msra.mxu0 0
        %1482 = vmatprep.subr.bf16.mxu0 0
        %1483 = vmatpush1.bf16.xpose.msra.mxu0 0
        %1484 = vmatprep.subr.bf16.mxu0 0
        %1485 = vmatpush1.bf16.xpose.msra.mxu0 0
        %1486 = vmatprep.subr.bf16.mxu0 0
        %1487 = vmatpush1.bf16.xpose.msra.mxu0 0
        %1488 = vmatprep.subr.bf16.mxu0 0
        %1489 = vmatpush1.bf16.xpose.msra.mxu0 0
        %1490 = vmatprep.subr.bf16.mxu0 0
        %1491 = vmatpush1.bf16.xpose.msra.mxu0 0
        %1492 = vmatprep.subr.bf16.mxu0 0
        %1493 = vmatpush1.bf16.xpose.msra.mxu0 0
        %1494 = vmatprep.subr.bf16.mxu0 0
        %1495 = vmatpush1.bf16.xpose.msra.mxu0 0
        %1496 = vmatprep.subr.bf16.mxu0 0
        %1497 = vmatpush1.bf16.xpose.msra.mxu0 0
        %1498 = vmatprep.subr.bf16.mxu0 0
        %1499 = vmatpush1.bf16.xpose.msra.mxu0 0
        %1500 = vmatprep.subr.bf16.mxu0 0
        %1501 = vmatpush1.bf16.xpose.msra.mxu0 0
        %1502 = vmatprep.subr.bf16.mxu0 0
        %1503 = vmatpush1.bf16.xpose.msra.mxu0 0
        %1504 = vmatprep.subr.bf16.mxu0 0
        %1505 = vmatpush1.bf16.xpose.msra.mxu0 0
        %1506 = vmatprep.mubr.bf16.mxu0 0
        %1507 = vmatmul.mubr.bf16.gmra.mrb[0].mxu0 %v1469
        %v1508 = vpop.f32.mrb[0].mxu0
        %v1509 = vadd.f32 0.0, %v1508
        %v1510 = vpop.f32.mrb[0].mxu0
        %v1511 = vpop.f32.mrb[0].mxu0
        %v1512 = vpop.f32.mrb[0].mxu0
        %1513 = vdwg.mxu0
        %v1514 = vmul.f32 %v1371, 0.35355338
        %v1515 = vmul.f32 %v1417, 0.35355338
        %v1516 = vmul.f32 %v1463, 0.35355338
        %v1517 = vmul.f32 %v1509, 0.35355338
        %v1518 = vsel %vm1329, %v1514, -inf
        %1519 = vmax.xlane.f32.xlu0 %v1518
        %v1520 = vpop.xlane.xlu0 %1519
        %v1521 = vsel %vm1329, %v1515, -inf
        %1522 = vmax.xlane.f32.xlu0 %v1521
        %v1523 = vpop.xlane.xlu0 %1522
        %v1524 = vsel %vm1329, %v1516, -inf
        %1525 = vmax.xlane.f32.xlu0 %v1524
        %v1526 = vpop.xlane.xlu0 %1525
        %v1527 = vsel %vm1329, %v1517, -inf
        %1528 = vmax.xlane.f32.xlu0 %v1527
        %v1529 = vpop.xlane.xlu0 %1528
        %v1530 = vsub.f32 %v1514, %v1520
        %v1531 = vsub.f32 %v1515, %v1523
        %v1532 = vsub.f32 %v1516, %v1526
        %v1533 = vsub.f32 %v1517, %v1529
        %v1534 = vmul.f32 %v1530, 1.442695
        %v1535 = vpow.pop %v1534
        %v1536 = vmul.f32 %v1531, 1.442695
        %v1537 = vpow.pop %v1536
        %v1538 = vmul.f32 %v1532, 1.442695
        %v1539 = vpow.pop %v1538
        %v1540 = vmul.f32 %v1533, 1.442695
        %v1541 = vpow.pop %v1540
        %v1542 = vsel %vm1329, %v1535, 0.0
        %1543 = vadd.xlane.f32.xlu0 %v1542
        %v1544 = vpop.xlane.xlu0 %1543
        %v1545 = vsel %vm1329, %v1537, 0.0
        %1546 = vadd.xlane.f32.xlu0 %v1545
        %v1547 = vpop.xlane.xlu0 %1546
        %v1548 = vsel %vm1329, %v1539, 0.0
        %1549 = vadd.xlane.f32.xlu0 %v1548
        %v1550 = vpop.xlane.xlu0 %1549
        %v1551 = vsel %vm1329, %v1541, 0.0
        %1552 = vadd.xlane.f32.xlu0 %v1551
        %v1553 = vpop.xlane.xlu0 %1552
        %v1554 = vrcp.pop %v1544
        %v1555 = vrcp.pop %v1547
        %v1556 = vrcp.pop %v1550
        %v1557 = vrcp.pop %v1553
        %v1558 = vmul.f32 %v1535, %v1554
        %v1559 = vmul.f32 %v1537, %v1555
        %v1560 = vmul.f32 %v1539, %v1556
        %v1561 = vmul.f32 %v1541, %v1557
        %v1562 = vpack.c.bf16 %v1558, %v1558
        %v1563 = vpack.c.bf16 %v1559, %v1559
        %v1564 = vpack.c.bf16 %v1560, %v1560
        %v1565 = vpack.c.bf16 %v1561, %v1561
        %v1566 = vpack.c.bf16 %v1317, %v1317
        %v1567 = vpack.c.bf16 %v1318, %v1318
        %v1568 = vpack.c.bf16 %v1319, %v1319
        %v1569 = vpack.c.bf16 %v1320, %v1320
        %v1571 = vsel %vm1329, %v1562, 0
        %vm1573 = vcmask 1043456
        %v1575 = vsel %vm1573, %v1566, 0
        %1577 = vmatprep.subr.bf16.mxu0 0
        %1578 = vmatpush1.bf16.msra.mxu0 %v1575
        %1579 = vmatprep.subr.bf16.mxu0 0
        %1580 = vmatpush1.bf16.msra.mxu0 0
        %1581 = vmatprep.subr.bf16.mxu0 0
        %1582 = vmatpush1.bf16.msra.mxu0 0
        %1583 = vmatprep.subr.bf16.mxu0 0
        %1584 = vmatpush1.bf16.msra.mxu0 0
        %1585 = vmatprep.subr.bf16.mxu0 0
        %1586 = vmatpush1.bf16.msra.mxu0 0
        %1587 = vmatprep.subr.bf16.mxu0 0
        %1588 = vmatpush1.bf16.msra.mxu0 0
        %1589 = vmatprep.subr.bf16.mxu0 0
        %1590 = vmatpush1.bf16.msra.mxu0 0
        %1591 = vmatprep.subr.bf16.mxu0 0
        %1592 = vmatpush1.bf16.msra.mxu0 0
        %1593 = vmatprep.subr.bf16.mxu0 0
        %1594 = vmatpush1.bf16.msra.mxu0 0
        %1595 = vmatprep.subr.bf16.mxu0 0
        %1596 = vmatpush1.bf16.msra.mxu0 0
        %1597 = vmatprep.subr.bf16.mxu0 0
        %1598 = vmatpush1.bf16.msra.mxu0 0
        %1599 = vmatprep.subr.bf16.mxu0 0
        %1600 = vmatpush1.bf16.msra.mxu0 0
        %1601 = vmatprep.subr.bf16.mxu0 0
        %1602 = vmatpush1.bf16.msra.mxu0 0
        %1603 = vmatprep.subr.bf16.mxu0 0
        %1604 = vmatpush1.bf16.msra.mxu0 0
        %1605 = vmatprep.subr.bf16.mxu0 0
        %1606 = vmatpush1.bf16.msra.mxu0 0
        %1607 = vmatprep.subr.bf16.mxu0 0
        %1608 = vmatpush1.bf16.msra.mxu0 0
        %1609 = vmatprep.mubr.bf16.mxu0 0
        %1610 = vmatmul.mubr.bf16.gmra.mrb[0].mxu0 %v1571
        %v1611 = vpop.f32.mrb[0].mxu0
        %v1612 = vadd.f32 0.0, %v1611
        %v1613 = vpop.f32.mrb[0].mxu0
        %v1614 = vpop.f32.mrb[0].mxu0
        %v1615 = vpop.f32.mrb[0].mxu0
        %1616 = vdwg.mxu0
        %v1618 = vsel %vm1329, %v1563, 0
        %v1621 = vsel %vm1573, %v1567, 0
        %1623 = vmatprep.subr.bf16.mxu0 0
        %1624 = vmatpush1.bf16.msra.mxu0 %v1621
        %1625 = vmatprep.subr.bf16.mxu0 0
        %1626 = vmatpush1.bf16.msra.mxu0 0
        %1627 = vmatprep.subr.bf16.mxu0 0
        %1628 = vmatpush1.bf16.msra.mxu0 0
        %1629 = vmatprep.subr.bf16.mxu0 0
        %1630 = vmatpush1.bf16.msra.mxu0 0
        %1631 = vmatprep.subr.bf16.mxu0 0
        %1632 = vmatpush1.bf16.msra.mxu0 0
        %1633 = vmatprep.subr.bf16.mxu0 0
        %1634 = vmatpush1.bf16.msra.mxu0 0
        %1635 = vmatprep.subr.bf16.mxu0 0
        %1636 = vmatpush1.bf16.msra.mxu0 0
        %1637 = vmatprep.subr.bf16.mxu0 0
        %1638 = vmatpush1.bf16.msra.mxu0 0
        %1639 = vmatprep.subr.bf16.mxu0 0
        %1640 = vmatpush1.bf16.msra.mxu0 0
        %1641 = vmatprep.subr.bf16.mxu0 0
        %1642 = vmatpush1.bf16.msra.mxu0 0
        %1643 = vmatprep.subr.bf16.mxu0 0
        %1644 = vmatpush1.bf16.msra.mxu0 0
        %1645 = vmatprep.subr.bf16.mxu0 0
        %1646 = vmatpush1.bf16.msra.mxu0 0
        %1647 = vmatprep.subr.bf16.mxu0 0
        %1648 = vmatpush1.bf16.msra.mxu0 0
        %1649 = vmatprep.subr.bf16.mxu0 0
        %1650 = vmatpush1.bf16.msra.mxu0 0
        %1651 = vmatprep.subr.bf16.mxu0 0
        %1652 = vmatpush1.bf16.msra.mxu0 0
        %1653 = vmatprep.subr.bf16.mxu0 0
        %1654 = vmatpush1.bf16.msra.mxu0 0
        %1655 = vmatprep.mubr.bf16.mxu0 0
        %1656 = vmatmul.mubr.bf16.gmra.mrb[0].mxu0 %v1618
        %v1657 = vpop.f32.mrb[0].mxu0
        %v1658 = vadd.f32 0.0, %v1657
        %v1659 = vpop.f32.mrb[0].mxu0
        %v1660 = vpop.f32.mrb[0].mxu0
        %v1661 = vpop.f32.mrb[0].mxu0
        %1662 = vdwg.mxu0
        %v1664 = vsel %vm1329, %v1564, 0
        %v1667 = vsel %vm1573, %v1568, 0
        %1669 = vmatprep.subr.bf16.mxu0 0
        %1670 = vmatpush1.bf16.msra.mxu0 %v1667
        %1671 = vmatprep.subr.bf16.mxu0 0
        %1672 = vmatpush1.bf16.msra.mxu0 0
        %1673 = vmatprep.subr.bf16.mxu0 0
        %1674 = vmatpush1.bf16.msra.mxu0 0
        %1675 = vmatprep.subr.bf16.mxu0 0
        %1676 = vmatpush1.bf16.msra.mxu0 0
        %1677 = vmatprep.subr.bf16.mxu0 0
        %1678 = vmatpush1.bf16.msra.mxu0 0
        %1679 = vmatprep.subr.bf16.mxu0 0
        %1680 = vmatpush1.bf16.msra.mxu0 0
        %1681 = vmatprep.subr.bf16.mxu0 0
        %1682 = vmatpush1.bf16.msra.mxu0 0
        %1683 = vmatprep.subr.bf16.mxu0 0
        %1684 = vmatpush1.bf16.msra.mxu0 0
        %1685 = vmatprep.subr.bf16.mxu0 0
        %1686 = vmatpush1.bf16.msra.mxu0 0
        %1687 = vmatprep.subr.bf16.mxu0 0
        %1688 = vmatpush1.bf16.msra.mxu0 0
        %1689 = vmatprep.subr.bf16.mxu0 0
        %1690 = vmatpush1.bf16.msra.mxu0 0
        %1691 = vmatprep.subr.bf16.mxu0 0
        %1692 = vmatpush1.bf16.msra.mxu0 0
        %1693 = vmatprep.subr.bf16.mxu0 0
        %1694 = vmatpush1.bf16.msra.mxu0 0
        %1695 = vmatprep.subr.bf16.mxu0 0
        %1696 = vmatpush1.bf16.msra.mxu0 0
        %1697 = vmatprep.subr.bf16.mxu0 0
        %1698 = vmatpush1.bf16.msra.mxu0 0
        %1699 = vmatprep.subr.bf16.mxu0 0
        %1700 = vmatpush1.bf16.msra.mxu0 0
        %1701 = vmatprep.mubr.bf16.mxu0 0
        %1702 = vmatmul.mubr.bf16.gmra.mrb[0].mxu0 %v1664
        %v1703 = vpop.f32.mrb[0].mxu0
        %v1704 = vadd.f32 0.0, %v1703
        %v1705 = vpop.f32.mrb[0].mxu0
        %v1706 = vpop.f32.mrb[0].mxu0
        %v1707 = vpop.f32.mrb[0].mxu0
        %1708 = vdwg.mxu0
        %v1710 = vsel %vm1329, %v1565, 0
        %v1713 = vsel %vm1573, %v1569, 0
        %1715 = vmatprep.subr.bf16.mxu0 0
        %1716 = vmatpush1.bf16.msra.mxu0 %v1713
        %1717 = vmatprep.subr.bf16.mxu0 0
        %1718 = vmatpush1.bf16.msra.mxu0 0
        %1719 = vmatprep.subr.bf16.mxu0 0
        %1720 = vmatpush1.bf16.msra.mxu0 0
        %1721 = vmatprep.subr.bf16.mxu0 0
        %1722 = vmatpush1.bf16.msra.mxu0 0
        %1723 = vmatprep.subr.bf16.mxu0 0
        %1724 = vmatpush1.bf16.msra.mxu0 0
        %1725 = vmatprep.subr.bf16.mxu0 0
        %1726 = vmatpush1.bf16.msra.mxu0 0
        %1727 = vmatprep.subr.bf16.mxu0 0
        %1728 = vmatpush1.bf16.msra.mxu0 0
        %1729 = vmatprep.subr.bf16.mxu0 0
        %1730 = vmatpush1.bf16.msra.mxu0 0
        %1731 = vmatprep.subr.bf16.mxu0 0
        %1732 = vmatpush1.bf16.msra.mxu0 0
        %1733 = vmatprep.subr.bf16.mxu0 0
        %1734 = vmatpush1.bf16.msra.mxu0 0
        %1735 = vmatprep.subr.bf16.mxu0 0
        %1736 = vmatpush1.bf16.msra.mxu0 0
        %1737 = vmatprep.subr.bf16.mxu0 0
        %1738 = vmatpush1.bf16.msra.mxu0 0
        %1739 = vmatprep.subr.bf16.mxu0 0
        %1740 = vmatpush1.bf16.msra.mxu0 0
        %1741 = vmatprep.subr.bf16.mxu0 0
        %1742 = vmatpush1.bf16.msra.mxu0 0
        %1743 = vmatprep.subr.bf16.mxu0 0
        %1744 = vmatpush1.bf16.msra.mxu0 0
        %1745 = vmatprep.subr.bf16.mxu0 0
        %1746 = vmatpush1.bf16.msra.mxu0 0
        %1747 = vmatprep.mubr.bf16.mxu0 0
        %1748 = vmatmul.mubr.bf16.gmra.mrb[0].mxu0 %v1710
        %v1749 = vpop.f32.mrb[0].mxu0
        %v1750 = vadd.f32 0.0, %v1749
        %v1751 = vpop.f32.mrb[0].mxu0
        %v1752 = vpop.f32.mrb[0].mxu0
        %v1753 = vpop.f32.mrb[0].mxu0
        %1754 = vdwg.mxu0
        %v1755 = vcombine.low %v1612, %v1704
        %v1756 = vcombine.high %v1612, %v1704
        %v1758 = vunpack.c.l.s4 1983009808
        %v1759 = vunpack.c.0.s8 %v1758
        %v1760 = vlaneseq
        %v1761 = vshrl.u32 %v1760, 7
        %v1762 = vsub.s32 %v1759, %v1761
        %v1763 = vrot.slane %v1755, %v1762
        %v1765 = vunpack.c.l.s4 1983009808
        %v1766 = vunpack.c.0.s8 %v1765
        %v1767 = vlaneseq
        %v1768 = vshrl.u32 %v1767, 7
        %v1769 = vsub.s32 %v1766, %v1768
        %v1770 = vrot.slane %v1756, %v1769
        %v1771 = vcombine.low %v1658, %v1750
        %v1772 = vcombine.high %v1658, %v1750
        %v1774 = vunpack.c.l.s4 1983009808
        %v1775 = vunpack.c.0.s8 %v1774
        %v1776 = vlaneseq
        %v1777 = vshrl.u32 %v1776, 7
        %v1778 = vsub.s32 %v1775, %v1777
        %v1779 = vrot.slane %v1771, %v1778
        %v1781 = vunpack.c.l.s4 1983009808
        %v1782 = vunpack.c.0.s8 %v1781
        %v1783 = vlaneseq
        %v1784 = vshrl.u32 %v1783, 7
        %v1785 = vsub.s32 %v1782, %v1784
        %v1786 = vrot.slane %v1772, %v1785
        %v1787 = vcombine.low %v1763, %v1779
        %v1788 = vcombine.high %v1763, %v1779
        %v1790 = vunpack.c.l.s4 1934713408
        %v1791 = vunpack.c.0.s8 %v1790
        %v1792 = vlaneseq
        %v1793 = vshrl.u32 %v1792, 7
        %v1794 = vsub.s32 %v1791, %v1793
        %v1795 = vrot.slane %v1787, %v1794
        %v1797 = vunpack.c.l.s4 1934713408
        %v1798 = vunpack.c.0.s8 %v1797
        %v1799 = vlaneseq
        %v1800 = vshrl.u32 %v1799, 7
        %v1801 = vsub.s32 %v1798, %v1800
        %v1802 = vrot.slane %v1788, %v1801
        %v1803 = vcombine.low %v1770, %v1786
        %v1804 = vcombine.high %v1770, %v1786
        %v1806 = vunpack.c.l.s4 1934713408
        %v1807 = vunpack.c.0.s8 %v1806
        %v1808 = vlaneseq
        %v1809 = vshrl.u32 %v1808, 7
        %v1810 = vsub.s32 %v1807, %v1809
        %v1811 = vrot.slane %v1803, %v1810
        %v1813 = vunpack.c.l.s4 1934713408
        %v1814 = vunpack.c.0.s8 %v1813
        %v1815 = vlaneseq
        %v1816 = vshrl.u32 %v1815, 7
        %v1817 = vsub.s32 %v1814, %v1816
        %v1818 = vrot.slane %v1804, %v1817
        %v1819 = vcombine.high %v1795, 0.0
        %v1820 = vcombine.high %v1802, 0.0
        %v1821 = vcombine.high %v1811, 0.0
        %v1822 = vcombine.high %v1818, 0.0
        %v1823 = vcombine.low %v1795, %v1802
        %v1825 = vunpack.c.l.s4 1983009808
        %v1826 = vunpack.c.0.s8 %v1825
        %v1827 = vlaneseq
        %v1828 = vshrl.u32 %v1827, 7
        %v1829 = vsub.s32 %v1826, %v1828
        %v1830 = vrot.slane %v1823, %v1829
        %v1831 = vcombine.low %v1819, %v1820
        %v1833 = vunpack.c.l.s4 1983009808
        %v1834 = vunpack.c.0.s8 %v1833
        %v1835 = vlaneseq
        %v1836 = vshrl.u32 %v1835, 7
        %v1837 = vsub.s32 %v1834, %v1836
        %v1838 = vrot.slane %v1831, %v1837
        %v1839 = vcombine.low %v1811, %v1818
        %v1841 = vunpack.c.l.s4 1983009808
        %v1842 = vunpack.c.0.s8 %v1841
        %v1843 = vlaneseq
        %v1844 = vshrl.u32 %v1843, 7
        %v1845 = vsub.s32 %v1842, %v1844
        %v1846 = vrot.slane %v1839, %v1845
        %v1847 = vcombine.low %v1821, %v1822
        %v1849 = vunpack.c.l.s4 1983009808
        %v1850 = vunpack.c.0.s8 %v1849
        %v1851 = vlaneseq
        %v1852 = vshrl.u32 %v1851, 7
        %v1853 = vsub.s32 %v1850, %v1852
        %v1854 = vrot.slane %v1847, %v1853
        %v1855 = vcombine.low %v1830, %v1838
        %v1856 = vcombine.high %v1830, %v1838
        %v1858 = vunpack.c.l.s4 1934713408
        %v1859 = vunpack.c.0.s8 %v1858
        %v1860 = vlaneseq
        %v1861 = vshrl.u32 %v1860, 7
        %v1862 = vsub.s32 %v1859, %v1861
        %v1863 = vrot.slane %v1855, %v1862
        %v1865 = vunpack.c.l.s4 1934713408
        %v1866 = vunpack.c.0.s8 %v1865
        %v1867 = vlaneseq
        %v1868 = vshrl.u32 %v1867, 7
        %v1869 = vsub.s32 %v1866, %v1868
        %v1870 = vrot.slane %v1856, %v1869
        %v1871 = vcombine.low %v1846, %v1854
        %v1872 = vcombine.high %v1846, %v1854
        %v1874 = vunpack.c.l.s4 1934713408
        %v1875 = vunpack.c.0.s8 %v1874
        %v1876 = vlaneseq
        %v1877 = vshrl.u32 %v1876, 7
        %v1878 = vsub.s32 %v1875, %v1877
        %v1879 = vrot.slane %v1871, %v1878
        %v1881 = vunpack.c.l.s4 1934713408
        %v1882 = vunpack.c.0.s8 %v1881
        %v1883 = vlaneseq
        %v1884 = vshrl.u32 %v1883, 7
        %v1885 = vsub.s32 %v1882, %v1884
        %v1886 = vrot.slane %v1872, %v1885
        %v1887 = vcombine.low %v1863, %v1879
        %v1888 = vcombine.high %v1863, %v1879
        %v1889 = vcombine.low %v1870, %v1886
        %v1890 = vcombine.high %v1870, %v1886
        %1892 = vrot.lane.b32.xlu0 %v1888, 8
        %v1893 = vpop.permute.xlu0 %1892
        %1896 = vrot.lane.b32.xlu0 %v1889, 16
        %v1897 = vpop.permute.xlu0 %1896
        %1900 = vrot.lane.b32.xlu0 %v1890, 24
        %v1901 = vpop.permute.xlu0 %1900
        %v1903 = vsel %vm1329, %v1887, %v1893
        %vm1904 = vcmask 130048
        %v1905 = vsel %vm1904, %v1903, %v1897
        %vm1906 = vcmask 195584
        %v1907 = vsel %vm1906, %v1905, %v1901
        %v1908 = vld [vmem:[#allocation8] sm:$0xf]
        %v1909 = vld [vmem:[#allocation8 + $0x4] sm:$0xf]
        %v1910 = vld [vmem:[#allocation8 + $0x8] sm:$0xf]
        %v1911 = vld [vmem:[#allocation8 + $0xc] sm:$0xf]
        %v1912 = vpack.c.bf16 %v1907, %v1907
        %v1913 = vld [vmem:[#allocation10] sm:$0x1]
        %v1915 = vlaneseq
        %v1916 = vshrl.u32 %v1915, 7
        %v1917 = vsub.s32 0, %v1916
        %v1918 = vrot.slane %v1913, %v1917
        %v1924 = vunpack.c.l.b16 %v1908
        %v1925 = vunpack.c.l.b16 %v1909
        %v1926 = vunpack.c.l.b16 %v1910
        %v1927 = vunpack.c.l.b16 %v1911
        %v1928 = vpack.c.b16 %v1925, %v1924
        %v1929 = vpack.c.b16 %v1927, %v1926
        %v1933 = vsel %vm710, %v1912, 0
        %1935 = vmatprep.subr.bf16.mxu0 0
        %1936 = vmatpush1.bf16.msra.mxu0 %v1928
        %1937 = vmatprep.subr.bf16.mxu0 0
        %1938 = vmatpush1.bf16.msra.mxu0 %v1929
        %1939 = vmatprep.subr.bf16.mxu0 0
        %1940 = vmatpush1.bf16.msra.mxu0 0
        %1941 = vmatprep.subr.bf16.mxu0 0
        %1942 = vmatpush1.bf16.msra.mxu0 0
        %1943 = vmatprep.subr.bf16.mxu0 0
        %1944 = vmatpush1.bf16.msra.mxu0 0
        %1945 = vmatprep.subr.bf16.mxu0 0
        %1946 = vmatpush1.bf16.msra.mxu0 0
        %1947 = vmatprep.subr.bf16.mxu0 0
        %1948 = vmatpush1.bf16.msra.mxu0 0
        %1949 = vmatprep.subr.bf16.mxu0 0
        %1950 = vmatpush1.bf16.msra.mxu0 0
        %1951 = vmatprep.subr.bf16.mxu0 0
        %1952 = vmatpush1.bf16.msra.mxu0 0
        %1953 = vmatprep.subr.bf16.mxu0 0
        %1954 = vmatpush1.bf16.msra.mxu0 0
        %1955 = vmatprep.subr.bf16.mxu0 0
        %1956 = vmatpush1.bf16.msra.mxu0 0
        %1957 = vmatprep.subr.bf16.mxu0 0
        %1958 = vmatpush1.bf16.msra.mxu0 0
        %1959 = vmatprep.subr.bf16.mxu0 0
        %1960 = vmatpush1.bf16.msra.mxu0 0
        %1961 = vmatprep.subr.bf16.mxu0 0
        %1962 = vmatpush1.bf16.msra.mxu0 0
        %1963 = vmatprep.subr.bf16.mxu0 0
        %1964 = vmatpush1.bf16.msra.mxu0 0
        %1965 = vmatprep.subr.bf16.mxu0 0
        %1966 = vmatpush1.bf16.msra.mxu0 0
        %1967 = vmatprep.mubr.bf16.mxu0 0
        %1968 = vmatmul.mubr.bf16.gmra.mrb[0].mxu0 %v1933
        %v1969 = vpop.f32.mrb[0].mxu0
        %v1970 = vadd.f32 %v1918, %v1969
        %v1971 = vpop.f32.mrb[0].mxu0
        %v1972 = vpop.f32.mrb[0].mxu0
        %v1973 = vpop.f32.mrb[0].mxu0
        %1974 = vdwg.mxu0
        %v1975 = vunpack.c.l.bf16 %v685
        %v1976 = vadd.f32 %v1970, %v1975
        %v1977 = vld [vmem:[%s10] sm:$0x1]
        %v1978 = vld [vmem:[%s11] sm:$0x1]
        %v1979 = vsel %vm710, %v1976, 0.0
        %1980 = vadd.xlane.f32.xlu0 %v1979
        %v1981 = vpop.xlane.xlu0 %1980
        %v1982 = vrcp.pop 32.0
        %v1983 = vmul.f32 %v1981, %v1982
        %v1984 = vsub.f32 %v1976, %v1983
        %v1985 = vmul.f32 %v1984, %v1984
        %v1986 = vsel %vm710, %v1985, 0.0
        %1987 = vadd.xlane.f32.xlu0 %v1986
        %v1988 = vpop.xlane.xlu0 %1987
        %v1989 = vmul.f32 %v1988, %v1982
        %v1990 = vadd.f32 %v1989, 1e-05
        %v1991 = vrsqrt.pop %v1990
        %v1992 = vmul.f32 %v1984, %v1991
        %v1994 = vlaneseq
        %v1995 = vshrl.u32 %v1994, 7
        %v1996 = vsub.s32 0, %v1995
        %v1997 = vrot.slane %v1977, %v1996
        %v1999 = vmul.f32 %v1992, %v1997
        %v2001 = vlaneseq
        %v2002 = vshrl.u32 %v2001, 7
        %v2003 = vsub.s32 0, %v2002
        %v2004 = vrot.slane %v1978, %v2003
        %v2006 = vadd.f32 %v1999, %v2004
        %v2007 = vld [vmem:[%s12] sm:$0xf]
        %v2008 = vld [vmem:[%s12 + $0x4] sm:$0xf]
        %v2009 = vld [vmem:[%s12 + $0x8] sm:$0xf]
        %v2010 = vld [vmem:[%s12 + $0xc] sm:$0xf]
        %v2011 = vpack.c.bf16 %v2006, %v2006
        %v2012 = vld [vmem:[%s13] sm:$0x1]
        %v2014 = vlaneseq
        %v2015 = vshrl.u32 %v2014, 7
        %v2016 = vsub.s32 0, %v2015
        %v2017 = vrot.slane %v2012, %v2016
        %v2023 = vunpack.c.l.b16 %v2007
        %v2024 = vunpack.c.l.b16 %v2008
        %v2025 = vunpack.c.l.b16 %v2009
        %v2026 = vunpack.c.l.b16 %v2010
        %v2027 = vpack.c.b16 %v2024, %v2023
        %v2028 = vpack.c.b16 %v2026, %v2025
        %v2032 = vsel %vm710, %v2011, 0
        %2034 = vmatprep.subr.bf16.mxu0 0
        %2035 = vmatpush1.bf16.msra.mxu0 %v2027
        %2036 = vmatprep.subr.bf16.mxu0 0
        %2037 = vmatpush1.bf16.msra.mxu0 %v2028
        %2038 = vmatprep.subr.bf16.mxu0 0
        %2039 = vmatpush1.bf16.msra.mxu0 0
        %2040 = vmatprep.subr.bf16.mxu0 0
        %2041 = vmatpush1.bf16.msra.mxu0 0
        %2042 = vmatprep.subr.bf16.mxu0 0
        %2043 = vmatpush1.bf16.msra.mxu0 0
        %2044 = vmatprep.subr.bf16.mxu0 0
        %2045 = vmatpush1.bf16.msra.mxu0 0
        %2046 = vmatprep.subr.bf16.mxu0 0
        %2047 = vmatpush1.bf16.msra.mxu0 0
        %2048 = vmatprep.subr.bf16.mxu0 0
        %2049 = vmatpush1.bf16.msra.mxu0 0
        %2050 = vmatprep.subr.bf16.mxu0 0
        %2051 = vmatpush1.bf16.msra.mxu0 0
        %2052 = vmatprep.subr.bf16.mxu0 0
        %2053 = vmatpush1.bf16.msra.mxu0 0
        %2054 = vmatprep.subr.bf16.mxu0 0
        %2055 = vmatpush1.bf16.msra.mxu0 0
        %2056 = vmatprep.subr.bf16.mxu0 0
        %2057 = vmatpush1.bf16.msra.mxu0 0
        %2058 = vmatprep.subr.bf16.mxu0 0
        %2059 = vmatpush1.bf16.msra.mxu0 0
        %2060 = vmatprep.subr.bf16.mxu0 0
        %2061 = vmatpush1.bf16.msra.mxu0 0
        %2062 = vmatprep.subr.bf16.mxu0 0
        %2063 = vmatpush1.bf16.msra.mxu0 0
        %2064 = vmatprep.subr.bf16.mxu0 0
        %2065 = vmatpush1.bf16.msra.mxu0 0
        %2066 = vmatprep.mubr.bf16.mxu0 0
        %2067 = vmatmul.mubr.bf16.gmra.mrb[0].mxu0 %v2032
        %v2068 = vpop.f32.mrb[0].mxu0
        %v2069 = vadd.f32 %v2017, %v2068
        %v2070 = vpop.f32.mrb[0].mxu0
        %v2071 = vpop.f32.mrb[0].mxu0
        %v2072 = vpop.f32.mrb[0].mxu0
        %2073 = vdwg.mxu0
        %v2074 = vmax.f32 %v2069, 0.0
        %v2075 = vld [vmem:[%s14] sm:$0xf]
        %v2076 = vld [vmem:[%s14 + $0x4] sm:$0xf]
        %v2077 = vld [vmem:[%s14 + $0x8] sm:$0xf]
        %v2078 = vld [vmem:[%s14 + $0xc] sm:$0xf]
        %v2079 = vld [vmem:[%s14 + $0x10] sm:$0xf]
        %v2080 = vld [vmem:[%s14 + $0x14] sm:$0xf]
        %v2081 = vld [vmem:[%s14 + $0x18] sm:$0xf]
        %v2082 = vld [vmem:[%s14 + $0x1c] sm:$0xf]
        %v2083 = vpack.c.bf16 %v2074, %v2074
        %v2084 = vld [vmem:[%s15] sm:$0x1]
        %v2086 = vlaneseq
        %v2087 = vshrl.u32 %v2086, 7
        %v2088 = vsub.s32 0, %v2087
        %v2089 = vrot.slane %v2084, %v2088
        %v2099 = vunpack.c.l.b16 %v2075
        %v2100 = vunpack.c.l.b16 %v2076
        %v2101 = vunpack.c.l.b16 %v2077
        %v2102 = vunpack.c.l.b16 %v2078
        %v2103 = vunpack.c.l.b16 %v2079
        %v2104 = vunpack.c.l.b16 %v2080
        %v2105 = vunpack.c.l.b16 %v2081
        %v2106 = vunpack.c.l.b16 %v2082
        %v2107 = vpack.c.b16 %v2100, %v2099
        %v2108 = vpack.c.b16 %v2102, %v2101
        %v2109 = vpack.c.b16 %v2104, %v2103
        %v2110 = vpack.c.b16 %v2106, %v2105
        %vm2115 = vcmask 523264
        %v2117 = vsel %vm2115, %v2083, 0
        %2119 = vmatprep.subr.bf16.mxu0 0
        %2120 = vmatpush1.bf16.msra.mxu0 %v2107
        %2121 = vmatprep.subr.bf16.mxu0 0
        %2122 = vmatpush1.bf16.msra.mxu0 %v2108
        %2123 = vmatprep.subr.bf16.mxu0 0
        %2124 = vmatpush1.bf16.msra.mxu0 %v2109
        %2125 = vmatprep.subr.bf16.mxu0 0
        %2126 = vmatpush1.bf16.msra.mxu0 %v2110
        %2127 = vmatprep.subr.bf16.mxu0 0
        %2128 = vmatpush1.bf16.msra.mxu0 0
        %2129 = vmatprep.subr.bf16.mxu0 0
        %2130 = vmatpush1.bf16.msra.mxu0 0
        %2131 = vmatprep.subr.bf16.mxu0 0
        %2132 = vmatpush1.bf16.msra.mxu0 0
        %2133 = vmatprep.subr.bf16.mxu0 0
        %2134 = vmatpush1.bf16.msra.mxu0 0
        %2135 = vmatprep.subr.bf16.mxu0 0
        %2136 = vmatpush1.bf16.msra.mxu0 0
        %2137 = vmatprep.subr.bf16.mxu0 0
        %2138 = vmatpush1.bf16.msra.mxu0 0
        %2139 = vmatprep.subr.bf16.mxu0 0
        %2140 = vmatpush1.bf16.msra.mxu0 0
        %2141 = vmatprep.subr.bf16.mxu0 0
        %2142 = vmatpush1.bf16.msra.mxu0 0
        %2143 = vmatprep.subr.bf16.mxu0 0
        %2144 = vmatpush1.bf16.msra.mxu0 0
        %2145 = vmatprep.subr.bf16.mxu0 0
        %2146 = vmatpush1.bf16.msra.mxu0 0
        %2147 = vmatprep.subr.bf16.mxu0 0
        %2148 = vmatpush1.bf16.msra.mxu0 0
        %2149 = vmatprep.subr.bf16.mxu0 0
        %2150 = vmatpush1.bf16.msra.mxu0 0
        %2151 = vmatprep.mubr.bf16.mxu0 0
        %2152 = vmatmul.mubr.bf16.gmra.mrb[0].mxu0 %v2117
        %v2153 = vpop.f32.mrb[0].mxu0
        %v2154 = vadd.f32 %v2089, %v2153
        %v2155 = vpop.f32.mrb[0].mxu0
        %v2156 = vpop.f32.mrb[0].mxu0
        %v2157 = vpop.f32.mrb[0].mxu0
        %2158 = vdwg.mxu0
        %v2159 = vadd.f32 %v2154, %v2006
        %v2160 = vld [vmem:[%s16] sm:$0x1]
        %v2161 = vld [vmem:[%s17] sm:$0x1]
        %v2162 = vsel %vm710, %v2159, 0.0
        %2163 = vadd.xlane.f32.xlu0 %v2162
        %v2164 = vpop.xlane.xlu0 %2163
        %v2165 = vmul.f32 %v2164, %v1982
        %v2166 = vsub.f32 %v2159, %v2165
        %v2167 = vmul.f32 %v2166, %v2166
        %v2168 = vsel %vm710, %v2167, 0.0
        %2169 = vadd.xlane.f32.xlu0 %v2168
        %v2170 = vpop.xlane.xlu0 %2169
        %v2171 = vmul.f32 %v2170, %v1982
        %v2172 = vadd.f32 %v2171, 1e-05
        %v2173 = vrsqrt.pop %v2172
        %v2174 = vmul.f32 %v2166, %v2173
        %v2176 = vlaneseq
        %v2177 = vshrl.u32 %v2176, 7
        %v2178 = vsub.s32 0, %v2177
        %v2179 = vrot.slane %v2160, %v2178
        %v2181 = vmul.f32 %v2174, %v2179
        %v2183 = vlaneseq
        %v2184 = vshrl.u32 %v2183, 7
        %v2185 = vsub.s32 0, %v2184
        %v2186 = vrot.slane %v2161, %v2185
        %v2188 = vadd.f32 %v2181, %v2186
        %v2189 = vpack.c.bf16 %v2188, %v2188
        %vm2190 = vcmask 257024
        %2191 = vst.msk [vmem:[%s683] sm:$0xf] %vm2190, %v2189
        %s2192 = sand.u32 %s451, 1
        %s2193 = scalar_lea.sflag [#allocation4], %s2192
        %s2194 = sand.u32 %s451, 1
        %s2195 = smul.addr %s2194, 4
        %s2196 = scalar_lea.vmem [#allocation11], %s2195
        // Predicated region
        $region113: #{tpu_custom_call.1} parent=91 // pred_check
          %p2197 = pneg %p461
        $region114: #{tpu_custom_call.1} parent=91 // pred_check_branch
          %2199 = sbr.rel (%p2197) target = $region116
        $region115: #{tpu_custom_call.1} parent=91 // pred_region
          %s2201 = ssub.s32 64, 64
          %2202 = vsyncadd %s2193, %s2201
          %s2203 = sadd.s32 %s44, %s43
          %s2204 = smul.addr %s2203, 64
          %s2205 = scalar_lea.hbm %s18, %s2204
          %s2207 = sshll.u32 %s2196, 4
          %s2208 = int_to_ptr.vmem [resolvable:$true] %s2207
          %2210 = dma.vmem_to_hbm [thread:$0]  %s2208, 64, %s2205, %s2193
        $region116: #{tpu_custom_call.1} parent=91 // pred_fallthru
          _
      $region92: #{tpu_custom_call.1} parent=5 // pred_fallthru
        _
      %p2211 = scmp.le.s32.totalorder 2, %s34
      // Predicated region
      $region117: #{tpu_custom_call.1} parent=5 // pred_check
        %p2212 = pneg %p2211
      $region118: #{tpu_custom_call.1} parent=5 // pred_check_branch
        %2214 = sbr.rel (%p2212) target = $region120
      $region119: #{tpu_custom_call.1} parent=5 // pred_region
        %s2215 = ssub.s32 %s34, 2
        // Predicated region
        $region121: #{tpu_custom_call.1} parent=119 // pred_check
          %p2216 = pneg %p467
        $region122: #{tpu_custom_call.1} parent=119 // pred_check_branch
          %2218 = sbr.rel (%p2216) target = $region124
        $region123: #{tpu_custom_call.1} parent=119 // pred_region
          %s2219 = sand.u32 %s452, 1
          %s2220 = scalar_lea.sflag [#allocation4], %s2219
          %s2221 = sand.u32 %s452, 1
          %s2222 = smul.addr %s2221, 4
          %s2223 = scalar_lea.vmem [#allocation11], %s2222
          %2224 = dma.done %s2220, 64
        $region124: #{tpu_custom_call.1} parent=119 // pred_fallthru
          _
      $region120: #{tpu_custom_call.1} parent=5 // pred_fallthru
        _
    $region6: #{tpu_custom_call.1} parent=1 // loop_footer
      %s38 = sadd.s32 1, %s34
    $region7: #{tpu_custom_call.1} parent=1 // loop_footer_branch
      %33 = sbr.rel target = $region3
    $region8: #{tpu_custom_call.1} parent=1 // loop_exit
      _
    %2225 = vsyncpa [#allocation3], 1
    %s2226 = scalar_lea.sflag [#allocation3], 1
    %2227 = vsyncpa %s2226, 1
    %2228 = vsyncpa [#allocation6], 1
    %s2229 = scalar_lea.sflag [#allocation6], 1
    %2230 = vsyncpa %s2229, 1
    %2231 = vsyncpa [#allocation9], 1
    %2232 = vsyncpa [#allocation4], 1
    %s2233 = scalar_lea.sflag [#allocation4], 1
    %2234 = vsyncpa %s2233, 1

// kernel: tpu_custom_call.1
$region0: #{tpu_custom_call.1}
  #allocation0 [shape = 'u32[]', space=smem, size = 0x4, offset = 0x4, fixed_abs, tag = 'smem constant byte address 0x4 - core index']
  #allocation1 [shape = 'u32[144,128]{1,0:T(1,128)}', space=vmem, size = 0x12000, scoped, tag = 'internal scratch']
  %s0 = inlined_call_operand.hbm [shape: bf16[2,8,32], index: 0, kind: input, shape index: {}]
  %s1 = inlined_call_operand.hbm [shape: bf16[2,8,32], index: 1, kind: input, shape index: {}]
  %s2 = inlined_call_operand.vmem [shape: bf16[32,32], index: 2, kind: input, shape index: {}]
  %s3 = inlined_call_operand.vmem [shape: f32[1,32], index: 3, kind: input, shape index: {}]
  %s4 = inlined_call_operand.vmem [shape: bf16[32,32], index: 4, kind: input, shape index: {}]
  %s5 = inlined_call_operand.vmem [shape: f32[1,32], index: 5, kind: input, shape index: {}]
  %s6 = inlined_call_operand.vmem [shape: bf16[32,32], index: 6, kind: input, shape index: {}]
  %s7 = inlined_call_operand.hbm [shape: f32[1,32], index: 7, kind: input, shape index: {}]
  %s8 = inlined_call_operand.hbm [shape: bf16[32,32], index: 8, kind: input, shape index: {}]
  %s9 = inlined_call_operand.hbm [shape: f32[1,32], index: 9, kind: input, shape index: {}]
  %s10 = inlined_call_operand.vmem [shape: f32[1,32], index: 10, kind: input, shape index: {}]
  %s11 = inlined_call_operand.vmem [shape: f32[1,32], index: 11, kind: input, shape index: {}]
  %s12 = inlined_call_operand.vmem [shape: bf16[32,64], index: 12, kind: input, shape index: {}]
  %s13 = inlined_call_operand.vmem [shape: f32[1,64], index: 13, kind: input, shape index: {}]
  %s14 = inlined_call_operand.vmem [shape: bf16[64,32], index: 14, kind: input, shape index: {}]
  %s15 = inlined_call_operand.vmem [shape: f32[1,32], index: 15, kind: input, shape index: {}]
  %s16 = inlined_call_operand.vmem [shape: f32[1,32], index: 16, kind: input, shape index: {}]
  %s17 = inlined_call_operand.vmem [shape: f32[1,32], index: 17, kind: input, shape index: {}]
  %s18 = inlined_call_operand.hbm [shape: bf16[2,8,32], index: 18, kind: output, shape index: {}]
  %s19 = sld [smem:[#allocation0]]
  $region125: #{tpu_custom_call.1} parent=0
    _
  %s21 = ssub.s32 1, %s19
  %s22 = scalar_select 0, %s21, %s19
  $region1: #{tpu_custom_call.1} parent=0
    #allocation2 [shape = 'u8[4096]{0}', space=vmem, size = 0x1000, scoped, tag = 'input window, operand 0']
    #allocation3 [shape = 's32[2]{0}', space=sflag, size = 0x8, scoped, tag = 'scoped memory for tpu_custom_call.1']
    #allocation4 [shape = 's32[2]{0}', space=sflag, size = 0x8, scoped, tag = 'scoped memory for tpu_custom_call.1']
    #allocation5 [shape = 'u8[4096]{0}', space=vmem, size = 0x1000, scoped, tag = 'input window, operand 1']
    #allocation6 [shape = 's32[2]{0}', space=sflag, size = 0x8, scoped, tag = 'scoped memory for tpu_custom_call.1']
    #allocation7 [shape = 'u8[512]{0}', space=vmem, size = 0x400, scoped, tag = 'input window, operand 7, single buffered']
    #allocation8 [shape = 'u8[8192]{0}', space=vmem, size = 0x2000, scoped, tag = 'input window, operand 8, single buffered']
    #allocation9 [shape = 's32[1]{0}', space=sflag, size = 0x4, scoped, tag = 'scoped memory for tpu_custom_call.1']
    #allocation10 [shape = 'u8[512]{0}', space=vmem, size = 0x400, scoped, tag = 'input window, operand 9, single buffered']
    #allocation11 [shape = 'u8[4096]{0}', space=vmem, size = 0x1000, scoped, tag = 'output window, operand 0']
    %23 = vsyncpa [#allocation3], 0
    %s24 = scalar_lea.sflag [#allocation3], 1
    %25 = vsyncpa %s24, 0
    %26 = vsyncpa [#allocation6], 0
    %s27 = scalar_lea.sflag [#allocation6], 1
    %28 = vsyncpa %s27, 0
    %29 = vsyncpa [#allocation9], 0
    %30 = vsyncpa [#allocation4], 0
    %s31 = scalar_lea.sflag [#allocation4], 1
    %32 = vsyncpa %s31, 0
    loop: start=0, step=1, limit=4
    $region2: #{tpu_custom_call.1} parent=1 // loop_pre_header
      _
    $region3: #{tpu_custom_call.1} parent=1 // loop_header
      %s34 = sphi 0, %s38
      %p35 = scmp.ge.s32.totalorder %s34, 4
      %s41 = sphi 0, %s53
      %s42 = sphi 0, %s49
      %s43 = sphi 0, %s41
      %s44 = sphi 0, %s42
      %s45 = sphi 0, %s43
      %s46 = sphi 0, %s44
      %s58 = sphi 0, %s60
      %s61 = sphi 0, %s58
      %s62 = sphi 0, %s61
      %s78 = sphi 0, %s62
      %s84 = sphi 0, %s86
      %s87 = sphi 0, %s84
      %s88 = sphi 0, %s87
      %s104 = sphi 0, %s88
      %s108 = sphi 0, %s108
      %s110 = sphi 0, %s108
      %s111 = sphi 0, %s110
      %s125 = sphi 0, %s111
      %s129 = sphi 0, %s129
      %s131 = sphi 0, %s129
      %s132 = sphi 0, %s131
      %s146 = sphi 0, %s132
      %s150 = sphi 0, %s150
      %s152 = sphi 0, %s150
      %s153 = sphi 0, %s152
      %s167 = sphi 0, %s153
      %s171 = sphi 0, %s171
      %s173 = sphi 0, %s171
      %s174 = sphi 0, %s173
      %s188 = sphi 0, %s174
      %s192 = sphi 0, %s192
      %s194 = sphi 0, %s192
      %s195 = sphi 0, %s194
      %s209 = sphi 0, %s195
      %s213 = sphi 0, %s213
      %s215 = sphi 0, %s213
      %s216 = sphi 0, %s215
      %s230 = sphi 0, %s216
      %s234 = sphi 0, %s234
      %s236 = sphi 0, %s234
      %s237 = sphi 0, %s236
      %s251 = sphi 0, %s237
      %s255 = sphi 0, %s255
      %s257 = sphi 0, %s255
      %s258 = sphi 0, %s257
      %s272 = sphi 0, %s258
      %s276 = sphi 0, %s276
      %s278 = sphi 0, %s276
      %s279 = sphi 0, %s278
      %s293 = sphi 0, %s279
      %s297 = sphi 0, %s297
      %s299 = sphi 0, %s297
      %s300 = sphi 0, %s299
      %s314 = sphi 0, %s300
      %s318 = sphi 0, %s318
      %s320 = sphi 0, %s318
      %s321 = sphi 0, %s320
      %s335 = sphi 0, %s321
      %s339 = sphi 0, %s339
      %s341 = sphi 0, %s339
      %s342 = sphi 0, %s341
      %s356 = sphi 0, %s342
      %s360 = sphi 0, %s360
      %s362 = sphi 0, %s360
      %s363 = sphi 0, %s362
      %s377 = sphi 0, %s363
      %s381 = sphi 0, %s381
      %s383 = sphi 0, %s381
      %s384 = sphi 0, %s383
      %s398 = sphi 0, %s384
      %s402 = sphi 0, %s402
      %s404 = sphi 0, %s402
      %s405 = sphi 0, %s404
      %s419 = sphi 0, %s405
      %s423 = sphi 0, %s423
      %s425 = sphi 0, %s423
      %s426 = sphi 0, %s425
      %s440 = sphi 0, %s426
      %s448 = sphi 0, %s450
      %s451 = sphi 0, %s448
      %s452 = sphi 0, %s451
      %s468 = sphi 0, %s452
    $region4: #{tpu_custom_call.1} parent=1 // loop_header_branch
      %37 = sbr.rel (%p35) target = $region8
    $region5: #{tpu_custom_call.1} parent=1 // loop_body
      %s39 = ssub.s32 %s34, 1
      %s40 = ssub.s32 %s34, 2
      %s47 = sadd.s32 1, %s42
      %p48 = scmp.ge.s32.totalorder %s47, 1
      %s49 = scalar_select %p48, 0, %s47
      %s50 = sadd.s32 1, %s41
      %s51 = scalar_select %p48, %s50, %s41
      %p52 = scmp.ge.s32.totalorder %s51, 2
      %s53 = scalar_select %p52, 0, %s51
      %s54 = ssub.s32 %s41, %s53
      %s55 = ssub.s32 %s42, %s49
      %s56 = sor.u32 %s54, %s55
      %p57 = scmp.eq.s32.totalorder %s56, 0
      %s59 = sadd.s32 %s58, 1
      %s60 = scalar_select %p57, %s58, %s59
      %p63 = pneg %p57
      %p64 = scmp.eq.s32.totalorder %s34, 1
      %p65 = por %p63, %p64
      %p66 = scmp.ne.s32.totalorder %s58, %s61
      %p67 = scmp.eq.s32.totalorder %s34, 0
      %p68 = por %p66, %p67
      %p69 = scmp.ne.s32.totalorder %s58, %s61
      %p70 = scmp.eq.s32.totalorder %s39, 1
      %p71 = por %p69, %p70
      %p72 = scmp.ne.s32.totalorder %s61, %s62
      %p73 = scmp.eq.s32.totalorder %s39, 0
      %p74 = por %p72, %p73
      %p75 = scmp.ne.s32.totalorder %s61, %s62
      %p76 = scmp.eq.s32.totalorder %s40, 1
      %p77 = por %p75, %p76
      %p79 = scmp.ne.s32.totalorder %s62, %s78
      %p80 = scmp.eq.s32.totalorder %s40, 0
      %p81 = por %p79, %p80
      %s82 = ssub.s32 %s41, %s53
      %p83 = scmp.eq.s32.totalorder %s82, 0
      %s85 = sadd.s32 %s84, 1
      %s86 = scalar_select %p83, %s84, %s85
      %p89 = pneg %p83
      %p90 = scmp.eq.s32.totalorder %s34, 1
      %p91 = por %p89, %p90
      %p92 = scmp.ne.s32.totalorder %s84, %s87
      %p93 = scmp.eq.s32.totalorder %s34, 0
      %p94 = por %p92, %p93
      %p95 = scmp.ne.s32.totalorder %s84, %s87
      %p96 = scmp.eq.s32.totalorder %s39, 1
      %p97 = por %p95, %p96
      %p98 = scmp.ne.s32.totalorder %s87, %s88
      %p99 = scmp.eq.s32.totalorder %s39, 0
      %p100 = por %p98, %p99
      %p101 = scmp.ne.s32.totalorder %s87, %s88
      %p102 = scmp.eq.s32.totalorder %s40, 1
      %p103 = por %p101, %p102
      %p105 = scmp.ne.s32.totalorder %s88, %s104
      %p106 = scmp.eq.s32.totalorder %s40, 0
      %p107 = por %p105, %p106
      %s109 = sadd.s32 %s108, 1
      %p112 = scmp.eq.s32.totalorder %s34, 1
      %p113 = scmp.ne.s32.totalorder %s108, %s110
      %p114 = scmp.eq.s32.totalorder %s34, 0
      %p115 = por %p113, %p114
      %p116 = scmp.ne.s32.totalorder %s108, %s110
      %p117 = scmp.eq.s32.totalorder %s39, 1
      %p118 = por %p116, %p117
      %p119 = scmp.ne.s32.totalorder %s110, %s111
      %p120 = scmp.eq.s32.totalorder %s39, 0
      %p121 = por %p119, %p120
      %p122 = scmp.ne.s32.totalorder %s110, %s111
      %p123 = scmp.eq.s32.totalorder %s40, 1
      %p124 = por %p122, %p123
      %p126 = scmp.ne.s32.totalorder %s111, %s125
      %p127 = scmp.eq.s32.totalorder %s40, 0
      %p128 = por %p126, %p127
      %s130 = sadd.s32 %s129, 1
      %p133 = scmp.eq.s32.totalorder %s34, 1
      %p134 = scmp.ne.s32.totalorder %s129, %s131
      %p135 = scmp.eq.s32.totalorder %s34, 0
      %p136 = por %p134, %p135
      %p137 = scmp.ne.s32.totalorder %s129, %s131
      %p138 = scmp.eq.s32.totalorder %s39, 1
      %p139 = por %p137, %p138
      %p140 = scmp.ne.s32.totalorder %s131, %s132
      %p141 = scmp.eq.s32.totalorder %s39, 0
      %p142 = por %p140, %p141
      %p143 = scmp.ne.s32.totalorder %s131, %s132
      %p144 = scmp.eq.s32.totalorder %s40, 1
      %p145 = por %p143, %p144
      %p147 = scmp.ne.s32.totalorder %s132, %s146
      %p148 = scmp.eq.s32.totalorder %s40, 0
      %p149 = por %p147, %p148
      %s151 = sadd.s32 %s150, 1
      %p154 = scmp.eq.s32.totalorder %s34, 1
      %p155 = scmp.ne.s32.totalorder %s150, %s152
      %p156 = scmp.eq.s32.totalorder %s34, 0
      %p157 = por %p155, %p156
      %p158 = scmp.ne.s32.totalorder %s150, %s152
      %p159 = scmp.eq.s32.totalorder %s39, 1
      %p160 = por %p158, %p159
      %p161 = scmp.ne.s32.totalorder %s152, %s153
      %p162 = scmp.eq.s32.totalorder %s39, 0
      %p163 = por %p161, %p162
      %p164 = scmp.ne.s32.totalorder %s152, %s153
      %p165 = scmp.eq.s32.totalorder %s40, 1
      %p166 = por %p164, %p165
      %p168 = scmp.ne.s32.totalorder %s153, %s167
      %p169 = scmp.eq.s32.totalorder %s40, 0
      %p170 = por %p168, %p169
      %s172 = sadd.s32 %s171, 1
      %p175 = scmp.eq.s32.totalorder %s34, 1
      %p176 = scmp.ne.s32.totalorder %s171, %s173
      %p177 = scmp.eq.s32.totalorder %s34, 0
      %p178 = por %p176, %p177
      %p179 = scmp.ne.s32.totalorder %s171, %s173
      %p180 = scmp.eq.s32.totalorder %s39, 1
      %p181 = por %p179, %p180
      %p182 = scmp.ne.s32.totalorder %s173, %s174
      %p183 = scmp.eq.s32.totalorder %s39, 0
      %p184 = por %p182, %p183
      %p185 = scmp.ne.s32.totalorder %s173, %s174
      %p186 = scmp.eq.s32.totalorder %s40, 1
      %p187 = por %p185, %p186
      %p189 = scmp.ne.s32.totalorder %s174, %s188
      %p190 = scmp.eq.s32.totalorder %s40, 0
      %p191 = por %p189, %p190
      %s193 = sadd.s32 %s192, 1
      %p196 = scmp.eq.s32.totalorder %s34, 1
      %p197 = scmp.ne.s32.totalorder %s192, %s194
      %p198 = scmp.eq.s32.totalorder %s34, 0
      %p199 = por %p197, %p198
      %p200 = scmp.ne.s32.totalorder %s192, %s194
      %p201 = scmp.eq.s32.totalorder %s39, 1
      %p202 = por %p200, %p201
      %p203 = scmp.ne.s32.totalorder %s194, %s195
      %p204 = scmp.eq.s32.totalorder %s39, 0
      %p205 = por %p203, %p204
      %p206 = scmp.ne.s32.totalorder %s194, %s195
      %p207 = scmp.eq.s32.totalorder %s40, 1
      %p208 = por %p206, %p207
      %p210 = scmp.ne.s32.totalorder %s195, %s209
      %p211 = scmp.eq.s32.totalorder %s40, 0
      %p212 = por %p210, %p211
      %s214 = sadd.s32 %s213, 1
      %p217 = scmp.eq.s32.totalorder %s34, 1
      %p218 = scmp.ne.s32.totalorder %s213, %s215
      %p219 = scmp.eq.s32.totalorder %s34, 0
      %p220 = por %p218, %p219
      %p221 = scmp.ne.s32.totalorder %s213, %s215
      %p222 = scmp.eq.s32.totalorder %s39, 1
      %p223 = por %p221, %p222
      %p224 = scmp.ne.s32.totalorder %s215, %s216
      %p225 = scmp.eq.s32.totalorder %s39, 0
      %p226 = por %p224, %p225
      %p227 = scmp.ne.s32.totalorder %s215, %s216
      %p228 = scmp.eq.s32.totalorder %s40, 1
      %p229 = por %p227, %p228
      %p231 = scmp.ne.s32.totalorder %s216, %s230
      %p232 = scmp.eq.s32.totalorder %s40, 0
      %p233 = por %p231, %p232
      %s235 = sadd.s32 %s234, 1
      %p238 = scmp.eq.s32.totalorder %s34, 1
      %p239 = scmp.ne.s32.totalorder %s234, %s236
      %p240 = scmp.eq.s32.totalorder %s34, 0
      %p241 = por %p239, %p240
      %p242 = scmp.ne.s32.totalorder %s234, %s236
      %p243 = scmp.eq.s32.totalorder %s39, 1
      %p244 = por %p242, %p243
      %p245 = scmp.ne.s32.totalorder %s236, %s237
      %p246 = scmp.eq.s32.totalorder %s39, 0
      %p247 = por %p245, %p246
      %p248 = scmp.ne.s32.totalorder %s236, %s237
      %p249 = scmp.eq.s32.totalorder %s40, 1
      %p250 = por %p248, %p249
      %p252 = scmp.ne.s32.totalorder %s237, %s251
      %p253 = scmp.eq.s32.totalorder %s40, 0
      %p254 = por %p252, %p253
      %s256 = sadd.s32 %s255, 1
      %p259 = scmp.eq.s32.totalorder %s34, 1
      %p260 = scmp.ne.s32.totalorder %s255, %s257
      %p261 = scmp.eq.s32.totalorder %s34, 0
      %p262 = por %p260, %p261
      %p263 = scmp.ne.s32.totalorder %s255, %s257
      %p264 = scmp.eq.s32.totalorder %s39, 1
      %p265 = por %p263, %p264
      %p266 = scmp.ne.s32.totalorder %s257, %s258
      %p267 = scmp.eq.s32.totalorder %s39, 0
      %p268 = por %p266, %p267
      %p269 = scmp.ne.s32.totalorder %s257, %s258
      %p270 = scmp.eq.s32.totalorder %s40, 1
      %p271 = por %p269, %p270
      %p273 = scmp.ne.s32.totalorder %s258, %s272
      %p274 = scmp.eq.s32.totalorder %s40, 0
      %p275 = por %p273, %p274
      %s277 = sadd.s32 %s276, 1
      %p280 = scmp.eq.s32.totalorder %s34, 1
      %p281 = scmp.ne.s32.totalorder %s276, %s278
      %p282 = scmp.eq.s32.totalorder %s34, 0
      %p283 = por %p281, %p282
      %p284 = scmp.ne.s32.totalorder %s276, %s278
      %p285 = scmp.eq.s32.totalorder %s39, 1
      %p286 = por %p284, %p285
      %p287 = scmp.ne.s32.totalorder %s278, %s279
      %p288 = scmp.eq.s32.totalorder %s39, 0
      %p289 = por %p287, %p288
      %p290 = scmp.ne.s32.totalorder %s278, %s279
      %p291 = scmp.eq.s32.totalorder %s40, 1
      %p292 = por %p290, %p291
      %p294 = scmp.ne.s32.totalorder %s279, %s293
      %p295 = scmp.eq.s32.totalorder %s40, 0
      %p296 = por %p294, %p295
      %s298 = sadd.s32 %s297, 1
      %p301 = scmp.eq.s32.totalorder %s34, 1
      %p302 = scmp.ne.s32.totalorder %s297, %s299
      %p303 = scmp.eq.s32.totalorder %s34, 0
      %p304 = por %p302, %p303
      %p305 = scmp.ne.s32.totalorder %s297, %s299
      %p306 = scmp.eq.s32.totalorder %s39, 1
      %p307 = por %p305, %p306
      %p308 = scmp.ne.s32.totalorder %s299, %s300
      %p309 = scmp.eq.s32.totalorder %s39, 0
      %p310 = por %p308, %p309
      %p311 = scmp.ne.s32.totalorder %s299, %s300
      %p312 = scmp.eq.s32.totalorder %s40, 1
      %p313 = por %p311, %p312
      %p315 = scmp.ne.s32.totalorder %s300, %s314
      %p316 = scmp.eq.s32.totalorder %s40, 0
      %p317 = por %p315, %p316
      %s319 = sadd.s32 %s318, 1
      %p322 = scmp.eq.s32.totalorder %s34, 1
      %p323 = scmp.ne.s32.totalorder %s318, %s320
      %p324 = scmp.eq.s32.totalorder %s34, 0
      %p325 = por %p323, %p324
      %p326 = scmp.ne.s32.totalorder %s318, %s320
      %p327 = scmp.eq.s32.totalorder %s39, 1
      %p328 = por %p326, %p327
      %p329 = scmp.ne.s32.totalorder %s320, %s321
      %p330 = scmp.eq.s32.totalorder %s39, 0
      %p331 = por %p329, %p330
      %p332 = scmp.ne.s32.totalorder %s320, %s321
      %p333 = scmp.eq.s32.totalorder %s40, 1
      %p334 = por %p332, %p333
      %p336 = scmp.ne.s32.totalorder %s321, %s335
      %p337 = scmp.eq.s32.totalorder %s40, 0
      %p338 = por %p336, %p337
      %s340 = sadd.s32 %s339, 1
      %p343 = scmp.eq.s32.totalorder %s34, 1
      %p344 = scmp.ne.s32.totalorder %s339, %s341
      %p345 = scmp.eq.s32.totalorder %s34, 0
      %p346 = por %p344, %p345
      %p347 = scmp.ne.s32.totalorder %s339, %s341
      %p348 = scmp.eq.s32.totalorder %s39, 1
      %p349 = por %p347, %p348
      %p350 = scmp.ne.s32.totalorder %s341, %s342
      %p351 = scmp.eq.s32.totalorder %s39, 0
      %p352 = por %p350, %p351
      %p353 = scmp.ne.s32.totalorder %s341, %s342
      %p354 = scmp.eq.s32.totalorder %s40, 1
      %p355 = por %p353, %p354
      %p357 = scmp.ne.s32.totalorder %s342, %s356
      %p358 = scmp.eq.s32.totalorder %s40, 0
      %p359 = por %p357, %p358
      %s361 = sadd.s32 %s360, 1
      %p364 = scmp.eq.s32.totalorder %s34, 1
      %p365 = scmp.ne.s32.totalorder %s360, %s362
      %p366 = scmp.eq.s32.totalorder %s34, 0
      %p367 = por %p365, %p366
      %p368 = scmp.ne.s32.totalorder %s360, %s362
      %p369 = scmp.eq.s32.totalorder %s39, 1
      %p370 = por %p368, %p369
      %p371 = scmp.ne.s32.totalorder %s362, %s363
      %p372 = scmp.eq.s32.totalorder %s39, 0
      %p373 = por %p371, %p372
      %p374 = scmp.ne.s32.totalorder %s362, %s363
      %p375 = scmp.eq.s32.totalorder %s40, 1
      %p376 = por %p374, %p375
      %p378 = scmp.ne.s32.totalorder %s363, %s377
      %p379 = scmp.eq.s32.totalorder %s40, 0
      %p380 = por %p378, %p379
      %s382 = sadd.s32 %s381, 1
      %p385 = scmp.eq.s32.totalorder %s34, 1
      %p386 = scmp.ne.s32.totalorder %s381, %s383
      %p387 = scmp.eq.s32.totalorder %s34, 0
      %p388 = por %p386, %p387
      %p389 = scmp.ne.s32.totalorder %s381, %s383
      %p390 = scmp.eq.s32.totalorder %s39, 1
      %p391 = por %p389, %p390
      %p392 = scmp.ne.s32.totalorder %s383, %s384
      %p393 = scmp.eq.s32.totalorder %s39, 0
      %p394 = por %p392, %p393
      %p395 = scmp.ne.s32.totalorder %s383, %s384
      %p396 = scmp.eq.s32.totalorder %s40, 1
      %p397 = por %p395, %p396
      %p399 = scmp.ne.s32.totalorder %s384, %s398
      %p400 = scmp.eq.s32.totalorder %s40, 0
      %p401 = por %p399, %p400
      %s403 = sadd.s32 %s402, 1
      %p406 = scmp.eq.s32.totalorder %s34, 1
      %p407 = scmp.ne.s32.totalorder %s402, %s404
      %p408 = scmp.eq.s32.totalorder %s34, 0
      %p409 = por %p407, %p408
      %p410 = scmp.ne.s32.totalorder %s402, %s404
      %p411 = scmp.eq.s32.totalorder %s39, 1
      %p412 = por %p410, %p411
      %p413 = scmp.ne.s32.totalorder %s404, %s405
      %p414 = scmp.eq.s32.totalorder %s39, 0
      %p415 = por %p413, %p414
      %p416 = scmp.ne.s32.totalorder %s404, %s405
      %p417 = scmp.eq.s32.totalorder %s40, 1
      %p418 = por %p416, %p417
      %p420 = scmp.ne.s32.totalorder %s405, %s419
      %p421 = scmp.eq.s32.totalorder %s40, 0
      %p422 = por %p420, %p421
      %s424 = sadd.s32 %s423, 1
      %p427 = scmp.eq.s32.totalorder %s34, 1
      %p428 = scmp.ne.s32.totalorder %s423, %s425
      %p429 = scmp.eq.s32.totalorder %s34, 0
      %p430 = por %p428, %p429
      %p431 = scmp.ne.s32.totalorder %s423, %s425
      %p432 = scmp.eq.s32.totalorder %s39, 1
      %p433 = por %p431, %p432
      %p434 = scmp.ne.s32.totalorder %s425, %s426
      %p435 = scmp.eq.s32.totalorder %s39, 0
      %p436 = por %p434, %p435
      %p437 = scmp.ne.s32.totalorder %s425, %s426
      %p438 = scmp.eq.s32.totalorder %s40, 1
      %p439 = por %p437, %p438
      %p441 = scmp.ne.s32.totalorder %s426, %s440
      %p442 = scmp.eq.s32.totalorder %s40, 0
      %p443 = por %p441, %p442
      %s444 = ssub.s32 %s41, %s53
      %s445 = ssub.s32 %s42, %s49
      %s446 = sor.u32 %s444, %s445
      %p447 = scmp.eq.s32.totalorder %s446, 0
      %s449 = sadd.s32 %s448, 1
      %s450 = scalar_select %p447, %s448, %s449
      %p453 = pneg %p447
      %p454 = scmp.eq.s32.totalorder %s34, 1
      %p455 = por %p453, %p454
      %p456 = scmp.ne.s32.totalorder %s448, %s451
      %p457 = scmp.eq.s32.totalorder %s34, 0
      %p458 = por %p456, %p457
      %p459 = scmp.ne.s32.totalorder %s448, %s451
      %p460 = scmp.eq.s32.totalorder %s39, 1
      %p461 = por %p459, %p460
      %p462 = scmp.ne.s32.totalorder %s451, %s452
      %p463 = scmp.eq.s32.totalorder %s39, 0
      %p464 = por %p462, %p463
      %p465 = scmp.ne.s32.totalorder %s451, %s452
      %p466 = scmp.eq.s32.totalorder %s40, 1
      %p467 = por %p465, %p466
      %p469 = scmp.ne.s32.totalorder %s452, %s468
      %p470 = scmp.eq.s32.totalorder %s40, 0
      %p471 = por %p469, %p470
      %p472 = scmp.le.s32.totalorder 1, %s34
      %p473 = scmp.lt.s32.totalorder %s34, 3
      %p474 = pnand %p472, %p473
      %p475 = pneg %p474
      // Predicated region
      $region9: #{tpu_custom_call.1} parent=5 // pred_check
        _
      $region10: #{tpu_custom_call.1} parent=5 // pred_check_branch
        %477 = sbr.rel (%p474) target = $region12
      $region11: #{tpu_custom_call.1} parent=5 // pred_region
        %s478 = ssub.s32 %s34, 1
        // Predicated region
        $region13: #{tpu_custom_call.1} parent=11 // pred_check
          %p479 = pneg %p121
        $region14: #{tpu_custom_call.1} parent=11 // pred_check_branch
          %481 = sbr.rel (%p479) target = $region16
        $region15: #{tpu_custom_call.1} parent=11 // pred_region
          _
        $region16: #{tpu_custom_call.1} parent=11 // pred_fallthru
          _
        // Predicated region
        $region17: #{tpu_custom_call.1} parent=11 // pred_check
          %p482 = pneg %p142
        $region18: #{tpu_custom_call.1} parent=11 // pred_check_branch
          %484 = sbr.rel (%p482) target = $region20
        $region19: #{tpu_custom_call.1} parent=11 // pred_region
          _
        $region20: #{tpu_custom_call.1} parent=11 // pred_fallthru
          _
        // Predicated region
        $region21: #{tpu_custom_call.1} parent=11 // pred_check
          %p485 = pneg %p163
        $region22: #{tpu_custom_call.1} parent=11 // pred_check_branch
          %487 = sbr.rel (%p485) target = $region24
        $region23: #{tpu_custom_call.1} parent=11 // pred_region
          _
        $region24: #{tpu_custom_call.1} parent=11 // pred_fallthru
          _
        // Predicated region
        $region25: #{tpu_custom_call.1} parent=11 // pred_check
          %p488 = pneg %p184
        $region26: #{tpu_custom_call.1} parent=11 // pred_check_branch
          %490 = sbr.rel (%p488) target = $region28
        $region27: #{tpu_custom_call.1} parent=11 // pred_region
          _
        $region28: #{tpu_custom_call.1} parent=11 // pred_fallthru
          _
        // Predicated region
        $region29: #{tpu_custom_call.1} parent=11 // pred_check
          %p491 = pneg %p205
        $region30: #{tpu_custom_call.1} parent=11 // pred_check_branch
          %493 = sbr.rel (%p491) target = $region32
        $region31: #{tpu_custom_call.1} parent=11 // pred_region
          _
        $region32: #{tpu_custom_call.1} parent=11 // pred_fallthru
          _
        // Predicated region
        $region33: #{tpu_custom_call.1} parent=11 // pred_check
          %p494 = pneg %p226
        $region34: #{tpu_custom_call.1} parent=11 // pred_check_branch
          %496 = sbr.rel (%p494) target = $region36
        $region35: #{tpu_custom_call.1} parent=11 // pred_region
          %s498 = ssub.s32 16, 16
          %499 = vsyncadd [#allocation6], %s498
          %s501 = sshll.u32 [#allocation7], 4
          %s502 = int_to_ptr.vmem [resolvable:$true] %s501
          %504 = dma.hbm_to_vmem [thread:$0]  %s7, 16, %s502, [#allocation6]
        $region36: #{tpu_custom_call.1} parent=11 // pred_fallthru
          _
        // Predicated region
        $region37: #{tpu_custom_call.1} parent=11 // pred_check
          %p505 = pneg %p247
        $region38: #{tpu_custom_call.1} parent=11 // pred_check_branch
          %507 = sbr.rel (%p505) target = $region40
        $region39: #{tpu_custom_call.1} parent=11 // pred_region
          %s509 = ssub.s32 256, 256
          %510 = vsyncadd [#allocation9], %s509
          %s511 = sshll.u32 [#allocation8], 4
          %s512 = int_to_ptr.vmem [resolvable:$true] %s511
          %517 = dma.hbm_to_vmem [thread:$0]  %s8, 256, %s512, [#allocation9], 64, 64, 4
        $region40: #{tpu_custom_call.1} parent=11 // pred_fallthru
          _
        // Predicated region
        $region41: #{tpu_custom_call.1} parent=11 // pred_check
          %p518 = pneg %p268
        $region42: #{tpu_custom_call.1} parent=11 // pred_check_branch
          %520 = sbr.rel (%p518) target = $region44
        $region43: #{tpu_custom_call.1} parent=11 // pred_region
          %s522 = ssub.s32 16, 16
          %523 = vsyncadd [#allocation9], %s522
          %s525 = sshll.u32 [#allocation10], 4
          %s526 = int_to_ptr.vmem [resolvable:$true] %s525
          %528 = dma.hbm_to_vmem [thread:$0]  %s9, 16, %s526, [#allocation9]
        $region44: #{tpu_custom_call.1} parent=11 // pred_fallthru
          _
        // Predicated region
        $region45: #{tpu_custom_call.1} parent=11 // pred_check
          %p529 = pneg %p289
        $region46: #{tpu_custom_call.1} parent=11 // pred_check_branch
          %531 = sbr.rel (%p529) target = $region48
        $region47: #{tpu_custom_call.1} parent=11 // pred_region
          _
        $region48: #{tpu_custom_call.1} parent=11 // pred_fallthru
          _
        // Predicated region
        $region49: #{tpu_custom_call.1} parent=11 // pred_check
          %p532 = pneg %p310
        $region50: #{tpu_custom_call.1} parent=11 // pred_check_branch
          %534 = sbr.rel (%p532) target = $region52
        $region51: #{tpu_custom_call.1} parent=11 // pred_region
          _
        $region52: #{tpu_custom_call.1} parent=11 // pred_fallthru
          _
        // Predicated region
        $region53: #{tpu_custom_call.1} parent=11 // pred_check
          %p535 = pneg %p331
        $region54: #{tpu_custom_call.1} parent=11 // pred_check_branch
          %537 = sbr.rel (%p535) target = $region56
        $region55: #{tpu_custom_call.1} parent=11 // pred_region
          _
        $region56: #{tpu_custom_call.1} parent=11 // pred_fallthru
          _
        // Predicated region
        $region57: #{tpu_custom_call.1} parent=11 // pred_check
          %p538 = pneg %p352
        $region58: #{tpu_custom_call.1} parent=11 // pred_check_branch
          %540 = sbr.rel (%p538) target = $region60
        $region59: #{tpu_custom_call.1} parent=11 // pred_region
          _
        $region60: #{tpu_custom_call.1} parent=11 // pred_fallthru
          _
        // Predicated region
        $region61: #{tpu_custom_call.1} parent=11 // pred_check
          %p541 = pneg %p373
        $region62: #{tpu_custom_call.1} parent=11 // pred_check_branch
          %543 = sbr.rel (%p541) target = $region64
        $region63: #{tpu_custom_call.1} parent=11 // pred_region
          _
        $region64: #{tpu_custom_call.1} parent=11 // pred_fallthru
          _
        // Predicated region
        $region65: #{tpu_custom_call.1} parent=11 // pred_check
          %p544 = pneg %p394
        $region66: #{tpu_custom_call.1} parent=11 // pred_check_branch
          %546 = sbr.rel (%p544) target = $region68
        $region67: #{tpu_custom_call.1} parent=11 // pred_region
          _
        $region68: #{tpu_custom_call.1} parent=11 // pred_fallthru
          _
        // Predicated region
        $region69: #{tpu_custom_call.1} parent=11 // pred_check
          %p547 = pneg %p415
        $region70: #{tpu_custom_call.1} parent=11 // pred_check_branch
          %549 = sbr.rel (%p547) target = $region72
        $region71: #{tpu_custom_call.1} parent=11 // pred_region
          _
        $region72: #{tpu_custom_call.1} parent=11 // pred_fallthru
          _
        // Predicated region
        $region73: #{tpu_custom_call.1} parent=11 // pred_check
          %p550 = pneg %p436
        $region74: #{tpu_custom_call.1} parent=11 // pred_check_branch
          %552 = sbr.rel (%p550) target = $region76
        $region75: #{tpu_custom_call.1} parent=11 // pred_region
          _
        $region76: #{tpu_custom_call.1} parent=11 // pred_fallthru
          _
      $region12: #{tpu_custom_call.1} parent=5 // pred_fallthru
        _
      %p553 = scmp.lt.s32.totalorder %s34, 2
      // Predicated region
      $region77: #{tpu_custom_call.1} parent=5 // pred_check
        %p554 = pneg %p553
      $region78: #{tpu_custom_call.1} parent=5 // pred_check_branch
        %556 = sbr.rel (%p554) target = $region80
      $region79: #{tpu_custom_call.1} parent=5 // pred_region
        // Predicated region
        $region81: #{tpu_custom_call.1} parent=79 // pred_check
          %p557 = pneg %p68
        $region82: #{tpu_custom_call.1} parent=79 // pred_check_branch
          %559 = sbr.rel (%p557) target = $region84
        $region83: #{tpu_custom_call.1} parent=79 // pred_region
          %s560 = sand.u32 %s58, 1
          %s561 = scalar_lea.sflag [#allocation3], %s560
          %s562 = sand.u32 %s58, 1
          %s563 = smul.addr %s562, 4
          %s564 = scalar_lea.vmem [#allocation2], %s563
          %s566 = ssub.s32 64, 64
          %567 = vsyncadd %s561, %s566
          %s568 = sadd.s32 %s42, %s41
          %s569 = smul.addr %s568, 64
          %s570 = scalar_lea.hbm %s0, %s569
          %s572 = sshll.u32 %s564, 4
          %s573 = int_to_ptr.vmem [resolvable:$true] %s572
          %575 = dma.hbm_to_vmem [thread:$0]  %s570, 64, %s573, %s561
        $region84: #{tpu_custom_call.1} parent=79 // pred_fallthru
          _
        // Predicated region
        $region85: #{tpu_custom_call.1} parent=79 // pred_check
          %p576 = pneg %p94
        $region86: #{tpu_custom_call.1} parent=79 // pred_check_branch
          %578 = sbr.rel (%p576) target = $region88
        $region87: #{tpu_custom_call.1} parent=79 // pred_region
          %s579 = sand.u32 %s34, 1
          %s580 = scalar_lea.sflag [#allocation6], %s579
          %s581 = sand.u32 %s84, 1
          %s582 = smul.addr %s581, 4
          %s583 = scalar_lea.vmem [#allocation5], %s582
          %s585 = ssub.s32 64, 64
          %586 = vsyncadd %s580, %s585
          %s587 = smul.addr %s41, 64
          %s588 = scalar_lea.hbm %s1, %s587
          %s590 = sshll.u32 %s583, 4
          %s591 = int_to_ptr.vmem [resolvable:$true] %s590
          %593 = dma.hbm_to_vmem [thread:$0]  %s588, 64, %s591, %s580
        $region88: #{tpu_custom_call.1} parent=79 // pred_fallthru
          _
      $region80: #{tpu_custom_call.1} parent=5 // pred_fallthru
        _
      %p594 = scmp.le.s32.totalorder 1, %s34
      %p595 = scmp.lt.s32.totalorder %s34, 3
      %p596 = pnand %p594, %p595
      %p597 = pneg %p596
      // Predicated region
      $region89: #{tpu_custom_call.1} parent=5 // pred_check
        _
      $region90: #{tpu_custom_call.1} parent=5 // pred_check_branch
        %599 = sbr.rel (%p596) target = $region92
      $region91: #{tpu_custom_call.1} parent=5 // pred_region
        %s600 = ssub.s32 %s34, 1
        %s601 = sand.u32 %s61, 1
        %s602 = scalar_lea.sflag [#allocation3], %s601
        %s603 = sand.u32 %s61, 1
        %s604 = smul.addr %s603, 4
        %s605 = scalar_lea.vmem [#allocation2], %s604
        // Predicated region
        $region93: #{tpu_custom_call.1} parent=91 // pred_check
          %p606 = pneg %p74
        $region94: #{tpu_custom_call.1} parent=91 // pred_check_branch
          %608 = sbr.rel (%p606) target = $region96
        $region95: #{tpu_custom_call.1} parent=91 // pred_region
          %609 = dma.done %s602, 64
        $region96: #{tpu_custom_call.1} parent=91 // pred_fallthru
          _
        %s610 = sand.u32 %s39, 1
        %s611 = scalar_lea.sflag [#allocation6], %s610
        %s612 = sand.u32 %s87, 1
        %s613 = smul.addr %s612, 4
        %s614 = scalar_lea.vmem [#allocation5], %s613
        // Predicated region
        $region97: #{tpu_custom_call.1} parent=91 // pred_check
          %p615 = pneg %p100
        $region98: #{tpu_custom_call.1} parent=91 // pred_check_branch
          %617 = sbr.rel (%p615) target = $region100
        $region99: #{tpu_custom_call.1} parent=91 // pred_region
          %618 = dma.done %s611, 64
        $region100: #{tpu_custom_call.1} parent=91 // pred_fallthru
          _
        // Predicated region
        $region101: #{tpu_custom_call.1} parent=91 // pred_check
          %p619 = pneg %p226
        $region102: #{tpu_custom_call.1} parent=91 // pred_check_branch
          %621 = sbr.rel (%p619) target = $region104
        $region103: #{tpu_custom_call.1} parent=91 // pred_region
          %622 = dma.done [#allocation6], 16
        $region104: #{tpu_custom_call.1} parent=91 // pred_fallthru
          _
        // Predicated region
        $region105: #{tpu_custom_call.1} parent=91 // pred_check
          %p623 = pneg %p247
        $region106: #{tpu_custom_call.1} parent=91 // pred_check_branch
          %625 = sbr.rel (%p623) target = $region108
        $region107: #{tpu_custom_call.1} parent=91 // pred_region
          %626 = dma.done [#allocation9], 256
        $region108: #{tpu_custom_call.1} parent=91 // pred_fallthru
          _
        // Predicated region
        $region109: #{tpu_custom_call.1} parent=91 // pred_check
          %p627 = pneg %p268
        $region110: #{tpu_custom_call.1} parent=91 // pred_check_branch
          %629 = sbr.rel (%p627) target = $region112
        $region111: #{tpu_custom_call.1} parent=91 // pred_region
          %630 = dma.done [#allocation9], 16
        $region112: #{tpu_custom_call.1} parent=91 // pred_fallthru
          _
        %s631 = sand.u32 %s61, 1
        %s632 = scalar_lea.sflag [#allocation3], %s631
        %s633 = sand.u32 %s61, 1
        %s634 = smul.addr %s633, 4
        %s635 = scalar_lea.vmem [#allocation2], %s634
        %p636 = pneg %p74
        %p637 = pneg %p71
        %s638 = sand.u32 %s39, 1
        %s639 = scalar_lea.sflag [#allocation6], %s638
        %s640 = sand.u32 %s87, 1
        %s641 = smul.addr %s640, 4
        %s642 = scalar_lea.vmem [#allocation5], %s641
        %p643 = pneg %p100
        %p644 = pneg %p97
        %p645 = pneg %p121
        %p646 = pneg %p118
        %p647 = pneg %p142
        %p648 = pneg %p139
        %p649 = pneg %p163
        %p650 = pneg %p160
        %p651 = pneg %p184
        %p652 = pneg %p181
        %p653 = pneg %p205
        %p654 = pneg %p202
        %p655 = pneg %p226
        %p656 = pneg %p223
        %p657 = pneg %p247
        %p658 = pneg %p244
        %p659 = pneg %p268
        %p660 = pneg %p265
        %p661 = pneg %p289
        %p662 = pneg %p286
        %p663 = pneg %p310
        %p664 = pneg %p307
        %p665 = pneg %p331
        %p666 = pneg %p328
        %p667 = pneg %p352
        %p668 = pneg %p349
        %p669 = pneg %p373
        %p670 = pneg %p370
        %p671 = pneg %p394
        %p672 = pneg %p391
        %p673 = pneg %p415
        %p674 = pneg %p412
        %p675 = pneg %p436
        %p676 = pneg %p433
        %p677 = pneg %p464
        %p678 = pneg %p461
        %s679 = sand.u32 %s451, 1
        %s680 = scalar_lea.sflag [#allocation4], %s679
        %s681 = sand.u32 %s451, 1
        %s682 = smul.addr %s681, 4
        %s683 = scalar_lea.vmem [#allocation11], %s682
        %v685 = vld [vmem:[%s605] sm:$0xf]
        %v686 = vld [vmem:[%s614] sm:$0xf]
        %v687 = vld [vmem:[%s2] sm:$0xf]
        %v688 = vld [vmem:[%s2 + $0x4] sm:$0xf]
        %v689 = vld [vmem:[%s2 + $0x8] sm:$0xf]
        %v690 = vld [vmem:[%s2 + $0xc] sm:$0xf]
        %v691 = vld [vmem:[%s3] sm:$0x1]
        %v693 = vlaneseq
        %v694 = vshrl.u32 %v693, 7
        %v695 = vsub.s32 0, %v694
        %v696 = vrot.slane %v691, %v695
        %v702 = vunpack.c.l.b16 %v687
        %v703 = vunpack.c.l.b16 %v688
        %v704 = vunpack.c.l.b16 %v689
        %v705 = vunpack.c.l.b16 %v690
        %v706 = vpack.c.b16 %v703, %v702
        %v707 = vpack.c.b16 %v705, %v704
        %vm710 = vcmask 261120
        %v712 = vsel %vm710, %v685, 0
        %714 = vmatprep.subr.bf16.mxu0 0
        %715 = vmatpush1.bf16.msra.mxu0 %v706
        %716 = vmatprep.subr.bf16.mxu0 0
        %717 = vmatpush1.bf16.msra.mxu0 %v707
        %718 = vmatprep.subr.bf16.mxu0 0
        %719 = vmatpush1.bf16.msra.mxu0 0
        %720 = vmatprep.subr.bf16.mxu0 0
        %721 = vmatpush1.bf16.msra.mxu0 0
        %722 = vmatprep.subr.bf16.mxu0 0
        %723 = vmatpush1.bf16.msra.mxu0 0
        %724 = vmatprep.subr.bf16.mxu0 0
        %725 = vmatpush1.bf16.msra.mxu0 0
        %726 = vmatprep.subr.bf16.mxu0 0
        %727 = vmatpush1.bf16.msra.mxu0 0
        %728 = vmatprep.subr.bf16.mxu0 0
        %729 = vmatpush1.bf16.msra.mxu0 0
        %730 = vmatprep.subr.bf16.mxu0 0
        %731 = vmatpush1.bf16.msra.mxu0 0
        %732 = vmatprep.subr.bf16.mxu0 0
        %733 = vmatpush1.bf16.msra.mxu0 0
        %734 = vmatprep.subr.bf16.mxu0 0
        %735 = vmatpush1.bf16.msra.mxu0 0
        %736 = vmatprep.subr.bf16.mxu0 0
        %737 = vmatpush1.bf16.msra.mxu0 0
        %738 = vmatprep.subr.bf16.mxu0 0
        %739 = vmatpush1.bf16.msra.mxu0 0
        %740 = vmatprep.subr.bf16.mxu0 0
        %741 = vmatpush1.bf16.msra.mxu0 0
        %742 = vmatprep.subr.bf16.mxu0 0
        %743 = vmatpush1.bf16.msra.mxu0 0
        %744 = vmatprep.subr.bf16.mxu0 0
        %745 = vmatpush1.bf16.msra.mxu0 0
        %746 = vmatprep.mubr.bf16.mxu0 0
        %747 = vmatmul.mubr.bf16.gmra.mrb[0].mxu0 %v712
        %v748 = vpop.f32.mrb[0].mxu0
        %v749 = vadd.f32 %v696, %v748
        %v750 = vpop.f32.mrb[0].mxu0
        %v751 = vpop.f32.mrb[0].mxu0
        %v752 = vpop.f32.mrb[0].mxu0
        %753 = vdwg.mxu0
        %v754 = vld [vmem:[%s4] sm:$0xf]
        %v755 = vld [vmem:[%s4 + $0x4] sm:$0xf]
        %v756 = vld [vmem:[%s4 + $0x8] sm:$0xf]
        %v757 = vld [vmem:[%s4 + $0xc] sm:$0xf]
        %v758 = vld [vmem:[%s5] sm:$0x1]
        %v760 = vlaneseq
        %v761 = vshrl.u32 %v760, 7
        %v762 = vsub.s32 0, %v761
        %v763 = vrot.slane %v758, %v762
        %v769 = vunpack.c.l.b16 %v754
        %v770 = vunpack.c.l.b16 %v755
        %v771 = vunpack.c.l.b16 %v756
        %v772 = vunpack.c.l.b16 %v757
        %v773 = vpack.c.b16 %v770, %v769
        %v774 = vpack.c.b16 %v772, %v771
        %v778 = vsel %vm710, %v686, 0
        %780 = vmatprep.subr.bf16.mxu0 0
        %781 = vmatpush1.bf16.msra.mxu0 %v773
        %782 = vmatprep.subr.bf16.mxu0 0
        %783 = vmatpush1.bf16.msra.mxu0 %v774
        %784 = vmatprep.subr.bf16.mxu0 0
        %785 = vmatpush1.bf16.msra.mxu0 0
        %786 = vmatprep.subr.bf16.mxu0 0
        %787 = vmatpush1.bf16.msra.mxu0 0
        %788 = vmatprep.subr.bf16.mxu0 0
        %789 = vmatpush1.bf16.msra.mxu0 0
        %790 = vmatprep.subr.bf16.mxu0 0
        %791 = vmatpush1.bf16.msra.mxu0 0
        %792 = vmatprep.subr.bf16.mxu0 0
        %793 = vmatpush1.bf16.msra.mxu0 0
        %794 = vmatprep.subr.bf16.mxu0 0
        %795 = vmatpush1.bf16.msra.mxu0 0
        %796 = vmatprep.subr.bf16.mxu0 0
        %797 = vmatpush1.bf16.msra.mxu0 0
        %798 = vmatprep.subr.bf16.mxu0 0
        %799 = vmatpush1.bf16.msra.mxu0 0
        %800 = vmatprep.subr.bf16.mxu0 0
        %801 = vmatpush1.bf16.msra.mxu0 0
        %802 = vmatprep.subr.bf16.mxu0 0
        %803 = vmatpush1.bf16.msra.mxu0 0
        %804 = vmatprep.subr.bf16.mxu0 0
        %805 = vmatpush1.bf16.msra.mxu0 0
        %806 = vmatprep.subr.bf16.mxu0 0
        %807 = vmatpush1.bf16.msra.mxu0 0
        %808 = vmatprep.subr.bf16.mxu0 0
        %809 = vmatpush1.bf16.msra.mxu0 0
        %810 = vmatprep.subr.bf16.mxu0 0
        %811 = vmatpush1.bf16.msra.mxu0 0
        %812 = vmatprep.mubr.bf16.mxu0 0
        %813 = vmatmul.mubr.bf16.gmra.mrb[0].mxu0 %v778
        %v814 = vpop.f32.mrb[0].mxu0
        %v815 = vadd.f32 %v763, %v814
        %v816 = vpop.f32.mrb[0].mxu0
        %v817 = vpop.f32.mrb[0].mxu0
        %v818 = vpop.f32.mrb[0].mxu0
        %819 = vdwg.mxu0
        %v820 = vld [vmem:[%s6] sm:$0xf]
        %v821 = vld [vmem:[%s6 + $0x4] sm:$0xf]
        %v822 = vld [vmem:[%s6 + $0x8] sm:$0xf]
        %v823 = vld [vmem:[%s6 + $0xc] sm:$0xf]
        %v824 = vld [vmem:[#allocation7] sm:$0x1]
        %v826 = vlaneseq
        %v827 = vshrl.u32 %v826, 7
        %v828 = vsub.s32 0, %v827
        %v829 = vrot.slane %v824, %v828
        %v835 = vunpack.c.l.b16 %v820
        %v836 = vunpack.c.l.b16 %v821
        %v837 = vunpack.c.l.b16 %v822
        %v838 = vunpack.c.l.b16 %v823
        %v839 = vpack.c.b16 %v836, %v835
        %v840 = vpack.c.b16 %v838, %v837
        %843 = vmatprep.subr.bf16.mxu0 0
        %844 = vmatpush1.bf16.msra.mxu0 %v839
        %845 = vmatprep.subr.bf16.mxu0 0
        %846 = vmatpush1.bf16.msra.mxu0 %v840
        %847 = vmatprep.subr.bf16.mxu0 0
        %848 = vmatpush1.bf16.msra.mxu0 0
        %849 = vmatprep.subr.bf16.mxu0 0
        %850 = vmatpush1.bf16.msra.mxu0 0
        %851 = vmatprep.subr.bf16.mxu0 0
        %852 = vmatpush1.bf16.msra.mxu0 0
        %853 = vmatprep.subr.bf16.mxu0 0
        %854 = vmatpush1.bf16.msra.mxu0 0
        %855 = vmatprep.subr.bf16.mxu0 0
        %856 = vmatpush1.bf16.msra.mxu0 0
        %857 = vmatprep.subr.bf16.mxu0 0
        %858 = vmatpush1.bf16.msra.mxu0 0
        %859 = vmatprep.subr.bf16.mxu0 0
        %860 = vmatpush1.bf16.msra.mxu0 0
        %861 = vmatprep.subr.bf16.mxu0 0
        %862 = vmatpush1.bf16.msra.mxu0 0
        %863 = vmatprep.subr.bf16.mxu0 0
        %864 = vmatpush1.bf16.msra.mxu0 0
        %865 = vmatprep.subr.bf16.mxu0 0
        %866 = vmatpush1.bf16.msra.mxu0 0
        %867 = vmatprep.subr.bf16.mxu0 0
        %868 = vmatpush1.bf16.msra.mxu0 0
        %869 = vmatprep.subr.bf16.mxu0 0
        %870 = vmatpush1.bf16.msra.mxu0 0
        %871 = vmatprep.subr.bf16.mxu0 0
        %872 = vmatpush1.bf16.msra.mxu0 0
        %873 = vmatprep.subr.bf16.mxu0 0
        %874 = vmatpush1.bf16.msra.mxu0 0
        %875 = vmatprep.mubr.bf16.mxu0 0
        %876 = vmatmul.mubr.bf16.gmra.mrb[0].mxu0 %v778
        %v877 = vpop.f32.mrb[0].mxu0
        %v878 = vadd.f32 %v829, %v877
        %v879 = vpop.f32.mrb[0].mxu0
        %v880 = vpop.f32.mrb[0].mxu0
        %v881 = vpop.f32.mrb[0].mxu0
        %882 = vdwg.mxu0
        %v883 = vpack.c.bf16 %v749, %v749
        %v884 = vpack.c.bf16 %v815, %v815
        %vm885 = vcmask 64512
        %v887 = vsel %vm885, %v883, 0
        %v890 = vsel %vm885, %v884, 0
        %892 = vmatprep.subr.bf16.mxu0 0
        %893 = vmatpush1.bf16.xpose.msra.mxu0 %v890
        %894 = vmatprep.subr.bf16.mxu0 0
        %895 = vmatpush1.bf16.xpose.msra.mxu0 0
        %896 = vmatprep.subr.bf16.mxu0 0
        %897 = vmatpush1.bf16.xpose.msra.mxu0 0
        %898 = vmatprep.subr.bf16.mxu0 0
        %899 = vmatpush1.bf16.xpose.msra.mxu0 0
        %900 = vmatprep.subr.bf16.mxu0 0
        %901 = vmatpush1.bf16.xpose.msra.mxu0 0
        %902 = vmatprep.subr.bf16.mxu0 0
        %903 = vmatpush1.bf16.xpose.msra.mxu0 0
        %904 = vmatprep.subr.bf16.mxu0 0
        %905 = vmatpush1.bf16.xpose.msra.mxu0 0
        %906 = vmatprep.subr.bf16.mxu0 0
        %907 = vmatpush1.bf16.xpose.msra.mxu0 0
        %908 = vmatprep.subr.bf16.mxu0 0
        %909 = vmatpush1.bf16.xpose.msra.mxu0 0
        %910 = vmatprep.subr.bf16.mxu0 0
        %911 = vmatpush1.bf16.xpose.msra.mxu0 0
        %912 = vmatprep.subr.bf16.mxu0 0
        %913 = vmatpush1.bf16.xpose.msra.mxu0 0
        %914 = vmatprep.subr.bf16.mxu0 0
        %915 = vmatpush1.bf16.xpose.msra.mxu0 0
        %916 = vmatprep.subr.bf16.mxu0 0
        %917 = vmatpush1.bf16.xpose.msra.mxu0 0
        %918 = vmatprep.subr.bf16.mxu0 0
        %919 = vmatpush1.bf16.xpose.msra.mxu0 0
        %920 = vmatprep.subr.bf16.mxu0 0
        %921 = vmatpush1.bf16.xpose.msra.mxu0 0
        %922 = vmatprep.subr.bf16.mxu0 0
        %923 = vmatpush1.bf16.xpose.msra.mxu0 0
        %924 = vmatprep.mubr.bf16.mxu0 0
        %925 = vmatmul.mubr.bf16.gmra.mrb[0].mxu0 %v887
        %v926 = vpop.f32.mrb[0].mxu0
        %v927 = vadd.f32 0.0, %v926
        %v928 = vpop.f32.mrb[0].mxu0
        %v929 = vpop.f32.mrb[0].mxu0
        %v930 = vpop.f32.mrb[0].mxu0
        %931 = vdwg.mxu0
        %v932 = vmul.f32 %v927, 0.35355338
        %v933 = vsel %vm885, %v932, -inf
        %934 = vmax.xlane.f32.xlu0 %v933
        %v935 = vpop.xlane.xlu0 %934
        %v936 = vsub.f32 %v932, %v935
        %v937 = vmul.f32 %v936, 1.442695
        %v938 = vpow.pop %v937
        %v939 = vsel %vm885, %v938, 0.0
        %940 = vadd.xlane.f32.xlu0 %v939
        %v941 = vpop.xlane.xlu0 %940
        %v942 = vrcp.pop %v941
        %v943 = vmul.f32 %v938, %v942
        %v944 = vpack.c.bf16 %v943, %v943
        %v945 = vpack.c.bf16 %v878, %v878
        %v947 = vsel %vm885, %v944, 0
        %vm949 = vcmask 1043456
        %v951 = vsel %vm949, %v945, 0
        %953 = vmatprep.subr.bf16.mxu0 0
        %954 = vmatpush1.bf16.msra.mxu0 %v951
        %955 = vmatprep.subr.bf16.mxu0 0
        %956 = vmatpush1.bf16.msra.mxu0 0
        %957 = vmatprep.subr.bf16.mxu0 0
        %958 = vmatpush1.bf16.msra.mxu0 0
        %959 = vmatprep.subr.bf16.mxu0 0
        %960 = vmatpush1.bf16.msra.mxu0 0
        %961 = vmatprep.subr.bf16.mxu0 0
        %962 = vmatpush1.bf16.msra.mxu0 0
        %963 = vmatprep.subr.bf16.mxu0 0
        %964 = vmatpush1.bf16.msra.mxu0 0
        %965 = vmatprep.subr.bf16.mxu0 0
        %966 = vmatpush1.bf16.msra.mxu0 0
        %967 = vmatprep.subr.bf16.mxu0 0
        %968 = vmatpush1.bf16.msra.mxu0 0
        %969 = vmatprep.subr.bf16.mxu0 0
        %970 = vmatpush1.bf16.msra.mxu0 0
        %971 = vmatprep.subr.bf16.mxu0 0
        %972 = vmatpush1.bf16.msra.mxu0 0
        %973 = vmatprep.subr.bf16.mxu0 0
        %974 = vmatpush1.bf16.msra.mxu0 0
        %975 = vmatprep.subr.bf16.mxu0 0
        %976 = vmatpush1.bf16.msra.mxu0 0
        %977 = vmatprep.subr.bf16.mxu0 0
        %978 = vmatpush1.bf16.msra.mxu0 0
        %979 = vmatprep.subr.bf16.mxu0 0
        %980 = vmatpush1.bf16.msra.mxu0 0
        %981 = vmatprep.subr.bf16.mxu0 0
        %982 = vmatpush1.bf16.msra.mxu0 0
        %983 = vmatprep.subr.bf16.mxu0 0
        %984 = vmatpush1.bf16.msra.mxu0 0
        %985 = vmatprep.mubr.bf16.mxu0 0
        %986 = vmatmul.mubr.bf16.gmra.mrb[0].mxu0 %v947
        %v987 = vpop.f32.mrb[0].mxu0
        %v988 = vadd.f32 0.0, %v987
        %v989 = vpop.f32.mrb[0].mxu0
        %v990 = vpop.f32.mrb[0].mxu0
        %v991 = vpop.f32.mrb[0].mxu0
        %992 = vdwg.mxu0
        %994 = vrot.lane.b32.xlu0 %v883, 120
        %v995 = vpop.permute.xlu0 %994
        %997 = vrot.lane.b32.xlu0 %v884, 120
        %v998 = vpop.permute.xlu0 %997
        %v1000 = vsel %vm885, %v995, 0
        %v1003 = vsel %vm885, %v998, 0
        %1005 = vmatprep.subr.bf16.mxu0 0
        %1006 = vmatpush1.bf16.xpose.msra.mxu0 %v1003
        %1007 = vmatprep.subr.bf16.mxu0 0
        %1008 = vmatpush1.bf16.xpose.msra.mxu0 0
        %1009 = vmatprep.subr.bf16.mxu0 0
        %1010 = vmatpush1.bf16.xpose.msra.mxu0 0
        %1011 = vmatprep.subr.bf16.mxu0 0
        %1012 = vmatpush1.bf16.xpose.msra.mxu0 0
        %1013 = vmatprep.subr.bf16.mxu0 0
        %1014 = vmatpush1.bf16.xpose.msra.mxu0 0
        %1015 = vmatprep.subr.bf16.mxu0 0
        %1016 = vmatpush1.bf16.xpose.msra.mxu0 0
        %1017 = vmatprep.subr.bf16.mxu0 0
        %1018 = vmatpush1.bf16.xpose.msra.mxu0 0
        %1019 = vmatprep.subr.bf16.mxu0 0
        %1020 = vmatpush1.bf16.xpose.msra.mxu0 0
        %1021 = vmatprep.subr.bf16.mxu0 0
        %1022 = vmatpush1.bf16.xpose.msra.mxu0 0
        %1023 = vmatprep.subr.bf16.mxu0 0
        %1024 = vmatpush1.bf16.xpose.msra.mxu0 0
        %1025 = vmatprep.subr.bf16.mxu0 0
        %1026 = vmatpush1.bf16.xpose.msra.mxu0 0
        %1027 = vmatprep.subr.bf16.mxu0 0
        %1028 = vmatpush1.bf16.xpose.msra.mxu0 0
        %1029 = vmatprep.subr.bf16.mxu0 0
        %1030 = vmatpush1.bf16.xpose.msra.mxu0 0
        %1031 = vmatprep.subr.bf16.mxu0 0
        %1032 = vmatpush1.bf16.xpose.msra.mxu0 0
        %1033 = vmatprep.subr.bf16.mxu0 0
        %1034 = vmatpush1.bf16.xpose.msra.mxu0 0
        %1035 = vmatprep.subr.bf16.mxu0 0
        %1036 = vmatpush1.bf16.xpose.msra.mxu0 0
        %1037 = vmatprep.mubr.bf16.mxu0 0
        %1038 = vmatmul.mubr.bf16.gmra.mrb[0].mxu0 %v1000
        %v1039 = vpop.f32.mrb[0].mxu0
        %v1040 = vadd.f32 0.0, %v1039
        %v1041 = vpop.f32.mrb[0].mxu0
        %v1042 = vpop.f32.mrb[0].mxu0
        %v1043 = vpop.f32.mrb[0].mxu0
        %1044 = vdwg.mxu0
        %v1045 = vmul.f32 %v1040, 0.35355338
        %v1046 = vsel %vm885, %v1045, -inf
        %1047 = vmax.xlane.f32.xlu0 %v1046
        %v1048 = vpop.xlane.xlu0 %1047
        %v1049 = vsub.f32 %v1045, %v1048
        %v1050 = vmul.f32 %v1049, 1.442695
        %v1051 = vpow.pop %v1050
        %v1052 = vsel %vm885, %v1051, 0.0
        %1053 = vadd.xlane.f32.xlu0 %v1052
        %v1054 = vpop.xlane.xlu0 %1053
        %v1055 = vrcp.pop %v1054
        %v1056 = vmul.f32 %v1051, %v1055
        %v1057 = vpack.c.bf16 %v1056, %v1056
        %1059 = vrot.lane.b32.xlu0 %v945, 120
        %v1060 = vpop.permute.xlu0 %1059
        %v1062 = vsel %vm885, %v1057, 0
        %v1065 = vsel %vm949, %v1060, 0
        %1067 = vmatprep.subr.bf16.mxu0 0
        %1068 = vmatpush1.bf16.msra.mxu0 %v1065
        %1069 = vmatprep.subr.bf16.mxu0 0
        %1070 = vmatpush1.bf16.msra.mxu0 0
        %1071 = vmatprep.subr.bf16.mxu0 0
        %1072 = vmatpush1.bf16.msra.mxu0 0
        %1073 = vmatprep.subr.bf16.mxu0 0
        %1074 = vmatpush1.bf16.msra.mxu0 0
        %1075 = vmatprep.subr.bf16.mxu0 0
        %1076 = vmatpush1.bf16.msra.mxu0 0
        %1077 = vmatprep.subr.bf16.mxu0 0
        %1078 = vmatpush1.bf16.msra.mxu0 0
        %1079 = vmatprep.subr.bf16.mxu0 0
        %1080 = vmatpush1.bf16.msra.mxu0 0
        %1081 = vmatprep.subr.bf16.mxu0 0
        %1082 = vmatpush1.bf16.msra.mxu0 0
        %1083 = vmatprep.subr.bf16.mxu0 0
        %1084 = vmatpush1.bf16.msra.mxu0 0
        %1085 = vmatprep.subr.bf16.mxu0 0
        %1086 = vmatpush1.bf16.msra.mxu0 0
        %1087 = vmatprep.subr.bf16.mxu0 0
        %1088 = vmatpush1.bf16.msra.mxu0 0
        %1089 = vmatprep.subr.bf16.mxu0 0
        %1090 = vmatpush1.bf16.msra.mxu0 0
        %1091 = vmatprep.subr.bf16.mxu0 0
        %1092 = vmatpush1.bf16.msra.mxu0 0
        %1093 = vmatprep.subr.bf16.mxu0 0
        %1094 = vmatpush1.bf16.msra.mxu0 0
        %1095 = vmatprep.subr.bf16.mxu0 0
        %1096 = vmatpush1.bf16.msra.mxu0 0
        %1097 = vmatprep.subr.bf16.mxu0 0
        %1098 = vmatpush1.bf16.msra.mxu0 0
        %1099 = vmatprep.mubr.bf16.mxu0 0
        %1100 = vmatmul.mubr.bf16.gmra.mrb[0].mxu0 %v1062
        %v1101 = vpop.f32.mrb[0].mxu0
        %v1102 = vadd.f32 0.0, %v1101
        %v1103 = vpop.f32.mrb[0].mxu0
        %v1104 = vpop.f32.mrb[0].mxu0
        %v1105 = vpop.f32.mrb[0].mxu0
        %1106 = vdwg.mxu0
        %1107 = vrot.lane.b32.xlu0 %v883, 112
        %v1108 = vpop.permute.xlu0 %1107
        %1109 = vrot.lane.b32.xlu0 %v884, 112
        %v1110 = vpop.permute.xlu0 %1109
        %v1112 = vsel %vm885, %v1108, 0
        %v1115 = vsel %vm885, %v1110, 0
        %1117 = vmatprep.subr.bf16.mxu0 0
        %1118 = vmatpush1.bf16.xpose.msra.mxu0 %v1115
        %1119 = vmatprep.subr.bf16.mxu0 0
        %1120 = vmatpush1.bf16.xpose.msra.mxu0 0
        %1121 = vmatprep.subr.bf16.mxu0 0
        %1122 = vmatpush1.bf16.xpose.msra.mxu0 0
        %1123 = vmatprep.subr.bf16.mxu0 0
        %1124 = vmatpush1.bf16.xpose.msra.mxu0 0
        %1125 = vmatprep.subr.bf16.mxu0 0
        %1126 = vmatpush1.bf16.xpose.msra.mxu0 0
        %1127 = vmatprep.subr.bf16.mxu0 0
        %1128 = vmatpush1.bf16.xpose.msra.mxu0 0
        %1129 = vmatprep.subr.bf16.mxu0 0
        %1130 = vmatpush1.bf16.xpose.msra.mxu0 0
        %1131 = vmatprep.subr.bf16.mxu0 0
        %1132 = vmatpush1.bf16.xpose.msra.mxu0 0
        %1133 = vmatprep.subr.bf16.mxu0 0
        %1134 = vmatpush1.bf16.xpose.msra.mxu0 0
        %1135 = vmatprep.subr.bf16.mxu0 0
        %1136 = vmatpush1.bf16.xpose.msra.mxu0 0
        %1137 = vmatprep.subr.bf16.mxu0 0
        %1138 = vmatpush1.bf16.xpose.msra.mxu0 0
        %1139 = vmatprep.subr.bf16.mxu0 0
        %1140 = vmatpush1.bf16.xpose.msra.mxu0 0
        %1141 = vmatprep.subr.bf16.mxu0 0
        %1142 = vmatpush1.bf16.xpose.msra.mxu0 0
        %1143 = vmatprep.subr.bf16.mxu0 0
        %1144 = vmatpush1.bf16.xpose.msra.mxu0 0
        %1145 = vmatprep.subr.bf16.mxu0 0
        %1146 = vmatpush1.bf16.xpose.msra.mxu0 0
        %1147 = vmatprep.subr.bf16.mxu0 0
        %1148 = vmatpush1.bf16.xpose.msra.mxu0 0
        %1149 = vmatprep.mubr.bf16.mxu0 0
        %1150 = vmatmul.mubr.bf16.gmra.mrb[0].mxu0 %v1112
        %v1151 = vpop.f32.mrb[0].mxu0
        %v1152 = vadd.f32 0.0, %v1151
        %v1153 = vpop.f32.mrb[0].mxu0
        %v1154 = vpop.f32.mrb[0].mxu0
        %v1155 = vpop.f32.mrb[0].mxu0
        %1156 = vdwg.mxu0
        %v1157 = vmul.f32 %v1152, 0.35355338
        %v1158 = vsel %vm885, %v1157, -inf
        %1159 = vmax.xlane.f32.xlu0 %v1158
        %v1160 = vpop.xlane.xlu0 %1159
        %v1161 = vsub.f32 %v1157, %v1160
        %v1162 = vmul.f32 %v1161, 1.442695
        %v1163 = vpow.pop %v1162
        %v1164 = vsel %vm885, %v1163, 0.0
        %1165 = vadd.xlane.f32.xlu0 %v1164
        %v1166 = vpop.xlane.xlu0 %1165
        %v1167 = vrcp.pop %v1166
        %v1168 = vmul.f32 %v1163, %v1167
        %v1169 = vpack.c.bf16 %v1168, %v1168
        %1170 = vrot.lane.b32.xlu0 %v945, 112
        %v1171 = vpop.permute.xlu0 %1170
        %v1173 = vsel %vm885, %v1169, 0
        %v1176 = vsel %vm949, %v1171, 0
        %1178 = vmatprep.subr.bf16.mxu0 0
        %1179 = vmatpush1.bf16.msra.mxu0 %v1176
        %1180 = vmatprep.subr.bf16.mxu0 0
        %1181 = vmatpush1.bf16.msra.mxu0 0
        %1182 = vmatprep.subr.bf16.mxu0 0
        %1183 = vmatpush1.bf16.msra.mxu0 0
        %1184 = vmatprep.subr.bf16.mxu0 0
        %1185 = vmatpush1.bf16.msra.mxu0 0
        %1186 = vmatprep.subr.bf16.mxu0 0
        %1187 = vmatpush1.bf16.msra.mxu0 0
        %1188 = vmatprep.subr.bf16.mxu0 0
        %1189 = vmatpush1.bf16.msra.mxu0 0
        %1190 = vmatprep.subr.bf16.mxu0 0
        %1191 = vmatpush1.bf16.msra.mxu0 0
        %1192 = vmatprep.subr.bf16.mxu0 0
        %1193 = vmatpush1.bf16.msra.mxu0 0
        %1194 = vmatprep.subr.bf16.mxu0 0
        %1195 = vmatpush1.bf16.msra.mxu0 0
        %1196 = vmatprep.subr.bf16.mxu0 0
        %1197 = vmatpush1.bf16.msra.mxu0 0
        %1198 = vmatprep.subr.bf16.mxu0 0
        %1199 = vmatpush1.bf16.msra.mxu0 0
        %1200 = vmatprep.subr.bf16.mxu0 0
        %1201 = vmatpush1.bf16.msra.mxu0 0
        %1202 = vmatprep.subr.bf16.mxu0 0
        %1203 = vmatpush1.bf16.msra.mxu0 0
        %1204 = vmatprep.subr.bf16.mxu0 0
        %1205 = vmatpush1.bf16.msra.mxu0 0
        %1206 = vmatprep.subr.bf16.mxu0 0
        %1207 = vmatpush1.bf16.msra.mxu0 0
        %1208 = vmatprep.subr.bf16.mxu0 0
        %1209 = vmatpush1.bf16.msra.mxu0 0
        %1210 = vmatprep.mubr.bf16.mxu0 0
        %1211 = vmatmul.mubr.bf16.gmra.mrb[0].mxu0 %v1173
        %v1212 = vpop.f32.mrb[0].mxu0
        %v1213 = vadd.f32 0.0, %v1212
        %v1214 = vpop.f32.mrb[0].mxu0
        %v1215 = vpop.f32.mrb[0].mxu0
        %v1216 = vpop.f32.mrb[0].mxu0
        %1217 = vdwg.mxu0
        %1218 = vrot.lane.b32.xlu0 %v883, 104
        %v1219 = vpop.permute.xlu0 %1218
        %1220 = vrot.lane.b32.xlu0 %v884, 104
        %v1221 = vpop.permute.xlu0 %1220
        %v1223 = vsel %vm885, %v1219, 0
        %v1226 = vsel %vm885, %v1221, 0
        %1228 = vmatprep.subr.bf16.mxu0 0
        %1229 = vmatpush1.bf16.xpose.msra.mxu0 %v1226
        %1230 = vmatprep.subr.bf16.mxu0 0
        %1231 = vmatpush1.bf16.xpose.msra.mxu0 0
        %1232 = vmatprep.subr.bf16.mxu0 0
        %1233 = vmatpush1.bf16.xpose.msra.mxu0 0
        %1234 = vmatprep.subr.bf16.mxu0 0
        %1235 = vmatpush1.bf16.xpose.msra.mxu0 0
        %1236 = vmatprep.subr.bf16.mxu0 0
        %1237 = vmatpush1.bf16.xpose.msra.mxu0 0
        %1238 = vmatprep.subr.bf16.mxu0 0
        %1239 = vmatpush1.bf16.xpose.msra.mxu0 0
        %1240 = vmatprep.subr.bf16.mxu0 0
        %1241 = vmatpush1.bf16.xpose.msra.mxu0 0
        %1242 = vmatprep.subr.bf16.mxu0 0
        %1243 = vmatpush1.bf16.xpose.msra.mxu0 0
        %1244 = vmatprep.subr.bf16.mxu0 0
        %1245 = vmatpush1.bf16.xpose.msra.mxu0 0
        %1246 = vmatprep.subr.bf16.mxu0 0
        %1247 = vmatpush1.bf16.xpose.msra.mxu0 0
        %1248 = vmatprep.subr.bf16.mxu0 0
        %1249 = vmatpush1.bf16.xpose.msra.mxu0 0
        %1250 = vmatprep.subr.bf16.mxu0 0
        %1251 = vmatpush1.bf16.xpose.msra.mxu0 0
        %1252 = vmatprep.subr.bf16.mxu0 0
        %1253 = vmatpush1.bf16.xpose.msra.mxu0 0
        %1254 = vmatprep.subr.bf16.mxu0 0
        %1255 = vmatpush1.bf16.xpose.msra.mxu0 0
        %1256 = vmatprep.subr.bf16.mxu0 0
        %1257 = vmatpush1.bf16.xpose.msra.mxu0 0
        %1258 = vmatprep.subr.bf16.mxu0 0
        %1259 = vmatpush1.bf16.xpose.msra.mxu0 0
        %1260 = vmatprep.mubr.bf16.mxu0 0
        %1261 = vmatmul.mubr.bf16.gmra.mrb[0].mxu0 %v1223
        %v1262 = vpop.f32.mrb[0].mxu0
        %v1263 = vadd.f32 0.0, %v1262
        %v1264 = vpop.f32.mrb[0].mxu0
        %v1265 = vpop.f32.mrb[0].mxu0
        %v1266 = vpop.f32.mrb[0].mxu0
        %1267 = vdwg.mxu0
        %v1268 = vmul.f32 %v1263, 0.35355338
        %v1269 = vsel %vm885, %v1268, -inf
        %1270 = vmax.xlane.f32.xlu0 %v1269
        %v1271 = vpop.xlane.xlu0 %1270
        %v1272 = vsub.f32 %v1268, %v1271
        %v1273 = vmul.f32 %v1272, 1.442695
        %v1274 = vpow.pop %v1273
        %v1275 = vsel %vm885, %v1274, 0.0
        %1276 = vadd.xlane.f32.xlu0 %v1275
        %v1277 = vpop.xlane.xlu0 %1276
        %v1278 = vrcp.pop %v1277
        %v1279 = vmul.f32 %v1274, %v1278
        %v1280 = vpack.c.bf16 %v1279, %v1279
        %1281 = vrot.lane.b32.xlu0 %v945, 104
        %v1282 = vpop.permute.xlu0 %1281
        %v1284 = vsel %vm885, %v1280, 0
        %v1287 = vsel %vm949, %v1282, 0
        %1289 = vmatprep.subr.bf16.mxu0 0
        %1290 = vmatpush1.bf16.msra.mxu0 %v1287
        %1291 = vmatprep.subr.bf16.mxu0 0
        %1292 = vmatpush1.bf16.msra.mxu0 0
        %1293 = vmatprep.subr.bf16.mxu0 0
        %1294 = vmatpush1.bf16.msra.mxu0 0
        %1295 = vmatprep.subr.bf16.mxu0 0
        %1296 = vmatpush1.bf16.msra.mxu0 0
        %1297 = vmatprep.subr.bf16.mxu0 0
        %1298 = vmatpush1.bf16.msra.mxu0 0
        %1299 = vmatprep.subr.bf16.mxu0 0
        %1300 = vmatpush1.bf16.msra.mxu0 0
        %1301 = vmatprep.subr.bf16.mxu0 0
        %1302 = vmatpush1.bf16.msra.mxu0 0
        %1303 = vmatprep.subr.bf16.mxu0 0
        %1304 = vmatpush1.bf16.msra.mxu0 0
        %1305 = vmatprep.subr.bf16.mxu0 0
        %1306 = vmatpush1.bf16.msra.mxu0 0
        %1307 = vmatprep.subr.bf16.mxu0 0
        %1308 = vmatpush1.bf16.msra.mxu0 0
        %1309 = vmatprep.subr.bf16.mxu0 0
        %1310 = vmatpush1.bf16.msra.mxu0 0
        %1311 = vmatprep.subr.bf16.mxu0 0
        %1312 = vmatpush1.bf16.msra.mxu0 0
        %1313 = vmatprep.subr.bf16.mxu0 0
        %1314 = vmatpush1.bf16.msra.mxu0 0
        %1315 = vmatprep.subr.bf16.mxu0 0
        %1316 = vmatpush1.bf16.msra.mxu0 0
        %1317 = vmatprep.subr.bf16.mxu0 0
        %1318 = vmatpush1.bf16.msra.mxu0 0
        %1319 = vmatprep.subr.bf16.mxu0 0
        %1320 = vmatpush1.bf16.msra.mxu0 0
        %1321 = vmatprep.mubr.bf16.mxu0 0
        %1322 = vmatmul.mubr.bf16.gmra.mrb[0].mxu0 %v1284
        %v1323 = vpop.f32.mrb[0].mxu0
        %v1324 = vadd.f32 0.0, %v1323
        %v1325 = vpop.f32.mrb[0].mxu0
        %v1326 = vpop.f32.mrb[0].mxu0
        %v1327 = vpop.f32.mrb[0].mxu0
        %1328 = vdwg.mxu0
        %1330 = vrot.lane.b32.xlu0 %v1102, 8
        %v1331 = vpop.permute.xlu0 %1330
        %1334 = vrot.lane.b32.xlu0 %v1213, 16
        %v1335 = vpop.permute.xlu0 %1334
        %1338 = vrot.lane.b32.xlu0 %v1324, 24
        %v1339 = vpop.permute.xlu0 %1338
        %v1341 = vsel %vm885, %v988, %v1331
        %vm1342 = vcmask 130048
        %v1343 = vsel %vm1342, %v1341, %v1335
        %vm1344 = vcmask 195584
        %v1345 = vsel %vm1344, %v1343, %v1339
        %v1346 = vld [vmem:[#allocation8] sm:$0xf]
        %v1347 = vld [vmem:[#allocation8 + $0x4] sm:$0xf]
        %v1348 = vld [vmem:[#allocation8 + $0x8] sm:$0xf]
        %v1349 = vld [vmem:[#allocation8 + $0xc] sm:$0xf]
        %v1350 = vpack.c.bf16 %v1345, %v1345
        %v1351 = vld [vmem:[#allocation10] sm:$0x1]
        %v1353 = vlaneseq
        %v1354 = vshrl.u32 %v1353, 7
        %v1355 = vsub.s32 0, %v1354
        %v1356 = vrot.slane %v1351, %v1355
        %v1362 = vunpack.c.l.b16 %v1346
        %v1363 = vunpack.c.l.b16 %v1347
        %v1364 = vunpack.c.l.b16 %v1348
        %v1365 = vunpack.c.l.b16 %v1349
        %v1366 = vpack.c.b16 %v1363, %v1362
        %v1367 = vpack.c.b16 %v1365, %v1364
        %v1371 = vsel %vm710, %v1350, 0
        %1373 = vmatprep.subr.bf16.mxu0 0
        %1374 = vmatpush1.bf16.msra.mxu0 %v1366
        %1375 = vmatprep.subr.bf16.mxu0 0
        %1376 = vmatpush1.bf16.msra.mxu0 %v1367
        %1377 = vmatprep.subr.bf16.mxu0 0
        %1378 = vmatpush1.bf16.msra.mxu0 0
        %1379 = vmatprep.subr.bf16.mxu0 0
        %1380 = vmatpush1.bf16.msra.mxu0 0
        %1381 = vmatprep.subr.bf16.mxu0 0
        %1382 = vmatpush1.bf16.msra.mxu0 0
        %1383 = vmatprep.subr.bf16.mxu0 0
        %1384 = vmatpush1.bf16.msra.mxu0 0
        %1385 = vmatprep.subr.bf16.mxu0 0
        %1386 = vmatpush1.bf16.msra.mxu0 0
        %1387 = vmatprep.subr.bf16.mxu0 0
        %1388 = vmatpush1.bf16.msra.mxu0 0
        %1389 = vmatprep.subr.bf16.mxu0 0
        %1390 = vmatpush1.bf16.msra.mxu0 0
        %1391 = vmatprep.subr.bf16.mxu0 0
        %1392 = vmatpush1.bf16.msra.mxu0 0
        %1393 = vmatprep.subr.bf16.mxu0 0
        %1394 = vmatpush1.bf16.msra.mxu0 0
        %1395 = vmatprep.subr.bf16.mxu0 0
        %1396 = vmatpush1.bf16.msra.mxu0 0
        %1397 = vmatprep.subr.bf16.mxu0 0
        %1398 = vmatpush1.bf16.msra.mxu0 0
        %1399 = vmatprep.subr.bf16.mxu0 0
        %1400 = vmatpush1.bf16.msra.mxu0 0
        %1401 = vmatprep.subr.bf16.mxu0 0
        %1402 = vmatpush1.bf16.msra.mxu0 0
        %1403 = vmatprep.subr.bf16.mxu0 0
        %1404 = vmatpush1.bf16.msra.mxu0 0
        %1405 = vmatprep.mubr.bf16.mxu0 0
        %1406 = vmatmul.mubr.bf16.gmra.mrb[0].mxu0 %v1371
        %v1407 = vpop.f32.mrb[0].mxu0
        %v1408 = vadd.f32 %v1356, %v1407
        %v1409 = vpop.f32.mrb[0].mxu0
        %v1410 = vpop.f32.mrb[0].mxu0
        %v1411 = vpop.f32.mrb[0].mxu0
        %1412 = vdwg.mxu0
        %v1413 = vunpack.c.l.bf16 %v685
        %v1414 = vadd.f32 %v1408, %v1413
        %v1415 = vld [vmem:[%s10] sm:$0x1]
        %v1416 = vld [vmem:[%s11] sm:$0x1]
        %v1417 = vsel %vm710, %v1414, 0.0
        %1418 = vadd.xlane.f32.xlu0 %v1417
        %v1419 = vpop.xlane.xlu0 %1418
        %v1420 = vrcp.pop 32.0
        %v1421 = vmul.f32 %v1419, %v1420
        %v1422 = vsub.f32 %v1414, %v1421
        %v1423 = vmul.f32 %v1422, %v1422
        %v1424 = vsel %vm710, %v1423, 0.0
        %1425 = vadd.xlane.f32.xlu0 %v1424
        %v1426 = vpop.xlane.xlu0 %1425
        %v1427 = vmul.f32 %v1426, %v1420
        %v1428 = vadd.f32 %v1427, 1e-05
        %v1429 = vrsqrt.pop %v1428
        %v1430 = vmul.f32 %v1422, %v1429
        %v1432 = vlaneseq
        %v1433 = vshrl.u32 %v1432, 7
        %v1434 = vsub.s32 0, %v1433
        %v1435 = vrot.slane %v1415, %v1434
        %v1437 = vmul.f32 %v1430, %v1435
        %v1439 = vlaneseq
        %v1440 = vshrl.u32 %v1439, 7
        %v1441 = vsub.s32 0, %v1440
        %v1442 = vrot.slane %v1416, %v1441
        %v1444 = vadd.f32 %v1437, %v1442
        %v1445 = vld [vmem:[%s12] sm:$0xf]
        %v1446 = vld [vmem:[%s12 + $0x4] sm:$0xf]
        %v1447 = vld [vmem:[%s12 + $0x8] sm:$0xf]
        %v1448 = vld [vmem:[%s12 + $0xc] sm:$0xf]
        %v1449 = vpack.c.bf16 %v1444, %v1444
        %v1450 = vld [vmem:[%s13] sm:$0x1]
        %v1452 = vlaneseq
        %v1453 = vshrl.u32 %v1452, 7
        %v1454 = vsub.s32 0, %v1453
        %v1455 = vrot.slane %v1450, %v1454
        %v1461 = vunpack.c.l.b16 %v1445
        %v1462 = vunpack.c.l.b16 %v1446
        %v1463 = vunpack.c.l.b16 %v1447
        %v1464 = vunpack.c.l.b16 %v1448
        %v1465 = vpack.c.b16 %v1462, %v1461
        %v1466 = vpack.c.b16 %v1464, %v1463
        %v1470 = vsel %vm710, %v1449, 0
        %1472 = vmatprep.subr.bf16.mxu0 0
        %1473 = vmatpush1.bf16.msra.mxu0 %v1465
        %1474 = vmatprep.subr.bf16.mxu0 0
        %1475 = vmatpush1.bf16.msra.mxu0 %v1466
        %1476 = vmatprep.subr.bf16.mxu0 0
        %1477 = vmatpush1.bf16.msra.mxu0 0
        %1478 = vmatprep.subr.bf16.mxu0 0
        %1479 = vmatpush1.bf16.msra.mxu0 0
        %1480 = vmatprep.subr.bf16.mxu0 0
        %1481 = vmatpush1.bf16.msra.mxu0 0
        %1482 = vmatprep.subr.bf16.mxu0 0
        %1483 = vmatpush1.bf16.msra.mxu0 0
        %1484 = vmatprep.subr.bf16.mxu0 0
        %1485 = vmatpush1.bf16.msra.mxu0 0
        %1486 = vmatprep.subr.bf16.mxu0 0
        %1487 = vmatpush1.bf16.msra.mxu0 0
        %1488 = vmatprep.subr.bf16.mxu0 0
        %1489 = vmatpush1.bf16.msra.mxu0 0
        %1490 = vmatprep.subr.bf16.mxu0 0
        %1491 = vmatpush1.bf16.msra.mxu0 0
        %1492 = vmatprep.subr.bf16.mxu0 0
        %1493 = vmatpush1.bf16.msra.mxu0 0
        %1494 = vmatprep.subr.bf16.mxu0 0
        %1495 = vmatpush1.bf16.msra.mxu0 0
        %1496 = vmatprep.subr.bf16.mxu0 0
        %1497 = vmatpush1.bf16.msra.mxu0 0
        %1498 = vmatprep.subr.bf16.mxu0 0
        %1499 = vmatpush1.bf16.msra.mxu0 0
        %1500 = vmatprep.subr.bf16.mxu0 0
        %1501 = vmatpush1.bf16.msra.mxu0 0
        %1502 = vmatprep.subr.bf16.mxu0 0
        %1503 = vmatpush1.bf16.msra.mxu0 0
        %1504 = vmatprep.mubr.bf16.mxu0 0
        %1505 = vmatmul.mubr.bf16.gmra.mrb[0].mxu0 %v1470
        %v1506 = vpop.f32.mrb[0].mxu0
        %v1507 = vadd.f32 %v1455, %v1506
        %v1508 = vpop.f32.mrb[0].mxu0
        %v1509 = vpop.f32.mrb[0].mxu0
        %v1510 = vpop.f32.mrb[0].mxu0
        %1511 = vdwg.mxu0
        %v1512 = vmax.f32 %v1507, 0.0
        %v1513 = vld [vmem:[%s14] sm:$0xf]
        %v1514 = vld [vmem:[%s14 + $0x4] sm:$0xf]
        %v1515 = vld [vmem:[%s14 + $0x8] sm:$0xf]
        %v1516 = vld [vmem:[%s14 + $0xc] sm:$0xf]
        %v1517 = vld [vmem:[%s14 + $0x10] sm:$0xf]
        %v1518 = vld [vmem:[%s14 + $0x14] sm:$0xf]
        %v1519 = vld [vmem:[%s14 + $0x18] sm:$0xf]
        %v1520 = vld [vmem:[%s14 + $0x1c] sm:$0xf]
        %v1521 = vpack.c.bf16 %v1512, %v1512
        %v1522 = vld [vmem:[%s15] sm:$0x1]
        %v1524 = vlaneseq
        %v1525 = vshrl.u32 %v1524, 7
        %v1526 = vsub.s32 0, %v1525
        %v1527 = vrot.slane %v1522, %v1526
        %v1537 = vunpack.c.l.b16 %v1513
        %v1538 = vunpack.c.l.b16 %v1514
        %v1539 = vunpack.c.l.b16 %v1515
        %v1540 = vunpack.c.l.b16 %v1516
        %v1541 = vunpack.c.l.b16 %v1517
        %v1542 = vunpack.c.l.b16 %v1518
        %v1543 = vunpack.c.l.b16 %v1519
        %v1544 = vunpack.c.l.b16 %v1520
        %v1545 = vpack.c.b16 %v1538, %v1537
        %v1546 = vpack.c.b16 %v1540, %v1539
        %v1547 = vpack.c.b16 %v1542, %v1541
        %v1548 = vpack.c.b16 %v1544, %v1543
        %vm1553 = vcmask 523264
        %v1555 = vsel %vm1553, %v1521, 0
        %1557 = vmatprep.subr.bf16.mxu0 0
        %1558 = vmatpush1.bf16.msra.mxu0 %v1545
        %1559 = vmatprep.subr.bf16.mxu0 0
        %1560 = vmatpush1.bf16.msra.mxu0 %v1546
        %1561 = vmatprep.subr.bf16.mxu0 0
        %1562 = vmatpush1.bf16.msra.mxu0 %v1547
        %1563 = vmatprep.subr.bf16.mxu0 0
        %1564 = vmatpush1.bf16.msra.mxu0 %v1548
        %1565 = vmatprep.subr.bf16.mxu0 0
        %1566 = vmatpush1.bf16.msra.mxu0 0
        %1567 = vmatprep.subr.bf16.mxu0 0
        %1568 = vmatpush1.bf16.msra.mxu0 0
        %1569 = vmatprep.subr.bf16.mxu0 0
        %1570 = vmatpush1.bf16.msra.mxu0 0
        %1571 = vmatprep.subr.bf16.mxu0 0
        %1572 = vmatpush1.bf16.msra.mxu0 0
        %1573 = vmatprep.subr.bf16.mxu0 0
        %1574 = vmatpush1.bf16.msra.mxu0 0
        %1575 = vmatprep.subr.bf16.mxu0 0
        %1576 = vmatpush1.bf16.msra.mxu0 0
        %1577 = vmatprep.subr.bf16.mxu0 0
        %1578 = vmatpush1.bf16.msra.mxu0 0
        %1579 = vmatprep.subr.bf16.mxu0 0
        %1580 = vmatpush1.bf16.msra.mxu0 0
        %1581 = vmatprep.subr.bf16.mxu0 0
        %1582 = vmatpush1.bf16.msra.mxu0 0
        %1583 = vmatprep.subr.bf16.mxu0 0
        %1584 = vmatpush1.bf16.msra.mxu0 0
        %1585 = vmatprep.subr.bf16.mxu0 0
        %1586 = vmatpush1.bf16.msra.mxu0 0
        %1587 = vmatprep.subr.bf16.mxu0 0
        %1588 = vmatpush1.bf16.msra.mxu0 0
        %1589 = vmatprep.mubr.bf16.mxu0 0
        %1590 = vmatmul.mubr.bf16.gmra.mrb[0].mxu0 %v1555
        %v1591 = vpop.f32.mrb[0].mxu0
        %v1592 = vadd.f32 %v1527, %v1591
        %v1593 = vpop.f32.mrb[0].mxu0
        %v1594 = vpop.f32.mrb[0].mxu0
        %v1595 = vpop.f32.mrb[0].mxu0
        %1596 = vdwg.mxu0
        %v1597 = vadd.f32 %v1592, %v1444
        %v1598 = vld [vmem:[%s16] sm:$0x1]
        %v1599 = vld [vmem:[%s17] sm:$0x1]
        %v1600 = vsel %vm710, %v1597, 0.0
        %1601 = vadd.xlane.f32.xlu0 %v1600
        %v1602 = vpop.xlane.xlu0 %1601
        %v1603 = vmul.f32 %v1602, %v1420
        %v1604 = vsub.f32 %v1597, %v1603
        %v1605 = vmul.f32 %v1604, %v1604
        %v1606 = vsel %vm710, %v1605, 0.0
        %1607 = vadd.xlane.f32.xlu0 %v1606
        %v1608 = vpop.xlane.xlu0 %1607
        %v1609 = vmul.f32 %v1608, %v1420
        %v1610 = vadd.f32 %v1609, 1e-05
        %v1611 = vrsqrt.pop %v1610
        %v1612 = vmul.f32 %v1604, %v1611
        %v1614 = vlaneseq
        %v1615 = vshrl.u32 %v1614, 7
        %v1616 = vsub.s32 0, %v1615
        %v1617 = vrot.slane %v1598, %v1616
        %v1619 = vmul.f32 %v1612, %v1617
        %v1621 = vlaneseq
        %v1622 = vshrl.u32 %v1621, 7
        %v1623 = vsub.s32 0, %v1622
        %v1624 = vrot.slane %v1599, %v1623
        %v1626 = vadd.f32 %v1619, %v1624
        %v1627 = vpack.c.bf16 %v1626, %v1626
        %vm1628 = vcmask 257024
        %1629 = vst.msk [vmem:[%s683] sm:$0xf] %vm1628, %v1627
        %s1630 = sand.u32 %s451, 1
        %s1631 = scalar_lea.sflag [#allocation4], %s1630
        %s1632 = sand.u32 %s451, 1
        %s1633 = smul.addr %s1632, 4
        %s1634 = scalar_lea.vmem [#allocation11], %s1633
        // Predicated region
        $region113: #{tpu_custom_call.1} parent=91 // pred_check
          %p1635 = pneg %p461
        $region114: #{tpu_custom_call.1} parent=91 // pred_check_branch
          %1637 = sbr.rel (%p1635) target = $region116
        $region115: #{tpu_custom_call.1} parent=91 // pred_region
          %s1639 = ssub.s32 64, 64
          %1640 = vsyncadd %s1631, %s1639
          %s1641 = sadd.s32 %s44, %s43
          %s1642 = smul.addr %s1641, 64
          %s1643 = scalar_lea.hbm %s18, %s1642
          %s1645 = sshll.u32 %s1634, 4
          %s1646 = int_to_ptr.vmem [resolvable:$true] %s1645
          %1648 = dma.vmem_to_hbm [thread:$0]  %s1646, 64, %s1643, %s1631
        $region116: #{tpu_custom_call.1} parent=91 // pred_fallthru
          _
      $region92: #{tpu_custom_call.1} parent=5 // pred_fallthru
        _
      %p1649 = scmp.le.s32.totalorder 2, %s34
      // Predicated region
      $region117: #{tpu_custom_call.1} parent=5 // pred_check
        %p1650 = pneg %p1649
      $region118: #{tpu_custom_call.1} parent=5 // pred_check_branch
        %1652 = sbr.rel (%p1650) target = $region120
      $region119: #{tpu_custom_call.1} parent=5 // pred_region
        %s1653 = ssub.s32 %s34, 2
        // Predicated region
        $region121: #{tpu_custom_call.1} parent=119 // pred_check
          %p1654 = pneg %p467
        $region122: #{tpu_custom_call.1} parent=119 // pred_check_branch
          %1656 = sbr.rel (%p1654) target = $region124
        $region123: #{tpu_custom_call.1} parent=119 // pred_region
          %s1657 = sand.u32 %s452, 1
          %s1658 = scalar_lea.sflag [#allocation4], %s1657
          %s1659 = sand.u32 %s452, 1
          %s1660 = smul.addr %s1659, 4
          %s1661 = scalar_lea.vmem [#allocation11], %s1660
          %1662 = dma.done %s1658, 64
        $region124: #{tpu_custom_call.1} parent=119 // pred_fallthru
          _
      $region120: #{tpu_custom_call.1} parent=5 // pred_fallthru
        _
    $region6: #{tpu_custom_call.1} parent=1 // loop_footer
      %s38 = sadd.s32 1, %s34
    $region7: #{tpu_custom_call.1} parent=1 // loop_footer_branch
      %33 = sbr.rel target = $region3
    $region8: #{tpu_custom_call.1} parent=1 // loop_exit
      _
    %1663 = vsyncpa [#allocation3], 1
    %s1664 = scalar_lea.sflag [#allocation3], 1
    %1665 = vsyncpa %s1664, 1
    %1666 = vsyncpa [#allocation6], 1
    %s1667 = scalar_lea.sflag [#allocation6], 1
    %1668 = vsyncpa %s1667, 1
    %1669 = vsyncpa [#allocation9], 1
    %1670 = vsyncpa [#allocation4], 1
    %s1671 = scalar_lea.sflag [#allocation4], 1
    %1672 = vsyncpa %s1671, 1

// kernel: tpu_custom_call.1
$region0: #{tpu_custom_call.1}
  #allocation0 [shape = 'u32[]', space=smem, size = 0x4, offset = 0x4, fixed_abs, tag = 'smem constant byte address 0x4 - core index']
  #allocation1 [shape = 'u32[144,128]{1,0:T(1,128)}', space=vmem, size = 0x12000, scoped, tag = 'internal scratch']
  %s0 = inlined_call_operand.hbm [shape: bf16[2,8,32], index: 0, kind: input, shape index: {}]
  %s1 = inlined_call_operand.hbm [shape: bf16[2,8,32], index: 1, kind: input, shape index: {}]
  %s2 = inlined_call_operand.vmem [shape: bf16[32,32], index: 2, kind: input, shape index: {}]
  %s3 = inlined_call_operand.vmem [shape: f32[1,32], index: 3, kind: input, shape index: {}]
  %s4 = inlined_call_operand.vmem [shape: bf16[32,32], index: 4, kind: input, shape index: {}]
  %s5 = inlined_call_operand.vmem [shape: f32[1,32], index: 5, kind: input, shape index: {}]
  %s6 = inlined_call_operand.vmem [shape: bf16[32,32], index: 6, kind: input, shape index: {}]
  %s7 = inlined_call_operand.hbm [shape: f32[1,32], index: 7, kind: input, shape index: {}]
  %s8 = inlined_call_operand.hbm [shape: bf16[32,32], index: 8, kind: input, shape index: {}]
  %s9 = inlined_call_operand.hbm [shape: f32[1,32], index: 9, kind: input, shape index: {}]
  %s10 = inlined_call_operand.vmem [shape: f32[1,32], index: 10, kind: input, shape index: {}]
  %s11 = inlined_call_operand.vmem [shape: f32[1,32], index: 11, kind: input, shape index: {}]
  %s12 = inlined_call_operand.vmem [shape: bf16[32,64], index: 12, kind: input, shape index: {}]
  %s13 = inlined_call_operand.vmem [shape: f32[1,64], index: 13, kind: input, shape index: {}]
  %s14 = inlined_call_operand.vmem [shape: bf16[64,32], index: 14, kind: input, shape index: {}]
  %s15 = inlined_call_operand.vmem [shape: f32[1,32], index: 15, kind: input, shape index: {}]
  %s16 = inlined_call_operand.vmem [shape: f32[1,32], index: 16, kind: input, shape index: {}]
  %s17 = inlined_call_operand.vmem [shape: f32[1,32], index: 17, kind: input, shape index: {}]
  %s18 = inlined_call_operand.hbm [shape: bf16[2,8,32], index: 18, kind: output, shape index: {}]
  %s19 = sld [smem:[#allocation0]]
  $region125: #{tpu_custom_call.1} parent=0
    _
  %s21 = ssub.s32 1, %s19
  %s22 = scalar_select 0, %s21, %s19
  $region1: #{tpu_custom_call.1} parent=0
    #allocation2 [shape = 'u8[4096]{0}', space=vmem, size = 0x1000, scoped, tag = 'input window, operand 0']
    #allocation3 [shape = 's32[2]{0}', space=sflag, size = 0x8, scoped, tag = 'scoped memory for tpu_custom_call.1']
    #allocation4 [shape = 's32[2]{0}', space=sflag, size = 0x8, scoped, tag = 'scoped memory for tpu_custom_call.1']
    #allocation5 [shape = 'u8[4096]{0}', space=vmem, size = 0x1000, scoped, tag = 'input window, operand 1']
    #allocation6 [shape = 's32[2]{0}', space=sflag, size = 0x8, scoped, tag = 'scoped memory for tpu_custom_call.1']
    #allocation7 [shape = 'u8[512]{0}', space=vmem, size = 0x400, scoped, tag = 'input window, operand 7, single buffered']
    #allocation8 [shape = 'u8[8192]{0}', space=vmem, size = 0x2000, scoped, tag = 'input window, operand 8, single buffered']
    #allocation9 [shape = 's32[1]{0}', space=sflag, size = 0x4, scoped, tag = 'scoped memory for tpu_custom_call.1']
    #allocation10 [shape = 'u8[512]{0}', space=vmem, size = 0x400, scoped, tag = 'input window, operand 9, single buffered']
    #allocation11 [shape = 'u8[4096]{0}', space=vmem, size = 0x1000, scoped, tag = 'output window, operand 0']
    %23 = vsyncpa [#allocation3], 0
    %s24 = scalar_lea.sflag [#allocation3], 1
    %25 = vsyncpa %s24, 0
    %26 = vsyncpa [#allocation6], 0
    %s27 = scalar_lea.sflag [#allocation6], 1
    %28 = vsyncpa %s27, 0
    %29 = vsyncpa [#allocation9], 0
    %30 = vsyncpa [#allocation4], 0
    %s31 = scalar_lea.sflag [#allocation4], 1
    %32 = vsyncpa %s31, 0
    loop: start=0, step=1, limit=4
    $region2: #{tpu_custom_call.1} parent=1 // loop_pre_header
      _
    $region3: #{tpu_custom_call.1} parent=1 // loop_header
      %s34 = sphi 0, %s38
      %p35 = scmp.ge.s32.totalorder %s34, 4
      %s41 = sphi 0, %s53
      %s42 = sphi 0, %s49
      %s43 = sphi 0, %s41
      %s44 = sphi 0, %s42
      %s45 = sphi 0, %s43
      %s46 = sphi 0, %s44
      %s58 = sphi 0, %s60
      %s61 = sphi 0, %s58
      %s62 = sphi 0, %s61
      %s78 = sphi 0, %s62
      %s84 = sphi 0, %s86
      %s87 = sphi 0, %s84
      %s88 = sphi 0, %s87
      %s104 = sphi 0, %s88
      %s108 = sphi 0, %s108
      %s110 = sphi 0, %s108
      %s111 = sphi 0, %s110
      %s125 = sphi 0, %s111
      %s129 = sphi 0, %s129
      %s131 = sphi 0, %s129
      %s132 = sphi 0, %s131
      %s146 = sphi 0, %s132
      %s150 = sphi 0, %s150
      %s152 = sphi 0, %s150
      %s153 = sphi 0, %s152
      %s167 = sphi 0, %s153
      %s171 = sphi 0, %s171
      %s173 = sphi 0, %s171
      %s174 = sphi 0, %s173
      %s188 = sphi 0, %s174
      %s192 = sphi 0, %s192
      %s194 = sphi 0, %s192
      %s195 = sphi 0, %s194
      %s209 = sphi 0, %s195
      %s213 = sphi 0, %s213
      %s215 = sphi 0, %s213
      %s216 = sphi 0, %s215
      %s230 = sphi 0, %s216
      %s234 = sphi 0, %s234
      %s236 = sphi 0, %s234
      %s237 = sphi 0, %s236
      %s251 = sphi 0, %s237
      %s255 = sphi 0, %s255
      %s257 = sphi 0, %s255
      %s258 = sphi 0, %s257
      %s272 = sphi 0, %s258
      %s276 = sphi 0, %s276
      %s278 = sphi 0, %s276
      %s279 = sphi 0, %s278
      %s293 = sphi 0, %s279
      %s297 = sphi 0, %s297
      %s299 = sphi 0, %s297
      %s300 = sphi 0, %s299
      %s314 = sphi 0, %s300
      %s318 = sphi 0, %s318
      %s320 = sphi 0, %s318
      %s321 = sphi 0, %s320
      %s335 = sphi 0, %s321
      %s339 = sphi 0, %s339
      %s341 = sphi 0, %s339
      %s342 = sphi 0, %s341
      %s356 = sphi 0, %s342
      %s360 = sphi 0, %s360
      %s362 = sphi 0, %s360
      %s363 = sphi 0, %s362
      %s377 = sphi 0, %s363
      %s381 = sphi 0, %s381
      %s383 = sphi 0, %s381
      %s384 = sphi 0, %s383
      %s398 = sphi 0, %s384
      %s402 = sphi 0, %s402
      %s404 = sphi 0, %s402
      %s405 = sphi 0, %s404
      %s419 = sphi 0, %s405
      %s423 = sphi 0, %s423
      %s425 = sphi 0, %s423
      %s426 = sphi 0, %s425
      %s440 = sphi 0, %s426
      %s448 = sphi 0, %s450
      %s451 = sphi 0, %s448
      %s452 = sphi 0, %s451
      %s468 = sphi 0, %s452
    $region4: #{tpu_custom_call.1} parent=1 // loop_header_branch
      %37 = sbr.rel (%p35) target = $region8
    $region5: #{tpu_custom_call.1} parent=1 // loop_body
      %s39 = ssub.s32 %s34, 1
      %s40 = ssub.s32 %s34, 2
      %s47 = sadd.s32 1, %s42
      %p48 = scmp.ge.s32.totalorder %s47, 1
      %s49 = scalar_select %p48, 0, %s47
      %s50 = sadd.s32 1, %s41
      %s51 = scalar_select %p48, %s50, %s41
      %p52 = scmp.ge.s32.totalorder %s51, 2
      %s53 = scalar_select %p52, 0, %s51
      %s54 = ssub.s32 %s41, %s53
      %s55 = ssub.s32 %s42, %s49
      %s56 = sor.u32 %s54, %s55
      %p57 = scmp.eq.s32.totalorder %s56, 0
      %s59 = sadd.s32 %s58, 1
      %s60 = scalar_select %p57, %s58, %s59
      %p63 = pneg %p57
      %p64 = scmp.eq.s32.totalorder %s34, 1
      %p65 = por %p63, %p64
      %p66 = scmp.ne.s32.totalorder %s58, %s61
      %p67 = scmp.eq.s32.totalorder %s34, 0
      %p68 = por %p66, %p67
      %p69 = scmp.ne.s32.totalorder %s58, %s61
      %p70 = scmp.eq.s32.totalorder %s39, 1
      %p71 = por %p69, %p70
      %p72 = scmp.ne.s32.totalorder %s61, %s62
      %p73 = scmp.eq.s32.totalorder %s39, 0
      %p74 = por %p72, %p73
      %p75 = scmp.ne.s32.totalorder %s61, %s62
      %p76 = scmp.eq.s32.totalorder %s40, 1
      %p77 = por %p75, %p76
      %p79 = scmp.ne.s32.totalorder %s62, %s78
      %p80 = scmp.eq.s32.totalorder %s40, 0
      %p81 = por %p79, %p80
      %s82 = ssub.s32 %s41, %s53
      %p83 = scmp.eq.s32.totalorder %s82, 0
      %s85 = sadd.s32 %s84, 1
      %s86 = scalar_select %p83, %s84, %s85
      %p89 = pneg %p83
      %p90 = scmp.eq.s32.totalorder %s34, 1
      %p91 = por %p89, %p90
      %p92 = scmp.ne.s32.totalorder %s84, %s87
      %p93 = scmp.eq.s32.totalorder %s34, 0
      %p94 = por %p92, %p93
      %p95 = scmp.ne.s32.totalorder %s84, %s87
      %p96 = scmp.eq.s32.totalorder %s39, 1
      %p97 = por %p95, %p96
      %p98 = scmp.ne.s32.totalorder %s87, %s88
      %p99 = scmp.eq.s32.totalorder %s39, 0
      %p100 = por %p98, %p99
      %p101 = scmp.ne.s32.totalorder %s87, %s88
      %p102 = scmp.eq.s32.totalorder %s40, 1
      %p103 = por %p101, %p102
      %p105 = scmp.ne.s32.totalorder %s88, %s104
      %p106 = scmp.eq.s32.totalorder %s40, 0
      %p107 = por %p105, %p106
      %s109 = sadd.s32 %s108, 1
      %p112 = scmp.eq.s32.totalorder %s34, 1
      %p113 = scmp.ne.s32.totalorder %s108, %s110
      %p114 = scmp.eq.s32.totalorder %s34, 0
      %p115 = por %p113, %p114
      %p116 = scmp.ne.s32.totalorder %s108, %s110
      %p117 = scmp.eq.s32.totalorder %s39, 1
      %p118 = por %p116, %p117
      %p119 = scmp.ne.s32.totalorder %s110, %s111
      %p120 = scmp.eq.s32.totalorder %s39, 0
      %p121 = por %p119, %p120
      %p122 = scmp.ne.s32.totalorder %s110, %s111
      %p123 = scmp.eq.s32.totalorder %s40, 1
      %p124 = por %p122, %p123
      %p126 = scmp.ne.s32.totalorder %s111, %s125
      %p127 = scmp.eq.s32.totalorder %s40, 0
      %p128 = por %p126, %p127
      %s130 = sadd.s32 %s129, 1
      %p133 = scmp.eq.s32.totalorder %s34, 1
      %p134 = scmp.ne.s32.totalorder %s129, %s131
      %p135 = scmp.eq.s32.totalorder %s34, 0
      %p136 = por %p134, %p135
      %p137 = scmp.ne.s32.totalorder %s129, %s131
      %p138 = scmp.eq.s32.totalorder %s39, 1
      %p139 = por %p137, %p138
      %p140 = scmp.ne.s32.totalorder %s131, %s132
      %p141 = scmp.eq.s32.totalorder %s39, 0
      %p142 = por %p140, %p141
      %p143 = scmp.ne.s32.totalorder %s131, %s132
      %p144 = scmp.eq.s32.totalorder %s40, 1
      %p145 = por %p143, %p144
      %p147 = scmp.ne.s32.totalorder %s132, %s146
      %p148 = scmp.eq.s32.totalorder %s40, 0
      %p149 = por %p147, %p148
      %s151 = sadd.s32 %s150, 1
      %p154 = scmp.eq.s32.totalorder %s34, 1
      %p155 = scmp.ne.s32.totalorder %s150, %s152
      %p156 = scmp.eq.s32.totalorder %s34, 0
      %p157 = por %p155, %p156
      %p158 = scmp.ne.s32.totalorder %s150, %s152
      %p159 = scmp.eq.s32.totalorder %s39, 1
      %p160 = por %p158, %p159
      %p161 = scmp.ne.s32.totalorder %s152, %s153
      %p162 = scmp.eq.s32.totalorder %s39, 0
      %p163 = por %p161, %p162
      %p164 = scmp.ne.s32.totalorder %s152, %s153
      %p165 = scmp.eq.s32.totalorder %s40, 1
      %p166 = por %p164, %p165
      %p168 = scmp.ne.s32.totalorder %s153, %s167
      %p169 = scmp.eq.s32.totalorder %s40, 0
      %p170 = por %p168, %p169
      %s172 = sadd.s32 %s171, 1
      %p175 = scmp.eq.s32.totalorder %s34, 1
      %p176 = scmp.ne.s32.totalorder %s171, %s173
      %p177 = scmp.eq.s32.totalorder %s34, 0
      %p178 = por %p176, %p177
      %p179 = scmp.ne.s32.totalorder %s171, %s173
      %p180 = scmp.eq.s32.totalorder %s39, 1
      %p181 = por %p179, %p180
      %p182 = scmp.ne.s32.totalorder %s173, %s174
      %p183 = scmp.eq.s32.totalorder %s39, 0
      %p184 = por %p182, %p183
      %p185 = scmp.ne.s32.totalorder %s173, %s174
      %p186 = scmp.eq.s32.totalorder %s40, 1
      %p187 = por %p185, %p186
      %p189 = scmp.ne.s32.totalorder %s174, %s188
      %p190 = scmp.eq.s32.totalorder %s40, 0
      %p191 = por %p189, %p190
      %s193 = sadd.s32 %s192, 1
      %p196 = scmp.eq.s32.totalorder %s34, 1
      %p197 = scmp.ne.s32.totalorder %s192, %s194
      %p198 = scmp.eq.s32.totalorder %s34, 0
      %p199 = por %p197, %p198
      %p200 = scmp.ne.s32.totalorder %s192, %s194
      %p201 = scmp.eq.s32.totalorder %s39, 1
      %p202 = por %p200, %p201
      %p203 = scmp.ne.s32.totalorder %s194, %s195
      %p204 = scmp.eq.s32.totalorder %s39, 0
      %p205 = por %p203, %p204
      %p206 = scmp.ne.s32.totalorder %s194, %s195
      %p207 = scmp.eq.s32.totalorder %s40, 1
      %p208 = por %p206, %p207
      %p210 = scmp.ne.s32.totalorder %s195, %s209
      %p211 = scmp.eq.s32.totalorder %s40, 0
      %p212 = por %p210, %p211
      %s214 = sadd.s32 %s213, 1
      %p217 = scmp.eq.s32.totalorder %s34, 1
      %p218 = scmp.ne.s32.totalorder %s213, %s215
      %p219 = scmp.eq.s32.totalorder %s34, 0
      %p220 = por %p218, %p219
      %p221 = scmp.ne.s32.totalorder %s213, %s215
      %p222 = scmp.eq.s32.totalorder %s39, 1
      %p223 = por %p221, %p222
      %p224 = scmp.ne.s32.totalorder %s215, %s216
      %p225 = scmp.eq.s32.totalorder %s39, 0
      %p226 = por %p224, %p225
      %p227 = scmp.ne.s32.totalorder %s215, %s216
      %p228 = scmp.eq.s32.totalorder %s40, 1
      %p229 = por %p227, %p228
      %p231 = scmp.ne.s32.totalorder %s216, %s230
      %p232 = scmp.eq.s32.totalorder %s40, 0
      %p233 = por %p231, %p232
      %s235 = sadd.s32 %s234, 1
      %p238 = scmp.eq.s32.totalorder %s34, 1
      %p239 = scmp.ne.s32.totalorder %s234, %s236
      %p240 = scmp.eq.s32.totalorder %s34, 0
      %p241 = por %p239, %p240
      %p242 = scmp.ne.s32.totalorder %s234, %s236
      %p243 = scmp.eq.s32.totalorder %s39, 1
      %p244 = por %p242, %p243
      %p245 = scmp.ne.s32.totalorder %s236, %s237
      %p246 = scmp.eq.s32.totalorder %s39, 0
      %p247 = por %p245, %p246
      %p248 = scmp.ne.s32.totalorder %s236, %s237
      %p249 = scmp.eq.s32.totalorder %s40, 1
      %p250 = por %p248, %p249
      %p252 = scmp.ne.s32.totalorder %s237, %s251
      %p253 = scmp.eq.s32.totalorder %s40, 0
      %p254 = por %p252, %p253
      %s256 = sadd.s32 %s255, 1
      %p259 = scmp.eq.s32.totalorder %s34, 1
      %p260 = scmp.ne.s32.totalorder %s255, %s257
      %p261 = scmp.eq.s32.totalorder %s34, 0
      %p262 = por %p260, %p261
      %p263 = scmp.ne.s32.totalorder %s255, %s257
      %p264 = scmp.eq.s32.totalorder %s39, 1
      %p265 = por %p263, %p264
      %p266 = scmp.ne.s32.totalorder %s257, %s258
      %p267 = scmp.eq.s32.totalorder %s39, 0
      %p268 = por %p266, %p267
      %p269 = scmp.ne.s32.totalorder %s257, %s258
      %p270 = scmp.eq.s32.totalorder %s40, 1
      %p271 = por %p269, %p270
      %p273 = scmp.ne.s32.totalorder %s258, %s272
      %p274 = scmp.eq.s32.totalorder %s40, 0
      %p275 = por %p273, %p274
      %s277 = sadd.s32 %s276, 1
      %p280 = scmp.eq.s32.totalorder %s34, 1
      %p281 = scmp.ne.s32.totalorder %s276, %s278
      %p282 = scmp.eq.s32.totalorder %s34, 0
      %p283 = por %p281, %p282
      %p284 = scmp.ne.s32.totalorder %s276, %s278
      %p285 = scmp.eq.s32.totalorder %s39, 1
      %p286 = por %p284, %p285
      %p287 = scmp.ne.s32.totalorder %s278, %s279
      %p288 = scmp.eq.s32.totalorder %s39, 0
      %p289 = por %p287, %p288
      %p290 = scmp.ne.s32.totalorder %s278, %s279
      %p291 = scmp.eq.s32.totalorder %s40, 1
      %p292 = por %p290, %p291
      %p294 = scmp.ne.s32.totalorder %s279, %s293
      %p295 = scmp.eq.s32.totalorder %s40, 0
      %p296 = por %p294, %p295
      %s298 = sadd.s32 %s297, 1
      %p301 = scmp.eq.s32.totalorder %s34, 1
      %p302 = scmp.ne.s32.totalorder %s297, %s299
      %p303 = scmp.eq.s32.totalorder %s34, 0
      %p304 = por %p302, %p303
      %p305 = scmp.ne.s32.totalorder %s297, %s299
      %p306 = scmp.eq.s32.totalorder %s39, 1
      %p307 = por %p305, %p306
      %p308 = scmp.ne.s32.totalorder %s299, %s300
      %p309 = scmp.eq.s32.totalorder %s39, 0
      %p310 = por %p308, %p309
      %p311 = scmp.ne.s32.totalorder %s299, %s300
      %p312 = scmp.eq.s32.totalorder %s40, 1
      %p313 = por %p311, %p312
      %p315 = scmp.ne.s32.totalorder %s300, %s314
      %p316 = scmp.eq.s32.totalorder %s40, 0
      %p317 = por %p315, %p316
      %s319 = sadd.s32 %s318, 1
      %p322 = scmp.eq.s32.totalorder %s34, 1
      %p323 = scmp.ne.s32.totalorder %s318, %s320
      %p324 = scmp.eq.s32.totalorder %s34, 0
      %p325 = por %p323, %p324
      %p326 = scmp.ne.s32.totalorder %s318, %s320
      %p327 = scmp.eq.s32.totalorder %s39, 1
      %p328 = por %p326, %p327
      %p329 = scmp.ne.s32.totalorder %s320, %s321
      %p330 = scmp.eq.s32.totalorder %s39, 0
      %p331 = por %p329, %p330
      %p332 = scmp.ne.s32.totalorder %s320, %s321
      %p333 = scmp.eq.s32.totalorder %s40, 1
      %p334 = por %p332, %p333
      %p336 = scmp.ne.s32.totalorder %s321, %s335
      %p337 = scmp.eq.s32.totalorder %s40, 0
      %p338 = por %p336, %p337
      %s340 = sadd.s32 %s339, 1
      %p343 = scmp.eq.s32.totalorder %s34, 1
      %p344 = scmp.ne.s32.totalorder %s339, %s341
      %p345 = scmp.eq.s32.totalorder %s34, 0
      %p346 = por %p344, %p345
      %p347 = scmp.ne.s32.totalorder %s339, %s341
      %p348 = scmp.eq.s32.totalorder %s39, 1
      %p349 = por %p347, %p348
      %p350 = scmp.ne.s32.totalorder %s341, %s342
      %p351 = scmp.eq.s32.totalorder %s39, 0
      %p352 = por %p350, %p351
      %p353 = scmp.ne.s32.totalorder %s341, %s342
      %p354 = scmp.eq.s32.totalorder %s40, 1
      %p355 = por %p353, %p354
      %p357 = scmp.ne.s32.totalorder %s342, %s356
      %p358 = scmp.eq.s32.totalorder %s40, 0
      %p359 = por %p357, %p358
      %s361 = sadd.s32 %s360, 1
      %p364 = scmp.eq.s32.totalorder %s34, 1
      %p365 = scmp.ne.s32.totalorder %s360, %s362
      %p366 = scmp.eq.s32.totalorder %s34, 0
      %p367 = por %p365, %p366
      %p368 = scmp.ne.s32.totalorder %s360, %s362
      %p369 = scmp.eq.s32.totalorder %s39, 1
      %p370 = por %p368, %p369
      %p371 = scmp.ne.s32.totalorder %s362, %s363
      %p372 = scmp.eq.s32.totalorder %s39, 0
      %p373 = por %p371, %p372
      %p374 = scmp.ne.s32.totalorder %s362, %s363
      %p375 = scmp.eq.s32.totalorder %s40, 1
      %p376 = por %p374, %p375
      %p378 = scmp.ne.s32.totalorder %s363, %s377
      %p379 = scmp.eq.s32.totalorder %s40, 0
      %p380 = por %p378, %p379
      %s382 = sadd.s32 %s381, 1
      %p385 = scmp.eq.s32.totalorder %s34, 1
      %p386 = scmp.ne.s32.totalorder %s381, %s383
      %p387 = scmp.eq.s32.totalorder %s34, 0
      %p388 = por %p386, %p387
      %p389 = scmp.ne.s32.totalorder %s381, %s383
      %p390 = scmp.eq.s32.totalorder %s39, 1
      %p391 = por %p389, %p390
      %p392 = scmp.ne.s32.totalorder %s383, %s384
      %p393 = scmp.eq.s32.totalorder %s39, 0
      %p394 = por %p392, %p393
      %p395 = scmp.ne.s32.totalorder %s383, %s384
      %p396 = scmp.eq.s32.totalorder %s40, 1
      %p397 = por %p395, %p396
      %p399 = scmp.ne.s32.totalorder %s384, %s398
      %p400 = scmp.eq.s32.totalorder %s40, 0
      %p401 = por %p399, %p400
      %s403 = sadd.s32 %s402, 1
      %p406 = scmp.eq.s32.totalorder %s34, 1
      %p407 = scmp.ne.s32.totalorder %s402, %s404
      %p408 = scmp.eq.s32.totalorder %s34, 0
      %p409 = por %p407, %p408
      %p410 = scmp.ne.s32.totalorder %s402, %s404
      %p411 = scmp.eq.s32.totalorder %s39, 1
      %p412 = por %p410, %p411
      %p413 = scmp.ne.s32.totalorder %s404, %s405
      %p414 = scmp.eq.s32.totalorder %s39, 0
      %p415 = por %p413, %p414
      %p416 = scmp.ne.s32.totalorder %s404, %s405
      %p417 = scmp.eq.s32.totalorder %s40, 1
      %p418 = por %p416, %p417
      %p420 = scmp.ne.s32.totalorder %s405, %s419
      %p421 = scmp.eq.s32.totalorder %s40, 0
      %p422 = por %p420, %p421
      %s424 = sadd.s32 %s423, 1
      %p427 = scmp.eq.s32.totalorder %s34, 1
      %p428 = scmp.ne.s32.totalorder %s423, %s425
      %p429 = scmp.eq.s32.totalorder %s34, 0
      %p430 = por %p428, %p429
      %p431 = scmp.ne.s32.totalorder %s423, %s425
      %p432 = scmp.eq.s32.totalorder %s39, 1
      %p433 = por %p431, %p432
      %p434 = scmp.ne.s32.totalorder %s425, %s426
      %p435 = scmp.eq.s32.totalorder %s39, 0
      %p436 = por %p434, %p435
      %p437 = scmp.ne.s32.totalorder %s425, %s426
      %p438 = scmp.eq.s32.totalorder %s40, 1
      %p439 = por %p437, %p438
      %p441 = scmp.ne.s32.totalorder %s426, %s440
      %p442 = scmp.eq.s32.totalorder %s40, 0
      %p443 = por %p441, %p442
      %s444 = ssub.s32 %s41, %s53
      %s445 = ssub.s32 %s42, %s49
      %s446 = sor.u32 %s444, %s445
      %p447 = scmp.eq.s32.totalorder %s446, 0
      %s449 = sadd.s32 %s448, 1
      %s450 = scalar_select %p447, %s448, %s449
      %p453 = pneg %p447
      %p454 = scmp.eq.s32.totalorder %s34, 1
      %p455 = por %p453, %p454
      %p456 = scmp.ne.s32.totalorder %s448, %s451
      %p457 = scmp.eq.s32.totalorder %s34, 0
      %p458 = por %p456, %p457
      %p459 = scmp.ne.s32.totalorder %s448, %s451
      %p460 = scmp.eq.s32.totalorder %s39, 1
      %p461 = por %p459, %p460
      %p462 = scmp.ne.s32.totalorder %s451, %s452
      %p463 = scmp.eq.s32.totalorder %s39, 0
      %p464 = por %p462, %p463
      %p465 = scmp.ne.s32.totalorder %s451, %s452
      %p466 = scmp.eq.s32.totalorder %s40, 1
      %p467 = por %p465, %p466
      %p469 = scmp.ne.s32.totalorder %s452, %s468
      %p470 = scmp.eq.s32.totalorder %s40, 0
      %p471 = por %p469, %p470
      %p472 = scmp.le.s32.totalorder 1, %s34
      %p473 = scmp.lt.s32.totalorder %s34, 3
      %p474 = pnand %p472, %p473
      %p475 = pneg %p474
      // Predicated region
      $region9: #{tpu_custom_call.1} parent=5 // pred_check
        _
      $region10: #{tpu_custom_call.1} parent=5 // pred_check_branch
        %477 = sbr.rel (%p474) target = $region12
      $region11: #{tpu_custom_call.1} parent=5 // pred_region
        %s478 = ssub.s32 %s34, 1
        // Predicated region
        $region13: #{tpu_custom_call.1} parent=11 // pred_check
          %p479 = pneg %p121
        $region14: #{tpu_custom_call.1} parent=11 // pred_check_branch
          %481 = sbr.rel (%p479) target = $region16
        $region15: #{tpu_custom_call.1} parent=11 // pred_region
          _
        $region16: #{tpu_custom_call.1} parent=11 // pred_fallthru
          _
        // Predicated region
        $region17: #{tpu_custom_call.1} parent=11 // pred_check
          %p482 = pneg %p142
        $region18: #{tpu_custom_call.1} parent=11 // pred_check_branch
          %484 = sbr.rel (%p482) target = $region20
        $region19: #{tpu_custom_call.1} parent=11 // pred_region
          _
        $region20: #{tpu_custom_call.1} parent=11 // pred_fallthru
          _
        // Predicated region
        $region21: #{tpu_custom_call.1} parent=11 // pred_check
          %p485 = pneg %p163
        $region22: #{tpu_custom_call.1} parent=11 // pred_check_branch
          %487 = sbr.rel (%p485) target = $region24
        $region23: #{tpu_custom_call.1} parent=11 // pred_region
          _
        $region24: #{tpu_custom_call.1} parent=11 // pred_fallthru
          _
        // Predicated region
        $region25: #{tpu_custom_call.1} parent=11 // pred_check
          %p488 = pneg %p184
        $region26: #{tpu_custom_call.1} parent=11 // pred_check_branch
          %490 = sbr.rel (%p488) target = $region28
        $region27: #{tpu_custom_call.1} parent=11 // pred_region
          _
        $region28: #{tpu_custom_call.1} parent=11 // pred_fallthru
          _
        // Predicated region
        $region29: #{tpu_custom_call.1} parent=11 // pred_check
          %p491 = pneg %p205
        $region30: #{tpu_custom_call.1} parent=11 // pred_check_branch
          %493 = sbr.rel (%p491) target = $region32
        $region31: #{tpu_custom_call.1} parent=11 // pred_region
          _
        $region32: #{tpu_custom_call.1} parent=11 // pred_fallthru
          _
        // Predicated region
        $region33: #{tpu_custom_call.1} parent=11 // pred_check
          %p494 = pneg %p226
        $region34: #{tpu_custom_call.1} parent=11 // pred_check_branch
          %496 = sbr.rel (%p494) target = $region36
        $region35: #{tpu_custom_call.1} parent=11 // pred_region
          %s498 = ssub.s32 16, 16
          %499 = vsyncadd [#allocation6], %s498
          %s501 = sshll.u32 [#allocation7], 4
          %s502 = int_to_ptr.vmem [resolvable:$true] %s501
          %504 = dma.hbm_to_vmem [thread:$0]  %s7, 16, %s502, [#allocation6]
        $region36: #{tpu_custom_call.1} parent=11 // pred_fallthru
          _
        // Predicated region
        $region37: #{tpu_custom_call.1} parent=11 // pred_check
          %p505 = pneg %p247
        $region38: #{tpu_custom_call.1} parent=11 // pred_check_branch
          %507 = sbr.rel (%p505) target = $region40
        $region39: #{tpu_custom_call.1} parent=11 // pred_region
          %s509 = ssub.s32 256, 256
          %510 = vsyncadd [#allocation9], %s509
          %s511 = sshll.u32 [#allocation8], 4
          %s512 = int_to_ptr.vmem [resolvable:$true] %s511
          %517 = dma.hbm_to_vmem [thread:$0]  %s8, 256, %s512, [#allocation9], 64, 64, 4
        $region40: #{tpu_custom_call.1} parent=11 // pred_fallthru
          _
        // Predicated region
        $region41: #{tpu_custom_call.1} parent=11 // pred_check
          %p518 = pneg %p268
        $region42: #{tpu_custom_call.1} parent=11 // pred_check_branch
          %520 = sbr.rel (%p518) target = $region44
        $region43: #{tpu_custom_call.1} parent=11 // pred_region
          %s522 = ssub.s32 16, 16
          %523 = vsyncadd [#allocation9], %s522
          %s525 = sshll.u32 [#allocation10], 4
          %s526 = int_to_ptr.vmem [resolvable:$true] %s525
          %528 = dma.hbm_to_vmem [thread:$0]  %s9, 16, %s526, [#allocation9]
        $region44: #{tpu_custom_call.1} parent=11 // pred_fallthru
          _
        // Predicated region
        $region45: #{tpu_custom_call.1} parent=11 // pred_check
          %p529 = pneg %p289
        $region46: #{tpu_custom_call.1} parent=11 // pred_check_branch
          %531 = sbr.rel (%p529) target = $region48
        $region47: #{tpu_custom_call.1} parent=11 // pred_region
          _
        $region48: #{tpu_custom_call.1} parent=11 // pred_fallthru
          _
        // Predicated region
        $region49: #{tpu_custom_call.1} parent=11 // pred_check
          %p532 = pneg %p310
        $region50: #{tpu_custom_call.1} parent=11 // pred_check_branch
          %534 = sbr.rel (%p532) target = $region52
        $region51: #{tpu_custom_call.1} parent=11 // pred_region
          _
        $region52: #{tpu_custom_call.1} parent=11 // pred_fallthru
          _
        // Predicated region
        $region53: #{tpu_custom_call.1} parent=11 // pred_check
          %p535 = pneg %p331
        $region54: #{tpu_custom_call.1} parent=11 // pred_check_branch
          %537 = sbr.rel (%p535) target = $region56
        $region55: #{tpu_custom_call.1} parent=11 // pred_region
          _
        $region56: #{tpu_custom_call.1} parent=11 // pred_fallthru
          _
        // Predicated region
        $region57: #{tpu_custom_call.1} parent=11 // pred_check
          %p538 = pneg %p352
        $region58: #{tpu_custom_call.1} parent=11 // pred_check_branch
          %540 = sbr.rel (%p538) target = $region60
        $region59: #{tpu_custom_call.1} parent=11 // pred_region
          _
        $region60: #{tpu_custom_call.1} parent=11 // pred_fallthru
          _
        // Predicated region
        $region61: #{tpu_custom_call.1} parent=11 // pred_check
          %p541 = pneg %p373
        $region62: #{tpu_custom_call.1} parent=11 // pred_check_branch
          %543 = sbr.rel (%p541) target = $region64
        $region63: #{tpu_custom_call.1} parent=11 // pred_region
          _
        $region64: #{tpu_custom_call.1} parent=11 // pred_fallthru
          _
        // Predicated region
        $region65: #{tpu_custom_call.1} parent=11 // pred_check
          %p544 = pneg %p394
        $region66: #{tpu_custom_call.1} parent=11 // pred_check_branch
          %546 = sbr.rel (%p544) target = $region68
        $region67: #{tpu_custom_call.1} parent=11 // pred_region
          _
        $region68: #{tpu_custom_call.1} parent=11 // pred_fallthru
          _
        // Predicated region
        $region69: #{tpu_custom_call.1} parent=11 // pred_check
          %p547 = pneg %p415
        $region70: #{tpu_custom_call.1} parent=11 // pred_check_branch
          %549 = sbr.rel (%p547) target = $region72
        $region71: #{tpu_custom_call.1} parent=11 // pred_region
          _
        $region72: #{tpu_custom_call.1} parent=11 // pred_fallthru
          _
        // Predicated region
        $region73: #{tpu_custom_call.1} parent=11 // pred_check
          %p550 = pneg %p436
        $region74: #{tpu_custom_call.1} parent=11 // pred_check_branch
          %552 = sbr.rel (%p550) target = $region76
        $region75: #{tpu_custom_call.1} parent=11 // pred_region
          _
        $region76: #{tpu_custom_call.1} parent=11 // pred_fallthru
          _
      $region12: #{tpu_custom_call.1} parent=5 // pred_fallthru
        _
      %p553 = scmp.lt.s32.totalorder %s34, 2
      // Predicated region
      $region77: #{tpu_custom_call.1} parent=5 // pred_check
        %p554 = pneg %p553
      $region78: #{tpu_custom_call.1} parent=5 // pred_check_branch
        %556 = sbr.rel (%p554) target = $region80
      $region79: #{tpu_custom_call.1} parent=5 // pred_region
        // Predicated region
        $region81: #{tpu_custom_call.1} parent=79 // pred_check
          %p557 = pneg %p68
        $region82: #{tpu_custom_call.1} parent=79 // pred_check_branch
          %559 = sbr.rel (%p557) target = $region84
        $region83: #{tpu_custom_call.1} parent=79 // pred_region
          %s560 = sand.u32 %s58, 1
          %s561 = scalar_lea.sflag [#allocation3], %s560
          %s562 = sand.u32 %s58, 1
          %s563 = smul.addr %s562, 4
          %s564 = scalar_lea.vmem [#allocation2], %s563
          %s566 = ssub.s32 64, 64
          %567 = vsyncadd %s561, %s566
          %s568 = sadd.s32 %s42, %s41
          %s569 = smul.addr %s568, 64
          %s570 = scalar_lea.hbm %s0, %s569
          %s572 = sshll.u32 %s564, 4
          %s573 = int_to_ptr.vmem [resolvable:$true] %s572
          %575 = dma.hbm_to_vmem [thread:$0]  %s570, 64, %s573, %s561
        $region84: #{tpu_custom_call.1} parent=79 // pred_fallthru
          _
        // Predicated region
        $region85: #{tpu_custom_call.1} parent=79 // pred_check
          %p576 = pneg %p94
        $region86: #{tpu_custom_call.1} parent=79 // pred_check_branch
          %578 = sbr.rel (%p576) target = $region88
        $region87: #{tpu_custom_call.1} parent=79 // pred_region
          %s579 = sand.u32 %s34, 1
          %s580 = scalar_lea.sflag [#allocation6], %s579
          %s581 = sand.u32 %s84, 1
          %s582 = smul.addr %s581, 4
          %s583 = scalar_lea.vmem [#allocation5], %s582
          %s585 = ssub.s32 64, 64
          %586 = vsyncadd %s580, %s585
          %s587 = smul.addr %s41, 64
          %s588 = scalar_lea.hbm %s1, %s587
          %s590 = sshll.u32 %s583, 4
          %s591 = int_to_ptr.vmem [resolvable:$true] %s590
          %593 = dma.hbm_to_vmem [thread:$0]  %s588, 64, %s591, %s580
        $region88: #{tpu_custom_call.1} parent=79 // pred_fallthru
          _
      $region80: #{tpu_custom_call.1} parent=5 // pred_fallthru
        _
      %p594 = scmp.le.s32.totalorder 1, %s34
      %p595 = scmp.lt.s32.totalorder %s34, 3
      %p596 = pnand %p594, %p595
      %p597 = pneg %p596
      // Predicated region
      $region89: #{tpu_custom_call.1} parent=5 // pred_check
        _
      $region90: #{tpu_custom_call.1} parent=5 // pred_check_branch
        %599 = sbr.rel (%p596) target = $region92
      $region91: #{tpu_custom_call.1} parent=5 // pred_region
        %s600 = ssub.s32 %s34, 1
        %s601 = sand.u32 %s61, 1
        %s602 = scalar_lea.sflag [#allocation3], %s601
        %s603 = sand.u32 %s61, 1
        %s604 = smul.addr %s603, 4
        %s605 = scalar_lea.vmem [#allocation2], %s604
        // Predicated region
        $region93: #{tpu_custom_call.1} parent=91 // pred_check
          %p606 = pneg %p74
        $region94: #{tpu_custom_call.1} parent=91 // pred_check_branch
          %608 = sbr.rel (%p606) target = $region96
        $region95: #{tpu_custom_call.1} parent=91 // pred_region
          %609 = dma.done %s602, 64
        $region96: #{tpu_custom_call.1} parent=91 // pred_fallthru
          _
        %s610 = sand.u32 %s39, 1
        %s611 = scalar_lea.sflag [#allocation6], %s610
        %s612 = sand.u32 %s87, 1
        %s613 = smul.addr %s612, 4
        %s614 = scalar_lea.vmem [#allocation5], %s613
        // Predicated region
        $region97: #{tpu_custom_call.1} parent=91 // pred_check
          %p615 = pneg %p100
        $region98: #{tpu_custom_call.1} parent=91 // pred_check_branch
          %617 = sbr.rel (%p615) target = $region100
        $region99: #{tpu_custom_call.1} parent=91 // pred_region
          %618 = dma.done %s611, 64
        $region100: #{tpu_custom_call.1} parent=91 // pred_fallthru
          _
        // Predicated region
        $region101: #{tpu_custom_call.1} parent=91 // pred_check
          %p619 = pneg %p226
        $region102: #{tpu_custom_call.1} parent=91 // pred_check_branch
          %621 = sbr.rel (%p619) target = $region104
        $region103: #{tpu_custom_call.1} parent=91 // pred_region
          %622 = dma.done [#allocation6], 16
        $region104: #{tpu_custom_call.1} parent=91 // pred_fallthru
          _
        // Predicated region
        $region105: #{tpu_custom_call.1} parent=91 // pred_check
          %p623 = pneg %p247
        $region106: #{tpu_custom_call.1} parent=91 // pred_check_branch
          %625 = sbr.rel (%p623) target = $region108
        $region107: #{tpu_custom_call.1} parent=91 // pred_region
          %626 = dma.done [#allocation9], 256
        $region108: #{tpu_custom_call.1} parent=91 // pred_fallthru
          _
        // Predicated region
        $region109: #{tpu_custom_call.1} parent=91 // pred_check
          %p627 = pneg %p268
        $region110: #{tpu_custom_call.1} parent=91 // pred_check_branch
          %629 = sbr.rel (%p627) target = $region112
        $region111: #{tpu_custom_call.1} parent=91 // pred_region
          %630 = dma.done [#allocation9], 16
        $region112: #{tpu_custom_call.1} parent=91 // pred_fallthru
          _
        %s631 = sand.u32 %s61, 1
        %s632 = scalar_lea.sflag [#allocation3], %s631
        %s633 = sand.u32 %s61, 1
        %s634 = smul.addr %s633, 4
        %s635 = scalar_lea.vmem [#allocation2], %s634
        %p636 = pneg %p74
        %p637 = pneg %p71
        %s638 = sand.u32 %s39, 1
        %s639 = scalar_lea.sflag [#allocation6], %s638
        %s640 = sand.u32 %s87, 1
        %s641 = smul.addr %s640, 4
        %s642 = scalar_lea.vmem [#allocation5], %s641
        %p643 = pneg %p100
        %p644 = pneg %p97
        %p645 = pneg %p121
        %p646 = pneg %p118
        %p647 = pneg %p142
        %p648 = pneg %p139
        %p649 = pneg %p163
        %p650 = pneg %p160
        %p651 = pneg %p184
        %p652 = pneg %p181
        %p653 = pneg %p205
        %p654 = pneg %p202
        %p655 = pneg %p226
        %p656 = pneg %p223
        %p657 = pneg %p247
        %p658 = pneg %p244
        %p659 = pneg %p268
        %p660 = pneg %p265
        %p661 = pneg %p289
        %p662 = pneg %p286
        %p663 = pneg %p310
        %p664 = pneg %p307
        %p665 = pneg %p331
        %p666 = pneg %p328
        %p667 = pneg %p352
        %p668 = pneg %p349
        %p669 = pneg %p373
        %p670 = pneg %p370
        %p671 = pneg %p394
        %p672 = pneg %p391
        %p673 = pneg %p415
        %p674 = pneg %p412
        %p675 = pneg %p436
        %p676 = pneg %p433
        %p677 = pneg %p464
        %p678 = pneg %p461
        %s679 = sand.u32 %s451, 1
        %s680 = scalar_lea.sflag [#allocation4], %s679
        %s681 = sand.u32 %s451, 1
        %s682 = smul.addr %s681, 4
        %s683 = scalar_lea.vmem [#allocation11], %s682
        %v685 = vld [vmem:[%s605] sm:$0xf]
        %v686 = vld [vmem:[%s614] sm:$0xf]
        %v687 = vld [vmem:[%s2] sm:$0xf]
        %v688 = vld [vmem:[%s2 + $0x4] sm:$0xf]
        %v689 = vld [vmem:[%s2 + $0x8] sm:$0xf]
        %v690 = vld [vmem:[%s2 + $0xc] sm:$0xf]
        %v691 = vld [vmem:[%s3] sm:$0x1]
        %v693 = vlaneseq
        %v694 = vshrl.u32 %v693, 7
        %v695 = vsub.s32 0, %v694
        %v696 = vrot.slane %v691, %v695
        %v702 = vunpack.c.l.b16 %v687
        %v703 = vunpack.c.l.b16 %v688
        %v704 = vunpack.c.l.b16 %v689
        %v705 = vunpack.c.l.b16 %v690
        %v706 = vpack.c.b16 %v703, %v702
        %v707 = vpack.c.b16 %v705, %v704
        %vm710 = vcmask 261120
        %v712 = vsel %vm710, %v685, 0
        %714 = vmatprep.subr.bf16.mxu0 0
        %715 = vmatpush1.bf16.msra.mxu0 %v706
        %716 = vmatprep.subr.bf16.mxu0 0
        %717 = vmatpush1.bf16.msra.mxu0 %v707
        %718 = vmatprep.subr.bf16.mxu0 0
        %719 = vmatpush1.bf16.msra.mxu0 0
        %720 = vmatprep.subr.bf16.mxu0 0
        %721 = vmatpush1.bf16.msra.mxu0 0
        %722 = vmatprep.subr.bf16.mxu0 0
        %723 = vmatpush1.bf16.msra.mxu0 0
        %724 = vmatprep.subr.bf16.mxu0 0
        %725 = vmatpush1.bf16.msra.mxu0 0
        %726 = vmatprep.subr.bf16.mxu0 0
        %727 = vmatpush1.bf16.msra.mxu0 0
        %728 = vmatprep.subr.bf16.mxu0 0
        %729 = vmatpush1.bf16.msra.mxu0 0
        %730 = vmatprep.subr.bf16.mxu0 0
        %731 = vmatpush1.bf16.msra.mxu0 0
        %732 = vmatprep.subr.bf16.mxu0 0
        %733 = vmatpush1.bf16.msra.mxu0 0
        %734 = vmatprep.subr.bf16.mxu0 0
        %735 = vmatpush1.bf16.msra.mxu0 0
        %736 = vmatprep.subr.bf16.mxu0 0
        %737 = vmatpush1.bf16.msra.mxu0 0
        %738 = vmatprep.subr.bf16.mxu0 0
        %739 = vmatpush1.bf16.msra.mxu0 0
        %740 = vmatprep.subr.bf16.mxu0 0
        %741 = vmatpush1.bf16.msra.mxu0 0
        %742 = vmatprep.subr.bf16.mxu0 0
        %743 = vmatpush1.bf16.msra.mxu0 0
        %744 = vmatprep.subr.bf16.mxu0 0
        %745 = vmatpush1.bf16.msra.mxu0 0
        %746 = vmatprep.mubr.bf16.mxu0 0
        %747 = vmatmul.mubr.bf16.gmra.mrb[0].mxu0 %v712
        %v748 = vpop.f32.mrb[0].mxu0
        %v749 = vadd.f32 %v696, %v748
        %v750 = vpop.f32.mrb[0].mxu0
        %v751 = vpop.f32.mrb[0].mxu0
        %v752 = vpop.f32.mrb[0].mxu0
        %753 = vdwg.mxu0
        %v754 = vld [vmem:[%s4] sm:$0xf]
        %v755 = vld [vmem:[%s4 + $0x4] sm:$0xf]
        %v756 = vld [vmem:[%s4 + $0x8] sm:$0xf]
        %v757 = vld [vmem:[%s4 + $0xc] sm:$0xf]
        %v758 = vld [vmem:[%s5] sm:$0x1]
        %v760 = vlaneseq
        %v761 = vshrl.u32 %v760, 7
        %v762 = vsub.s32 0, %v761
        %v763 = vrot.slane %v758, %v762
        %v769 = vunpack.c.l.b16 %v754
        %v770 = vunpack.c.l.b16 %v755
        %v771 = vunpack.c.l.b16 %v756
        %v772 = vunpack.c.l.b16 %v757
        %v773 = vpack.c.b16 %v770, %v769
        %v774 = vpack.c.b16 %v772, %v771
        %v778 = vsel %vm710, %v686, 0
        %780 = vmatprep.subr.bf16.mxu0 0
        %781 = vmatpush1.bf16.msra.mxu0 %v773
        %782 = vmatprep.subr.bf16.mxu0 0
        %783 = vmatpush1.bf16.msra.mxu0 %v774
        %784 = vmatprep.subr.bf16.mxu0 0
        %785 = vmatpush1.bf16.msra.mxu0 0
        %786 = vmatprep.subr.bf16.mxu0 0
        %787 = vmatpush1.bf16.msra.mxu0 0
        %788 = vmatprep.subr.bf16.mxu0 0
        %789 = vmatpush1.bf16.msra.mxu0 0
        %790 = vmatprep.subr.bf16.mxu0 0
        %791 = vmatpush1.bf16.msra.mxu0 0
        %792 = vmatprep.subr.bf16.mxu0 0
        %793 = vmatpush1.bf16.msra.mxu0 0
        %794 = vmatprep.subr.bf16.mxu0 0
        %795 = vmatpush1.bf16.msra.mxu0 0
        %796 = vmatprep.subr.bf16.mxu0 0
        %797 = vmatpush1.bf16.msra.mxu0 0
        %798 = vmatprep.subr.bf16.mxu0 0
        %799 = vmatpush1.bf16.msra.mxu0 0
        %800 = vmatprep.subr.bf16.mxu0 0
        %801 = vmatpush1.bf16.msra.mxu0 0
        %802 = vmatprep.subr.bf16.mxu0 0
        %803 = vmatpush1.bf16.msra.mxu0 0
        %804 = vmatprep.subr.bf16.mxu0 0
        %805 = vmatpush1.bf16.msra.mxu0 0
        %806 = vmatprep.subr.bf16.mxu0 0
        %807 = vmatpush1.bf16.msra.mxu0 0
        %808 = vmatprep.subr.bf16.mxu0 0
        %809 = vmatpush1.bf16.msra.mxu0 0
        %810 = vmatprep.subr.bf16.mxu0 0
        %811 = vmatpush1.bf16.msra.mxu0 0
        %812 = vmatprep.mubr.bf16.mxu0 0
        %813 = vmatmul.mubr.bf16.gmra.mrb[0].mxu0 %v778
        %v814 = vpop.f32.mrb[0].mxu0
        %v815 = vadd.f32 %v763, %v814
        %v816 = vpop.f32.mrb[0].mxu0
        %v817 = vpop.f32.mrb[0].mxu0
        %v818 = vpop.f32.mrb[0].mxu0
        %819 = vdwg.mxu0
        %v820 = vld [vmem:[%s6] sm:$0xf]
        %v821 = vld [vmem:[%s6 + $0x4] sm:$0xf]
        %v822 = vld [vmem:[%s6 + $0x8] sm:$0xf]
        %v823 = vld [vmem:[%s6 + $0xc] sm:$0xf]
        %v824 = vld [vmem:[#allocation7] sm:$0x1]
        %v826 = vlaneseq
        %v827 = vshrl.u32 %v826, 7
        %v828 = vsub.s32 0, %v827
        %v829 = vrot.slane %v824, %v828
        %v835 = vunpack.c.l.b16 %v820
        %v836 = vunpack.c.l.b16 %v821
        %v837 = vunpack.c.l.b16 %v822
        %v838 = vunpack.c.l.b16 %v823
        %v839 = vpack.c.b16 %v836, %v835
        %v840 = vpack.c.b16 %v838, %v837
        %843 = vmatprep.subr.bf16.mxu0 0
        %844 = vmatpush1.bf16.msra.mxu0 %v839
        %845 = vmatprep.subr.bf16.mxu0 0
        %846 = vmatpush1.bf16.msra.mxu0 %v840
        %847 = vmatprep.subr.bf16.mxu0 0
        %848 = vmatpush1.bf16.msra.mxu0 0
        %849 = vmatprep.subr.bf16.mxu0 0
        %850 = vmatpush1.bf16.msra.mxu0 0
        %851 = vmatprep.subr.bf16.mxu0 0
        %852 = vmatpush1.bf16.msra.mxu0 0
        %853 = vmatprep.subr.bf16.mxu0 0
        %854 = vmatpush1.bf16.msra.mxu0 0
        %855 = vmatprep.subr.bf16.mxu0 0
        %856 = vmatpush1.bf16.msra.mxu0 0
        %857 = vmatprep.subr.bf16.mxu0 0
        %858 = vmatpush1.bf16.msra.mxu0 0
        %859 = vmatprep.subr.bf16.mxu0 0
        %860 = vmatpush1.bf16.msra.mxu0 0
        %861 = vmatprep.subr.bf16.mxu0 0
        %862 = vmatpush1.bf16.msra.mxu0 0
        %863 = vmatprep.subr.bf16.mxu0 0
        %864 = vmatpush1.bf16.msra.mxu0 0
        %865 = vmatprep.subr.bf16.mxu0 0
        %866 = vmatpush1.bf16.msra.mxu0 0
        %867 = vmatprep.subr.bf16.mxu0 0
        %868 = vmatpush1.bf16.msra.mxu0 0
        %869 = vmatprep.subr.bf16.mxu0 0
        %870 = vmatpush1.bf16.msra.mxu0 0
        %871 = vmatprep.subr.bf16.mxu0 0
        %872 = vmatpush1.bf16.msra.mxu0 0
        %873 = vmatprep.subr.bf16.mxu0 0
        %874 = vmatpush1.bf16.msra.mxu0 0
        %875 = vmatprep.mubr.bf16.mxu0 0
        %876 = vmatmul.mubr.bf16.gmra.mrb[0].mxu0 %v778
        %v877 = vpop.f32.mrb[0].mxu0
        %v878 = vadd.f32 %v829, %v877
        %v879 = vpop.f32.mrb[0].mxu0
        %v880 = vpop.f32.mrb[0].mxu0
        %v881 = vpop.f32.mrb[0].mxu0
        %882 = vdwg.mxu0
        %884 = vrot.lane.b32.xlu0 %v749, 120
        %v885 = vpop.permute.xlu0 %884
        %887 = vrot.lane.b32.xlu0 %v749, 112
        %v888 = vpop.permute.xlu0 %887
        %890 = vrot.lane.b32.xlu0 %v749, 104
        %v891 = vpop.permute.xlu0 %890
        %v893 = vcombine.low %v749, %v888
        %v894 = vcombine.high %v749, %v888
        %v896 = vunpack.c.l.s4 1983009808
        %v897 = vunpack.c.0.s8 %v896
        %v898 = vlaneseq
        %v899 = vshrl.u32 %v898, 7
        %v900 = vsub.s32 %v897, %v899
        %v901 = vrot.slane %v893, %v900
        %v903 = vunpack.c.l.s4 1983009808
        %v904 = vunpack.c.0.s8 %v903
        %v905 = vlaneseq
        %v906 = vshrl.u32 %v905, 7
        %v907 = vsub.s32 %v904, %v906
        %v908 = vrot.slane %v894, %v907
        %v909 = vcombine.low %v885, %v891
        %v910 = vcombine.high %v885, %v891
        %v912 = vunpack.c.l.s4 1983009808
        %v913 = vunpack.c.0.s8 %v912
        %v914 = vlaneseq
        %v915 = vshrl.u32 %v914, 7
        %v916 = vsub.s32 %v913, %v915
        %v917 = vrot.slane %v909, %v916
        %v919 = vunpack.c.l.s4 1983009808
        %v920 = vunpack.c.0.s8 %v919
        %v921 = vlaneseq
        %v922 = vshrl.u32 %v921, 7
        %v923 = vsub.s32 %v920, %v922
        %v924 = vrot.slane %v910, %v923
        %v925 = vcombine.low %v901, %v917
        %v926 = vcombine.high %v901, %v917
        %v928 = vunpack.c.l.s4 1934713408
        %v929 = vunpack.c.0.s8 %v928
        %v930 = vlaneseq
        %v931 = vshrl.u32 %v930, 7
        %v932 = vsub.s32 %v929, %v931
        %v933 = vrot.slane %v925, %v932
        %v935 = vunpack.c.l.s4 1934713408
        %v936 = vunpack.c.0.s8 %v935
        %v937 = vlaneseq
        %v938 = vshrl.u32 %v937, 7
        %v939 = vsub.s32 %v936, %v938
        %v940 = vrot.slane %v926, %v939
        %v941 = vcombine.low %v908, %v924
        %v942 = vcombine.high %v908, %v924
        %v944 = vunpack.c.l.s4 1934713408
        %v945 = vunpack.c.0.s8 %v944
        %v946 = vlaneseq
        %v947 = vshrl.u32 %v946, 7
        %v948 = vsub.s32 %v945, %v947
        %v949 = vrot.slane %v941, %v948
        %v951 = vunpack.c.l.s4 1934713408
        %v952 = vunpack.c.0.s8 %v951
        %v953 = vlaneseq
        %v954 = vshrl.u32 %v953, 7
        %v955 = vsub.s32 %v952, %v954
        %v956 = vrot.slane %v942, %v955
        %v957 = vcombine.high %v933, 0.0
        %v958 = vcombine.high %v940, 0.0
        %v959 = vcombine.high %v949, 0.0
        %v960 = vcombine.high %v956, 0.0
        %v961 = vcombine.low %v933, %v940
        %v963 = vunpack.c.l.s4 1983009808
        %v964 = vunpack.c.0.s8 %v963
        %v965 = vlaneseq
        %v966 = vshrl.u32 %v965, 7
        %v967 = vsub.s32 %v964, %v966
        %v968 = vrot.slane %v961, %v967
        %v969 = vcombine.low %v957, %v958
        %v971 = vunpack.c.l.s4 1983009808
        %v972 = vunpack.c.0.s8 %v971
        %v973 = vlaneseq
        %v974 = vshrl.u32 %v973, 7
        %v975 = vsub.s32 %v972, %v974
        %v976 = vrot.slane %v969, %v975
        %v977 = vcombine.low %v949, %v956
        %v979 = vunpack.c.l.s4 1983009808
        %v980 = vunpack.c.0.s8 %v979
        %v981 = vlaneseq
        %v982 = vshrl.u32 %v981, 7
        %v983 = vsub.s32 %v980, %v982
        %v984 = vrot.slane %v977, %v983
        %v985 = vcombine.low %v959, %v960
        %v987 = vunpack.c.l.s4 1983009808
        %v988 = vunpack.c.0.s8 %v987
        %v989 = vlaneseq
        %v990 = vshrl.u32 %v989, 7
        %v991 = vsub.s32 %v988, %v990
        %v992 = vrot.slane %v985, %v991
        %v993 = vcombine.low %v968, %v976
        %v994 = vcombine.high %v968, %v976
        %v996 = vunpack.c.l.s4 1934713408
        %v997 = vunpack.c.0.s8 %v996
        %v998 = vlaneseq
        %v999 = vshrl.u32 %v998, 7
        %v1000 = vsub.s32 %v997, %v999
        %v1001 = vrot.slane %v993, %v1000
        %v1003 = vunpack.c.l.s4 1934713408
        %v1004 = vunpack.c.0.s8 %v1003
        %v1005 = vlaneseq
        %v1006 = vshrl.u32 %v1005, 7
        %v1007 = vsub.s32 %v1004, %v1006
        %v1008 = vrot.slane %v994, %v1007
        %v1009 = vcombine.low %v984, %v992
        %v1010 = vcombine.high %v984, %v992
        %v1012 = vunpack.c.l.s4 1934713408
        %v1013 = vunpack.c.0.s8 %v1012
        %v1014 = vlaneseq
        %v1015 = vshrl.u32 %v1014, 7
        %v1016 = vsub.s32 %v1013, %v1015
        %v1017 = vrot.slane %v1009, %v1016
        %v1019 = vunpack.c.l.s4 1934713408
        %v1020 = vunpack.c.0.s8 %v1019
        %v1021 = vlaneseq
        %v1022 = vshrl.u32 %v1021, 7
        %v1023 = vsub.s32 %v1020, %v1022
        %v1024 = vrot.slane %v1010, %v1023
        %v1025 = vcombine.low %v1001, %v1017
        %v1026 = vcombine.high %v1001, %v1017
        %v1027 = vcombine.low %v1008, %v1024
        %v1028 = vcombine.high %v1008, %v1024
        %1030 = vrot.lane.b32.xlu0 %v815, 120
        %v1031 = vpop.permute.xlu0 %1030
        %1033 = vrot.lane.b32.xlu0 %v815, 112
        %v1034 = vpop.permute.xlu0 %1033
        %1036 = vrot.lane.b32.xlu0 %v815, 104
        %v1037 = vpop.permute.xlu0 %1036
        %v1039 = vcombine.low %v815, %v1034
        %v1040 = vcombine.high %v815, %v1034
        %v1042 = vunpack.c.l.s4 1983009808
        %v1043 = vunpack.c.0.s8 %v1042
        %v1044 = vlaneseq
        %v1045 = vshrl.u32 %v1044, 7
        %v1046 = vsub.s32 %v1043, %v1045
        %v1047 = vrot.slane %v1039, %v1046
        %v1049 = vunpack.c.l.s4 1983009808
        %v1050 = vunpack.c.0.s8 %v1049
        %v1051 = vlaneseq
        %v1052 = vshrl.u32 %v1051, 7
        %v1053 = vsub.s32 %v1050, %v1052
        %v1054 = vrot.slane %v1040, %v1053
        %v1055 = vcombine.low %v1031, %v1037
        %v1056 = vcombine.high %v1031, %v1037
        %v1058 = vunpack.c.l.s4 1983009808
        %v1059 = vunpack.c.0.s8 %v1058
        %v1060 = vlaneseq
        %v1061 = vshrl.u32 %v1060, 7
        %v1062 = vsub.s32 %v1059, %v1061
        %v1063 = vrot.slane %v1055, %v1062
        %v1065 = vunpack.c.l.s4 1983009808
        %v1066 = vunpack.c.0.s8 %v1065
        %v1067 = vlaneseq
        %v1068 = vshrl.u32 %v1067, 7
        %v1069 = vsub.s32 %v1066, %v1068
        %v1070 = vrot.slane %v1056, %v1069
        %v1071 = vcombine.low %v1047, %v1063
        %v1072 = vcombine.high %v1047, %v1063
        %v1074 = vunpack.c.l.s4 1934713408
        %v1075 = vunpack.c.0.s8 %v1074
        %v1076 = vlaneseq
        %v1077 = vshrl.u32 %v1076, 7
        %v1078 = vsub.s32 %v1075, %v1077
        %v1079 = vrot.slane %v1071, %v1078
        %v1081 = vunpack.c.l.s4 1934713408
        %v1082 = vunpack.c.0.s8 %v1081
        %v1083 = vlaneseq
        %v1084 = vshrl.u32 %v1083, 7
        %v1085 = vsub.s32 %v1082, %v1084
        %v1086 = vrot.slane %v1072, %v1085
        %v1087 = vcombine.low %v1054, %v1070
        %v1088 = vcombine.high %v1054, %v1070
        %v1090 = vunpack.c.l.s4 1934713408
        %v1091 = vunpack.c.0.s8 %v1090
        %v1092 = vlaneseq
        %v1093 = vshrl.u32 %v1092, 7
        %v1094 = vsub.s32 %v1091, %v1093
        %v1095 = vrot.slane %v1087, %v1094
        %v1097 = vunpack.c.l.s4 1934713408
        %v1098 = vunpack.c.0.s8 %v1097
        %v1099 = vlaneseq
        %v1100 = vshrl.u32 %v1099, 7
        %v1101 = vsub.s32 %v1098, %v1100
        %v1102 = vrot.slane %v1088, %v1101
        %v1103 = vcombine.high %v1079, 0.0
        %v1104 = vcombine.high %v1086, 0.0
        %v1105 = vcombine.high %v1095, 0.0
        %v1106 = vcombine.high %v1102, 0.0
        %v1107 = vcombine.low %v1079, %v1086
        %v1109 = vunpack.c.l.s4 1983009808
        %v1110 = vunpack.c.0.s8 %v1109
        %v1111 = vlaneseq
        %v1112 = vshrl.u32 %v1111, 7
        %v1113 = vsub.s32 %v1110, %v1112
        %v1114 = vrot.slane %v1107, %v1113
        %v1115 = vcombine.low %v1103, %v1104
        %v1117 = vunpack.c.l.s4 1983009808
        %v1118 = vunpack.c.0.s8 %v1117
        %v1119 = vlaneseq
        %v1120 = vshrl.u32 %v1119, 7
        %v1121 = vsub.s32 %v1118, %v1120
        %v1122 = vrot.slane %v1115, %v1121
        %v1123 = vcombine.low %v1095, %v1102
        %v1125 = vunpack.c.l.s4 1983009808
        %v1126 = vunpack.c.0.s8 %v1125
        %v1127 = vlaneseq
        %v1128 = vshrl.u32 %v1127, 7
        %v1129 = vsub.s32 %v1126, %v1128
        %v1130 = vrot.slane %v1123, %v1129
        %v1131 = vcombine.low %v1105, %v1106
        %v1133 = vunpack.c.l.s4 1983009808
        %v1134 = vunpack.c.0.s8 %v1133
        %v1135 = vlaneseq
        %v1136 = vshrl.u32 %v1135, 7
        %v1137 = vsub.s32 %v1134, %v1136
        %v1138 = vrot.slane %v1131, %v1137
        %v1139 = vcombine.low %v1114, %v1122
        %v1140 = vcombine.high %v1114, %v1122
        %v1142 = vunpack.c.l.s4 1934713408
        %v1143 = vunpack.c.0.s8 %v1142
        %v1144 = vlaneseq
        %v1145 = vshrl.u32 %v1144, 7
        %v1146 = vsub.s32 %v1143, %v1145
        %v1147 = vrot.slane %v1139, %v1146
        %v1149 = vunpack.c.l.s4 1934713408
        %v1150 = vunpack.c.0.s8 %v1149
        %v1151 = vlaneseq
        %v1152 = vshrl.u32 %v1151, 7
        %v1153 = vsub.s32 %v1150, %v1152
        %v1154 = vrot.slane %v1140, %v1153
        %v1155 = vcombine.low %v1130, %v1138
        %v1156 = vcombine.high %v1130, %v1138
        %v1158 = vunpack.c.l.s4 1934713408
        %v1159 = vunpack.c.0.s8 %v1158
        %v1160 = vlaneseq
        %v1161 = vshrl.u32 %v1160, 7
        %v1162 = vsub.s32 %v1159, %v1161
        %v1163 = vrot.slane %v1155, %v1162
        %v1165 = vunpack.c.l.s4 1934713408
        %v1166 = vunpack.c.0.s8 %v1165
        %v1167 = vlaneseq
        %v1168 = vshrl.u32 %v1167, 7
        %v1169 = vsub.s32 %v1166, %v1168
        %v1170 = vrot.slane %v1156, %v1169
        %v1171 = vcombine.low %v1147, %v1163
        %v1172 = vcombine.high %v1147, %v1163
        %v1173 = vcombine.low %v1154, %v1170
        %v1174 = vcombine.high %v1154, %v1170
        %1176 = vrot.lane.b32.xlu0 %v878, 120
        %v1177 = vpop.permute.xlu0 %1176
        %1179 = vrot.lane.b32.xlu0 %v878, 112
        %v1180 = vpop.permute.xlu0 %1179
        %1182 = vrot.lane.b32.xlu0 %v878, 104
        %v1183 = vpop.permute.xlu0 %1182
        %v1185 = vcombine.low %v878, %v1180
        %v1186 = vcombine.high %v878, %v1180
        %v1188 = vunpack.c.l.s4 1983009808
        %v1189 = vunpack.c.0.s8 %v1188
        %v1190 = vlaneseq
        %v1191 = vshrl.u32 %v1190, 7
        %v1192 = vsub.s32 %v1189, %v1191
        %v1193 = vrot.slane %v1185, %v1192
        %v1195 = vunpack.c.l.s4 1983009808
        %v1196 = vunpack.c.0.s8 %v1195
        %v1197 = vlaneseq
        %v1198 = vshrl.u32 %v1197, 7
        %v1199 = vsub.s32 %v1196, %v1198
        %v1200 = vrot.slane %v1186, %v1199
        %v1201 = vcombine.low %v1177, %v1183
        %v1202 = vcombine.high %v1177, %v1183
        %v1204 = vunpack.c.l.s4 1983009808
        %v1205 = vunpack.c.0.s8 %v1204
        %v1206 = vlaneseq
        %v1207 = vshrl.u32 %v1206, 7
        %v1208 = vsub.s32 %v1205, %v1207
        %v1209 = vrot.slane %v1201, %v1208
        %v1211 = vunpack.c.l.s4 1983009808
        %v1212 = vunpack.c.0.s8 %v1211
        %v1213 = vlaneseq
        %v1214 = vshrl.u32 %v1213, 7
        %v1215 = vsub.s32 %v1212, %v1214
        %v1216 = vrot.slane %v1202, %v1215
        %v1217 = vcombine.low %v1193, %v1209
        %v1218 = vcombine.high %v1193, %v1209
        %v1220 = vunpack.c.l.s4 1934713408
        %v1221 = vunpack.c.0.s8 %v1220
        %v1222 = vlaneseq
        %v1223 = vshrl.u32 %v1222, 7
        %v1224 = vsub.s32 %v1221, %v1223
        %v1225 = vrot.slane %v1217, %v1224
        %v1227 = vunpack.c.l.s4 1934713408
        %v1228 = vunpack.c.0.s8 %v1227
        %v1229 = vlaneseq
        %v1230 = vshrl.u32 %v1229, 7
        %v1231 = vsub.s32 %v1228, %v1230
        %v1232 = vrot.slane %v1218, %v1231
        %v1233 = vcombine.low %v1200, %v1216
        %v1234 = vcombine.high %v1200, %v1216
        %v1236 = vunpack.c.l.s4 1934713408
        %v1237 = vunpack.c.0.s8 %v1236
        %v1238 = vlaneseq
        %v1239 = vshrl.u32 %v1238, 7
        %v1240 = vsub.s32 %v1237, %v1239
        %v1241 = vrot.slane %v1233, %v1240
        %v1243 = vunpack.c.l.s4 1934713408
        %v1244 = vunpack.c.0.s8 %v1243
        %v1245 = vlaneseq
        %v1246 = vshrl.u32 %v1245, 7
        %v1247 = vsub.s32 %v1244, %v1246
        %v1248 = vrot.slane %v1234, %v1247
        %v1249 = vcombine.high %v1225, 0.0
        %v1250 = vcombine.high %v1232, 0.0
        %v1251 = vcombine.high %v1241, 0.0
        %v1252 = vcombine.high %v1248, 0.0
        %v1253 = vcombine.low %v1225, %v1232
        %v1255 = vunpack.c.l.s4 1983009808
        %v1256 = vunpack.c.0.s8 %v1255
        %v1257 = vlaneseq
        %v1258 = vshrl.u32 %v1257, 7
        %v1259 = vsub.s32 %v1256, %v1258
        %v1260 = vrot.slane %v1253, %v1259
        %v1261 = vcombine.low %v1249, %v1250
        %v1263 = vunpack.c.l.s4 1983009808
        %v1264 = vunpack.c.0.s8 %v1263
        %v1265 = vlaneseq
        %v1266 = vshrl.u32 %v1265, 7
        %v1267 = vsub.s32 %v1264, %v1266
        %v1268 = vrot.slane %v1261, %v1267
        %v1269 = vcombine.low %v1241, %v1248
        %v1271 = vunpack.c.l.s4 1983009808
        %v1272 = vunpack.c.0.s8 %v1271
        %v1273 = vlaneseq
        %v1274 = vshrl.u32 %v1273, 7
        %v1275 = vsub.s32 %v1272, %v1274
        %v1276 = vrot.slane %v1269, %v1275
        %v1277 = vcombine.low %v1251, %v1252
        %v1279 = vunpack.c.l.s4 1983009808
        %v1280 = vunpack.c.0.s8 %v1279
        %v1281 = vlaneseq
        %v1282 = vshrl.u32 %v1281, 7
        %v1283 = vsub.s32 %v1280, %v1282
        %v1284 = vrot.slane %v1277, %v1283
        %v1285 = vcombine.low %v1260, %v1268
        %v1286 = vcombine.high %v1260, %v1268
        %v1288 = vunpack.c.l.s4 1934713408
        %v1289 = vunpack.c.0.s8 %v1288
        %v1290 = vlaneseq
        %v1291 = vshrl.u32 %v1290, 7
        %v1292 = vsub.s32 %v1289, %v1291
        %v1293 = vrot.slane %v1285, %v1292
        %v1295 = vunpack.c.l.s4 1934713408
        %v1296 = vunpack.c.0.s8 %v1295
        %v1297 = vlaneseq
        %v1298 = vshrl.u32 %v1297, 7
        %v1299 = vsub.s32 %v1296, %v1298
        %v1300 = vrot.slane %v1286, %v1299
        %v1301 = vcombine.low %v1276, %v1284
        %v1302 = vcombine.high %v1276, %v1284
        %v1304 = vunpack.c.l.s4 1934713408
        %v1305 = vunpack.c.0.s8 %v1304
        %v1306 = vlaneseq
        %v1307 = vshrl.u32 %v1306, 7
        %v1308 = vsub.s32 %v1305, %v1307
        %v1309 = vrot.slane %v1301, %v1308
        %v1311 = vunpack.c.l.s4 1934713408
        %v1312 = vunpack.c.0.s8 %v1311
        %v1313 = vlaneseq
        %v1314 = vshrl.u32 %v1313, 7
        %v1315 = vsub.s32 %v1312, %v1314
        %v1316 = vrot.slane %v1302, %v1315
        %v1317 = vcombine.low %v1293, %v1309
        %v1318 = vcombine.high %v1293, %v1309
        %v1319 = vcombine.low %v1300, %v1316
        %v1320 = vcombine.high %v1300, %v1316
        %v1321 = vpack.c.bf16 %v1025, %v1025
        %v1322 = vpack.c.bf16 %v1026, %v1026
        %v1323 = vpack.c.bf16 %v1027, %v1027
        %v1324 = vpack.c.bf16 %v1028, %v1028
        %v1325 = vpack.c.bf16 %v1171, %v1171
        %v1326 = vpack.c.bf16 %v1172, %v1172
        %v1327 = vpack.c.bf16 %v1173, %v1173
        %v1328 = vpack.c.bf16 %v1174, %v1174
        %vm1329 = vcmask 64512
        %v1331 = vsel %vm1329, %v1321, 0
        %v1334 = vsel %vm1329, %v1325, 0
        %1336 = vmatprep.subr.bf16.mxu0 0
        %1337 = vmatpush1.bf16.xpose.msra.mxu0 %v1334
        %1338 = vmatprep.subr.bf16.mxu0 0
        %1339 = vmatpush1.bf16.xpose.msra.mxu0 0
        %1340 = vmatprep.subr.bf16.mxu0 0
        %1341 = vmatpush1.bf16.xpose.msra.mxu0 0
        %1342 = vmatprep.subr.bf16.mxu0 0
        %1343 = vmatpush1.bf16.xpose.msra.mxu0 0
        %1344 = vmatprep.subr.bf16.mxu0 0
        %1345 = vmatpush1.bf16.xpose.msra.mxu0 0
        %1346 = vmatprep.subr.bf16.mxu0 0
        %1347 = vmatpush1.bf16.xpose.msra.mxu0 0
        %1348 = vmatprep.subr.bf16.mxu0 0
        %1349 = vmatpush1.bf16.xpose.msra.mxu0 0
        %1350 = vmatprep.subr.bf16.mxu0 0
        %1351 = vmatpush1.bf16.xpose.msra.mxu0 0
        %1352 = vmatprep.subr.bf16.mxu0 0
        %1353 = vmatpush1.bf16.xpose.msra.mxu0 0
        %1354 = vmatprep.subr.bf16.mxu0 0
        %1355 = vmatpush1.bf16.xpose.msra.mxu0 0
        %1356 = vmatprep.subr.bf16.mxu0 0
        %1357 = vmatpush1.bf16.xpose.msra.mxu0 0
        %1358 = vmatprep.subr.bf16.mxu0 0
        %1359 = vmatpush1.bf16.xpose.msra.mxu0 0
        %1360 = vmatprep.subr.bf16.mxu0 0
        %1361 = vmatpush1.bf16.xpose.msra.mxu0 0
        %1362 = vmatprep.subr.bf16.mxu0 0
        %1363 = vmatpush1.bf16.xpose.msra.mxu0 0
        %1364 = vmatprep.subr.bf16.mxu0 0
        %1365 = vmatpush1.bf16.xpose.msra.mxu0 0
        %1366 = vmatprep.subr.bf16.mxu0 0
        %1367 = vmatpush1.bf16.xpose.msra.mxu0 0
        %1368 = vmatprep.mubr.bf16.mxu0 0
        %1369 = vmatmul.mubr.bf16.gmra.mrb[0].mxu0 %v1331
        %v1370 = vpop.f32.mrb[0].mxu0
        %v1371 = vadd.f32 0.0, %v1370
        %v1372 = vpop.f32.mrb[0].mxu0
        %v1373 = vpop.f32.mrb[0].mxu0
        %v1374 = vpop.f32.mrb[0].mxu0
        %1375 = vdwg.mxu0
        %v1377 = vsel %vm1329, %v1322, 0
        %v1380 = vsel %vm1329, %v1326, 0
        %1382 = vmatprep.subr.bf16.mxu0 0
        %1383 = vmatpush1.bf16.xpose.msra.mxu0 %v1380
        %1384 = vmatprep.subr.bf16.mxu0 0
        %1385 = vmatpush1.bf16.xpose.msra.mxu0 0
        %1386 = vmatprep.subr.bf16.mxu0 0
        %1387 = vmatpush1.bf16.xpose.msra.mxu0 0
        %1388 = vmatprep.subr.bf16.mxu0 0
        %1389 = vmatpush1.bf16.xpose.msra.mxu0 0
        %1390 = vmatprep.subr.bf16.mxu0 0
        %1391 = vmatpush1.bf16.xpose.msra.mxu0 0
        %1392 = vmatprep.subr.bf16.mxu0 0
        %1393 = vmatpush1.bf16.xpose.msra.mxu0 0
        %1394 = vmatprep.subr.bf16.mxu0 0
        %1395 = vmatpush1.bf16.xpose.msra.mxu0 0
        %1396 = vmatprep.subr.bf16.mxu0 0
        %1397 = vmatpush1.bf16.xpose.msra.mxu0 0
        %1398 = vmatprep.subr.bf16.mxu0 0
        %1399 = vmatpush1.bf16.xpose.msra.mxu0 0
        %1400 = vmatprep.subr.bf16.mxu0 0
        %1401 = vmatpush1.bf16.xpose.msra.mxu0 0
        %1402 = vmatprep.subr.bf16.mxu0 0
        %1403 = vmatpush1.bf16.xpose.msra.mxu0 0
        %1404 = vmatprep.subr.bf16.mxu0 0
        %1405 = vmatpush1.bf16.xpose.msra.mxu0 0
        %1406 = vmatprep.subr.bf16.mxu0 0
        %1407 = vmatpush1.bf16.xpose.msra.mxu0 0
        %1408 = vmatprep.subr.bf16.mxu0 0
        %1409 = vmatpush1.bf16.xpose.msra.mxu0 0
        %1410 = vmatprep.subr.bf16.mxu0 0
        %1411 = vmatpush1.bf16.xpose.msra.mxu0 0
        %1412 = vmatprep.subr.bf16.mxu0 0
        %1413 = vmatpush1.bf16.xpose.msra.mxu0 0
        %1414 = vmatprep.mubr.bf16.mxu0 0
        %1415 = vmatmul.mubr.bf16.gmra.mrb[0].mxu0 %v1377
        %v1416 = vpop.f32.mrb[0].mxu0
        %v1417 = vadd.f32 0.0, %v1416
        %v1418 = vpop.f32.mrb[0].mxu0
        %v1419 = vpop.f32.mrb[0].mxu0
        %v1420 = vpop.f32.mrb[0].mxu0
        %1421 = vdwg.mxu0
        %v1423 = vsel %vm1329, %v1323, 0
        %v1426 = vsel %vm1329, %v1327, 0
        %1428 = vmatprep.subr.bf16.mxu0 0
        %1429 = vmatpush1.bf16.xpose.msra.mxu0 %v1426
        %1430 = vmatprep.subr.bf16.mxu0 0
        %1431 = vmatpush1.bf16.xpose.msra.mxu0 0
        %1432 = vmatprep.subr.bf16.mxu0 0
        %1433 = vmatpush1.bf16.xpose.msra.mxu0 0
        %1434 = vmatprep.subr.bf16.mxu0 0
        %1435 = vmatpush1.bf16.xpose.msra.mxu0 0
        %1436 = vmatprep.subr.bf16.mxu0 0
        %1437 = vmatpush1.bf16.xpose.msra.mxu0 0
        %1438 = vmatprep.subr.bf16.mxu0 0
        %1439 = vmatpush1.bf16.xpose.msra.mxu0 0
        %1440 = vmatprep.subr.bf16.mxu0 0
        %1441 = vmatpush1.bf16.xpose.msra.mxu0 0
        %1442 = vmatprep.subr.bf16.mxu0 0
        %1443 = vmatpush1.bf16.xpose.msra.mxu0 0
        %1444 = vmatprep.subr.bf16.mxu0 0
        %1445 = vmatpush1.bf16.xpose.msra.mxu0 0
        %1446 = vmatprep.subr.bf16.mxu0 0
        %1447 = vmatpush1.bf16.xpose.msra.mxu0 0
        %1448 = vmatprep.subr.bf16.mxu0 0
        %1449 = vmatpush1.bf16.xpose.msra.mxu0 0
        %1450 = vmatprep.subr.bf16.mxu0 0
        %1451 = vmatpush1.bf16.xpose.msra.mxu0 0
        %1452 = vmatprep.subr.bf16.mxu0 0
        %1453 = vmatpush1.bf16.xpose.msra.mxu0 0
        %1454 = vmatprep.subr.bf16.mxu0 0
        %1455 = vmatpush1.bf16.xpose.msra.mxu0 0
        %1456 = vmatprep.subr.bf16.mxu0 0
        %1457 = vmatpush1.bf16.xpose.msra.mxu0 0
        %1458 = vmatprep.subr.bf16.mxu0 0
        %1459 = vmatpush1.bf16.xpose.msra.mxu0 0
        %1460 = vmatprep.mubr.bf16.mxu0 0
        %1461 = vmatmul.mubr.bf16.gmra.mrb[0].mxu0 %v1423
        %v1462 = vpop.f32.mrb[0].mxu0
        %v1463 = vadd.f32 0.0, %v1462
        %v1464 = vpop.f32.mrb[0].mxu0
        %v1465 = vpop.f32.mrb[0].mxu0
        %v1466 = vpop.f32.mrb[0].mxu0
        %1467 = vdwg.mxu0
        %v1469 = vsel %vm1329, %v1324, 0
        %v1472 = vsel %vm1329, %v1328, 0
        %1474 = vmatprep.subr.bf16.mxu0 0
        %1475 = vmatpush1.bf16.xpose.msra.mxu0 %v1472
        %1476 = vmatprep.subr.bf16.mxu0 0
        %1477 = vmatpush1.bf16.xpose.msra.mxu0 0
        %1478 = vmatprep.subr.bf16.mxu0 0
        %1479 = vmatpush1.bf16.xpose.msra.mxu0 0
        %1480 = vmatprep.subr.bf16.mxu0 0
        %1481 = vmatpush1.bf16.xpose.msra.mxu0 0
        %1482 = vmatprep.subr.bf16.mxu0 0
        %1483 = vmatpush1.bf16.xpose.msra.mxu0 0
        %1484 = vmatprep.subr.bf16.mxu0 0
        %1485 = vmatpush1.bf16.xpose.msra.mxu0 0
        %1486 = vmatprep.subr.bf16.mxu0 0
        %1487 = vmatpush1.bf16.xpose.msra.mxu0 0
        %1488 = vmatprep.subr.bf16.mxu0 0
        %1489 = vmatpush1.bf16.xpose.msra.mxu0 0
        %1490 = vmatprep.subr.bf16.mxu0 0
        %1491 = vmatpush1.bf16.xpose.msra.mxu0 0
        %1492 = vmatprep.subr.bf16.mxu0 0
        %1493 = vmatpush1.bf16.xpose.msra.mxu0 0
        %1494 = vmatprep.subr.bf16.mxu0 0
        %1495 = vmatpush1.bf16.xpose.msra.mxu0 0
        %1496 = vmatprep.subr.bf16.mxu0 0
        %1497 = vmatpush1.bf16.xpose.msra.mxu0 0
        %1498 = vmatprep.subr.bf16.mxu0 0
        %1499 = vmatpush1.bf16.xpose.msra.mxu0 0
        %1500 = vmatprep.subr.bf16.mxu0 0
        %1501 = vmatpush1.bf16.xpose.msra.mxu0 0
        %1502 = vmatprep.subr.bf16.mxu0 0
        %1503 = vmatpush1.bf16.xpose.msra.mxu0 0
        %1504 = vmatprep.subr.bf16.mxu0 0
        %1505 = vmatpush1.bf16.xpose.msra.mxu0 0
        %1506 = vmatprep.mubr.bf16.mxu0 0
        %1507 = vmatmul.mubr.bf16.gmra.mrb[0].mxu0 %v1469
        %v1508 = vpop.f32.mrb[0].mxu0
        %v1509 = vadd.f32 0.0, %v1508
        %v1510 = vpop.f32.mrb[0].mxu0
        %v1511 = vpop.f32.mrb[0].mxu0
        %v1512 = vpop.f32.mrb[0].mxu0
        %1513 = vdwg.mxu0
        %v1514 = vmul.f32 %v1371, 0.35355338
        %v1515 = vmul.f32 %v1417, 0.35355338
        %v1516 = vmul.f32 %v1463, 0.35355338
        %v1517 = vmul.f32 %v1509, 0.35355338
        %v1518 = vsel %vm1329, %v1514, -inf
        %1519 = vmax.xlane.f32.xlu0 %v1518
        %v1520 = vpop.xlane.xlu0 %1519
        %v1521 = vsel %vm1329, %v1515, -inf
        %1522 = vmax.xlane.f32.xlu0 %v1521
        %v1523 = vpop.xlane.xlu0 %1522
        %v1524 = vsel %vm1329, %v1516, -inf
        %1525 = vmax.xlane.f32.xlu0 %v1524
        %v1526 = vpop.xlane.xlu0 %1525
        %v1527 = vsel %vm1329, %v1517, -inf
        %1528 = vmax.xlane.f32.xlu0 %v1527
        %v1529 = vpop.xlane.xlu0 %1528
        %v1530 = vsub.f32 %v1514, %v1520
        %v1531 = vsub.f32 %v1515, %v1523
        %v1532 = vsub.f32 %v1516, %v1526
        %v1533 = vsub.f32 %v1517, %v1529
        %v1534 = vmul.f32 %v1530, 1.442695
        %v1535 = vpow.pop %v1534
        %v1536 = vmul.f32 %v1531, 1.442695
        %v1537 = vpow.pop %v1536
        %v1538 = vmul.f32 %v1532, 1.442695
        %v1539 = vpow.pop %v1538
        %v1540 = vmul.f32 %v1533, 1.442695
        %v1541 = vpow.pop %v1540
        %v1542 = vsel %vm1329, %v1535, 0.0
        %1543 = vadd.xlane.f32.xlu0 %v1542
        %v1544 = vpop.xlane.xlu0 %1543
        %v1545 = vsel %vm1329, %v1537, 0.0
        %1546 = vadd.xlane.f32.xlu0 %v1545
        %v1547 = vpop.xlane.xlu0 %1546
        %v1548 = vsel %vm1329, %v1539, 0.0
        %1549 = vadd.xlane.f32.xlu0 %v1548
        %v1550 = vpop.xlane.xlu0 %1549
        %v1551 = vsel %vm1329, %v1541, 0.0
        %1552 = vadd.xlane.f32.xlu0 %v1551
        %v1553 = vpop.xlane.xlu0 %1552
        %v1554 = vrcp.pop %v1544
        %v1555 = vrcp.pop %v1547
        %v1556 = vrcp.pop %v1550
        %v1557 = vrcp.pop %v1553
        %v1558 = vmul.f32 %v1535, %v1554
        %v1559 = vmul.f32 %v1537, %v1555
        %v1560 = vmul.f32 %v1539, %v1556
        %v1561 = vmul.f32 %v1541, %v1557
        %v1562 = vpack.c.bf16 %v1558, %v1558
        %v1563 = vpack.c.bf16 %v1559, %v1559
        %v1564 = vpack.c.bf16 %v1560, %v1560
        %v1565 = vpack.c.bf16 %v1561, %v1561
        %v1566 = vpack.c.bf16 %v1317, %v1317
        %v1567 = vpack.c.bf16 %v1318, %v1318
        %v1568 = vpack.c.bf16 %v1319, %v1319
        %v1569 = vpack.c.bf16 %v1320, %v1320
        %v1571 = vsel %vm1329, %v1562, 0
        %vm1573 = vcmask 1043456
        %v1575 = vsel %vm1573, %v1566, 0
        %1577 = vmatprep.subr.bf16.mxu0 0
        %1578 = vmatpush1.bf16.msra.mxu0 %v1575
        %1579 = vmatprep.subr.bf16.mxu0 0
        %1580 = vmatpush1.bf16.msra.mxu0 0
        %1581 = vmatprep.subr.bf16.mxu0 0
        %1582 = vmatpush1.bf16.msra.mxu0 0
        %1583 = vmatprep.subr.bf16.mxu0 0
        %1584 = vmatpush1.bf16.msra.mxu0 0
        %1585 = vmatprep.subr.bf16.mxu0 0
        %1586 = vmatpush1.bf16.msra.mxu0 0
        %1587 = vmatprep.subr.bf16.mxu0 0
        %1588 = vmatpush1.bf16.msra.mxu0 0
        %1589 = vmatprep.subr.bf16.mxu0 0
        %1590 = vmatpush1.bf16.msra.mxu0 0
        %1591 = vmatprep.subr.bf16.mxu0 0
        %1592 = vmatpush1.bf16.msra.mxu0 0
        %1593 = vmatprep.subr.bf16.mxu0 0
        %1594 = vmatpush1.bf16.msra.mxu0 0
        %1595 = vmatprep.subr.bf16.mxu0 0
        %1596 = vmatpush1.bf16.msra.mxu0 0
        %1597 = vmatprep.subr.bf16.mxu0 0
        %1598 = vmatpush1.bf16.msra.mxu0 0
        %1599 = vmatprep.subr.bf16.mxu0 0
        %1600 = vmatpush1.bf16.msra.mxu0 0
        %1601 = vmatprep.subr.bf16.mxu0 0
        %1602 = vmatpush1.bf16.msra.mxu0 0
        %1603 = vmatprep.subr.bf16.mxu0 0
        %1604 = vmatpush1.bf16.msra.mxu0 0
        %1605 = vmatprep.subr.bf16.mxu0 0
        %1606 = vmatpush1.bf16.msra.mxu0 0
        %1607 = vmatprep.subr.bf16.mxu0 0
        %1608 = vmatpush1.bf16.msra.mxu0 0
        %1609 = vmatprep.mubr.bf16.mxu0 0
        %1610 = vmatmul.mubr.bf16.gmra.mrb[0].mxu0 %v1571
        %v1611 = vpop.f32.mrb[0].mxu0
        %v1612 = vadd.f32 0.0, %v1611
        %v1613 = vpop.f32.mrb[0].mxu0
        %v1614 = vpop.f32.mrb[0].mxu0
        %v1615 = vpop.f32.mrb[0].mxu0
        %1616 = vdwg.mxu0
        %v1618 = vsel %vm1329, %v1563, 0
        %v1621 = vsel %vm1573, %v1567, 0
        %1623 = vmatprep.subr.bf16.mxu0 0
        %1624 = vmatpush1.bf16.msra.mxu0 %v1621
        %1625 = vmatprep.subr.bf16.mxu0 0
        %1626 = vmatpush1.bf16.msra.mxu0 0
        %1627 = vmatprep.subr.bf16.mxu0 0
        %1628 = vmatpush1.bf16.msra.mxu0 0
        %1629 = vmatprep.subr.bf16.mxu0 0
        %1630 = vmatpush1.bf16.msra.mxu0 0
        %1631 = vmatprep.subr.bf16.mxu0 0
        %1632 = vmatpush1.bf16.msra.mxu0 0
        %1633 = vmatprep.subr.bf16.mxu0 0
        %1634 = vmatpush1.bf16.msra.mxu0 0
        %1635 = vmatprep.subr.bf16.mxu0 0
        %1636 = vmatpush1.bf16.msra.mxu0 0
        %1637 = vmatprep.subr.bf16.mxu0 0
        %1638 = vmatpush1.bf16.msra.mxu0 0
        %1639 = vmatprep.subr.bf16.mxu0 0
        %1640 = vmatpush1.bf16.msra.mxu0 0
        %1641 = vmatprep.subr.bf16.mxu0 0
        %1642 = vmatpush1.bf16.msra.mxu0 0
        %1643 = vmatprep.subr.bf16.mxu0 0
        %1644 = vmatpush1.bf16.msra.mxu0 0
        %1645 = vmatprep.subr.bf16.mxu0 0
        %1646 = vmatpush1.bf16.msra.mxu0 0
        %1647 = vmatprep.subr.bf16.mxu0 0
        %1648 = vmatpush1.bf16.msra.mxu0 0
        %1649 = vmatprep.subr.bf16.mxu0 0
        %1650 = vmatpush1.bf16.msra.mxu0 0
        %1651 = vmatprep.subr.bf16.mxu0 0
        %1652 = vmatpush1.bf16.msra.mxu0 0
        %1653 = vmatprep.subr.bf16.mxu0 0
        %1654 = vmatpush1.bf16.msra.mxu0 0
        %1655 = vmatprep.mubr.bf16.mxu0 0
        %1656 = vmatmul.mubr.bf16.gmra.mrb[0].mxu0 %v1618
        %v1657 = vpop.f32.mrb[0].mxu0
        %v1658 = vadd.f32 0.0, %v1657
        %v1659 = vpop.f32.mrb[0].mxu0
        %v1660 = vpop.f32.mrb[0].mxu0
        %v1661 = vpop.f32.mrb[0].mxu0
        %1662 = vdwg.mxu0
        %v1664 = vsel %vm1329, %v1564, 0
        %v1667 = vsel %vm1573, %v1568, 0
        %1669 = vmatprep.subr.bf16.mxu0 0
        %1670 = vmatpush1.bf16.msra.mxu0 %v1667
        %1671 = vmatprep.subr.bf16.mxu0 0
        %1672 = vmatpush1.bf16.msra.mxu0 0
        %1673 = vmatprep.subr.bf16.mxu0 0
        %1674 = vmatpush1.bf16.msra.mxu0 0
        %1675 = vmatprep.subr.bf16.mxu0 0
        %1676 = vmatpush1.bf16.msra.mxu0 0
        %1677 = vmatprep.subr.bf16.mxu0 0
        %1678 = vmatpush1.bf16.msra.mxu0 0
        %1679 = vmatprep.subr.bf16.mxu0 0
        %1680 = vmatpush1.bf16.msra.mxu0 0
        %1681 = vmatprep.subr.bf16.mxu0 0
        %1682 = vmatpush1.bf16.msra.mxu0 0
        %1683 = vmatprep.subr.bf16.mxu0 0
        %1684 = vmatpush1.bf16.msra.mxu0 0
        %1685 = vmatprep.subr.bf16.mxu0 0
        %1686 = vmatpush1.bf16.msra.mxu0 0
        %1687 = vmatprep.subr.bf16.mxu0 0
        %1688 = vmatpush1.bf16.msra.mxu0 0
        %1689 = vmatprep.subr.bf16.mxu0 0
        %1690 = vmatpush1.bf16.msra.mxu0 0
        %1691 = vmatprep.subr.bf16.mxu0 0
        %1692 = vmatpush1.bf16.msra.mxu0 0
        %1693 = vmatprep.subr.bf16.mxu0 0
        %1694 = vmatpush1.bf16.msra.mxu0 0
        %1695 = vmatprep.subr.bf16.mxu0 0
        %1696 = vmatpush1.bf16.msra.mxu0 0
        %1697 = vmatprep.subr.bf16.mxu0 0
        %1698 = vmatpush1.bf16.msra.mxu0 0
        %1699 = vmatprep.subr.bf16.mxu0 0
        %1700 = vmatpush1.bf16.msra.mxu0 0
        %1701 = vmatprep.mubr.bf16.mxu0 0
        %1702 = vmatmul.mubr.bf16.gmra.mrb[0].mxu0 %v1664
        %v1703 = vpop.f32.mrb[0].mxu0
        %v1704 = vadd.f32 0.0, %v1703
        %v1705 = vpop.f32.mrb[0].mxu0
        %v1706 = vpop.f32.mrb[0].mxu0
        %v1707 = vpop.f32.mrb[0].mxu0
        %1708 = vdwg.mxu0
        %v1710 = vsel %vm1329, %v1565, 0
        %v1713 = vsel %vm1573, %v1569, 0
        %1715 = vmatprep.subr.bf16.mxu0 0
        %1716 = vmatpush1.bf16.msra.mxu0 %v1713
        %1717 = vmatprep.subr.bf16.mxu0 0
        %1718 = vmatpush1.bf16.msra.mxu0 0
        %1719 = vmatprep.subr.bf16.mxu0 0
        %1720 = vmatpush1.bf16.msra.mxu0 0
        %1721 = vmatprep.subr.bf16.mxu0 0
        %1722 = vmatpush1.bf16.msra.mxu0 0
        %1723 = vmatprep.subr.bf16.mxu0 0
        %1724 = vmatpush1.bf16.msra.mxu0 0
        %1725 = vmatprep.subr.bf16.mxu0 0
        %1726 = vmatpush1.bf16.msra.mxu0 0
        %1727 = vmatprep.subr.bf16.mxu0 0
        %1728 = vmatpush1.bf16.msra.mxu0 0
        %1729 = vmatprep.subr.bf16.mxu0 0
        %1730 = vmatpush1.bf16.msra.mxu0 0
        %1731 = vmatprep.subr.bf16.mxu0 0
        %1732 = vmatpush1.bf16.msra.mxu0 0
        %1733 = vmatprep.subr.bf16.mxu0 0
        %1734 = vmatpush1.bf16.msra.mxu0 0
        %1735 = vmatprep.subr.bf16.mxu0 0
        %1736 = vmatpush1.bf16.msra.mxu0 0
        %1737 = vmatprep.subr.bf16.mxu0 0
        %1738 = vmatpush1.bf16.msra.mxu0 0
        %1739 = vmatprep.subr.bf16.mxu0 0
        %1740 = vmatpush1.bf16.msra.mxu0 0
        %1741 = vmatprep.subr.bf16.mxu0 0
        %1742 = vmatpush1.bf16.msra.mxu0 0
        %1743 = vmatprep.subr.bf16.mxu0 0
        %1744 = vmatpush1.bf16.msra.mxu0 0
        %1745 = vmatprep.subr.bf16.mxu0 0
        %1746 = vmatpush1.bf16.msra.mxu0 0
        %1747 = vmatprep.mubr.bf16.mxu0 0
        %1748 = vmatmul.mubr.bf16.gmra.mrb[0].mxu0 %v1710
        %v1749 = vpop.f32.mrb[0].mxu0
        %v1750 = vadd.f32 0.0, %v1749
        %v1751 = vpop.f32.mrb[0].mxu0
        %v1752 = vpop.f32.mrb[0].mxu0
        %v1753 = vpop.f32.mrb[0].mxu0
        %1754 = vdwg.mxu0
        %v1755 = vcombine.low %v1612, %v1704
        %v1756 = vcombine.high %v1612, %v1704
        %v1758 = vunpack.c.l.s4 1983009808
        %v1759 = vunpack.c.0.s8 %v1758
        %v1760 = vlaneseq
        %v1761 = vshrl.u32 %v1760, 7
        %v1762 = vsub.s32 %v1759, %v1761
        %v1763 = vrot.slane %v1755, %v1762
        %v1765 = vunpack.c.l.s4 1983009808
        %v1766 = vunpack.c.0.s8 %v1765
        %v1767 = vlaneseq
        %v1768 = vshrl.u32 %v1767, 7
        %v1769 = vsub.s32 %v1766, %v1768
        %v1770 = vrot.slane %v1756, %v1769
        %v1771 = vcombine.low %v1658, %v1750
        %v1772 = vcombine.high %v1658, %v1750
        %v1774 = vunpack.c.l.s4 1983009808
        %v1775 = vunpack.c.0.s8 %v1774
        %v1776 = vlaneseq
        %v1777 = vshrl.u32 %v1776, 7
        %v1778 = vsub.s32 %v1775, %v1777
        %v1779 = vrot.slane %v1771, %v1778
        %v1781 = vunpack.c.l.s4 1983009808
        %v1782 = vunpack.c.0.s8 %v1781
        %v1783 = vlaneseq
        %v1784 = vshrl.u32 %v1783, 7
        %v1785 = vsub.s32 %v1782, %v1784
        %v1786 = vrot.slane %v1772, %v1785
        %v1787 = vcombine.low %v1763, %v1779
        %v1788 = vcombine.high %v1763, %v1779
        %v1790 = vunpack.c.l.s4 1934713408
        %v1791 = vunpack.c.0.s8 %v1790
        %v1792 = vlaneseq
        %v1793 = vshrl.u32 %v1792, 7
        %v1794 = vsub.s32 %v1791, %v1793
        %v1795 = vrot.slane %v1787, %v1794
        %v1797 = vunpack.c.l.s4 1934713408
        %v1798 = vunpack.c.0.s8 %v1797
        %v1799 = vlaneseq
        %v1800 = vshrl.u32 %v1799, 7
        %v1801 = vsub.s32 %v1798, %v1800
        %v1802 = vrot.slane %v1788, %v1801
        %v1803 = vcombine.low %v1770, %v1786
        %v1804 = vcombine.high %v1770, %v1786
        %v1806 = vunpack.c.l.s4 1934713408
        %v1807 = vunpack.c.0.s8 %v1806
        %v1808 = vlaneseq
        %v1809 = vshrl.u32 %v1808, 7
        %v1810 = vsub.s32 %v1807, %v1809
        %v1811 = vrot.slane %v1803, %v1810
        %v1813 = vunpack.c.l.s4 1934713408
        %v1814 = vunpack.c.0.s8 %v1813
        %v1815 = vlaneseq
        %v1816 = vshrl.u32 %v1815, 7
        %v1817 = vsub.s32 %v1814, %v1816
        %v1818 = vrot.slane %v1804, %v1817
        %v1819 = vcombine.high %v1795, 0.0
        %v1820 = vcombine.high %v1802, 0.0
        %v1821 = vcombine.high %v1811, 0.0
        %v1822 = vcombine.high %v1818, 0.0
        %v1823 = vcombine.low %v1795, %v1802
        %v1825 = vunpack.c.l.s4 1983009808
        %v1826 = vunpack.c.0.s8 %v1825
        %v1827 = vlaneseq
        %v1828 = vshrl.u32 %v1827, 7
        %v1829 = vsub.s32 %v1826, %v1828
        %v1830 = vrot.slane %v1823, %v1829
        %v1831 = vcombine.low %v1819, %v1820
        %v1833 = vunpack.c.l.s4 1983009808
        %v1834 = vunpack.c.0.s8 %v1833
        %v1835 = vlaneseq
        %v1836 = vshrl.u32 %v1835, 7
        %v1837 = vsub.s32 %v1834, %v1836
        %v1838 = vrot.slane %v1831, %v1837
        %v1839 = vcombine.low %v1811, %v1818
        %v1841 = vunpack.c.l.s4 1983009808
        %v1842 = vunpack.c.0.s8 %v1841
        %v1843 = vlaneseq
        %v1844 = vshrl.u32 %v1843, 7
        %v1845 = vsub.s32 %v1842, %v1844
        %v1846 = vrot.slane %v1839, %v1845
        %v1847 = vcombine.low %v1821, %v1822
        %v1849 = vunpack.c.l.s4 1983009808
        %v1850 = vunpack.c.0.s8 %v1849
        %v1851 = vlaneseq
        %v1852 = vshrl.u32 %v1851, 7
        %v1853 = vsub.s32 %v1850, %v1852
        %v1854 = vrot.slane %v1847, %v1853
        %v1855 = vcombine.low %v1830, %v1838
        %v1856 = vcombine.high %v1830, %v1838
        %v1858 = vunpack.c.l.s4 1934713408
        %v1859 = vunpack.c.0.s8 %v1858
        %v1860 = vlaneseq
        %v1861 = vshrl.u32 %v1860, 7
        %v1862 = vsub.s32 %v1859, %v1861
        %v1863 = vrot.slane %v1855, %v1862
        %v1865 = vunpack.c.l.s4 1934713408
        %v1866 = vunpack.c.0.s8 %v1865
        %v1867 = vlaneseq
        %v1868 = vshrl.u32 %v1867, 7
        %v1869 = vsub.s32 %v1866, %v1868
        %v1870 = vrot.slane %v1856, %v1869
        %v1871 = vcombine.low %v1846, %v1854
        %v1872 = vcombine.high %v1846, %v1854
        %v1874 = vunpack.c.l.s4 1934713408
        %v1875 = vunpack.c.0.s8 %v1874
        %v1876 = vlaneseq
        %v1877 = vshrl.u32 %v1876, 7
        %v1878 = vsub.s32 %v1875, %v1877
        %v1879 = vrot.slane %v1871, %v1878
        %v1881 = vunpack.c.l.s4 1934713408
        %v1882 = vunpack.c.0.s8 %v1881
        %v1883 = vlaneseq
        %v1884 = vshrl.u32 %v1883, 7
        %v1885 = vsub.s32 %v1882, %v1884
        %v1886 = vrot.slane %v1872, %v1885
        %v1887 = vcombine.low %v1863, %v1879
        %v1888 = vcombine.high %v1863, %v1879
        %v1889 = vcombine.low %v1870, %v1886
        %v1890 = vcombine.high %v1870, %v1886
        %1892 = vrot.lane.b32.xlu0 %v1888, 8
        %v1893 = vpop.permute.xlu0 %1892
        %1896 = vrot.lane.b32.xlu0 %v1889, 16
        %v1897 = vpop.permute.xlu0 %1896
        %1900 = vrot.lane.b32.xlu0 %v1890, 24
        %v1901 = vpop.permute.xlu0 %1900
        %v1903 = vsel %vm1329, %v1887, %v1893
        %vm1904 = vcmask 130048
        %v1905 = vsel %vm1904, %v1903, %v1897
        %vm1906 = vcmask 195584
        %v1907 = vsel %vm1906, %v1905, %v1901
        %v1908 = vld [vmem:[#allocation8] sm:$0xf]
        %v1909 = vld [vmem:[#allocation8 + $0x4] sm:$0xf]
        %v1910 = vld [vmem:[#allocation8 + $0x8] sm:$0xf]
        %v1911 = vld [vmem:[#allocation8 + $0xc] sm:$0xf]
        %v1912 = vpack.c.bf16 %v1907, %v1907
        %v1913 = vld [vmem:[#allocation10] sm:$0x1]
        %v1915 = vlaneseq
        %v1916 = vshrl.u32 %v1915, 7
        %v1917 = vsub.s32 0, %v1916
        %v1918 = vrot.slane %v1913, %v1917
        %v1924 = vunpack.c.l.b16 %v1908
        %v1925 = vunpack.c.l.b16 %v1909
        %v1926 = vunpack.c.l.b16 %v1910
        %v1927 = vunpack.c.l.b16 %v1911
        %v1928 = vpack.c.b16 %v1925, %v1924
        %v1929 = vpack.c.b16 %v1927, %v1926
        %v1933 = vsel %vm710, %v1912, 0
        %1935 = vmatprep.subr.bf16.mxu0 0
        %1936 = vmatpush1.bf16.msra.mxu0 %v1928
        %1937 = vmatprep.subr.bf16.mxu0 0
        %1938 = vmatpush1.bf16.msra.mxu0 %v1929
        %1939 = vmatprep.subr.bf16.mxu0 0
        %1940 = vmatpush1.bf16.msra.mxu0 0
        %1941 = vmatprep.subr.bf16.mxu0 0
        %1942 = vmatpush1.bf16.msra.mxu0 0
        %1943 = vmatprep.subr.bf16.mxu0 0
        %1944 = vmatpush1.bf16.msra.mxu0 0
        %1945 = vmatprep.subr.bf16.mxu0 0
        %1946 = vmatpush1.bf16.msra.mxu0 0
        %1947 = vmatprep.subr.bf16.mxu0 0
        %1948 = vmatpush1.bf16.msra.mxu0 0
        %1949 = vmatprep.subr.bf16.mxu0 0
        %1950 = vmatpush1.bf16.msra.mxu0 0
        %1951 = vmatprep.subr.bf16.mxu0 0
        %1952 = vmatpush1.bf16.msra.mxu0 0
        %1953 = vmatprep.subr.bf16.mxu0 0
        %1954 = vmatpush1.bf16.msra.mxu0 0
        %1955 = vmatprep.subr.bf16.mxu0 0
        %1956 = vmatpush1.bf16.msra.mxu0 0
        %1957 = vmatprep.subr.bf16.mxu0 0
        %1958 = vmatpush1.bf16.msra.mxu0 0
        %1959 = vmatprep.subr.bf16.mxu0 0
        %1960 = vmatpush1.bf16.msra.mxu0 0
        %1961 = vmatprep.subr.bf16.mxu0 0
        %1962 = vmatpush1.bf16.msra.mxu0 0
        %1963 = vmatprep.subr.bf16.mxu0 0
        %1964 = vmatpush1.bf16.msra.mxu0 0
        %1965 = vmatprep.subr.bf16.mxu0 0
        %1966 = vmatpush1.bf16.msra.mxu0 0
        %1967 = vmatprep.mubr.bf16.mxu0 0
        %1968 = vmatmul.mubr.bf16.gmra.mrb[0].mxu0 %v1933
        %v1969 = vpop.f32.mrb[0].mxu0
        %v1970 = vadd.f32 %v1918, %v1969
        %v1971 = vpop.f32.mrb[0].mxu0
        %v1972 = vpop.f32.mrb[0].mxu0
        %v1973 = vpop.f32.mrb[0].mxu0
        %1974 = vdwg.mxu0
        %v1975 = vunpack.c.l.bf16 %v685
        %v1976 = vadd.f32 %v1970, %v1975
        %v1977 = vld [vmem:[%s10] sm:$0x1]
        %v1978 = vld [vmem:[%s11] sm:$0x1]
        %v1979 = vsel %vm710, %v1976, 0.0
        %1980 = vadd.xlane.f32.xlu0 %v1979
        %v1981 = vpop.xlane.xlu0 %1980
        %v1982 = vrcp.pop 32.0
        %v1983 = vmul.f32 %v1981, %v1982
        %v1984 = vsub.f32 %v1976, %v1983
        %v1985 = vmul.f32 %v1984, %v1984
        %v1986 = vsel %vm710, %v1985, 0.0
        %1987 = vadd.xlane.f32.xlu0 %v1986
        %v1988 = vpop.xlane.xlu0 %1987
        %v1989 = vmul.f32 %v1988, %v1982
        %v1990 = vadd.f32 %v1989, 1e-05
        %v1991 = vrsqrt.pop %v1990
        %v1992 = vmul.f32 %v1984, %v1991
        %v1994 = vlaneseq
        %v1995 = vshrl.u32 %v1994, 7
        %v1996 = vsub.s32 0, %v1995
        %v1997 = vrot.slane %v1977, %v1996
        %v1999 = vmul.f32 %v1992, %v1997
        %v2001 = vlaneseq
        %v2002 = vshrl.u32 %v2001, 7
        %v2003 = vsub.s32 0, %v2002
        %v2004 = vrot.slane %v1978, %v2003
        %v2006 = vadd.f32 %v1999, %v2004
        %v2007 = vld [vmem:[%s12] sm:$0xf]
        %v2008 = vld [vmem:[%s12 + $0x4] sm:$0xf]
        %v2009 = vld [vmem:[%s12 + $0x8] sm:$0xf]
        %v2010 = vld [vmem:[%s12 + $0xc] sm:$0xf]
        %v2011 = vpack.c.bf16 %v2006, %v2006
        %v2012 = vld [vmem:[%s13] sm:$0x1]
        %v2014 = vlaneseq
        %v2015 = vshrl.u32 %v2014, 7
        %v2016 = vsub.s32 0, %v2015
        %v2017 = vrot.slane %v2012, %v2016
        %v2023 = vunpack.c.l.b16 %v2007
        %v2024 = vunpack.c.l.b16 %v2008
        %v2025 = vunpack.c.l.b16 %v2009
        %v2026 = vunpack.c.l.b16 %v2010
        %v2027 = vpack.c.b16 %v2024, %v2023
        %v2028 = vpack.c.b16 %v2026, %v2025
        %v2032 = vsel %vm710, %v2011, 0
        %2034 = vmatprep.subr.bf16.mxu0 0
        %2035 = vmatpush1.bf16.msra.mxu0 %v2027
        %2036 = vmatprep.subr.bf16.mxu0 0
        %2037 = vmatpush1.bf16.msra.mxu0 %v2028
        %2038 = vmatprep.subr.bf16.mxu0 0
        %2039 = vmatpush1.bf16.msra.mxu0 0
        %2040 = vmatprep.subr.bf16.mxu0 0
        %2041 = vmatpush1.bf16.msra.mxu0 0
        %2042 = vmatprep.subr.bf16.mxu0 0
        %2043 = vmatpush1.bf16.msra.mxu0 0
        %2044 = vmatprep.subr.bf16.mxu0 0
        %2045 = vmatpush1.bf16.msra.mxu0 0
        %2046 = vmatprep.subr.bf16.mxu0 0
        %2047 = vmatpush1.bf16.msra.mxu0 0
        %2048 = vmatprep.subr.bf16.mxu0 0
        %2049 = vmatpush1.bf16.msra.mxu0 0
        %2050 = vmatprep.subr.bf16.mxu0 0
        %2051 = vmatpush1.bf16.msra.mxu0 0
        %2052 = vmatprep.subr.bf16.mxu0 0
        %2053 = vmatpush1.bf16.msra.mxu0 0
        %2054 = vmatprep.subr.bf16.mxu0 0
        %2055 = vmatpush1.bf16.msra.mxu0 0
        %2056 = vmatprep.subr.bf16.mxu0 0
        %2057 = vmatpush1.bf16.msra.mxu0 0
        %2058 = vmatprep.subr.bf16.mxu0 0
        %2059 = vmatpush1.bf16.msra.mxu0 0
        %2060 = vmatprep.subr.bf16.mxu0 0
        %2061 = vmatpush1.bf16.msra.mxu0 0
        %2062 = vmatprep.subr.bf16.mxu0 0
        %2063 = vmatpush1.bf16.msra.mxu0 0
        %2064 = vmatprep.subr.bf16.mxu0 0
        %2065 = vmatpush1.bf16.msra.mxu0 0
        %2066 = vmatprep.mubr.bf16.mxu0 0
        %2067 = vmatmul.mubr.bf16.gmra.mrb[0].mxu0 %v2032
        %v2068 = vpop.f32.mrb[0].mxu0
        %v2069 = vadd.f32 %v2017, %v2068
        %v2070 = vpop.f32.mrb[0].mxu0
        %v2071 = vpop.f32.mrb[0].mxu0
        %v2072 = vpop.f32.mrb[0].mxu0
        %2073 = vdwg.mxu0
        %v2074 = vmax.f32 %v2069, 0.0
        %v2075 = vld [vmem:[%s14] sm:$0xf]
        %v2076 = vld [vmem:[%s14 + $0x4] sm:$0xf]
        %v2077 = vld [vmem:[%s14 + $0x8] sm:$0xf]
        %v2078 = vld [vmem:[%s14 + $0xc] sm:$0xf]
        %v2079 = vld [vmem:[%s14 + $0x10] sm:$0xf]
        %v2080 = vld [vmem:[%s14 + $0x14] sm:$0xf]
        %v2081 = vld [vmem:[%s14 + $0x18] sm:$0xf]
        %v2082 = vld [vmem:[%s14 + $0x1c] sm:$0xf]
        %v2083 = vpack.c.bf16 %v2074, %v2074
        %v2084 = vld [vmem:[%s15] sm:$0x1]
        %v2086 = vlaneseq
        %v2087 = vshrl.u32 %v2086, 7
        %v2088 = vsub.s32 0, %v2087
        %v2089 = vrot.slane %v2084, %v2088
        %v2099 = vunpack.c.l.b16 %v2075
        %v2100 = vunpack.c.l.b16 %v2076
        %v2101 = vunpack.c.l.b16 %v2077
        %v2102 = vunpack.c.l.b16 %v2078
        %v2103 = vunpack.c.l.b16 %v2079
        %v2104 = vunpack.c.l.b16 %v2080
        %v2105 = vunpack.c.l.b16 %v2081
        %v2106 = vunpack.c.l.b16 %v2082
        %v2107 = vpack.c.b16 %v2100, %v2099
        %v2108 = vpack.c.b16 %v2102, %v2101
        %v2109 = vpack.c.b16 %v2104, %v2103
        %v2110 = vpack.c.b16 %v2106, %v2105
        %vm2115 = vcmask 523264
        %v2117 = vsel %vm2115, %v2083, 0
        %2119 = vmatprep.subr.bf16.mxu0 0
        %2120 = vmatpush1.bf16.msra.mxu0 %v2107
        %2121 = vmatprep.subr.bf16.mxu0 0
        %2122 = vmatpush1.bf16.msra.mxu0 %v2108
        %2123 = vmatprep.subr.bf16.mxu0 0
        %2124 = vmatpush1.bf16.msra.mxu0 %v2109
        %2125 = vmatprep.subr.bf16.mxu0 0
        %2126 = vmatpush1.bf16.msra.mxu0 %v2110
        %2127 = vmatprep.subr.bf16.mxu0 0
        %2128 = vmatpush1.bf16.msra.mxu0 0
        %2129 = vmatprep.subr.bf16.mxu0 0
        %2130 = vmatpush1.bf16.msra.mxu0 0
        %2131 = vmatprep.subr.bf16.mxu0 0
        %2132 = vmatpush1.bf16.msra.mxu0 0
        %2133 = vmatprep.subr.bf16.mxu0 0
        %2134 = vmatpush1.bf16.msra.mxu0 0
        %2135 = vmatprep.subr.bf16.mxu0 0
        %2136 = vmatpush1.bf16.msra.mxu0 0
        %2137 = vmatprep.subr.bf16.mxu0 0
        %2138 = vmatpush1.bf16.msra.mxu0 0
        %2139 = vmatprep.subr.bf16.mxu0 0
        %2140 = vmatpush1.bf16.msra.mxu0 0
        %2141 = vmatprep.subr.bf16.mxu0 0
        %2142 = vmatpush1.bf16.msra.mxu0 0
        %2143 = vmatprep.subr.bf16.mxu0 0
        %2144 = vmatpush1.bf16.msra.mxu0 0
        %2145 = vmatprep.subr.bf16.mxu0 0
        %2146 = vmatpush1.bf16.msra.mxu0 0
        %2147 = vmatprep.subr.bf16.mxu0 0
        %2148 = vmatpush1.bf16.msra.mxu0 0
        %2149 = vmatprep.subr.bf16.mxu0 0
        %2150 = vmatpush1.bf16.msra.mxu0 0
        %2151 = vmatprep.mubr.bf16.mxu0 0
        %2152 = vmatmul.mubr.bf16.gmra.mrb[0].mxu0 %v2117
        %v2153 = vpop.f32.mrb[0].mxu0
        %v2154 = vadd.f32 %v2089, %v2153
        %v2155 = vpop.f32.mrb[0].mxu0
        %v2156 = vpop.f32.mrb[0].mxu0
        %v2157 = vpop.f32.mrb[0].mxu0
        %2158 = vdwg.mxu0
        %v2159 = vadd.f32 %v2154, %v2006
        %v2160 = vld [vmem:[%s16] sm:$0x1]
        %v2161 = vld [vmem:[%s17] sm:$0x1]
        %v2162 = vsel %vm710, %v2159, 0.0
        %2163 = vadd.xlane.f32.xlu0 %v2162
        %v2164 = vpop.xlane.xlu0 %2163
        %v2165 = vmul.f32 %v2164, %v1982
        %v2166 = vsub.f32 %v2159, %v2165
        %v2167 = vmul.f32 %v2166, %v2166
        %v2168 = vsel %vm710, %v2167, 0.0
        %2169 = vadd.xlane.f32.xlu0 %v2168
        %v2170 = vpop.xlane.xlu0 %2169
        %v2171 = vmul.f32 %v2170, %v1982
        %v2172 = vadd.f32 %v2171, 1e-05
        %v2173 = vrsqrt.pop %v2172
        %v2174 = vmul.f32 %v2166, %v2173
        %v2176 = vlaneseq
        %v2177 = vshrl.u32 %v2176, 7
        %v2178 = vsub.s32 0, %v2177
        %v2179 = vrot.slane %v2160, %v2178
        %v2181 = vmul.f32 %v2174, %v2179
        %v2183 = vlaneseq
        %v2184 = vshrl.u32 %v2183, 7
        %v2185 = vsub.s32 0, %v2184
        %v2186 = vrot.slane %v2161, %v2185
        %v2188 = vadd.f32 %v2181, %v2186
        %v2189 = vpack.c.bf16 %v2188, %v2188
        %vm2190 = vcmask 257024
        %2191 = vst.msk [vmem:[%s683] sm:$0xf] %vm2190, %v2189
        %s2192 = sand.u32 %s451, 1
        %s2193 = scalar_lea.sflag [#allocation4], %s2192
        %s2194 = sand.u32 %s451, 1
        %s2195 = smul.addr %s2194, 4
        %s2196 = scalar_lea.vmem [#allocation11], %s2195
        // Predicated region
        $region113: #{tpu_custom_call.1} parent=91 // pred_check
          %p2197 = pneg %p461
        $region114: #{tpu_custom_call.1} parent=91 // pred_check_branch
          %2199 = sbr.rel (%p2197) target = $region116
        $region115: #{tpu_custom_call.1} parent=91 // pred_region
          %s2201 = ssub.s32 64, 64
          %2202 = vsyncadd %s2193, %s2201
          %s2203 = sadd.s32 %s44, %s43
          %s2204 = smul.addr %s2203, 64
          %s2205 = scalar_lea.hbm %s18, %s2204
          %s2207 = sshll.u32 %s2196, 4
          %s2208 = int_to_ptr.vmem [resolvable:$true] %s2207
          %2210 = dma.vmem_to_hbm [thread:$0]  %s2208, 64, %s2205, %s2193
        $region116: #{tpu_custom_call.1} parent=91 // pred_fallthru
          _
      $region92: #{tpu_custom_call.1} parent=5 // pred_fallthru
        _
      %p2211 = scmp.le.s32.totalorder 2, %s34
      // Predicated region
      $region117: #{tpu_custom_call.1} parent=5 // pred_check
        %p2212 = pneg %p2211
      $region118: #{tpu_custom_call.1} parent=5 // pred_check_branch
        %2214 = sbr.rel (%p2212) target = $region120
      $region119: #{tpu_custom_call.1} parent=5 // pred_region
        %s2215 = ssub.s32 %s34, 2
        // Predicated region
        $region121: #{tpu_custom_call.1} parent=119 // pred_check
          %p2216 = pneg %p467
        $region122: #{tpu_custom_call.1} parent=119 // pred_check_branch
          %2218 = sbr.rel (%p2216) target = $region124
        $region123: #{tpu_custom_call.1} parent=119 // pred_region
          %s2219 = sand.u32 %s452, 1
          %s2220 = scalar_lea.sflag [#allocation4], %s2219
          %s2221 = sand.u32 %s452, 1
          %s2222 = smul.addr %s2221, 4
          %s2223 = scalar_lea.vmem [#allocation11], %s2222
          %2224 = dma.done %s2220, 64
        $region124: #{tpu_custom_call.1} parent=119 // pred_fallthru
          _
      $region120: #{tpu_custom_call.1} parent=5 // pred_fallthru
        _
    $region6: #{tpu_custom_call.1} parent=1 // loop_footer
      %s38 = sadd.s32 1, %s34
    $region7: #{tpu_custom_call.1} parent=1 // loop_footer_branch
      %33 = sbr.rel target = $region3
    $region8: #{tpu_custom_call.1} parent=1 // loop_exit
      _
    %2225 = vsyncpa [#allocation3], 1
    %s2226 = scalar_lea.sflag [#allocation3], 1
    %2227 = vsyncpa %s2226, 1
    %2228 = vsyncpa [#allocation6], 1
    %s2229 = scalar_lea.sflag [#allocation6], 1
    %2230 = vsyncpa %s2229, 1
    %2231 = vsyncpa [#allocation9], 1
    %2232 = vsyncpa [#allocation4], 1
    %s2233 = scalar_lea.sflag [#allocation4], 1
    %2234 = vsyncpa %s2233, 1

// kernel: tpu_custom_call.1
$region0: #{tpu_custom_call.1}
  #allocation0 [shape = 'u32[]', space=smem, size = 0x4, offset = 0x4, fixed_abs, tag = 'smem constant byte address 0x4 - core index']
  #allocation1 [shape = 'u32[144,128]{1,0:T(1,128)}', space=vmem, size = 0x12000, scoped, tag = 'internal scratch']
  %s0 = inlined_call_operand.hbm [shape: bf16[2,8,32], index: 0, kind: input, shape index: {}]
  %s1 = inlined_call_operand.hbm [shape: bf16[2,8,32], index: 1, kind: input, shape index: {}]
  %s2 = inlined_call_operand.vmem [shape: bf16[32,32], index: 2, kind: input, shape index: {}]
  %s3 = inlined_call_operand.vmem [shape: f32[1,32], index: 3, kind: input, shape index: {}]
  %s4 = inlined_call_operand.vmem [shape: bf16[32,32], index: 4, kind: input, shape index: {}]
  %s5 = inlined_call_operand.vmem [shape: f32[1,32], index: 5, kind: input, shape index: {}]
  %s6 = inlined_call_operand.vmem [shape: bf16[32,32], index: 6, kind: input, shape index: {}]
  %s7 = inlined_call_operand.hbm [shape: f32[1,32], index: 7, kind: input, shape index: {}]
  %s8 = inlined_call_operand.hbm [shape: bf16[32,32], index: 8, kind: input, shape index: {}]
  %s9 = inlined_call_operand.hbm [shape: f32[1,32], index: 9, kind: input, shape index: {}]
  %s10 = inlined_call_operand.vmem [shape: f32[1,32], index: 10, kind: input, shape index: {}]
  %s11 = inlined_call_operand.vmem [shape: f32[1,32], index: 11, kind: input, shape index: {}]
  %s12 = inlined_call_operand.vmem [shape: bf16[32,64], index: 12, kind: input, shape index: {}]
  %s13 = inlined_call_operand.vmem [shape: f32[1,64], index: 13, kind: input, shape index: {}]
  %s14 = inlined_call_operand.vmem [shape: bf16[64,32], index: 14, kind: input, shape index: {}]
  %s15 = inlined_call_operand.vmem [shape: f32[1,32], index: 15, kind: input, shape index: {}]
  %s16 = inlined_call_operand.vmem [shape: f32[1,32], index: 16, kind: input, shape index: {}]
  %s17 = inlined_call_operand.vmem [shape: f32[1,32], index: 17, kind: input, shape index: {}]
  %s18 = inlined_call_operand.hbm [shape: bf16[2,8,32], index: 18, kind: output, shape index: {}]
  %s19 = sld [smem:[#allocation0]]
  $region125: #{tpu_custom_call.1} parent=0
    _
  %s21 = ssub.s32 1, %s19
  %s22 = scalar_select 0, %s21, %s19
  $region1: #{tpu_custom_call.1} parent=0
    #allocation2 [shape = 'u8[4096]{0}', space=vmem, size = 0x1000, scoped, tag = 'input window, operand 0']
    #allocation3 [shape = 's32[2]{0}', space=sflag, size = 0x8, scoped, tag = 'scoped memory for tpu_custom_call.1']
    #allocation4 [shape = 's32[2]{0}', space=sflag, size = 0x8, scoped, tag = 'scoped memory for tpu_custom_call.1']
    #allocation5 [shape = 'u8[4096]{0}', space=vmem, size = 0x1000, scoped, tag = 'input window, operand 1']
    #allocation6 [shape = 's32[2]{0}', space=sflag, size = 0x8, scoped, tag = 'scoped memory for tpu_custom_call.1']
    #allocation7 [shape = 'u8[512]{0}', space=vmem, size = 0x400, scoped, tag = 'input window, operand 7, single buffered']
    #allocation8 [shape = 'u8[8192]{0}', space=vmem, size = 0x2000, scoped, tag = 'input window, operand 8, single buffered']
    #allocation9 [shape = 's32[1]{0}', space=sflag, size = 0x4, scoped, tag = 'scoped memory for tpu_custom_call.1']
    #allocation10 [shape = 'u8[512]{0}', space=vmem, size = 0x400, scoped, tag = 'input window, operand 9, single buffered']
    #allocation11 [shape = 'u8[4096]{0}', space=vmem, size = 0x1000, scoped, tag = 'output window, operand 0']
    %23 = vsyncpa [#allocation3], 0
    %s24 = scalar_lea.sflag [#allocation3], 1
    %25 = vsyncpa %s24, 0
    %26 = vsyncpa [#allocation6], 0
    %s27 = scalar_lea.sflag [#allocation6], 1
    %28 = vsyncpa %s27, 0
    %29 = vsyncpa [#allocation9], 0
    %30 = vsyncpa [#allocation4], 0
    %s31 = scalar_lea.sflag [#allocation4], 1
    %32 = vsyncpa %s31, 0
    loop: start=0, step=1, limit=4
    $region2: #{tpu_custom_call.1} parent=1 // loop_pre_header
      _
    $region3: #{tpu_custom_call.1} parent=1 // loop_header
      %s34 = sphi 0, %s38
      %p35 = scmp.ge.s32.totalorder %s34, 4
      %s41 = sphi 0, %s53
      %s42 = sphi 0, %s49
      %s43 = sphi 0, %s41
      %s44 = sphi 0, %s42
      %s45 = sphi 0, %s43
      %s46 = sphi 0, %s44
      %s58 = sphi 0, %s60
      %s61 = sphi 0, %s58
      %s62 = sphi 0, %s61
      %s78 = sphi 0, %s62
      %s84 = sphi 0, %s86
      %s87 = sphi 0, %s84
      %s88 = sphi 0, %s87
      %s104 = sphi 0, %s88
      %s108 = sphi 0, %s108
      %s110 = sphi 0, %s108
      %s111 = sphi 0, %s110
      %s125 = sphi 0, %s111
      %s129 = sphi 0, %s129
      %s131 = sphi 0, %s129
      %s132 = sphi 0, %s131
      %s146 = sphi 0, %s132
      %s150 = sphi 0, %s150
      %s152 = sphi 0, %s150
      %s153 = sphi 0, %s152
      %s167 = sphi 0, %s153
      %s171 = sphi 0, %s171
      %s173 = sphi 0, %s171
      %s174 = sphi 0, %s173
      %s188 = sphi 0, %s174
      %s192 = sphi 0, %s192
      %s194 = sphi 0, %s192
      %s195 = sphi 0, %s194
      %s209 = sphi 0, %s195
      %s213 = sphi 0, %s213
      %s215 = sphi 0, %s213
      %s216 = sphi 0, %s215
      %s230 = sphi 0, %s216
      %s234 = sphi 0, %s234
      %s236 = sphi 0, %s234
      %s237 = sphi 0, %s236
      %s251 = sphi 0, %s237
      %s255 = sphi 0, %s255
      %s257 = sphi 0, %s255
      %s258 = sphi 0, %s257
      %s272 = sphi 0, %s258
      %s276 = sphi 0, %s276
      %s278 = sphi 0, %s276
      %s279 = sphi 0, %s278
      %s293 = sphi 0, %s279
      %s297 = sphi 0, %s297
      %s299 = sphi 0, %s297
      %s300 = sphi 0, %s299
      %s314 = sphi 0, %s300
      %s318 = sphi 0, %s318
      %s320 = sphi 0, %s318
      %s321 = sphi 0, %s320
      %s335 = sphi 0, %s321
      %s339 = sphi 0, %s339
      %s341 = sphi 0, %s339
      %s342 = sphi 0, %s341
      %s356 = sphi 0, %s342
      %s360 = sphi 0, %s360
      %s362 = sphi 0, %s360
      %s363 = sphi 0, %s362
      %s377 = sphi 0, %s363
      %s381 = sphi 0, %s381
      %s383 = sphi 0, %s381
      %s384 = sphi 0, %s383
      %s398 = sphi 0, %s384
      %s402 = sphi 0, %s402
      %s404 = sphi 0, %s402
      %s405 = sphi 0, %s404
      %s419 = sphi 0, %s405
      %s423 = sphi 0, %s423
      %s425 = sphi 0, %s423
      %s426 = sphi 0, %s425
      %s440 = sphi 0, %s426
      %s448 = sphi 0, %s450
      %s451 = sphi 0, %s448
      %s452 = sphi 0, %s451
      %s468 = sphi 0, %s452
    $region4: #{tpu_custom_call.1} parent=1 // loop_header_branch
      %37 = sbr.rel (%p35) target = $region8
    $region5: #{tpu_custom_call.1} parent=1 // loop_body
      %s39 = ssub.s32 %s34, 1
      %s40 = ssub.s32 %s34, 2
      %s47 = sadd.s32 1, %s42
      %p48 = scmp.ge.s32.totalorder %s47, 1
      %s49 = scalar_select %p48, 0, %s47
      %s50 = sadd.s32 1, %s41
      %s51 = scalar_select %p48, %s50, %s41
      %p52 = scmp.ge.s32.totalorder %s51, 2
      %s53 = scalar_select %p52, 0, %s51
      %s54 = ssub.s32 %s41, %s53
      %s55 = ssub.s32 %s42, %s49
      %s56 = sor.u32 %s54, %s55
      %p57 = scmp.eq.s32.totalorder %s56, 0
      %s59 = sadd.s32 %s58, 1
      %s60 = scalar_select %p57, %s58, %s59
      %p63 = pneg %p57
      %p64 = scmp.eq.s32.totalorder %s34, 1
      %p65 = por %p63, %p64
      %p66 = scmp.ne.s32.totalorder %s58, %s61
      %p67 = scmp.eq.s32.totalorder %s34, 0
      %p68 = por %p66, %p67
      %p69 = scmp.ne.s32.totalorder %s58, %s61
      %p70 = scmp.eq.s32.totalorder %s39, 1
      %p71 = por %p69, %p70
      %p72 = scmp.ne.s32.totalorder %s61, %s62
      %p73 = scmp.eq.s32.totalorder %s39, 0
      %p74 = por %p72, %p73
      %p75 = scmp.ne.s32.totalorder %s61, %s62
      %p76 = scmp.eq.s32.totalorder %s40, 1
      %p77 = por %p75, %p76
      %p79 = scmp.ne.s32.totalorder %s62, %s78
      %p80 = scmp.eq.s32.totalorder %s40, 0
      %p81 = por %p79, %p80
      %s82 = ssub.s32 %s41, %s53
      %p83 = scmp.eq.s32.totalorder %s82, 0
      %s85 = sadd.s32 %s84, 1
      %s86 = scalar_select %p83, %s84, %s85
      %p89 = pneg %p83
      %p90 = scmp.eq.s32.totalorder %s34, 1
      %p91 = por %p89, %p90
      %p92 = scmp.ne.s32.totalorder %s84, %s87
      %p93 = scmp.eq.s32.totalorder %s34, 0
      %p94 = por %p92, %p93
      %p95 = scmp.ne.s32.totalorder %s84, %s87
      %p96 = scmp.eq.s32.totalorder %s39, 1
      %p97 = por %p95, %p96
      %p98 = scmp.ne.s32.totalorder %s87, %s88
      %p99 = scmp.eq.s32.totalorder %s39, 0
      %p100 = por %p98, %p99
      %p101 = scmp.ne.s32.totalorder %s87, %s88
      %p102 = scmp.eq.s32.totalorder %s40, 1
      %p103 = por %p101, %p102
      %p105 = scmp.ne.s32.totalorder %s88, %s104
      %p106 = scmp.eq.s32.totalorder %s40, 0
      %p107 = por %p105, %p106
      %s109 = sadd.s32 %s108, 1
      %p112 = scmp.eq.s32.totalorder %s34, 1
      %p113 = scmp.ne.s32.totalorder %s108, %s110
      %p114 = scmp.eq.s32.totalorder %s34, 0
      %p115 = por %p113, %p114
      %p116 = scmp.ne.s32.totalorder %s108, %s110
      %p117 = scmp.eq.s32.totalorder %s39, 1
      %p118 = por %p116, %p117
      %p119 = scmp.ne.s32.totalorder %s110, %s111
      %p120 = scmp.eq.s32.totalorder %s39, 0
      %p121 = por %p119, %p120
      %p122 = scmp.ne.s32.totalorder %s110, %s111
      %p123 = scmp.eq.s32.totalorder %s40, 1
      %p124 = por %p122, %p123
      %p126 = scmp.ne.s32.totalorder %s111, %s125
      %p127 = scmp.eq.s32.totalorder %s40, 0
      %p128 = por %p126, %p127
      %s130 = sadd.s32 %s129, 1
      %p133 = scmp.eq.s32.totalorder %s34, 1
      %p134 = scmp.ne.s32.totalorder %s129, %s131
      %p135 = scmp.eq.s32.totalorder %s34, 0
      %p136 = por %p134, %p135
      %p137 = scmp.ne.s32.totalorder %s129, %s131
      %p138 = scmp.eq.s32.totalorder %s39, 1
      %p139 = por %p137, %p138
      %p140 = scmp.ne.s32.totalorder %s131, %s132
      %p141 = scmp.eq.s32.totalorder %s39, 0
      %p142 = por %p140, %p141
      %p143 = scmp.ne.s32.totalorder %s131, %s132
      %p144 = scmp.eq.s32.totalorder %s40, 1
      %p145 = por %p143, %p144
      %p147 = scmp.ne.s32.totalorder %s132, %s146
      %p148 = scmp.eq.s32.totalorder %s40, 0
      %p149 = por %p147, %p148
      %s151 = sadd.s32 %s150, 1
      %p154 = scmp.eq.s32.totalorder %s34, 1
      %p155 = scmp.ne.s32.totalorder %s150, %s152
      %p156 = scmp.eq.s32.totalorder %s34, 0
      %p157 = por %p155, %p156
      %p158 = scmp.ne.s32.totalorder %s150, %s152
      %p159 = scmp.eq.s32.totalorder %s39, 1
      %p160 = por %p158, %p159
      %p161 = scmp.ne.s32.totalorder %s152, %s153
      %p162 = scmp.eq.s32.totalorder %s39, 0
      %p163 = por %p161, %p162
      %p164 = scmp.ne.s32.totalorder %s152, %s153
      %p165 = scmp.eq.s32.totalorder %s40, 1
      %p166 = por %p164, %p165
      %p168 = scmp.ne.s32.totalorder %s153, %s167
      %p169 = scmp.eq.s32.totalorder %s40, 0
      %p170 = por %p168, %p169
      %s172 = sadd.s32 %s171, 1
      %p175 = scmp.eq.s32.totalorder %s34, 1
      %p176 = scmp.ne.s32.totalorder %s171, %s173
      %p177 = scmp.eq.s32.totalorder %s34, 0
      %p178 = por %p176, %p177
      %p179 = scmp.ne.s32.totalorder %s171, %s173
      %p180 = scmp.eq.s32.totalorder %s39, 1
      %p181 = por %p179, %p180
      %p182 = scmp.ne.s32.totalorder %s173, %s174
      %p183 = scmp.eq.s32.totalorder %s39, 0
      %p184 = por %p182, %p183
      %p185 = scmp.ne.s32.totalorder %s173, %s174
      %p186 = scmp.eq.s32.totalorder %s40, 1
      %p187 = por %p185, %p186
      %p189 = scmp.ne.s32.totalorder %s174, %s188
      %p190 = scmp.eq.s32.totalorder %s40, 0
      %p191 = por %p189, %p190
      %s193 = sadd.s32 %s192, 1
      %p196 = scmp.eq.s32.totalorder %s34, 1
      %p197 = scmp.ne.s32.totalorder %s192, %s194
      %p198 = scmp.eq.s32.totalorder %s34, 0
      %p199 = por %p197, %p198
      %p200 = scmp.ne.s32.totalorder %s192, %s194
      %p201 = scmp.eq.s32.totalorder %s39, 1
      %p202 = por %p200, %p201
      %p203 = scmp.ne.s32.totalorder %s194, %s195
      %p204 = scmp.eq.s32.totalorder %s39, 0
      %p205 = por %p203, %p204
      %p206 = scmp.ne.s32.totalorder %s194, %s195
      %p207 = scmp.eq.s32.totalorder %s40, 1
      %p208 = por %p206, %p207
      %p210 = scmp.ne.s32.totalorder %s195, %s209
      %p211 = scmp.eq.s32.totalorder %s40, 0
      %p212 = por %p210, %p211
      %s214 = sadd.s32 %s213, 1
      %p217 = scmp.eq.s32.totalorder %s34, 1
      %p218 = scmp.ne.s32.totalorder %s213, %s215
      %p219 = scmp.eq.s32.totalorder %s34, 0
      %p220 = por %p218, %p219
      %p221 = scmp.ne.s32.totalorder %s213, %s215
      %p222 = scmp.eq.s32.totalorder %s39, 1
      %p223 = por %p221, %p222
      %p224 = scmp.ne.s32.totalorder %s215, %s216
      %p225 = scmp.eq.s32.totalorder %s39, 0
      %p226 = por %p224, %p225
      %p227 = scmp.ne.s32.totalorder %s215, %s216
      %p228 = scmp.eq.s32.totalorder %s40, 1
      %p229 = por %p227, %p228
      %p231 = scmp.ne.s32.totalorder %s216, %s230
      %p232 = scmp.eq.s32.totalorder %s40, 0
      %p233 = por %p231, %p232
      %s235 = sadd.s32 %s234, 1
      %p238 = scmp.eq.s32.totalorder %s34, 1
      %p239 = scmp.ne.s32.totalorder %s234, %s236
      %p240 = scmp.eq.s32.totalorder %s34, 0
      %p241 = por %p239, %p240
      %p242 = scmp.ne.s32.totalorder %s234, %s236
      %p243 = scmp.eq.s32.totalorder %s39, 1
      %p244 = por %p242, %p243
      %p245 = scmp.ne.s32.totalorder %s236, %s237
      %p246 = scmp.eq.s32.totalorder %s39, 0
      %p247 = por %p245, %p246
      %p248 = scmp.ne.s32.totalorder %s236, %s237
      %p249 = scmp.eq.s32.totalorder %s40, 1
      %p250 = por %p248, %p249
      %p252 = scmp.ne.s32.totalorder %s237, %s251
      %p253 = scmp.eq.s32.totalorder %s40, 0
      %p254 = por %p252, %p253
      %s256 = sadd.s32 %s255, 1
      %p259 = scmp.eq.s32.totalorder %s34, 1
      %p260 = scmp.ne.s32.totalorder %s255, %s257
      %p261 = scmp.eq.s32.totalorder %s34, 0
      %p262 = por %p260, %p261
      %p263 = scmp.ne.s32.totalorder %s255, %s257
      %p264 = scmp.eq.s32.totalorder %s39, 1
      %p265 = por %p263, %p264
      %p266 = scmp.ne.s32.totalorder %s257, %s258
      %p267 = scmp.eq.s32.totalorder %s39, 0
      %p268 = por %p266, %p267
      %p269 = scmp.ne.s32.totalorder %s257, %s258
      %p270 = scmp.eq.s32.totalorder %s40, 1
      %p271 = por %p269, %p270
      %p273 = scmp.ne.s32.totalorder %s258, %s272
      %p274 = scmp.eq.s32.totalorder %s40, 0
      %p275 = por %p273, %p274
      %s277 = sadd.s32 %s276, 1
      %p280 = scmp.eq.s32.totalorder %s34, 1
      %p281 = scmp.ne.s32.totalorder %s276, %s278
      %p282 = scmp.eq.s32.totalorder %s34, 0
      %p283 = por %p281, %p282
      %p284 = scmp.ne.s32.totalorder %s276, %s278
      %p285 = scmp.eq.s32.totalorder %s39, 1
      %p286 = por %p284, %p285
      %p287 = scmp.ne.s32.totalorder %s278, %s279
      %p288 = scmp.eq.s32.totalorder %s39, 0
      %p289 = por %p287, %p288
      %p290 = scmp.ne.s32.totalorder %s278, %s279
      %p291 = scmp.eq.s32.totalorder %s40, 1
      %p292 = por %p290, %p291
      %p294 = scmp.ne.s32.totalorder %s279, %s293
      %p295 = scmp.eq.s32.totalorder %s40, 0
      %p296 = por %p294, %p295
      %s298 = sadd.s32 %s297, 1
      %p301 = scmp.eq.s32.totalorder %s34, 1
      %p302 = scmp.ne.s32.totalorder %s297, %s299
      %p303 = scmp.eq.s32.totalorder %s34, 0
      %p304 = por %p302, %p303
      %p305 = scmp.ne.s32.totalorder %s297, %s299
      %p306 = scmp.eq.s32.totalorder %s39, 1
      %p307 = por %p305, %p306
      %p308 = scmp.ne.s32.totalorder %s299, %s300
      %p309 = scmp.eq.s32.totalorder %s39, 0
      %p310 = por %p308, %p309
      %p311 = scmp.ne.s32.totalorder %s299, %s300
      %p312 = scmp.eq.s32.totalorder %s40, 1
      %p313 = por %p311, %p312
      %p315 = scmp.ne.s32.totalorder %s300, %s314
      %p316 = scmp.eq.s32.totalorder %s40, 0
      %p317 = por %p315, %p316
      %s319 = sadd.s32 %s318, 1
      %p322 = scmp.eq.s32.totalorder %s34, 1
      %p323 = scmp.ne.s32.totalorder %s318, %s320
      %p324 = scmp.eq.s32.totalorder %s34, 0
      %p325 = por %p323, %p324
      %p326 = scmp.ne.s32.totalorder %s318, %s320
      %p327 = scmp.eq.s32.totalorder %s39, 1
      %p328 = por %p326, %p327
      %p329 = scmp.ne.s32.totalorder %s320, %s321
      %p330 = scmp.eq.s32.totalorder %s39, 0
      %p331 = por %p329, %p330
      %p332 = scmp.ne.s32.totalorder %s320, %s321
      %p333 = scmp.eq.s32.totalorder %s40, 1
      %p334 = por %p332, %p333
      %p336 = scmp.ne.s32.totalorder %s321, %s335
      %p337 = scmp.eq.s32.totalorder %s40, 0
      %p338 = por %p336, %p337
      %s340 = sadd.s32 %s339, 1
      %p343 = scmp.eq.s32.totalorder %s34, 1
      %p344 = scmp.ne.s32.totalorder %s339, %s341
      %p345 = scmp.eq.s32.totalorder %s34, 0
      %p346 = por %p344, %p345
      %p347 = scmp.ne.s32.totalorder %s339, %s341
      %p348 = scmp.eq.s32.totalorder %s39, 1
      %p349 = por %p347, %p348
      %p350 = scmp.ne.s32.totalorder %s341, %s342
      %p351 = scmp.eq.s32.totalorder %s39, 0
      %p352 = por %p350, %p351
      %p353 = scmp.ne.s32.totalorder %s341, %s342
      %p354 = scmp.eq.s32.totalorder %s40, 1
      %p355 = por %p353, %p354
      %p357 = scmp.ne.s32.totalorder %s342, %s356
      %p358 = scmp.eq.s32.totalorder %s40, 0
      %p359 = por %p357, %p358
      %s361 = sadd.s32 %s360, 1
      %p364 = scmp.eq.s32.totalorder %s34, 1
      %p365 = scmp.ne.s32.totalorder %s360, %s362
      %p366 = scmp.eq.s32.totalorder %s34, 0
      %p367 = por %p365, %p366
      %p368 = scmp.ne.s32.totalorder %s360, %s362
      %p369 = scmp.eq.s32.totalorder %s39, 1
      %p370 = por %p368, %p369
      %p371 = scmp.ne.s32.totalorder %s362, %s363
      %p372 = scmp.eq.s32.totalorder %s39, 0
      %p373 = por %p371, %p372
      %p374 = scmp.ne.s32.totalorder %s362, %s363
      %p375 = scmp.eq.s32.totalorder %s40, 1
      %p376 = por %p374, %p375
      %p378 = scmp.ne.s32.totalorder %s363, %s377
      %p379 = scmp.eq.s32.totalorder %s40, 0
      %p380 = por %p378, %p379
      %s382 = sadd.s32 %s381, 1
      %p385 = scmp.eq.s32.totalorder %s34, 1
      %p386 = scmp.ne.s32.totalorder %s381, %s383
      %p387 = scmp.eq.s32.totalorder %s34, 0
      %p388 = por %p386, %p387
      %p389 = scmp.ne.s32.totalorder %s381, %s383
      %p390 = scmp.eq.s32.totalorder %s39, 1
      %p391 = por %p389, %p390
      %p392 = scmp.ne.s32.totalorder %s383, %s384
      %p393 = scmp.eq.s32.totalorder %s39, 0
      %p394 = por %p392, %p393
      %p395 = scmp.ne.s32.totalorder %s383, %s384
      %p396 = scmp.eq.s32.totalorder %s40, 1
      %p397 = por %p395, %p396
      %p399 = scmp.ne.s32.totalorder %s384, %s398
      %p400 = scmp.eq.s32.totalorder %s40, 0
      %p401 = por %p399, %p400
      %s403 = sadd.s32 %s402, 1
      %p406 = scmp.eq.s32.totalorder %s34, 1
      %p407 = scmp.ne.s32.totalorder %s402, %s404
      %p408 = scmp.eq.s32.totalorder %s34, 0
      %p409 = por %p407, %p408
      %p410 = scmp.ne.s32.totalorder %s402, %s404
      %p411 = scmp.eq.s32.totalorder %s39, 1
      %p412 = por %p410, %p411
      %p413 = scmp.ne.s32.totalorder %s404, %s405
      %p414 = scmp.eq.s32.totalorder %s39, 0
      %p415 = por %p413, %p414
      %p416 = scmp.ne.s32.totalorder %s404, %s405
      %p417 = scmp.eq.s32.totalorder %s40, 1
      %p418 = por %p416, %p417
      %p420 = scmp.ne.s32.totalorder %s405, %s419
      %p421 = scmp.eq.s32.totalorder %s40, 0
      %p422 = por %p420, %p421
      %s424 = sadd.s32 %s423, 1
      %p427 = scmp.eq.s32.totalorder %s34, 1
      %p428 = scmp.ne.s32.totalorder %s423, %s425
      %p429 = scmp.eq.s32.totalorder %s34, 0
      %p430 = por %p428, %p429
      %p431 = scmp.ne.s32.totalorder %s423, %s425
      %p432 = scmp.eq.s32.totalorder %s39, 1
      %p433 = por %p431, %p432
      %p434 = scmp.ne.s32.totalorder %s425, %s426
      %p435 = scmp.eq.s32.totalorder %s39, 0
      %p436 = por %p434, %p435
      %p437 = scmp.ne.s32.totalorder %s425, %s426
      %p438 = scmp.eq.s32.totalorder %s40, 1
      %p439 = por %p437, %p438
      %p441 = scmp.ne.s32.totalorder %s426, %s440
      %p442 = scmp.eq.s32.totalorder %s40, 0
      %p443 = por %p441, %p442
      %s444 = ssub.s32 %s41, %s53
      %s445 = ssub.s32 %s42, %s49
      %s446 = sor.u32 %s444, %s445
      %p447 = scmp.eq.s32.totalorder %s446, 0
      %s449 = sadd.s32 %s448, 1
      %s450 = scalar_select %p447, %s448, %s449
      %p453 = pneg %p447
      %p454 = scmp.eq.s32.totalorder %s34, 1
      %p455 = por %p453, %p454
      %p456 = scmp.ne.s32.totalorder %s448, %s451
      %p457 = scmp.eq.s32.totalorder %s34, 0
      %p458 = por %p456, %p457
      %p459 = scmp.ne.s32.totalorder %s448, %s451
      %p460 = scmp.eq.s32.totalorder %s39, 1
      %p461 = por %p459, %p460
      %p462 = scmp.ne.s32.totalorder %s451, %s452
      %p463 = scmp.eq.s32.totalorder %s39, 0
      %p464 = por %p462, %p463
      %p465 = scmp.ne.s32.totalorder %s451, %s452
      %p466 = scmp.eq.s32.totalorder %s40, 1
      %p467 = por %p465, %p466
      %p469 = scmp.ne.s32.totalorder %s452, %s468
      %p470 = scmp.eq.s32.totalorder %s40, 0
      %p471 = por %p469, %p470
      %p472 = scmp.le.s32.totalorder 1, %s34
      %p473 = scmp.lt.s32.totalorder %s34, 3
      %p474 = pnand %p472, %p473
      %p475 = pneg %p474
      // Predicated region
      $region9: #{tpu_custom_call.1} parent=5 // pred_check
        _
      $region10: #{tpu_custom_call.1} parent=5 // pred_check_branch
        %477 = sbr.rel (%p474) target = $region12
      $region11: #{tpu_custom_call.1} parent=5 // pred_region
        %s478 = ssub.s32 %s34, 1
        // Predicated region
        $region13: #{tpu_custom_call.1} parent=11 // pred_check
          %p479 = pneg %p121
        $region14: #{tpu_custom_call.1} parent=11 // pred_check_branch
          %481 = sbr.rel (%p479) target = $region16
        $region15: #{tpu_custom_call.1} parent=11 // pred_region
          _
        $region16: #{tpu_custom_call.1} parent=11 // pred_fallthru
          _
        // Predicated region
        $region17: #{tpu_custom_call.1} parent=11 // pred_check
          %p482 = pneg %p142
        $region18: #{tpu_custom_call.1} parent=11 // pred_check_branch
          %484 = sbr.rel (%p482) target = $region20
        $region19: #{tpu_custom_call.1} parent=11 // pred_region
          _
        $region20: #{tpu_custom_call.1} parent=11 // pred_fallthru
          _
        // Predicated region
        $region21: #{tpu_custom_call.1} parent=11 // pred_check
          %p485 = pneg %p163
        $region22: #{tpu_custom_call.1} parent=11 // pred_check_branch
          %487 = sbr.rel (%p485) target = $region24
        $region23: #{tpu_custom_call.1} parent=11 // pred_region
          _
        $region24: #{tpu_custom_call.1} parent=11 // pred_fallthru
          _
        // Predicated region
        $region25: #{tpu_custom_call.1} parent=11 // pred_check
          %p488 = pneg %p184
        $region26: #{tpu_custom_call.1} parent=11 // pred_check_branch
          %490 = sbr.rel (%p488) target = $region28
        $region27: #{tpu_custom_call.1} parent=11 // pred_region
          _
        $region28: #{tpu_custom_call.1} parent=11 // pred_fallthru
          _
        // Predicated region
        $region29: #{tpu_custom_call.1} parent=11 // pred_check
          %p491 = pneg %p205
        $region30: #{tpu_custom_call.1} parent=11 // pred_check_branch
          %493 = sbr.rel (%p491) target = $region32
        $region31: #{tpu_custom_call.1} parent=11 // pred_region
          _
        $region32: #{tpu_custom_call.1} parent=11 // pred_fallthru
          _
        // Predicated region
        $region33: #{tpu_custom_call.1} parent=11 // pred_check
          %p494 = pneg %p226
        $region34: #{tpu_custom_call.1} parent=11 // pred_check_branch
          %496 = sbr.rel (%p494) target = $region36
        $region35: #{tpu_custom_call.1} parent=11 // pred_region
          %s498 = ssub.s32 16, 16
          %499 = vsyncadd [#allocation6], %s498
          %s501 = sshll.u32 [#allocation7], 4
          %s502 = int_to_ptr.vmem [resolvable:$true] %s501
          %504 = dma.hbm_to_vmem [thread:$0]  %s7, 16, %s502, [#allocation6]
        $region36: #{tpu_custom_call.1} parent=11 // pred_fallthru
          _
        // Predicated region
        $region37: #{tpu_custom_call.1} parent=11 // pred_check
          %p505 = pneg %p247
        $region38: #{tpu_custom_call.1} parent=11 // pred_check_branch
          %507 = sbr.rel (%p505) target = $region40
        $region39: #{tpu_custom_call.1} parent=11 // pred_region
          %s509 = ssub.s32 256, 256
          %510 = vsyncadd [#allocation9], %s509
          %s511 = sshll.u32 [#allocation8], 4
          %s512 = int_to_ptr.vmem [resolvable:$true] %s511
          %517 = dma.hbm_to_vmem [thread:$0]  %s8, 256, %s512, [#allocation9], 64, 64, 4
        $region40: #{tpu_custom_call.1} parent=11 // pred_fallthru
          _
        // Predicated region
        $region41: #{tpu_custom_call.1} parent=11 // pred_check
          %p518 = pneg %p268
        $region42: #{tpu_custom_call.1} parent=11 // pred_check_branch
          %520 = sbr.rel (%p518) target = $region44
        $region43: #{tpu_custom_call.1} parent=11 // pred_region
          %s522 = ssub.s32 16, 16
          %523 = vsyncadd [#allocation9], %s522
          %s525 = sshll.u32 [#allocation10], 4
          %s526 = int_to_ptr.vmem [resolvable:$true] %s525
          %528 = dma.hbm_to_vmem [thread:$0]  %s9, 16, %s526, [#allocation9]
        $region44: #{tpu_custom_call.1} parent=11 // pred_fallthru
          _
        // Predicated region
        $region45: #{tpu_custom_call.1} parent=11 // pred_check
          %p529 = pneg %p289
        $region46: #{tpu_custom_call.1} parent=11 // pred_check_branch
          %531 = sbr.rel (%p529) target = $region48
        $region47: #{tpu_custom_call.1} parent=11 // pred_region
          _
        $region48: #{tpu_custom_call.1} parent=11 // pred_fallthru
          _
        // Predicated region
        $region49: #{tpu_custom_call.1} parent=11 // pred_check
          %p532 = pneg %p310
        $region50: #{tpu_custom_call.1} parent=11 // pred_check_branch
          %534 = sbr.rel (%p532) target = $region52
        $region51: #{tpu_custom_call.1} parent=11 // pred_region
          _
        $region52: #{tpu_custom_call.1} parent=11 // pred_fallthru
          _
        // Predicated region
        $region53: #{tpu_custom_call.1} parent=11 // pred_check
          %p535 = pneg %p331
        $region54: #{tpu_custom_call.1} parent=11 // pred_check_branch
          %537 = sbr.rel (%p535) target = $region56
        $region55: #{tpu_custom_call.1} parent=11 // pred_region
          _
        $region56: #{tpu_custom_call.1} parent=11 // pred_fallthru
          _
        // Predicated region
        $region57: #{tpu_custom_call.1} parent=11 // pred_check
          %p538 = pneg %p352
        $region58: #{tpu_custom_call.1} parent=11 // pred_check_branch
          %540 = sbr.rel (%p538) target = $region60
        $region59: #{tpu_custom_call.1} parent=11 // pred_region
          _
        $region60: #{tpu_custom_call.1} parent=11 // pred_fallthru
          _
        // Predicated region
        $region61: #{tpu_custom_call.1} parent=11 // pred_check
          %p541 = pneg %p373
        $region62: #{tpu_custom_call.1} parent=11 // pred_check_branch
          %543 = sbr.rel (%p541) target = $region64
        $region63: #{tpu_custom_call.1} parent=11 // pred_region
          _
        $region64: #{tpu_custom_call.1} parent=11 // pred_fallthru
          _
        // Predicated region
        $region65: #{tpu_custom_call.1} parent=11 // pred_check
          %p544 = pneg %p394
        $region66: #{tpu_custom_call.1} parent=11 // pred_check_branch
          %546 = sbr.rel (%p544) target = $region68
        $region67: #{tpu_custom_call.1} parent=11 // pred_region
          _
        $region68: #{tpu_custom_call.1} parent=11 // pred_fallthru
          _
        // Predicated region
        $region69: #{tpu_custom_call.1} parent=11 // pred_check
          %p547 = pneg %p415
        $region70: #{tpu_custom_call.1} parent=11 // pred_check_branch
          %549 = sbr.rel (%p547) target = $region72
        $region71: #{tpu_custom_call.1} parent=11 // pred_region
          _
        $region72: #{tpu_custom_call.1} parent=11 // pred_fallthru
          _
        // Predicated region
        $region73: #{tpu_custom_call.1} parent=11 // pred_check
          %p550 = pneg %p436
        $region74: #{tpu_custom_call.1} parent=11 // pred_check_branch
          %552 = sbr.rel (%p550) target = $region76
        $region75: #{tpu_custom_call.1} parent=11 // pred_region
          _
        $region76: #{tpu_custom_call.1} parent=11 // pred_fallthru
          _
      $region12: #{tpu_custom_call.1} parent=5 // pred_fallthru
        _
      %p553 = scmp.lt.s32.totalorder %s34, 2
      // Predicated region
      $region77: #{tpu_custom_call.1} parent=5 // pred_check
        %p554 = pneg %p553
      $region78: #{tpu_custom_call.1} parent=5 // pred_check_branch
        %556 = sbr.rel (%p554) target = $region80
      $region79: #{tpu_custom_call.1} parent=5 // pred_region
        // Predicated region
        $region81: #{tpu_custom_call.1} parent=79 // pred_check
          %p557 = pneg %p68
        $region82: #{tpu_custom_call.1} parent=79 // pred_check_branch
          %559 = sbr.rel (%p557) target = $region84
        $region83: #{tpu_custom_call.1} parent=79 // pred_region
          %s560 = sand.u32 %s58, 1
          %s561 = scalar_lea.sflag [#allocation3], %s560
          %s562 = sand.u32 %s58, 1
          %s563 = smul.addr %s562, 4
          %s564 = scalar_lea.vmem [#allocation2], %s563
          %s566 = ssub.s32 64, 64
          %567 = vsyncadd %s561, %s566
          %s568 = sadd.s32 %s42, %s41
          %s569 = smul.addr %s568, 64
          %s570 = scalar_lea.hbm %s0, %s569
          %s572 = sshll.u32 %s564, 4
          %s573 = int_to_ptr.vmem [resolvable:$true] %s572
          %575 = dma.hbm_to_vmem [thread:$0]  %s570, 64, %s573, %s561
        $region84: #{tpu_custom_call.1} parent=79 // pred_fallthru
          _
        // Predicated region
        $region85: #{tpu_custom_call.1} parent=79 // pred_check
          %p576 = pneg %p94
        $region86: #{tpu_custom_call.1} parent=79 // pred_check_branch
          %578 = sbr.rel (%p576) target = $region88
        $region87: #{tpu_custom_call.1} parent=79 // pred_region
          %s579 = sand.u32 %s34, 1
          %s580 = scalar_lea.sflag [#allocation6], %s579
          %s581 = sand.u32 %s84, 1
          %s582 = smul.addr %s581, 4
          %s583 = scalar_lea.vmem [#allocation5], %s582
          %s585 = ssub.s32 64, 64
          %586 = vsyncadd %s580, %s585
          %s587 = smul.addr %s41, 64
          %s588 = scalar_lea.hbm %s1, %s587
          %s590 = sshll.u32 %s583, 4
          %s591 = int_to_ptr.vmem [resolvable:$true] %s590
          %593 = dma.hbm_to_vmem [thread:$0]  %s588, 64, %s591, %s580
        $region88: #{tpu_custom_call.1} parent=79 // pred_fallthru
          _
      $region80: #{tpu_custom_call.1} parent=5 // pred_fallthru
        _
      %p594 = scmp.le.s32.totalorder 1, %s34
      %p595 = scmp.lt.s32.totalorder %s34, 3
      %p596 = pnand %p594, %p595
      %p597 = pneg %p596
      // Predicated region
      $region89: #{tpu_custom_call.1} parent=5 // pred_check
        _
      $region90: #{tpu_custom_call.1} parent=5 // pred_check_branch
        %599 = sbr.rel (%p596) target = $region92
      $region91: #{tpu_custom_call.1} parent=5 // pred_region
        %s600 = ssub.s32 %s34, 1
        %s601 = sand.u32 %s61, 1
        %s602 = scalar_lea.sflag [#allocation3], %s601
        %s603 = sand.u32 %s61, 1
        %s604 = smul.addr %s603, 4
        %s605 = scalar_lea.vmem [#allocation2], %s604
        // Predicated region
        $region93: #{tpu_custom_call.1} parent=91 // pred_check
          %p606 = pneg %p74
        $region94: #{tpu_custom_call.1} parent=91 // pred_check_branch
          %608 = sbr.rel (%p606) target = $region96
        $region95: #{tpu_custom_call.1} parent=91 // pred_region
          %609 = dma.done %s602, 64
        $region96: #{tpu_custom_call.1} parent=91 // pred_fallthru
          _
        %s610 = sand.u32 %s39, 1
        %s611 = scalar_lea.sflag [#allocation6], %s610
        %s612 = sand.u32 %s87, 1
        %s613 = smul.addr %s612, 4
        %s614 = scalar_lea.vmem [#allocation5], %s613
        // Predicated region
        $region97: #{tpu_custom_call.1} parent=91 // pred_check
          %p615 = pneg %p100
        $region98: #{tpu_custom_call.1} parent=91 // pred_check_branch
          %617 = sbr.rel (%p615) target = $region100
        $region99: #{tpu_custom_call.1} parent=91 // pred_region
          %618 = dma.done %s611, 64
        $region100: #{tpu_custom_call.1} parent=91 // pred_fallthru
          _
        // Predicated region
        $region101: #{tpu_custom_call.1} parent=91 // pred_check
          %p619 = pneg %p226
        $region102: #{tpu_custom_call.1} parent=91 // pred_check_branch
          %621 = sbr.rel (%p619) target = $region104
        $region103: #{tpu_custom_call.1} parent=91 // pred_region
          %622 = dma.done [#allocation6], 16
        $region104: #{tpu_custom_call.1} parent=91 // pred_fallthru
          _
        // Predicated region
        $region105: #{tpu_custom_call.1} parent=91 // pred_check
          %p623 = pneg %p247
        $region106: #{tpu_custom_call.1} parent=91 // pred_check_branch
          %625 = sbr.rel (%p623) target = $region108
        $region107: #{tpu_custom_call.1} parent=91 // pred_region
          %626 = dma.done [#allocation9], 256
        $region108: #{tpu_custom_call.1} parent=91 // pred_fallthru
          _
        // Predicated region
        $region109: #{tpu_custom_call.1} parent=91 // pred_check
          %p627 = pneg %p268
        $region110: #{tpu_custom_call.1} parent=91 // pred_check_branch
          %629 = sbr.rel (%p627) target = $region112
        $region111: #{tpu_custom_call.1} parent=91 // pred_region
          %630 = dma.done [#allocation9], 16
        $region112: #{tpu_custom_call.1} parent=91 // pred_fallthru
          _
        %s631 = sand.u32 %s61, 1
        %s632 = scalar_lea.sflag [#allocation3], %s631
        %s633 = sand.u32 %s61, 1
        %s634 = smul.addr %s633, 4
        %s635 = scalar_lea.vmem [#allocation2], %s634
        %p636 = pneg %p74
        %p637 = pneg %p71
        %s638 = sand.u32 %s39, 1
        %s639 = scalar_lea.sflag [#allocation6], %s638
        %s640 = sand.u32 %s87, 1
        %s641 = smul.addr %s640, 4
        %s642 = scalar_lea.vmem [#allocation5], %s641
        %p643 = pneg %p100
        %p644 = pneg %p97
        %p645 = pneg %p121
        %p646 = pneg %p118
        %p647 = pneg %p142
        %p648 = pneg %p139
        %p649 = pneg %p163
        %p650 = pneg %p160
        %p651 = pneg %p184
        %p652 = pneg %p181
        %p653 = pneg %p205
        %p654 = pneg %p202
        %p655 = pneg %p226
        %p656 = pneg %p223
        %p657 = pneg %p247
        %p658 = pneg %p244
        %p659 = pneg %p268
        %p660 = pneg %p265
        %p661 = pneg %p289
        %p662 = pneg %p286
        %p663 = pneg %p310
        %p664 = pneg %p307
        %p665 = pneg %p331
        %p666 = pneg %p328
        %p667 = pneg %p352
        %p668 = pneg %p349
        %p669 = pneg %p373
        %p670 = pneg %p370
        %p671 = pneg %p394
        %p672 = pneg %p391
        %p673 = pneg %p415
        %p674 = pneg %p412
        %p675 = pneg %p436
        %p676 = pneg %p433
        %p677 = pneg %p464
        %p678 = pneg %p461
        %s679 = sand.u32 %s451, 1
        %s680 = scalar_lea.sflag [#allocation4], %s679
        %s681 = sand.u32 %s451, 1
        %s682 = smul.addr %s681, 4
        %s683 = scalar_lea.vmem [#allocation11], %s682
        %v685 = vld [vmem:[%s605] sm:$0xf]
        %v686 = vld [vmem:[%s614] sm:$0xf]
        %v687 = vld [vmem:[%s2] sm:$0xf]
        %v688 = vld [vmem:[%s2 + $0x4] sm:$0xf]
        %v689 = vld [vmem:[%s2 + $0x8] sm:$0xf]
        %v690 = vld [vmem:[%s2 + $0xc] sm:$0xf]
        %v691 = vld [vmem:[%s3] sm:$0x1]
        %v693 = vlaneseq
        %v694 = vshrl.u32 %v693, 7
        %v695 = vsub.s32 0, %v694
        %v696 = vrot.slane %v691, %v695
        %v702 = vunpack.c.l.b16 %v687
        %v703 = vunpack.c.l.b16 %v688
        %v704 = vunpack.c.l.b16 %v689
        %v705 = vunpack.c.l.b16 %v690
        %v706 = vpack.c.b16 %v703, %v702
        %v707 = vpack.c.b16 %v705, %v704
        %vm710 = vcmask 261120
        %v712 = vsel %vm710, %v685, 0
        %714 = vmatprep.subr.bf16.mxu0 0
        %715 = vmatpush1.bf16.msra.mxu0 %v706
        %716 = vmatprep.subr.bf16.mxu0 0
        %717 = vmatpush1.bf16.msra.mxu0 %v707
        %718 = vmatprep.subr.bf16.mxu0 0
        %719 = vmatpush1.bf16.msra.mxu0 0
        %720 = vmatprep.subr.bf16.mxu0 0
        %721 = vmatpush1.bf16.msra.mxu0 0
        %722 = vmatprep.subr.bf16.mxu0 0
        %723 = vmatpush1.bf16.msra.mxu0 0
        %724 = vmatprep.subr.bf16.mxu0 0
        %725 = vmatpush1.bf16.msra.mxu0 0
        %726 = vmatprep.subr.bf16.mxu0 0
        %727 = vmatpush1.bf16.msra.mxu0 0
        %728 = vmatprep.subr.bf16.mxu0 0
        %729 = vmatpush1.bf16.msra.mxu0 0
        %730 = vmatprep.subr.bf16.mxu0 0
        %731 = vmatpush1.bf16.msra.mxu0 0
        %732 = vmatprep.subr.bf16.mxu0 0
        %733 = vmatpush1.bf16.msra.mxu0 0
        %734 = vmatprep.subr.bf16.mxu0 0
        %735 = vmatpush1.bf16.msra.mxu0 0
        %736 = vmatprep.subr.bf16.mxu0 0
        %737 = vmatpush1.bf16.msra.mxu0 0
        %738 = vmatprep.subr.bf16.mxu0 0
        %739 = vmatpush1.bf16.msra.mxu0 0
        %740 = vmatprep.subr.bf16.mxu0 0
        %741 = vmatpush1.bf16.msra.mxu0 0
        %742 = vmatprep.subr.bf16.mxu0 0
        %743 = vmatpush1.bf16.msra.mxu0 0
        %744 = vmatprep.subr.bf16.mxu0 0
        %745 = vmatpush1.bf16.msra.mxu0 0
        %746 = vmatprep.mubr.bf16.mxu0 0
        %747 = vmatmul.mubr.bf16.gmra.mrb[0].mxu0 %v712
        %v748 = vpop.f32.mrb[0].mxu0
        %v749 = vadd.f32 %v696, %v748
        %v750 = vpop.f32.mrb[0].mxu0
        %v751 = vpop.f32.mrb[0].mxu0
        %v752 = vpop.f32.mrb[0].mxu0
        %753 = vdwg.mxu0
        %v754 = vld [vmem:[%s4] sm:$0xf]
        %v755 = vld [vmem:[%s4 + $0x4] sm:$0xf]
        %v756 = vld [vmem:[%s4 + $0x8] sm:$0xf]
        %v757 = vld [vmem:[%s4 + $0xc] sm:$0xf]
        %v758 = vld [vmem:[%s5] sm:$0x1]
        %v760 = vlaneseq
        %v761 = vshrl.u32 %v760, 7
        %v762 = vsub.s32 0, %v761
        %v763 = vrot.slane %v758, %v762
        %v769 = vunpack.c.l.b16 %v754
        %v770 = vunpack.c.l.b16 %v755
        %v771 = vunpack.c.l.b16 %v756
        %v772 = vunpack.c.l.b16 %v757
        %v773 = vpack.c.b16 %v770, %v769
        %v774 = vpack.c.b16 %v772, %v771
        %v778 = vsel %vm710, %v686, 0
        %780 = vmatprep.subr.bf16.mxu0 0
        %781 = vmatpush1.bf16.msra.mxu0 %v773
        %782 = vmatprep.subr.bf16.mxu0 0
        %783 = vmatpush1.bf16.msra.mxu0 %v774
        %784 = vmatprep.subr.bf16.mxu0 0
        %785 = vmatpush1.bf16.msra.mxu0 0
        %786 = vmatprep.subr.bf16.mxu0 0
        %787 = vmatpush1.bf16.msra.mxu0 0
        %788 = vmatprep.subr.bf16.mxu0 0
        %789 = vmatpush1.bf16.msra.mxu0 0
        %790 = vmatprep.subr.bf16.mxu0 0
        %791 = vmatpush1.bf16.msra.mxu0 0
        %792 = vmatprep.subr.bf16.mxu0 0
        %793 = vmatpush1.bf16.msra.mxu0 0
        %794 = vmatprep.subr.bf16.mxu0 0
        %795 = vmatpush1.bf16.msra.mxu0 0
        %796 = vmatprep.subr.bf16.mxu0 0
        %797 = vmatpush1.bf16.msra.mxu0 0
        %798 = vmatprep.subr.bf16.mxu0 0
        %799 = vmatpush1.bf16.msra.mxu0 0
        %800 = vmatprep.subr.bf16.mxu0 0
        %801 = vmatpush1.bf16.msra.mxu0 0
        %802 = vmatprep.subr.bf16.mxu0 0
        %803 = vmatpush1.bf16.msra.mxu0 0
        %804 = vmatprep.subr.bf16.mxu0 0
        %805 = vmatpush1.bf16.msra.mxu0 0
        %806 = vmatprep.subr.bf16.mxu0 0
        %807 = vmatpush1.bf16.msra.mxu0 0
        %808 = vmatprep.subr.bf16.mxu0 0
        %809 = vmatpush1.bf16.msra.mxu0 0
        %810 = vmatprep.subr.bf16.mxu0 0
        %811 = vmatpush1.bf16.msra.mxu0 0
        %812 = vmatprep.mubr.bf16.mxu0 0
        %813 = vmatmul.mubr.bf16.gmra.mrb[0].mxu0 %v778
        %v814 = vpop.f32.mrb[0].mxu0
        %v815 = vadd.f32 %v763, %v814
        %v816 = vpop.f32.mrb[0].mxu0
        %v817 = vpop.f32.mrb[0].mxu0
        %v818 = vpop.f32.mrb[0].mxu0
        %819 = vdwg.mxu0
        %v820 = vld [vmem:[%s6] sm:$0xf]
        %v821 = vld [vmem:[%s6 + $0x4] sm:$0xf]
        %v822 = vld [vmem:[%s6 + $0x8] sm:$0xf]
        %v823 = vld [vmem:[%s6 + $0xc] sm:$0xf]
        %v824 = vld [vmem:[#allocation7] sm:$0x1]
        %v826 = vlaneseq
        %v827 = vshrl.u32 %v826, 7
        %v828 = vsub.s32 0, %v827
        %v829 = vrot.slane %v824, %v828
        %v835 = vunpack.c.l.b16 %v820
        %v836 = vunpack.c.l.b16 %v821
        %v837 = vunpack.c.l.b16 %v822
        %v838 = vunpack.c.l.b16 %v823
        %v839 = vpack.c.b16 %v836, %v835
        %v840 = vpack.c.b16 %v838, %v837
        %843 = vmatprep.subr.bf16.mxu0 0
        %844 = vmatpush1.bf16.msra.mxu0 %v839
        %845 = vmatprep.subr.bf16.mxu0 0
        %846 = vmatpush1.bf16.msra.mxu0 %v840
        %847 = vmatprep.subr.bf16.mxu0 0
        %848 = vmatpush1.bf16.msra.mxu0 0
        %849 = vmatprep.subr.bf16.mxu0 0
        %850 = vmatpush1.bf16.msra.mxu0 0
        %851 = vmatprep.subr.bf16.mxu0 0
        %852 = vmatpush1.bf16.msra.mxu0 0
        %853 = vmatprep.subr.bf16.mxu0 0
        %854 = vmatpush1.bf16.msra.mxu0 0
        %855 = vmatprep.subr.bf16.mxu0 0
        %856 = vmatpush1.bf16.msra.mxu0 0
        %857 = vmatprep.subr.bf16.mxu0 0
        %858 = vmatpush1.bf16.msra.mxu0 0
        %859 = vmatprep.subr.bf16.mxu0 0
        %860 = vmatpush1.bf16.msra.mxu0 0
        %861 = vmatprep.subr.bf16.mxu0 0
        %862 = vmatpush1.bf16.msra.mxu0 0
        %863 = vmatprep.subr.bf16.mxu0 0
        %864 = vmatpush1.bf16.msra.mxu0 0
        %865 = vmatprep.subr.bf16.mxu0 0
        %866 = vmatpush1.bf16.msra.mxu0 0
        %867 = vmatprep.subr.bf16.mxu0 0
        %868 = vmatpush1.bf16.msra.mxu0 0
        %869 = vmatprep.subr.bf16.mxu0 0
        %870 = vmatpush1.bf16.msra.mxu0 0
        %871 = vmatprep.subr.bf16.mxu0 0
        %872 = vmatpush1.bf16.msra.mxu0 0
        %873 = vmatprep.subr.bf16.mxu0 0
        %874 = vmatpush1.bf16.msra.mxu0 0
        %875 = vmatprep.mubr.bf16.mxu0 0
        %876 = vmatmul.mubr.bf16.gmra.mrb[0].mxu0 %v778
        %v877 = vpop.f32.mrb[0].mxu0
        %v878 = vadd.f32 %v829, %v877
        %v879 = vpop.f32.mrb[0].mxu0
        %v880 = vpop.f32.mrb[0].mxu0
        %v881 = vpop.f32.mrb[0].mxu0
        %882 = vdwg.mxu0
        %v883 = vpack.c.bf16 %v749, %v749
        %v884 = vpack.c.bf16 %v815, %v815
        %vm885 = vcmask 64512
        %v887 = vsel %vm885, %v883, 0
        %v890 = vsel %vm885, %v884, 0
        %892 = vmatprep.subr.bf16.mxu0 0
        %893 = vmatpush1.bf16.xpose.msra.mxu0 %v890
        %894 = vmatprep.subr.bf16.mxu0 0
        %895 = vmatpush1.bf16.xpose.msra.mxu0 0
        %896 = vmatprep.subr.bf16.mxu0 0
        %897 = vmatpush1.bf16.xpose.msra.mxu0 0
        %898 = vmatprep.subr.bf16.mxu0 0
        %899 = vmatpush1.bf16.xpose.msra.mxu0 0
        %900 = vmatprep.subr.bf16.mxu0 0
        %901 = vmatpush1.bf16.xpose.msra.mxu0 0
        %902 = vmatprep.subr.bf16.mxu0 0
        %903 = vmatpush1.bf16.xpose.msra.mxu0 0
        %904 = vmatprep.subr.bf16.mxu0 0
        %905 = vmatpush1.bf16.xpose.msra.mxu0 0
        %906 = vmatprep.subr.bf16.mxu0 0
        %907 = vmatpush1.bf16.xpose.msra.mxu0 0
        %908 = vmatprep.subr.bf16.mxu0 0
        %909 = vmatpush1.bf16.xpose.msra.mxu0 0
        %910 = vmatprep.subr.bf16.mxu0 0
        %911 = vmatpush1.bf16.xpose.msra.mxu0 0
        %912 = vmatprep.subr.bf16.mxu0 0
        %913 = vmatpush1.bf16.xpose.msra.mxu0 0
        %914 = vmatprep.subr.bf16.mxu0 0
        %915 = vmatpush1.bf16.xpose.msra.mxu0 0
        %916 = vmatprep.subr.bf16.mxu0 0
        %917 = vmatpush1.bf16.xpose.msra.mxu0 0
        %918 = vmatprep.subr.bf16.mxu0 0
        %919 = vmatpush1.bf16.xpose.msra.mxu0 0
        %920 = vmatprep.subr.bf16.mxu0 0
        %921 = vmatpush1.bf16.xpose.msra.mxu0 0
        %922 = vmatprep.subr.bf16.mxu0 0
        %923 = vmatpush1.bf16.xpose.msra.mxu0 0
        %924 = vmatprep.mubr.bf16.mxu0 0
        %925 = vmatmul.mubr.bf16.gmra.mrb[0].mxu0 %v887
        %v926 = vpop.f32.mrb[0].mxu0
        %v927 = vadd.f32 0.0, %v926
        %v928 = vpop.f32.mrb[0].mxu0
        %v929 = vpop.f32.mrb[0].mxu0
        %v930 = vpop.f32.mrb[0].mxu0
        %931 = vdwg.mxu0
        %v932 = vmul.f32 %v927, 0.35355338
        %v933 = vsel %vm885, %v932, -inf
        %934 = vmax.xlane.f32.xlu0 %v933
        %v935 = vpop.xlane.xlu0 %934
        %v936 = vsub.f32 %v932, %v935
        %v937 = vmul.f32 %v936, 1.442695
        %v938 = vpow.pop %v937
        %v939 = vsel %vm885, %v938, 0.0
        %940 = vadd.xlane.f32.xlu0 %v939
        %v941 = vpop.xlane.xlu0 %940
        %v942 = vrcp.pop %v941
        %v943 = vmul.f32 %v938, %v942
        %v944 = vpack.c.bf16 %v943, %v943
        %v945 = vpack.c.bf16 %v878, %v878
        %v947 = vsel %vm885, %v944, 0
        %vm949 = vcmask 1043456
        %v951 = vsel %vm949, %v945, 0
        %953 = vmatprep.subr.bf16.mxu0 0
        %954 = vmatpush1.bf16.msra.mxu0 %v951
        %955 = vmatprep.subr.bf16.mxu0 0
        %956 = vmatpush1.bf16.msra.mxu0 0
        %957 = vmatprep.subr.bf16.mxu0 0
        %958 = vmatpush1.bf16.msra.mxu0 0
        %959 = vmatprep.subr.bf16.mxu0 0
        %960 = vmatpush1.bf16.msra.mxu0 0
        %961 = vmatprep.subr.bf16.mxu0 0
        %962 = vmatpush1.bf16.msra.mxu0 0
        %963 = vmatprep.subr.bf16.mxu0 0
        %964 = vmatpush1.bf16.msra.mxu0 0
        %965 = vmatprep.subr.bf16.mxu0 0
        %966 = vmatpush1.bf16.msra.mxu0 0
        %967 = vmatprep.subr.bf16.mxu0 0
        %968 = vmatpush1.bf16.msra.mxu0 0
        %969 = vmatprep.subr.bf16.mxu0 0
        %970 = vmatpush1.bf16.msra.mxu0 0
        %971 = vmatprep.subr.bf16.mxu0 0
        %972 = vmatpush1.bf16.msra.mxu0 0
        %973 = vmatprep.subr.bf16.mxu0 0
        %974 = vmatpush1.bf16.msra.mxu0 0
        %975 = vmatprep.subr.bf16.mxu0 0
        %976 = vmatpush1.bf16.msra.mxu0 0
        %977 = vmatprep.subr.bf16.mxu0 0
        %978 = vmatpush1.bf16.msra.mxu0 0
        %979 = vmatprep.subr.bf16.mxu0 0
        %980 = vmatpush1.bf16.msra.mxu0 0
        %981 = vmatprep.subr.bf16.mxu0 0
        %982 = vmatpush1.bf16.msra.mxu0 0
        %983 = vmatprep.subr.bf16.mxu0 0
        %984 = vmatpush1.bf16.msra.mxu0 0
        %985 = vmatprep.mubr.bf16.mxu0 0
        %986 = vmatmul.mubr.bf16.gmra.mrb[0].mxu0 %v947
        %v987 = vpop.f32.mrb[0].mxu0
        %v988 = vadd.f32 0.0, %v987
        %v989 = vpop.f32.mrb[0].mxu0
        %v990 = vpop.f32.mrb[0].mxu0
        %v991 = vpop.f32.mrb[0].mxu0
        %992 = vdwg.mxu0
        %994 = vrot.lane.b32.xlu0 %v883, 120
        %v995 = vpop.permute.xlu0 %994
        %997 = vrot.lane.b32.xlu0 %v884, 120
        %v998 = vpop.permute.xlu0 %997
        %v1000 = vsel %vm885, %v995, 0
        %v1003 = vsel %vm885, %v998, 0
        %1005 = vmatprep.subr.bf16.mxu0 0
        %1006 = vmatpush1.bf16.xpose.msra.mxu0 %v1003
        %1007 = vmatprep.subr.bf16.mxu0 0
        %1008 = vmatpush1.bf16.xpose.msra.mxu0 0
        %1009 = vmatprep.subr.bf16.mxu0 0
        %1010 = vmatpush1.bf16.xpose.msra.mxu0 0
        %1011 = vmatprep.subr.bf16.mxu0 0
        %1012 = vmatpush1.bf16.xpose.msra.mxu0 0
        %1013 = vmatprep.subr.bf16.mxu0 0
        %1014 = vmatpush1.bf16.xpose.msra.mxu0 0
        %1015 = vmatprep.subr.bf16.mxu0 0
        %1016 = vmatpush1.bf16.xpose.msra.mxu0 0
        %1017 = vmatprep.subr.bf16.mxu0 0
        %1018 = vmatpush1.bf16.xpose.msra.mxu0 0
        %1019 = vmatprep.subr.bf16.mxu0 0
        %1020 = vmatpush1.bf16.xpose.msra.mxu0 0
        %1021 = vmatprep.subr.bf16.mxu0 0
        %1022 = vmatpush1.bf16.xpose.msra.mxu0 0
        %1023 = vmatprep.subr.bf16.mxu0 0
        %1024 = vmatpush1.bf16.xpose.msra.mxu0 0
        %1025 = vmatprep.subr.bf16.mxu0 0
        %1026 = vmatpush1.bf16.xpose.msra.mxu0 0
        %1027 = vmatprep.subr.bf16.mxu0 0
        %1028 = vmatpush1.bf16.xpose.msra.mxu0 0
        %1029 = vmatprep.subr.bf16.mxu0 0
        %1030 = vmatpush1.bf16.xpose.msra.mxu0 0
        %1031 = vmatprep.subr.bf16.mxu0 0
        %1032 = vmatpush1.bf16.xpose.msra.mxu0 0
        %1033 = vmatprep.subr.bf16.mxu0 0
        %1034 = vmatpush1.bf16.xpose.msra.mxu0 0
        %1035 = vmatprep.subr.bf16.mxu0 0
        %1036 = vmatpush1.bf16.xpose.msra.mxu0 0
        %1037 = vmatprep.mubr.bf16.mxu0 0
        %1038 = vmatmul.mubr.bf16.gmra.mrb[0].mxu0 %v1000
        %v1039 = vpop.f32.mrb[0].mxu0
        %v1040 = vadd.f32 0.0, %v1039
        %v1041 = vpop.f32.mrb[0].mxu0
        %v1042 = vpop.f32.mrb[0].mxu0
        %v1043 = vpop.f32.mrb[0].mxu0
        %1044 = vdwg.mxu0
        %v1045 = vmul.f32 %v1040, 0.35355338
        %v1046 = vsel %vm885, %v1045, -inf
        %1047 = vmax.xlane.f32.xlu0 %v1046
        %v1048 = vpop.xlane.xlu0 %1047
        %v1049 = vsub.f32 %v1045, %v1048
        %v1050 = vmul.f32 %v1049, 1.442695
        %v1051 = vpow.pop %v1050
        %v1052 = vsel %vm885, %v1051, 0.0
        %1053 = vadd.xlane.f32.xlu0 %v1052
        %v1054 = vpop.xlane.xlu0 %1053
        %v1055 = vrcp.pop %v1054
        %v1056 = vmul.f32 %v1051, %v1055
        %v1057 = vpack.c.bf16 %v1056, %v1056
        %1059 = vrot.lane.b32.xlu0 %v945, 120
        %v1060 = vpop.permute.xlu0 %1059
        %v1062 = vsel %vm885, %v1057, 0
        %v1065 = vsel %vm949, %v1060, 0
        %1067 = vmatprep.subr.bf16.mxu0 0
        %1068 = vmatpush1.bf16.msra.mxu0 %v1065
        %1069 = vmatprep.subr.bf16.mxu0 0
        %1070 = vmatpush1.bf16.msra.mxu0 0
        %1071 = vmatprep.subr.bf16.mxu0 0
        %1072 = vmatpush1.bf16.msra.mxu0 0
        %1073 = vmatprep.subr.bf16.mxu0 0
        %1074 = vmatpush1.bf16.msra.mxu0 0
        %1075 = vmatprep.subr.bf16.mxu0 0
        %1076 = vmatpush1.bf16.msra.mxu0 0
        %1077 = vmatprep.subr.bf16.mxu0 0
        %1078 = vmatpush1.bf16.msra.mxu0 0
        %1079 = vmatprep.subr.bf16.mxu0 0
        %1080 = vmatpush1.bf16.msra.mxu0 0
        %1081 = vmatprep.subr.bf16.mxu0 0
        %1082 = vmatpush1.bf16.msra.mxu0 0
        %1083 = vmatprep.subr.bf16.mxu0 0
        %1084 = vmatpush1.bf16.msra.mxu0 0
        %1085 = vmatprep.subr.bf16.mxu0 0
        %1086 = vmatpush1.bf16.msra.mxu0 0
        %1087 = vmatprep.subr.bf16.mxu0 0
        %1088 = vmatpush1.bf16.msra.mxu0 0
        %1089 = vmatprep.subr.bf16.mxu0 0
        %1090 = vmatpush1.bf16.msra.mxu0 0
        %1091 = vmatprep.subr.bf16.mxu0 0
        %1092 = vmatpush1.bf16.msra.mxu0 0
        %1093 = vmatprep.subr.bf16.mxu0 0
        %1094 = vmatpush1.bf16.msra.mxu0 0
        %1095 = vmatprep.subr.bf16.mxu0 0
        %1096 = vmatpush1.bf16.msra.mxu0 0
        %1097 = vmatprep.subr.bf16.mxu0 0
        %1098 = vmatpush1.bf16.msra.mxu0 0
        %1099 = vmatprep.mubr.bf16.mxu0 0
        %1100 = vmatmul.mubr.bf16.gmra.mrb[0].mxu0 %v1062
        %v1101 = vpop.f32.mrb[0].mxu0
        %v1102 = vadd.f32 0.0, %v1101
        %v1103 = vpop.f32.mrb[0].mxu0
        %v1104 = vpop.f32.mrb[0].mxu0
        %v1105 = vpop.f32.mrb[0].mxu0
        %1106 = vdwg.mxu0
        %1107 = vrot.lane.b32.xlu0 %v883, 112
        %v1108 = vpop.permute.xlu0 %1107
        %1109 = vrot.lane.b32.xlu0 %v884, 112
        %v1110 = vpop.permute.xlu0 %1109
        %v1112 = vsel %vm885, %v1108, 0
        %v1115 = vsel %vm885, %v1110, 0
        %1117 = vmatprep.subr.bf16.mxu0 0
        %1118 = vmatpush1.bf16.xpose.msra.mxu0 %v1115
        %1119 = vmatprep.subr.bf16.mxu0 0
        %1120 = vmatpush1.bf16.xpose.msra.mxu0 0
        %1121 = vmatprep.subr.bf16.mxu0 0
        %1122 = vmatpush1.bf16.xpose.msra.mxu0 0
        %1123 = vmatprep.subr.bf16.mxu0 0
        %1124 = vmatpush1.bf16.xpose.msra.mxu0 0
        %1125 = vmatprep.subr.bf16.mxu0 0
        %1126 = vmatpush1.bf16.xpose.msra.mxu0 0
        %1127 = vmatprep.subr.bf16.mxu0 0
        %1128 = vmatpush1.bf16.xpose.msra.mxu0 0
        %1129 = vmatprep.subr.bf16.mxu0 0
        %1130 = vmatpush1.bf16.xpose.msra.mxu0 0
        %1131 = vmatprep.subr.bf16.mxu0 0
        %1132 = vmatpush1.bf16.xpose.msra.mxu0 0
        %1133 = vmatprep.subr.bf16.mxu0 0
        %1134 = vmatpush1.bf16.xpose.msra.mxu0 0
        %1135 = vmatprep.subr.bf16.mxu0 0
        %1136 = vmatpush1.bf16.xpose.msra.mxu0 0
        %1137 = vmatprep.subr.bf16.mxu0 0
        %1138 = vmatpush1.bf16.xpose.msra.mxu0 0
        %1139 = vmatprep.subr.bf16.mxu0 0
        %1140 = vmatpush1.bf16.xpose.msra.mxu0 0
        %1141 = vmatprep.subr.bf16.mxu0 0
        %1142 = vmatpush1.bf16.xpose.msra.mxu0 0
        %1143 = vmatprep.subr.bf16.mxu0 0
        %1144 = vmatpush1.bf16.xpose.msra.mxu0 0
        %1145 = vmatprep.subr.bf16.mxu0 0
        %1146 = vmatpush1.bf16.xpose.msra.mxu0 0
        %1147 = vmatprep.subr.bf16.mxu0 0
        %1148 = vmatpush1.bf16.xpose.msra.mxu0 0
        %1149 = vmatprep.mubr.bf16.mxu0 0
        %1150 = vmatmul.mubr.bf16.gmra.mrb[0].mxu0 %v1112
        %v1151 = vpop.f32.mrb[0].mxu0
        %v1152 = vadd.f32 0.0, %v1151
        %v1153 = vpop.f32.mrb[0].mxu0
        %v1154 = vpop.f32.mrb[0].mxu0
        %v1155 = vpop.f32.mrb[0].mxu0
        %1156 = vdwg.mxu0
        %v1157 = vmul.f32 %v1152, 0.35355338
        %v1158 = vsel %vm885, %v1157, -inf
        %1159 = vmax.xlane.f32.xlu0 %v1158
        %v1160 = vpop.xlane.xlu0 %1159
        %v1161 = vsub.f32 %v1157, %v1160
        %v1162 = vmul.f32 %v1161, 1.442695
        %v1163 = vpow.pop %v1162
        %v1164 = vsel %vm885, %v1163, 0.0
        %1165 = vadd.xlane.f32.xlu0 %v1164
        %v1166 = vpop.xlane.xlu0 %1165
        %v1167 = vrcp.pop %v1166
        %v1168 = vmul.f32 %v1163, %v1167
        %v1169 = vpack.c.bf16 %v1168, %v1168
        %1170 = vrot.lane.b32.xlu0 %v945, 112
        %v1171 = vpop.permute.xlu0 %1170
        %v1173 = vsel %vm885, %v1169, 0
        %v1176 = vsel %vm949, %v1171, 0
        %1178 = vmatprep.subr.bf16.mxu0 0
        %1179 = vmatpush1.bf16.msra.mxu0 %v1176
        %1180 = vmatprep.subr.bf16.mxu0 0
        %1181 = vmatpush1.bf16.msra.mxu0 0
        %1182 = vmatprep.subr.bf16.mxu0 0
        %1183 = vmatpush1.bf16.msra.mxu0 0
        %1184 = vmatprep.subr.bf16.mxu0 0
        %1185 = vmatpush1.bf16.msra.mxu0 0
        %1186 = vmatprep.subr.bf16.mxu0 0
        %1187 = vmatpush1.bf16.msra.mxu0 0
        %1188 = vmatprep.subr.bf16.mxu0 0
        %1189 = vmatpush1.bf16.msra.mxu0 0
        %1190 = vmatprep.subr.bf16.mxu0 0
        %1191 = vmatpush1.bf16.msra.mxu0 0
        %1192 = vmatprep.subr.bf16.mxu0 0
        %1193 = vmatpush1.bf16.msra.mxu0 0
        %1194 = vmatprep.subr.bf16.mxu0 0
        %1195 = vmatpush1.bf16.msra.mxu0 0
        %1196 = vmatprep.subr.bf16.mxu0 0
        %1197 = vmatpush1.bf16.msra.mxu0 0
        %1198 = vmatprep.subr.bf16.mxu0 0
        %1199 = vmatpush1.bf16.msra.mxu0 0
        %1200 = vmatprep.subr.bf16.mxu0 0
        %1201 = vmatpush1.bf16.msra.mxu0 0
        %1202 = vmatprep.subr.bf16.mxu0 0
        %1203 = vmatpush1.bf16.msra.mxu0 0
        %1204 = vmatprep.subr.bf16.mxu0 0
        %1205 = vmatpush1.bf16.msra.mxu0 0
        %1206 = vmatprep.subr.bf16.mxu0 0
        %1207 = vmatpush1.bf16.msra.mxu0 0
        %1208 = vmatprep.subr.bf16.mxu0 0
        %1209 = vmatpush1.bf16.msra.mxu0 0
        %1210 = vmatprep.mubr.bf16.mxu0 0
        %1211 = vmatmul.mubr.bf16.gmra.mrb[0].mxu0 %v1173
        %v1212 = vpop.f32.mrb[0].mxu0
        %v1213 = vadd.f32 0.0, %v1212
        %v1214 = vpop.f32.mrb[0].mxu0
        %v1215 = vpop.f32.mrb[0].mxu0
        %v1216 = vpop.f32.mrb[0].mxu0
        %1217 = vdwg.mxu0
        %1218 = vrot.lane.b32.xlu0 %v883, 104
        %v1219 = vpop.permute.xlu0 %1218
        %1220 = vrot.lane.b32.xlu0 %v884, 104
        %v1221 = vpop.permute.xlu0 %1220
        %v1223 = vsel %vm885, %v1219, 0
        %v1226 = vsel %vm885, %v1221, 0
        %1228 = vmatprep.subr.bf16.mxu0 0
        %1229 = vmatpush1.bf16.xpose.msra.mxu0 %v1226
        %1230 = vmatprep.subr.bf16.mxu0 0
        %1231 = vmatpush1.bf16.xpose.msra.mxu0 0
        %1232 = vmatprep.subr.bf16.mxu0 0
        %1233 = vmatpush1.bf16.xpose.msra.mxu0 0
        %1234 = vmatprep.subr.bf16.mxu0 0
        %1235 = vmatpush1.bf16.xpose.msra.mxu0 0
        %1236 = vmatprep.subr.bf16.mxu0 0
        %1237 = vmatpush1.bf16.xpose.msra.mxu0 0
        %1238 = vmatprep.subr.bf16.mxu0 0
        %1239 = vmatpush1.bf16.xpose.msra.mxu0 0
        %1240 = vmatprep.subr.bf16.mxu0 0
        %1241 = vmatpush1.bf16.xpose.msra.mxu0 0
        %1242 = vmatprep.subr.bf16.mxu0 0
        %1243 = vmatpush1.bf16.xpose.msra.mxu0 0
        %1244 = vmatprep.subr.bf16.mxu0 0
        %1245 = vmatpush1.bf16.xpose.msra.mxu0 0
        %1246 = vmatprep.subr.bf16.mxu0 0
        %1247 = vmatpush1.bf16.xpose.msra.mxu0 0
        %1248 = vmatprep.subr.bf16.mxu0 0
        %1249 = vmatpush1.bf16.xpose.msra.mxu0 0
        %1250 = vmatprep.subr.bf16.mxu0 0
        %1251 = vmatpush1.bf16.xpose.msra.mxu0 0
        %1252 = vmatprep.subr.bf16.mxu0 0
        %1253 = vmatpush1.bf16.xpose.msra.mxu0 0
        %1254 = vmatprep.subr.bf16.mxu0 0
        %1255 = vmatpush1.bf16.xpose.msra.mxu0 0
        %1256 = vmatprep.subr.bf16.mxu0 0
        %1257 = vmatpush1.bf16.xpose.msra.mxu0 0
        %1258 = vmatprep.subr.bf16.mxu0 0
        %1259 = vmatpush1.bf16.xpose.msra.mxu0 0
        %1260 = vmatprep.mubr.bf16.mxu0 0
        %1261 = vmatmul.mubr.bf16.gmra.mrb[0].mxu0 %v1223
        %v1262 = vpop.f32.mrb[0].mxu0
        %v1263 = vadd.f32 0.0, %v1262
        %v1264 = vpop.f32.mrb[0].mxu0
        %v1265 = vpop.f32.mrb[0].mxu0
        %v1266 = vpop.f32.mrb[0].mxu0
        %1267 = vdwg.mxu0
        %v1268 = vmul.f32 %v1263, 0.35355338
        %v1269 = vsel %vm885, %v1268, -inf
        %1270 = vmax.xlane.f32.xlu0 %v1269
        %v1271 = vpop.xlane.xlu0 %1270
        %v1272 = vsub.f32 %v1268, %v1271
        %v1273 = vmul.f32 %v1272, 1.442695
        %v1274 = vpow.pop %v1273
        %v1275 = vsel %vm885, %v1274, 0.0
        %1276 = vadd.xlane.f32.xlu0 %v1275
        %v1277 = vpop.xlane.xlu0 %1276
        %v1278 = vrcp.pop %v1277
        %v1279 = vmul.f32 %v1274, %v1278
        %v1280 = vpack.c.bf16 %v1279, %v1279
        %1281 = vrot.lane.b32.xlu0 %v945, 104
        %v1282 = vpop.permute.xlu0 %1281
        %v1284 = vsel %vm885, %v1280, 0
        %v1287 = vsel %vm949, %v1282, 0
        %1289 = vmatprep.subr.bf16.mxu0 0
        %1290 = vmatpush1.bf16.msra.mxu0 %v1287
        %1291 = vmatprep.subr.bf16.mxu0 0
        %1292 = vmatpush1.bf16.msra.mxu0 0
        %1293 = vmatprep.subr.bf16.mxu0 0
        %1294 = vmatpush1.bf16.msra.mxu0 0
        %1295 = vmatprep.subr.bf16.mxu0 0
        %1296 = vmatpush1.bf16.msra.mxu0 0
        %1297 = vmatprep.subr.bf16.mxu0 0
        %1298 = vmatpush1.bf16.msra.mxu0 0
        %1299 = vmatprep.subr.bf16.mxu0 0
        %1300 = vmatpush1.bf16.msra.mxu0 0
        %1301 = vmatprep.subr.bf16.mxu0 0
        %1302 = vmatpush1.bf16.msra.mxu0 0
        %1303 = vmatprep.subr.bf16.mxu0 0
        %1304 = vmatpush1.bf16.msra.mxu0 0
        %1305 = vmatprep.subr.bf16.mxu0 0
        %1306 = vmatpush1.bf16.msra.mxu0 0
        %1307 = vmatprep.subr.bf16.mxu0 0
        %1308 = vmatpush1.bf16.msra.mxu0 0
        %1309 = vmatprep.subr.bf16.mxu0 0
        %1310 = vmatpush1.bf16.msra.mxu0 0
        %1311 = vmatprep.subr.bf16.mxu0 0
        %1312 = vmatpush1.bf16.msra.mxu0 0
        %1313 = vmatprep.subr.bf16.mxu0 0
        %1314 = vmatpush1.bf16.msra.mxu0 0
        %1315 = vmatprep.subr.bf16.mxu0 0
        %1316 = vmatpush1.bf16.msra.mxu0 0
        %1317 = vmatprep.subr.bf16.mxu0 0
        %1318 = vmatpush1.bf16.msra.mxu0 0
        %1319 = vmatprep.subr.bf16.mxu0 0
        %1320 = vmatpush1.bf16.msra.mxu0 0
        %1321 = vmatprep.mubr.bf16.mxu0 0
        %1322 = vmatmul.mubr.bf16.gmra.mrb[0].mxu0 %v1284
        %v1323 = vpop.f32.mrb[0].mxu0
        %v1324 = vadd.f32 0.0, %v1323
        %v1325 = vpop.f32.mrb[0].mxu0
        %v1326 = vpop.f32.mrb[0].mxu0
        %v1327 = vpop.f32.mrb[0].mxu0
        %1328 = vdwg.mxu0
        %1330 = vrot.lane.b32.xlu0 %v1102, 8
        %v1331 = vpop.permute.xlu0 %1330
        %1334 = vrot.lane.b32.xlu0 %v1213, 16
        %v1335 = vpop.permute.xlu0 %1334
        %1338 = vrot.lane.b32.xlu0 %v1324, 24
        %v1339 = vpop.permute.xlu0 %1338
        %v1341 = vsel %vm885, %v988, %v1331
        %vm1342 = vcmask 130048
        %v1343 = vsel %vm1342, %v1341, %v1335
        %vm1344 = vcmask 195584
        %v1345 = vsel %vm1344, %v1343, %v1339
        %v1346 = vld [vmem:[#allocation8] sm:$0xf]
        %v1347 = vld [vmem:[#allocation8 + $0x4] sm:$0xf]
        %v1348 = vld [vmem:[#allocation8 + $0x8] sm:$0xf]
        %v1349 = vld [vmem:[#allocation8 + $0xc] sm:$0xf]
        %v1350 = vpack.c.bf16 %v1345, %v1345
        %v1351 = vld [vmem:[#allocation10] sm:$0x1]
        %v1353 = vlaneseq
        %v1354 = vshrl.u32 %v1353, 7
        %v1355 = vsub.s32 0, %v1354
        %v1356 = vrot.slane %v1351, %v1355
        %v1362 = vunpack.c.l.b16 %v1346
        %v1363 = vunpack.c.l.b16 %v1347
        %v1364 = vunpack.c.l.b16 %v1348
        %v1365 = vunpack.c.l.b16 %v1349
        %v1366 = vpack.c.b16 %v1363, %v1362
        %v1367 = vpack.c.b16 %v1365, %v1364
        %v1371 = vsel %vm710, %v1350, 0
        %1373 = vmatprep.subr.bf16.mxu0 0
        %1374 = vmatpush1.bf16.msra.mxu0 %v1366
        %1375 = vmatprep.subr.bf16.mxu0 0
        %1376 = vmatpush1.bf16.msra.mxu0 %v1367
        %1377 = vmatprep.subr.bf16.mxu0 0
        %1378 = vmatpush1.bf16.msra.mxu0 0
        %1379 = vmatprep.subr.bf16.mxu0 0
        %1380 = vmatpush1.bf16.msra.mxu0 0
        %1381 = vmatprep.subr.bf16.mxu0 0
        %1382 = vmatpush1.bf16.msra.mxu0 0
        %1383 = vmatprep.subr.bf16.mxu0 0
        %1384 = vmatpush1.bf16.msra.mxu0 0
        %1385 = vmatprep.subr.bf16.mxu0 0
        %1386 = vmatpush1.bf16.msra.mxu0 0
        %1387 = vmatprep.subr.bf16.mxu0 0
        %1388 = vmatpush1.bf16.msra.mxu0 0
        %1389 = vmatprep.subr.bf16.mxu0 0
        %1390 = vmatpush1.bf16.msra.mxu0 0
        %1391 = vmatprep.subr.bf16.mxu0 0
        %1392 = vmatpush1.bf16.msra.mxu0 0
        %1393 = vmatprep.subr.bf16.mxu0 0
        %1394 = vmatpush1.bf16.msra.mxu0 0
        %1395 = vmatprep.subr.bf16.mxu0 0
        %1396 = vmatpush1.bf16.msra.mxu0 0
        %1397 = vmatprep.subr.bf16.mxu0 0
        %1398 = vmatpush1.bf16.msra.mxu0 0
        %1399 = vmatprep.subr.bf16.mxu0 0
        %1400 = vmatpush1.bf16.msra.mxu0 0
        %1401 = vmatprep.subr.bf16.mxu0 0
        %1402 = vmatpush1.bf16.msra.mxu0 0
        %1403 = vmatprep.subr.bf16.mxu0 0
        %1404 = vmatpush1.bf16.msra.mxu0 0
        %1405 = vmatprep.mubr.bf16.mxu0 0
        %1406 = vmatmul.mubr.bf16.gmra.mrb[0].mxu0 %v1371
        %v1407 = vpop.f32.mrb[0].mxu0
        %v1408 = vadd.f32 %v1356, %v1407
        %v1409 = vpop.f32.mrb[0].mxu0
        %v1410 = vpop.f32.mrb[0].mxu0
        %v1411 = vpop.f32.mrb[0].mxu0
        %1412 = vdwg.mxu0
        %v1413 = vunpack.c.l.bf16 %v685
        %v1414 = vadd.f32 %v1408, %v1413
        %v1415 = vld [vmem:[%s10] sm:$0x1]
        %v1416 = vld [vmem:[%s11] sm:$0x1]
        %v1417 = vsel %vm710, %v1414, 0.0
        %1418 = vadd.xlane.f32.xlu0 %v1417
        %v1419 = vpop.xlane.xlu0 %1418
        %v1420 = vrcp.pop 32.0
        %v1421 = vmul.f32 %v1419, %v1420
        %v1422 = vsub.f32 %v1414, %v1421
        %v1423 = vmul.f32 %v1422, %v1422
        %v1424 = vsel %vm710, %v1423, 0.0
        %1425 = vadd.xlane.f32.xlu0 %v1424
        %v1426 = vpop.xlane.xlu0 %1425
        %v1427 = vmul.f32 %v1426, %v1420
        %v1428 = vadd.f32 %v1427, 1e-05
        %v1429 = vrsqrt.pop %v1428
        %v1430 = vmul.f32 %v1422, %v1429
        %v1432 = vlaneseq
        %v1433 = vshrl.u32 %v1432, 7
        %v1434 = vsub.s32 0, %v1433
        %v1435 = vrot.slane %v1415, %v1434
        %v1437 = vmul.f32 %v1430, %v1435
        %v1439 = vlaneseq
        %v1440 = vshrl.u32 %v1439, 7
        %v1441 = vsub.s32 0, %v1440
        %v1442 = vrot.slane %v1416, %v1441
        %v1444 = vadd.f32 %v1437, %v1442
        %v1445 = vld [vmem:[%s12] sm:$0xf]
        %v1446 = vld [vmem:[%s12 + $0x4] sm:$0xf]
        %v1447 = vld [vmem:[%s12 + $0x8] sm:$0xf]
        %v1448 = vld [vmem:[%s12 + $0xc] sm:$0xf]
        %v1449 = vpack.c.bf16 %v1444, %v1444
        %v1450 = vld [vmem:[%s13] sm:$0x1]
        %v1452 = vlaneseq
        %v1453 = vshrl.u32 %v1452, 7
        %v1454 = vsub.s32 0, %v1453
        %v1455 = vrot.slane %v1450, %v1454
        %v1461 = vunpack.c.l.b16 %v1445
        %v1462 = vunpack.c.l.b16 %v1446
        %v1463 = vunpack.c.l.b16 %v1447
        %v1464 = vunpack.c.l.b16 %v1448
        %v1465 = vpack.c.b16 %v1462, %v1461
        %v1466 = vpack.c.b16 %v1464, %v1463
        %v1470 = vsel %vm710, %v1449, 0
        %1472 = vmatprep.subr.bf16.mxu0 0
        %1473 = vmatpush1.bf16.msra.mxu0 %v1465
        %1474 = vmatprep.subr.bf16.mxu0 0
        %1475 = vmatpush1.bf16.msra.mxu0 %v1466
        %1476 = vmatprep.subr.bf16.mxu0 0
        %1477 = vmatpush1.bf16.msra.mxu0 0
        %1478 = vmatprep.subr.bf16.mxu0 0
        %1479 = vmatpush1.bf16.msra.mxu0 0
        %1480 = vmatprep.subr.bf16.mxu0 0
        %1481 = vmatpush1.bf16.msra.mxu0 0
        %1482 = vmatprep.subr.bf16.mxu0 0
        %1483 = vmatpush1.bf16.msra.mxu0 0
        %1484 = vmatprep.subr.bf16.mxu0 0
        %1485 = vmatpush1.bf16.msra.mxu0 0
        %1486 = vmatprep.subr.bf16.mxu0 0
        %1487 = vmatpush1.bf16.msra.mxu0 0
        %1488 = vmatprep.subr.bf16.mxu0 0
        %1489 = vmatpush1.bf16.msra.mxu0 0
        %1490 = vmatprep.subr.bf16.mxu0 0
        %1491 = vmatpush1.bf16.msra.mxu0 0
        %1492 = vmatprep.subr.bf16.mxu0 0
        %1493 = vmatpush1.bf16.msra.mxu0 0
        %1494 = vmatprep.subr.bf16.mxu0 0
        %1495 = vmatpush1.bf16.msra.mxu0 0
        %1496 = vmatprep.subr.bf16.mxu0 0
        %1497 = vmatpush1.bf16.msra.mxu0 0
        %1498 = vmatprep.subr.bf16.mxu0 0
        %1499 = vmatpush1.bf16.msra.mxu0 0
        %1500 = vmatprep.subr.bf16.mxu0 0
        %1501 = vmatpush1.bf16.msra.mxu0 0
        %1502 = vmatprep.subr.bf16.mxu0 0
        %1503 = vmatpush1.bf16.msra.mxu0 0
        %1504 = vmatprep.mubr.bf16.mxu0 0
        %1505 = vmatmul.mubr.bf16.gmra.mrb[0].mxu0 %v1470
        %v1506 = vpop.f32.mrb[0].mxu0
        %v1507 = vadd.f32 %v1455, %v1506
        %v1508 = vpop.f32.mrb[0].mxu0
        %v1509 = vpop.f32.mrb[0].mxu0
        %v1510 = vpop.f32.mrb[0].mxu0
        %1511 = vdwg.mxu0
        %v1512 = vmax.f32 %v1507, 0.0
        %v1513 = vld [vmem:[%s14] sm:$0xf]
        %v1514 = vld [vmem:[%s14 + $0x4] sm:$0xf]
        %v1515 = vld [vmem:[%s14 + $0x8] sm:$0xf]
        %v1516 = vld [vmem:[%s14 + $0xc] sm:$0xf]
        %v1517 = vld [vmem:[%s14 + $0x10] sm:$0xf]
        %v1518 = vld [vmem:[%s14 + $0x14] sm:$0xf]
        %v1519 = vld [vmem:[%s14 + $0x18] sm:$0xf]
        %v1520 = vld [vmem:[%s14 + $0x1c] sm:$0xf]
        %v1521 = vpack.c.bf16 %v1512, %v1512
        %v1522 = vld [vmem:[%s15] sm:$0x1]
        %v1524 = vlaneseq
        %v1525 = vshrl.u32 %v1524, 7
        %v1526 = vsub.s32 0, %v1525
        %v1527 = vrot.slane %v1522, %v1526
        %v1537 = vunpack.c.l.b16 %v1513
        %v1538 = vunpack.c.l.b16 %v1514
        %v1539 = vunpack.c.l.b16 %v1515
        %v1540 = vunpack.c.l.b16 %v1516
        %v1541 = vunpack.c.l.b16 %v1517
        %v1542 = vunpack.c.l.b16 %v1518
        %v1543 = vunpack.c.l.b16 %v1519
        %v1544 = vunpack.c.l.b16 %v1520
        %v1545 = vpack.c.b16 %v1538, %v1537
        %v1546 = vpack.c.b16 %v1540, %v1539
        %v1547 = vpack.c.b16 %v1542, %v1541
        %v1548 = vpack.c.b16 %v1544, %v1543
        %vm1553 = vcmask 523264
        %v1555 = vsel %vm1553, %v1521, 0
        %1557 = vmatprep.subr.bf16.mxu0 0
        %1558 = vmatpush1.bf16.msra.mxu0 %v1545
        %1559 = vmatprep.subr.bf16.mxu0 0
        %1560 = vmatpush1.bf16.msra.mxu0 %v1546
        %1561 = vmatprep.subr.bf16.mxu0 0
        %1562 = vmatpush1.bf16.msra.mxu0 %v1547
        %1563 = vmatprep.subr.bf16.mxu0 0
        %1564 = vmatpush1.bf16.msra.mxu0 %v1548
        %1565 = vmatprep.subr.bf16.mxu0 0
        %1566 = vmatpush1.bf16.msra.mxu0 0
        %1567 = vmatprep.subr.bf16.mxu0 0
        %1568 = vmatpush1.bf16.msra.mxu0 0
        %1569 = vmatprep.subr.bf16.mxu0 0
        %1570 = vmatpush1.bf16.msra.mxu0 0
        %1571 = vmatprep.subr.bf16.mxu0 0
        %1572 = vmatpush1.bf16.msra.mxu0 0
        %1573 = vmatprep.subr.bf16.mxu0 0
        %1574 = vmatpush1.bf16.msra.mxu0 0
        %1575 = vmatprep.subr.bf16.mxu0 0
        %1576 = vmatpush1.bf16.msra.mxu0 0
        %1577 = vmatprep.subr.bf16.mxu0 0
        %1578 = vmatpush1.bf16.msra.mxu0 0
        %1579 = vmatprep.subr.bf16.mxu0 0
        %1580 = vmatpush1.bf16.msra.mxu0 0
        %1581 = vmatprep.subr.bf16.mxu0 0
        %1582 = vmatpush1.bf16.msra.mxu0 0
        %1583 = vmatprep.subr.bf16.mxu0 0
        %1584 = vmatpush1.bf16.msra.mxu0 0
        %1585 = vmatprep.subr.bf16.mxu0 0
        %1586 = vmatpush1.bf16.msra.mxu0 0
        %1587 = vmatprep.subr.bf16.mxu0 0
        %1588 = vmatpush1.bf16.msra.mxu0 0
        %1589 = vmatprep.mubr.bf16.mxu0 0
        %1590 = vmatmul.mubr.bf16.gmra.mrb[0].mxu0 %v1555
        %v1591 = vpop.f32.mrb[0].mxu0
        %v1592 = vadd.f32 %v1527, %v1591
        %v1593 = vpop.f32.mrb[0].mxu0
        %v1594 = vpop.f32.mrb[0].mxu0
        %v1595 = vpop.f32.mrb[0].mxu0
        %1596 = vdwg.mxu0
        %v1597 = vadd.f32 %v1592, %v1444
        %v1598 = vld [vmem:[%s16] sm:$0x1]
        %v1599 = vld [vmem:[%s17] sm:$0x1]
        %v1600 = vsel %vm710, %v1597, 0.0
        %1601 = vadd.xlane.f32.xlu0 %v1600
        %v1602 = vpop.xlane.xlu0 %1601
        %v1603 = vmul.f32 %v1602, %v1420
        %v1604 = vsub.f32 %v1597, %v1603
        %v1605 = vmul.f32 %v1604, %v1604
        %v1606 = vsel %vm710, %v1605, 0.0
        %1607 = vadd.xlane.f32.xlu0 %v1606
        %v1608 = vpop.xlane.xlu0 %1607
        %v1609 = vmul.f32 %v1608, %v1420
        %v1610 = vadd.f32 %v1609, 1e-05
        %v1611 = vrsqrt.pop %v1610
        %v1612 = vmul.f32 %v1604, %v1611
        %v1614 = vlaneseq
        %v1615 = vshrl.u32 %v1614, 7
        %v1616 = vsub.s32 0, %v1615
        %v1617 = vrot.slane %v1598, %v1616
        %v1619 = vmul.f32 %v1612, %v1617
        %v1621 = vlaneseq
        %v1622 = vshrl.u32 %v1621, 7
        %v1623 = vsub.s32 0, %v1622
        %v1624 = vrot.slane %v1599, %v1623
        %v1626 = vadd.f32 %v1619, %v1624
        %v1627 = vpack.c.bf16 %v1626, %v1626
        %vm1628 = vcmask 257024
        %1629 = vst.msk [vmem:[%s683] sm:$0xf] %vm1628, %v1627
        %s1630 = sand.u32 %s451, 1
        %s1631 = scalar_lea.sflag [#allocation4], %s1630
        %s1632 = sand.u32 %s451, 1
        %s1633 = smul.addr %s1632, 4
        %s1634 = scalar_lea.vmem [#allocation11], %s1633
        // Predicated region
        $region113: #{tpu_custom_call.1} parent=91 // pred_check
          %p1635 = pneg %p461
        $region114: #{tpu_custom_call.1} parent=91 // pred_check_branch
          %1637 = sbr.rel (%p1635) target = $region116
        $region115: #{tpu_custom_call.1} parent=91 // pred_region
          %s1639 = ssub.s32 64, 64
          %1640 = vsyncadd %s1631, %s1639
          %s1641 = sadd.s32 %s44, %s43
          %s1642 = smul.addr %s1641, 64
          %s1643 = scalar_lea.hbm %s18, %s1642
          %s1645 = sshll.u32 %s1634, 4
          %s1646 = int_to_ptr.vmem [resolvable:$true] %s1645
          %1648 = dma.vmem_to_hbm [thread:$0]  %s1646, 64, %s1643, %s1631
        $region116: #{tpu_custom_call.1} parent=91 // pred_fallthru
          _
      $region92: #{tpu_custom_call.1} parent=5 // pred_fallthru
        _
      %p1649 = scmp.le.s32.totalorder 2, %s34
      // Predicated region
      $region117: #{tpu_custom_call.1} parent=5 // pred_check
        %p1650 = pneg %p1649
      $region118: #{tpu_custom_call.1} parent=5 // pred_check_branch
        %1652 = sbr.rel (%p1650) target = $region120
      $region119: #{tpu_custom_call.1} parent=5 // pred_region
        %s1653 = ssub.s32 %s34, 2
        // Predicated region
        $region121: #{tpu_custom_call.1} parent=119 // pred_check
          %p1654 = pneg %p467
        $region122: #{tpu_custom_call.1} parent=119 // pred_check_branch
          %1656 = sbr.rel (%p1654) target = $region124
        $region123: #{tpu_custom_call.1} parent=119 // pred_region
          %s1657 = sand.u32 %s452, 1
          %s1658 = scalar_lea.sflag [#allocation4], %s1657
          %s1659 = sand.u32 %s452, 1
          %s1660 = smul.addr %s1659, 4
          %s1661 = scalar_lea.vmem [#allocation11], %s1660
          %1662 = dma.done %s1658, 64
        $region124: #{tpu_custom_call.1} parent=119 // pred_fallthru
          _
      $region120: #{tpu_custom_call.1} parent=5 // pred_fallthru
        _
    $region6: #{tpu_custom_call.1} parent=1 // loop_footer
      %s38 = sadd.s32 1, %s34
    $region7: #{tpu_custom_call.1} parent=1 // loop_footer_branch
      %33 = sbr.rel target = $region3
    $region8: #{tpu_custom_call.1} parent=1 // loop_exit
      _
    %1663 = vsyncpa [#allocation3], 1
    %s1664 = scalar_lea.sflag [#allocation3], 1
    %1665 = vsyncpa %s1664, 1
    %1666 = vsyncpa [#allocation6], 1
    %s1667 = scalar_lea.sflag [#allocation6], 1
    %1668 = vsyncpa %s1667, 1
    %1669 = vsyncpa [#allocation9], 1
    %1670 = vsyncpa [#allocation4], 1
    %s1671 = scalar_lea.sflag [#allocation4], 1
    %1672 = vsyncpa %s1671, 1

</llo_original>
